<compile_context>
chip_gen: v7x
topology: tpu7x:2x2x1
jax: 0.10.0
libtpu: 0.0.40
codegen_flags: <defaults>
</compile_context>

<pallas_src>
import functools

import jax
import jax.numpy as jnp
from jax.experimental import pallas as pl
from jax.experimental.pallas import tpu as pltpu

BN_EPS = 1e-3
NEG_INF = float("-inf")
MAX_TM = 1024  # max rows of the (im2col) activation matrix per grid step


def _round_up(x, m):
    return (x + m - 1) // m * m


# ----------------------------- Pallas kernels ------------------------------

def _matmul_bias_kernel(x_ref, w_ref, b_ref, o_ref, *, relu):
    # (tm, K) bf16 @ (K, Cout) bf16 -> f32 accumulate, + bias (f32), optional ReLU.
    acc = jnp.dot(x_ref[...], w_ref[...], preferred_element_type=jnp.float32)
    acc = acc + b_ref[...]
    if relu:
        acc = jnp.maximum(acc, 0.0)
    o_ref[...] = acc.astype(o_ref.dtype)


def _maxpool_s2_kernel(ee_ref, eo_ref, oe_ref, oo_ref, o_ref):
    # 3x3 / stride-2 max pool expressed on the 4 input parity planes:
    #   out[y,x] = max_{dy,dx in 0..2} in[2y+dy, 2x+dx]
    # even/even taps live in ee, even/odd in eo, odd/even in oe, odd/odd in oo,
    # so only the true (quarter-size) output is ever computed, with unit-offset
    # static window reads (no strided in-kernel access, no 4x over-compute).
    _, Ho, Wo, _ = o_ref.shape
    m = ee_ref[:, 0:Ho, 0:Wo, :]
    m = jnp.maximum(m, ee_ref[:, 0:Ho, 1:Wo + 1, :])
    m = jnp.maximum(m, ee_ref[:, 1:Ho + 1, 0:Wo, :])
    m = jnp.maximum(m, ee_ref[:, 1:Ho + 1, 1:Wo + 1, :])
    m = jnp.maximum(m, eo_ref[:, 0:Ho, :, :])
    m = jnp.maximum(m, eo_ref[:, 1:Ho + 1, :, :])
    m = jnp.maximum(m, oe_ref[:, :, 0:Wo, :])
    m = jnp.maximum(m, oe_ref[:, :, 1:Wo + 1, :])
    o_ref[...] = jnp.maximum(m, oo_ref[...])


def _maxpool_s1_kernel(x_ref, o_ref):
    # 3x3 / stride-1 / pad-1 max pool on a spatially pre-padded block.
    _, H, W, _ = o_ref.shape
    m = x_ref[:, 0:H, 0:W, :]
    for dy in range(3):
        for dx in range(3):
            if dy == 0 and dx == 0:
                continue
            m = jnp.maximum(m, x_ref[:, dy:dy + H, dx:dx + W, :])
    o_ref[...] = m


# ----------------------------- op wrappers ---------------------------------

def matmul_bias(x2d, w, b, relu=True):
    """(M, K) @ (K, Cout) + bias (+ReLU).  bf16 MXU matmul, f32 accumulate."""
    M, K = x2d.shape
    Cout = w.shape[1]
    Mp = _round_up(M, 8)
    if Mp != M:  # never taken at the shapes used here; keeps blocks well-formed
        x2d = jnp.pad(x2d, ((0, Mp - M), (0, 0)))
    tm = min(MAX_TM, Mp)
    y = pl.pallas_call(
        functools.partial(_matmul_bias_kernel, relu=relu),
        out_shape=jax.ShapeDtypeStruct((Mp, Cout), jnp.float32),
        grid=(pl.cdiv(Mp, tm),),
        in_specs=[
            pl.BlockSpec((tm, K), lambda i: (i, 0)),
            pl.BlockSpec((K, Cout), lambda i: (0, 0)),
            pl.BlockSpec((1, Cout), lambda i: (0, 0)),
        ],
        out_specs=pl.BlockSpec((tm, Cout), lambda i: (i, 0)),
        compiler_params=pltpu.CompilerParams(
            dimension_semantics=("parallel",)),
    )(x2d.astype(jnp.bfloat16), w.astype(jnp.bfloat16),
      b.reshape(1, Cout).astype(jnp.float32))
    return y if Mp == M else y[:M]


def conv1x1(x, w, b, relu=True):
    N, H, W, Cin = x.shape
    Cout = w.shape[1]
    y = matmul_bias(x.reshape(N * H * W, Cin), w, b, relu)
    return y.reshape(N, H, W, Cout)


def conv2d(x, w, b, *, ksize, stride, pad, relu=True):
    """k x k conv via im2col (XLA glue, in bf16) + Pallas MXU matmul."""
    # TODO(synk): fuse the k*k tap loop into the matmul kernel with halo'd row
    # tiles to avoid materializing the im2col patch matrix in HBM.
    N, H, W, Cin = x.shape
    Cout = w.shape[1]
    Ho = (H + 2 * pad - ksize) // stride + 1
    Wo = (W + 2 * pad - ksize) // stride + 1
    xb = x.astype(jnp.bfloat16)
    if pad:
        xb = jnp.pad(xb, ((0, 0), (pad, pad), (pad, pad), (0, 0)))
    patches = []
    for dy in range(ksize):
        for dx in range(ksize):
            patches.append(
                xb[:, dy:dy + stride * (Ho - 1) + 1:stride,
                   dx:dx + stride * (Wo - 1) + 1:stride, :])
    pm = jnp.concatenate(patches, axis=-1).reshape(N * Ho * Wo, ksize * ksize * Cin)
    y = matmul_bias(pm, w, b, relu)
    return y.reshape(N, Ho, Wo, Cout)


def maxpool3x3_s2_ceil(x):
    """nn.MaxPool2d(3, stride=2, ceil_mode=True) with true stride-2 in-kernel."""
    N, H, W, C = x.shape
    Ho = (H - 2) // 2 + 1            # == ceil((H - 3) / 2) + 1
    Wo = (W - 2) // 2 + 1
    Hp, Wp = 2 * Ho + 1, 2 * Wo + 1  # pad bottom/right by 0 or 1 for ceil mode
    xp = jnp.pad(x, ((0, 0), (0, Hp - H), (0, Wp - W), (0, 0)),
                 constant_values=NEG_INF)
    ee = xp[:, 0::2, 0::2, :]        # (N, Ho+1, Wo+1, C)
    eo = xp[:, 0::2, 1::2, :]        # (N, Ho+1, Wo,   C)
    oe = xp[:, 1::2, 0::2, :]        # (N, Ho,   Wo+1, C)
    oo = xp[:, 1::2, 1::2, :]        # (N, Ho,   Wo,   C)
    return pl.pallas_call(
        _maxpool_s2_kernel,
        out_shape=jax.ShapeDtypeStruct((N, Ho, Wo, C), jnp.float32),
        grid=(N,),
        in_specs=[
            pl.BlockSpec((1, Ho + 1, Wo + 1, C), lambda n: (n, 0, 0, 0)),
            pl.BlockSpec((1, Ho + 1, Wo, C), lambda n: (n, 0, 0, 0)),
            pl.BlockSpec((1, Ho, Wo + 1, C), lambda n: (n, 0, 0, 0)),
            pl.BlockSpec((1, Ho, Wo, C), lambda n: (n, 0, 0, 0)),
        ],
        out_specs=pl.BlockSpec((1, Ho, Wo, C), lambda n: (n, 0, 0, 0)),
        compiler_params=pltpu.CompilerParams(
            dimension_semantics=("parallel",)),
    )(ee, eo, oe, oo)


def maxpool3x3_s1_p1(x):
    """nn.MaxPool2d(3, stride=1, padding=1, ceil_mode=True) -> same spatial size."""
    N, H, W, C = x.shape
    xp = jnp.pad(x, ((0, 0), (1, 1), (1, 1), (0, 0)), constant_values=NEG_INF)
    return pl.pallas_call(
        _maxpool_s1_kernel,
        out_shape=jax.ShapeDtypeStruct((N, H, W, C), jnp.float32),
        grid=(N,),
        in_specs=[pl.BlockSpec((1, H + 2, W + 2, C), lambda n: (n, 0, 0, 0))],
        out_specs=pl.BlockSpec((1, H, W, C), lambda n: (n, 0, 0, 0)),
        compiler_params=pltpu.CompilerParams(
            dimension_semantics=("parallel",)),
    )(xp)


# -------------------------- parameter construction -------------------------
# TODO(synk): IMAGENET1K_V1 / torch.load(path) weight loading has no in-script
# equivalent; weights are deterministic random with eval-mode BN folded in.

class KeyGen:
    def __init__(self, seed=0):
        self.key = jax.random.PRNGKey(seed)

    def __call__(self):
        self.key, sub = jax.random.split(self.key)
        return sub


def _fold_bn(kg, w, cout):
    # eval-mode BatchNorm(eps=1e-3) folded into the preceding conv (bias=False)
    gamma = 1.0 + 0.1 * jax.random.normal(kg(), (cout,), jnp.float32)
    beta = 0.01 * jax.random.normal(kg(), (cout,), jnp.float32)
    mean = 0.01 * jax.random.normal(kg(), (cout,), jnp.float32)
    var = 1.0 + 0.1 * jax.random.uniform(kg(), (cout,), jnp.float32)
    scale = gamma / jnp.sqrt(var + BN_EPS)
    w_f = (w * scale).astype(jnp.bfloat16)           # bf16 weights for the MXU
    b_f = (beta - mean * scale).astype(jnp.float32)  # bias/ReLU stay in f32
    return w_f, b_f


def init_basic_conv(kg, ksize, cin, cout):
    fan_in = ksize * ksize * cin
    w = ((2.0 / fan_in) ** 0.5) * jax.random.normal(
        kg(), (ksize * ksize * cin, cout), jnp.float32)  # rows ordered (dy,dx,cin)
    return _fold_bn(kg, w, cout)


def init_inception(kg, cin, c1, c2r, c2, c3r, c3, c4):
    w1, b1 = init_basic_conv(kg, 1, cin, c1)
    w2r, b2r = init_basic_conv(kg, 1, cin, c2r)
    w3r, b3r = init_basic_conv(kg, 1, cin, c3r)
    return {
        # branch1 / branch2-reduce / branch3-reduce read the same input:
        # fuse into one matmul by concatenating along Cout (exact; BN is per-channel).
        "fused1x1": (jnp.concatenate([w1, w2r, w3r], axis=1),
                     jnp.concatenate([b1, b2r, b3r], axis=0)),
        "b2": init_basic_conv(kg, 3, c2r, c2),
        "b3": init_basic_conv(kg, 3, c3r, c3),  # torchvision uses 3x3 here (known quirk)
        "b4": init_basic_conv(kg, 1, cin, c4),
    }


def init_params(seed=0):
    kg = KeyGen(seed)
    return {
        "conv1": init_basic_conv(kg, 7, 3, 64),
        "conv2": init_basic_conv(kg, 1, 64, 64),
        "conv3": init_basic_conv(kg, 3, 64, 192),
        "inception3a": init_inception(kg, 192, 64, 96, 128, 16, 32, 32),
        "inception3b": init_inception(kg, 256, 128, 128, 192, 32, 96, 64),
    }


# ------------------------------- forward -----------------------------------

def inception_block(x, p):
    w2, b2 = p["b2"]
    w3, b3 = p["b3"]
    wf, bf = p["fused1x1"]
    c2r = w2.shape[0] // 9
    c3r = w3.shape[0] // 9
    c1 = wf.shape[1] - c2r - c3r

    y = conv1x1(x, wf, bf)                        # [branch1 | b2-reduce | b3-reduce]
    br1 = y[..., :c1]
    br2 = conv2d(y[..., c1:c1 + c2r], w2, b2, ksize=3, stride=1, pad=1)
    br3 = conv2d(y[..., c1 + c2r:], w3, b3, ksize=3, stride=1, pad=1)
    br4 = conv1x1(maxpool3x3_s1_p1(x), *p["b4"])
    return jnp.concatenate([br1, br2, br3, br4], axis=-1)


def googlenet_forward(params, x_nchw):
    x = jnp.transpose(x_nchw, (0, 2, 3, 1)).astype(jnp.float32)   # NCHW -> NHWC
    x = conv2d(x, *params["conv1"], ksize=7, stride=2, pad=3)     # conv1    3 ->  64
    x = maxpool3x3_s2_ceil(x)                                     # maxpool1
    x = conv1x1(x, *params["conv2"])                              # conv2   64 ->  64
    x = conv2d(x, *params["conv3"], ksize=3, stride=1, pad=1)     # conv3   64 -> 192
    x = maxpool3x3_s2_ceil(x)                                     # maxpool2
    x = inception_block(x, params["inception3a"])                 # -> 256
    x = inception_block(x, params["inception3b"])                 # -> 480
    x = maxpool3x3_s2_ceil(x)                                     # maxpool3
    return jnp.transpose(x, (0, 3, 1, 2))                         # NHWC -> NCHW


if __name__ == "__main__":
    x = jax.random.normal(jax.random.PRNGKey(0), (2, 3, 32, 32), jnp.float32)
    params = init_params(seed=0)
    fwd = jax.jit(googlenet_forward)
    out = jax.block_until_ready(fwd(params, x))
    assert out.shape == (2, 480, 2, 2), out.shape
    assert bool(jnp.all(jnp.isfinite(out)))
    print("KERNEL_OK")
</pallas_src>

<mosaic_0001>
module attributes {stable_mosaic.version = 11 : i64} {
  func.func @_matmul_bias_kernel(%arg0: i32, %arg1: memref<512x147xbf16, #tpu.memory_space<vmem>>, %arg2: memref<147x64xbf16, #tpu.memory_space<vmem>>, %arg3: memref<1x64xf32, #tpu.memory_space<vmem>>, %arg4: memref<512x64xf32, #tpu.memory_space<vmem>>) attributes {dimension_semantics = [#tpu.dimension_semantics<parallel>], iteration_bounds = array<i64: 1>, scalar_prefetch = 0 : i64, scratch_operands = 0 : i64, tpu.core_type = #tpu.core_type<tc>, window_params = [{transform_indices = @transform_0, window_bounds = array<i64: 512, 147>}, {pipeline_mode = #tpu.pipeline_mode<synchronous>, transform_indices = @transform_1, window_bounds = array<i64: 147, 64>}, {pipeline_mode = #tpu.pipeline_mode<synchronous>, transform_indices = @transform_2, window_bounds = array<i64: 1, 64>}, {transform_indices = @transform_3, window_bounds = array<i64: 512, 64>}]} {
    %c0 = arith.constant 0 : index
    %c0_0 = arith.constant 0 : index
    %0 = vector.load %arg1[%c0, %c0_0] : memref<512x147xbf16, #tpu.memory_space<vmem>>, vector<512x147xbf16>
    %c0_1 = arith.constant 0 : index
    %c0_2 = arith.constant 0 : index
    %1 = vector.load %arg2[%c0_1, %c0_2] : memref<147x64xbf16, #tpu.memory_space<vmem>>, vector<147x64xbf16>
    %cst = arith.constant dense<0.000000e+00> : vector<512x64xf32>
    %2 = tpu.matmul %0, %1, %cst {dimension_numbers = #tpu.dot_dimension_numbers<[1], [0], [0], [1], [0, 0, 1, 1], [], []>} : vector<512x147xbf16>, vector<147x64xbf16>, vector<512x64xf32> -> vector<512x64xf32>
    %c0_3 = arith.constant 0 : index
    %c0_4 = arith.constant 0 : index
    %3 = vector.load %arg3[%c0_3, %c0_4] : memref<1x64xf32, #tpu.memory_space<vmem>>, vector<1x64xf32>
    %4 = vector.broadcast %3 : vector<1x64xf32> to vector<512x64xf32>
    %5 = arith.addf %2, %4 : vector<512x64xf32>
    %cst_5 = arith.constant 0.000000e+00 : f32
    %6 = vector.broadcast %cst_5 : f32 to vector<512x64xf32>
    %7 = arith.maximumf %5, %6 : vector<512x64xf32>
    %c0_6 = arith.constant 0 : index
    %c0_7 = arith.constant 0 : index
    %8 = vector.load %arg4[%c0_6, %c0_7] : memref<512x64xf32, #tpu.memory_space<vmem>>, vector<512x64xf32>
    tpu.vector_store %arg4[%c0_6, %c0_7], %7 {strides = array<i32>} : memref<512x64xf32, #tpu.memory_space<vmem>>, vector<512x64xf32>,
    return
  }
  func.func @transform_0(%arg0: i32) -> (i32, i32) {
    %c0_i32 = arith.constant 0 : i32
    %c0_i32_0 = arith.constant 0 : i32
    return %arg0, %c0_i32 : i32, i32
  }
  func.func @transform_1(%arg0: i32) -> (i32, i32) {
    %c0_i32 = arith.constant 0 : i32
    %c0_i32_0 = arith.constant 0 : i32
    %c0_i32_1 = arith.constant 0 : i32
    return %c0_i32, %c0_i32_0 : i32, i32
  }
  func.func @transform_2(%arg0: i32) -> (i32, i32) {
    %c0_i32 = arith.constant 0 : i32
    %c0_i32_0 = arith.constant 0 : i32
    %c0_i32_1 = arith.constant 0 : i32
    return %c0_i32, %c0_i32_0 : i32, i32
  }
  func.func @transform_3(%arg0: i32) -> (i32, i32) {
    %c0_i32 = arith.constant 0 : i32
    %c0_i32_0 = arith.constant 0 : i32
    return %arg0, %c0_i32 : i32, i32
  }
}

module attributes {stable_mosaic.version = 11 : i64} {
  func.func @_maxpool_s2_kernel(%arg0: i32, %arg1: memref<1x9x9x64xf32, #tpu.memory_space<vmem>>, %arg2: memref<1x9x8x64xf32, #tpu.memory_space<vmem>>, %arg3: memref<1x8x9x64xf32, #tpu.memory_space<vmem>>, %arg4: memref<1x8x8x64xf32, #tpu.memory_space<vmem>>, %arg5: memref<1x8x8x64xf32, #tpu.memory_space<vmem>>) attributes {dimension_semantics = [#tpu.dimension_semantics<parallel>], iteration_bounds = array<i64: 2>, scalar_prefetch = 0 : i64, scratch_operands = 0 : i64, tpu.core_type = #tpu.core_type<tc>, window_params = [{transform_indices = @transform_0, window_bounds = array<i64: 1, 9, 9, 64>}, {transform_indices = @transform_1, window_bounds = array<i64: 1, 9, 8, 64>}, {transform_indices = @transform_2, window_bounds = array<i64: 1, 8, 9, 64>}, {transform_indices = @transform_3, window_bounds = array<i64: 1, 8, 8, 64>}, {transform_indices = @transform_4, window_bounds = array<i64: 1, 8, 8, 64>}]} {
    %c0 = arith.constant 0 : index
    %c0_0 = arith.constant 0 : index
    %c0_1 = arith.constant 0 : index
    %c0_2 = arith.constant 0 : index
    %0 = vector.load %arg1[%c0, %c0_0, %c0_1, %c0_2] : memref<1x9x9x64xf32, #tpu.memory_space<vmem>>, vector<1x8x8x64xf32>
    %c0_3 = arith.constant 0 : index
    %c0_4 = arith.constant 0 : index
    %c1 = arith.constant 1 : index
    %c0_5 = arith.constant 0 : index
    %1 = vector.load %arg1[%c0_3, %c0_4, %c1, %c0_5] : memref<1x9x9x64xf32, #tpu.memory_space<vmem>>, vector<1x8x8x64xf32>
    %2 = arith.maximumf %0, %1 : vector<1x8x8x64xf32>
    %c0_6 = arith.constant 0 : index
    %c1_7 = arith.constant 1 : index
    %c0_8 = arith.constant 0 : index
    %c0_9 = arith.constant 0 : index
    %3 = vector.load %arg1[%c0_6, %c1_7, %c0_8, %c0_9] : memref<1x9x9x64xf32, #tpu.memory_space<vmem>>, vector<1x8x8x64xf32>
    %4 = arith.maximumf %2, %3 : vector<1x8x8x64xf32>
    %c0_10 = arith.constant 0 : index
    %c1_11 = arith.constant 1 : index
    %c1_12 = arith.constant 1 : index
    %c0_13 = arith.constant 0 : index
    %5 = vector.load %arg1[%c0_10, %c1_11, %c1_12, %c0_13] : memref<1x9x9x64xf32, #tpu.memory_space<vmem>>, vector<1x8x8x64xf32>
    %6 = arith.maximumf %4, %5 : vector<1x8x8x64xf32>
    %c0_14 = arith.constant 0 : index
    %c0_15 = arith.constant 0 : index
    %c0_16 = arith.constant 0 : index
    %c0_17 = arith.constant 0 : index
    %7 = vector.load %arg2[%c0_14, %c0_15, %c0_16, %c0_17] : memref<1x9x8x64xf32, #tpu.memory_space<vmem>>, vector<1x8x8x64xf32>
    %8 = arith.maximumf %6, %7 : vector<1x8x8x64xf32>
    %c0_18 = arith.constant 0 : index
    %c1_19 = arith.constant 1 : index
    %c0_20 = arith.constant 0 : index
    %c0_21 = arith.constant 0 : index
    %9 = vector.load %arg2[%c0_18, %c1_19, %c0_20, %c0_21] : memref<1x9x8x64xf32, #tpu.memory_space<vmem>>, vector<1x8x8x64xf32>
    %10 = arith.maximumf %8, %9 : vector<1x8x8x64xf32>
    %c0_22 = arith.constant 0 : index
    %c0_23 = arith.constant 0 : index
    %c0_24 = arith.constant 0 : index
    %c0_25 = arith.constant 0 : index
    %11 = vector.load %arg3[%c0_22, %c0_23, %c0_24, %c0_25] : memref<1x8x9x64xf32, #tpu.memory_space<vmem>>, vector<1x8x8x64xf32>
    %12 = arith.maximumf %10, %11 : vector<1x8x8x64xf32>
    %c0_26 = arith.constant 0 : index
    %c0_27 = arith.constant 0 : index
    %c1_28 = arith.constant 1 : index
    %c0_29 = arith.constant 0 : index
    %13 = vector.load %arg3[%c0_26, %c0_27, %c1_28, %c0_29] : memref<1x8x9x64xf32, #tpu.memory_space<vmem>>, vector<1x8x8x64xf32>
    %14 = arith.maximumf %12, %13 : vector<1x8x8x64xf32>
    %c0_30 = arith.constant 0 : index
    %c0_31 = arith.constant 0 : index
    %c0_32 = arith.constant 0 : index
    %c0_33 = arith.constant 0 : index
    %15 = vector.load %arg4[%c0_30, %c0_31, %c0_32, %c0_33] : memref<1x8x8x64xf32, #tpu.memory_space<vmem>>, vector<1x8x8x64xf32>
    %16 = arith.maximumf %14, %15 : vector<1x8x8x64xf32>
    %c0_34 = arith.constant 0 : index
    %c0_35 = arith.constant 0 : index
    %c0_36 = arith.constant 0 : index
    %c0_37 = arith.constant 0 : index
    %17 = vector.load %arg5[%c0_34, %c0_35, %c0_36, %c0_37] : memref<1x8x8x64xf32, #tpu.memory_space<vmem>>, vector<1x8x8x64xf32>
    tpu.vector_store %arg5[%c0_34, %c0_35, %c0_36, %c0_37], %16 {strides = array<i32>} : memref<1x8x8x64xf32, #tpu.memory_space<vmem>>, vector<1x8x8x64xf32>,
    return
  }
  func.func @transform_0(%arg0: i32) -> (i32, i32, i32, i32) {
    %c0_i32 = arith.constant 0 : i32
    %c0_i32_0 = arith.constant 0 : i32
    %c0_i32_1 = arith.constant 0 : i32
    %c0_i32_2 = arith.constant 0 : i32
    return %arg0, %c0_i32, %c0_i32_0, %c0_i32_1 : i32, i32, i32, i32
  }
  func.func @transform_1(%arg0: i32) -> (i32, i32, i32, i32) {
    %c0_i32 = arith.constant 0 : i32
    %c0_i32_0 = arith.constant 0 : i32
    %c0_i32_1 = arith.constant 0 : i32
    %c0_i32_2 = arith.constant 0 : i32
    return %arg0, %c0_i32, %c0_i32_0, %c0_i32_1 : i32, i32, i32, i32
  }
  func.func @transform_2(%arg0: i32) -> (i32, i32, i32, i32) {
    %c0_i32 = arith.constant 0 : i32
    %c0_i32_0 = arith.constant 0 : i32
    %c0_i32_1 = arith.constant 0 : i32
    %c0_i32_2 = arith.constant 0 : i32
    return %arg0, %c0_i32, %c0_i32_0, %c0_i32_1 : i32, i32, i32, i32
  }
  func.func @transform_3(%arg0: i32) -> (i32, i32, i32, i32) {
    %c0_i32 = arith.constant 0 : i32
    %c0_i32_0 = arith.constant 0 : i32
    %c0_i32_1 = arith.constant 0 : i32
    %c0_i32_2 = arith.constant 0 : i32
    return %arg0, %c0_i32, %c0_i32_0, %c0_i32_1 : i32, i32, i32, i32
  }
  func.func @transform_4(%arg0: i32) -> (i32, i32, i32, i32) {
    %c0_i32 = arith.constant 0 : i32
    %c0_i32_0 = arith.constant 0 : i32
    %c0_i32_1 = arith.constant 0 : i32
    %c0_i32_2 = arith.constant 0 : i32
    return %arg0, %c0_i32, %c0_i32_0, %c0_i32_1 : i32, i32, i32, i32
  }
}

module attributes {stable_mosaic.version = 11 : i64} {
  func.func @_matmul_bias_kernel(%arg0: i32, %arg1: memref<128x64xbf16, #tpu.memory_space<vmem>>, %arg2: memref<64x64xbf16, #tpu.memory_space<vmem>>, %arg3: memref<1x64xf32, #tpu.memory_space<vmem>>, %arg4: memref<128x64xf32, #tpu.memory_space<vmem>>) attributes {dimension_semantics = [#tpu.dimension_semantics<parallel>], iteration_bounds = array<i64: 1>, scalar_prefetch = 0 : i64, scratch_operands = 0 : i64, tpu.core_type = #tpu.core_type<tc>, window_params = [{transform_indices = @transform_0, window_bounds = array<i64: 128, 64>}, {pipeline_mode = #tpu.pipeline_mode<synchronous>, transform_indices = @transform_1, window_bounds = array<i64: 64, 64>}, {pipeline_mode = #tpu.pipeline_mode<synchronous>, transform_indices = @transform_2, window_bounds = array<i64: 1, 64>}, {transform_indices = @transform_3, window_bounds = array<i64: 128, 64>}]} {
    %c0 = arith.constant 0 : index
    %c0_0 = arith.constant 0 : index
    %0 = vector.load %arg1[%c0, %c0_0] : memref<128x64xbf16, #tpu.memory_space<vmem>>, vector<128x64xbf16>
    %c0_1 = arith.constant 0 : index
    %c0_2 = arith.constant 0 : index
    %1 = vector.load %arg2[%c0_1, %c0_2] : memref<64x64xbf16, #tpu.memory_space<vmem>>, vector<64x64xbf16>
    %cst = arith.constant dense<0.000000e+00> : vector<128x64xf32>
    %2 = tpu.matmul %0, %1, %cst {dimension_numbers = #tpu.dot_dimension_numbers<[1], [0], [0], [1], [0, 0, 1, 1], [], []>} : vector<128x64xbf16>, vector<64x64xbf16>, vector<128x64xf32> -> vector<128x64xf32>
    %c0_3 = arith.constant 0 : index
    %c0_4 = arith.constant 0 : index
    %3 = vector.load %arg3[%c0_3, %c0_4] : memref<1x64xf32, #tpu.memory_space<vmem>>, vector<1x64xf32>
    %4 = vector.broadcast %3 : vector<1x64xf32> to vector<128x64xf32>
    %5 = arith.addf %2, %4 : vector<128x64xf32>
    %cst_5 = arith.constant 0.000000e+00 : f32
    %6 = vector.broadcast %cst_5 : f32 to vector<128x64xf32>
    %7 = arith.maximumf %5, %6 : vector<128x64xf32>
    %c0_6 = arith.constant 0 : index
    %c0_7 = arith.constant 0 : index
    %8 = vector.load %arg4[%c0_6, %c0_7] : memref<128x64xf32, #tpu.memory_space<vmem>>, vector<128x64xf32>
    tpu.vector_store %arg4[%c0_6, %c0_7], %7 {strides = array<i32>} : memref<128x64xf32, #tpu.memory_space<vmem>>, vector<128x64xf32>,
    return
  }
  func.func @transform_0(%arg0: i32) -> (i32, i32) {
    %c0_i32 = arith.constant 0 : i32
    %c0_i32_0 = arith.constant 0 : i32
    return %arg0, %c0_i32 : i32, i32
  }
  func.func @transform_1(%arg0: i32) -> (i32, i32) {
    %c0_i32 = arith.constant 0 : i32
    %c0_i32_0 = arith.constant 0 : i32
    %c0_i32_1 = arith.constant 0 : i32
    return %c0_i32, %c0_i32_0 : i32, i32
  }
  func.func @transform_2(%arg0: i32) -> (i32, i32) {
    %c0_i32 = arith.constant 0 : i32
    %c0_i32_0 = arith.constant 0 : i32
    %c0_i32_1 = arith.constant 0 : i32
    return %c0_i32, %c0_i32_0 : i32, i32
  }
  func.func @transform_3(%arg0: i32) -> (i32, i32) {
    %c0_i32 = arith.constant 0 : i32
    %c0_i32_0 = arith.constant 0 : i32
    return %arg0, %c0_i32 : i32, i32
  }
}

module attributes {stable_mosaic.version = 11 : i64} {
  func.func @_matmul_bias_kernel(%arg0: i32, %arg1: memref<128x576xbf16, #tpu.memory_space<vmem>>, %arg2: memref<576x192xbf16, #tpu.memory_space<vmem>>, %arg3: memref<1x192xf32, #tpu.memory_space<vmem>>, %arg4: memref<128x192xf32, #tpu.memory_space<vmem>>) attributes {dimension_semantics = [#tpu.dimension_semantics<parallel>], iteration_bounds = array<i64: 1>, scalar_prefetch = 0 : i64, scratch_operands = 0 : i64, tpu.core_type = #tpu.core_type<tc>, window_params = [{transform_indices = @transform_0, window_bounds = array<i64: 128, 576>}, {pipeline_mode = #tpu.pipeline_mode<synchronous>, transform_indices = @transform_1, window_bounds = array<i64: 576, 192>}, {pipeline_mode = #tpu.pipeline_mode<synchronous>, transform_indices = @transform_2, window_bounds = array<i64: 1, 192>}, {transform_indices = @transform_3, window_bounds = array<i64: 128, 192>}]} {
    %c0 = arith.constant 0 : index
    %c0_0 = arith.constant 0 : index
    %0 = vector.load %arg1[%c0, %c0_0] : memref<128x576xbf16, #tpu.memory_space<vmem>>, vector<128x576xbf16>
    %c0_1 = arith.constant 0 : index
    %c0_2 = arith.constant 0 : index
    %1 = vector.load %arg2[%c0_1, %c0_2] : memref<576x192xbf16, #tpu.memory_space<vmem>>, vector<576x192xbf16>
    %cst = arith.constant dense<0.000000e+00> : vector<128x192xf32>
    %2 = tpu.matmul %0, %1, %cst {dimension_numbers = #tpu.dot_dimension_numbers<[1], [0], [0], [1], [0, 0, 1, 1], [], []>} : vector<128x576xbf16>, vector<576x192xbf16>, vector<128x192xf32> -> vector<128x192xf32>
    %c0_3 = arith.constant 0 : index
    %c0_4 = arith.constant 0 : index
    %3 = vector.load %arg3[%c0_3, %c0_4] : memref<1x192xf32, #tpu.memory_space<vmem>>, vector<1x192xf32>
    %4 = vector.broadcast %3 : vector<1x192xf32> to vector<128x192xf32>
    %5 = arith.addf %2, %4 : vector<128x192xf32>
    %cst_5 = arith.constant 0.000000e+00 : f32
    %6 = vector.broadcast %cst_5 : f32 to vector<128x192xf32>
    %7 = arith.maximumf %5, %6 : vector<128x192xf32>
    %c0_6 = arith.constant 0 : index
    %c0_7 = arith.constant 0 : index
    %8 = vector.load %arg4[%c0_6, %c0_7] : memref<128x192xf32, #tpu.memory_space<vmem>>, vector<128x192xf32>
    tpu.vector_store %arg4[%c0_6, %c0_7], %7 {strides = array<i32>} : memref<128x192xf32, #tpu.memory_space<vmem>>, vector<128x192xf32>,
    return
  }
  func.func @transform_0(%arg0: i32) -> (i32, i32) {
    %c0_i32 = arith.constant 0 : i32
    %c0_i32_0 = arith.constant 0 : i32
    return %arg0, %c0_i32 : i32, i32
  }
  func.func @transform_1(%arg0: i32) -> (i32, i32) {
    %c0_i32 = arith.constant 0 : i32
    %c0_i32_0 = arith.constant 0 : i32
    %c0_i32_1 = arith.constant 0 : i32
    return %c0_i32, %c0_i32_0 : i32, i32
  }
  func.func @transform_2(%arg0: i32) -> (i32, i32) {
    %c0_i32 = arith.constant 0 : i32
    %c0_i32_0 = arith.constant 0 : i32
    %c0_i32_1 = arith.constant 0 : i32
    return %c0_i32, %c0_i32_0 : i32, i32
  }
  func.func @transform_3(%arg0: i32) -> (i32, i32) {
    %c0_i32 = arith.constant 0 : i32
    %c0_i32_0 = arith.constant 0 : i32
    return %arg0, %c0_i32 : i32, i32
  }
}

module attributes {stable_mosaic.version = 11 : i64} {
  func.func @_maxpool_s2_kernel(%arg0: i32, %arg1: memref<1x5x5x192xf32, #tpu.memory_space<vmem>>, %arg2: memref<1x5x4x192xf32, #tpu.memory_space<vmem>>, %arg3: memref<1x4x5x192xf32, #tpu.memory_space<vmem>>, %arg4: memref<1x4x4x192xf32, #tpu.memory_space<vmem>>, %arg5: memref<1x4x4x192xf32, #tpu.memory_space<vmem>>) attributes {dimension_semantics = [#tpu.dimension_semantics<parallel>], iteration_bounds = array<i64: 2>, scalar_prefetch = 0 : i64, scratch_operands = 0 : i64, tpu.core_type = #tpu.core_type<tc>, window_params = [{transform_indices = @transform_0, window_bounds = array<i64: 1, 5, 5, 192>}, {transform_indices = @transform_1, window_bounds = array<i64: 1, 5, 4, 192>}, {transform_indices = @transform_2, window_bounds = array<i64: 1, 4, 5, 192>}, {transform_indices = @transform_3, window_bounds = array<i64: 1, 4, 4, 192>}, {transform_indices = @transform_4, window_bounds = array<i64: 1, 4, 4, 192>}]} {
    %c0 = arith.constant 0 : index
    %c0_0 = arith.constant 0 : index
    %c0_1 = arith.constant 0 : index
    %c0_2 = arith.constant 0 : index
    %0 = vector.load %arg1[%c0, %c0_0, %c0_1, %c0_2] : memref<1x5x5x192xf32, #tpu.memory_space<vmem>>, vector<1x4x4x192xf32>
    %c0_3 = arith.constant 0 : index
    %c0_4 = arith.constant 0 : index
    %c1 = arith.constant 1 : index
    %c0_5 = arith.constant 0 : index
    %1 = vector.load %arg1[%c0_3, %c0_4, %c1, %c0_5] : memref<1x5x5x192xf32, #tpu.memory_space<vmem>>, vector<1x4x4x192xf32>
    %2 = arith.maximumf %0, %1 : vector<1x4x4x192xf32>
    %c0_6 = arith.constant 0 : index
    %c1_7 = arith.constant 1 : index
    %c0_8 = arith.constant 0 : index
    %c0_9 = arith.constant 0 : index
    %3 = vector.load %arg1[%c0_6, %c1_7, %c0_8, %c0_9] : memref<1x5x5x192xf32, #tpu.memory_space<vmem>>, vector<1x4x4x192xf32>
    %4 = arith.maximumf %2, %3 : vector<1x4x4x192xf32>
    %c0_10 = arith.constant 0 : index
    %c1_11 = arith.constant 1 : index
    %c1_12 = arith.constant 1 : index
    %c0_13 = arith.constant 0 : index
    %5 = vector.load %arg1[%c0_10, %c1_11, %c1_12, %c0_13] : memref<1x5x5x192xf32, #tpu.memory_space<vmem>>, vector<1x4x4x192xf32>
    %6 = arith.maximumf %4, %5 : vector<1x4x4x192xf32>
    %c0_14 = arith.constant 0 : index
    %c0_15 = arith.constant 0 : index
    %c0_16 = arith.constant 0 : index
    %c0_17 = arith.constant 0 : index
    %7 = vector.load %arg2[%c0_14, %c0_15, %c0_16, %c0_17] : memref<1x5x4x192xf32, #tpu.memory_space<vmem>>, vector<1x4x4x192xf32>
    %8 = arith.maximumf %6, %7 : vector<1x4x4x192xf32>
    %c0_18 = arith.constant 0 : index
    %c1_19 = arith.constant 1 : index
    %c0_20 = arith.constant 0 : index
    %c0_21 = arith.constant 0 : index
    %9 = vector.load %arg2[%c0_18, %c1_19, %c0_20, %c0_21] : memref<1x5x4x192xf32, #tpu.memory_space<vmem>>, vector<1x4x4x192xf32>
    %10 = arith.maximumf %8, %9 : vector<1x4x4x192xf32>
    %c0_22 = arith.constant 0 : index
    %c0_23 = arith.constant 0 : index
    %c0_24 = arith.constant 0 : index
    %c0_25 = arith.constant 0 : index
    %11 = vector.load %arg3[%c0_22, %c0_23, %c0_24, %c0_25] : memref<1x4x5x192xf32, #tpu.memory_space<vmem>>, vector<1x4x4x192xf32>
    %12 = arith.maximumf %10, %11 : vector<1x4x4x192xf32>
    %c0_26 = arith.constant 0 : index
    %c0_27 = arith.constant 0 : index
    %c1_28 = arith.constant 1 : index
    %c0_29 = arith.constant 0 : index
    %13 = vector.load %arg3[%c0_26, %c0_27, %c1_28, %c0_29] : memref<1x4x5x192xf32, #tpu.memory_space<vmem>>, vector<1x4x4x192xf32>
    %14 = arith.maximumf %12, %13 : vector<1x4x4x192xf32>
    %c0_30 = arith.constant 0 : index
    %c0_31 = arith.constant 0 : index
    %c0_32 = arith.constant 0 : index
    %c0_33 = arith.constant 0 : index
    %15 = vector.load %arg4[%c0_30, %c0_31, %c0_32, %c0_33] : memref<1x4x4x192xf32, #tpu.memory_space<vmem>>, vector<1x4x4x192xf32>
    %16 = arith.maximumf %14, %15 : vector<1x4x4x192xf32>
    %c0_34 = arith.constant 0 : index
    %c0_35 = arith.constant 0 : index
    %c0_36 = arith.constant 0 : index
    %c0_37 = arith.constant 0 : index
    %17 = vector.load %arg5[%c0_34, %c0_35, %c0_36, %c0_37] : memref<1x4x4x192xf32, #tpu.memory_space<vmem>>, vector<1x4x4x192xf32>
    tpu.vector_store %arg5[%c0_34, %c0_35, %c0_36, %c0_37], %16 {strides = array<i32>} : memref<1x4x4x192xf32, #tpu.memory_space<vmem>>, vector<1x4x4x192xf32>,
    return
  }
  func.func @transform_0(%arg0: i32) -> (i32, i32, i32, i32) {
    %c0_i32 = arith.constant 0 : i32
    %c0_i32_0 = arith.constant 0 : i32
    %c0_i32_1 = arith.constant 0 : i32
    %c0_i32_2 = arith.constant 0 : i32
    return %arg0, %c0_i32, %c0_i32_0, %c0_i32_1 : i32, i32, i32, i32
  }
  func.func @transform_1(%arg0: i32) -> (i32, i32, i32, i32) {
    %c0_i32 = arith.constant 0 : i32
    %c0_i32_0 = arith.constant 0 : i32
    %c0_i32_1 = arith.constant 0 : i32
    %c0_i32_2 = arith.constant 0 : i32
    return %arg0, %c0_i32, %c0_i32_0, %c0_i32_1 : i32, i32, i32, i32
  }
  func.func @transform_2(%arg0: i32) -> (i32, i32, i32, i32) {
    %c0_i32 = arith.constant 0 : i32
    %c0_i32_0 = arith.constant 0 : i32
    %c0_i32_1 = arith.constant 0 : i32
    %c0_i32_2 = arith.constant 0 : i32
    return %arg0, %c0_i32, %c0_i32_0, %c0_i32_1 : i32, i32, i32, i32
  }
  func.func @transform_3(%arg0: i32) -> (i32, i32, i32, i32) {
    %c0_i32 = arith.constant 0 : i32
    %c0_i32_0 = arith.constant 0 : i32
    %c0_i32_1 = arith.constant 0 : i32
    %c0_i32_2 = arith.constant 0 : i32
    return %arg0, %c0_i32, %c0_i32_0, %c0_i32_1 : i32, i32, i32, i32
  }
  func.func @transform_4(%arg0: i32) -> (i32, i32, i32, i32) {
    %c0_i32 = arith.constant 0 : i32
    %c0_i32_0 = arith.constant 0 : i32
    %c0_i32_1 = arith.constant 0 : i32
    %c0_i32_2 = arith.constant 0 : i32
    return %arg0, %c0_i32, %c0_i32_0, %c0_i32_1 : i32, i32, i32, i32
  }
}

module attributes {stable_mosaic.version = 11 : i64} {
  func.func @_matmul_bias_kernel(%arg0: i32, %arg1: memref<32x192xbf16, #tpu.memory_space<vmem>>, %arg2: memref<192x176xbf16, #tpu.memory_space<vmem>>, %arg3: memref<1x176xf32, #tpu.memory_space<vmem>>, %arg4: memref<32x176xf32, #tpu.memory_space<vmem>>) attributes {dimension_semantics = [#tpu.dimension_semantics<parallel>], iteration_bounds = array<i64: 1>, scalar_prefetch = 0 : i64, scratch_operands = 0 : i64, tpu.core_type = #tpu.core_type<tc>, window_params = [{transform_indices = @transform_0, window_bounds = array<i64: 32, 192>}, {pipeline_mode = #tpu.pipeline_mode<synchronous>, transform_indices = @transform_1, window_bounds = array<i64: 192, 176>}, {pipeline_mode = #tpu.pipeline_mode<synchronous>, transform_indices = @transform_2, window_bounds = array<i64: 1, 176>}, {transform_indices = @transform_3, window_bounds = array<i64: 32, 176>}]} {
    %c0 = arith.constant 0 : index
    %c0_0 = arith.constant 0 : index
    %0 = vector.load %arg1[%c0, %c0_0] : memref<32x192xbf16, #tpu.memory_space<vmem>>, vector<32x192xbf16>
    %c0_1 = arith.constant 0 : index
    %c0_2 = arith.constant 0 : index
    %1 = vector.load %arg2[%c0_1, %c0_2] : memref<192x176xbf16, #tpu.memory_space<vmem>>, vector<192x176xbf16>
    %cst = arith.constant dense<0.000000e+00> : vector<32x176xf32>
    %2 = tpu.matmul %0, %1, %cst {dimension_numbers = #tpu.dot_dimension_numbers<[1], [0], [0], [1], [0, 0, 1, 1], [], []>} : vector<32x192xbf16>, vector<192x176xbf16>, vector<32x176xf32> -> vector<32x176xf32>
    %c0_3 = arith.constant 0 : index
    %c0_4 = arith.constant 0 : index
    %3 = vector.load %arg3[%c0_3, %c0_4] : memref<1x176xf32, #tpu.memory_space<vmem>>, vector<1x176xf32>
    %4 = vector.broadcast %3 : vector<1x176xf32> to vector<32x176xf32>
    %5 = arith.addf %2, %4 : vector<32x176xf32>
    %cst_5 = arith.constant 0.000000e+00 : f32
    %6 = vector.broadcast %cst_5 : f32 to vector<32x176xf32>
    %7 = arith.maximumf %5, %6 : vector<32x176xf32>
    %c0_6 = arith.constant 0 : index
    %c0_7 = arith.constant 0 : index
    %8 = vector.load %arg4[%c0_6, %c0_7] : memref<32x176xf32, #tpu.memory_space<vmem>>, vector<32x176xf32>
    tpu.vector_store %arg4[%c0_6, %c0_7], %7 {strides = array<i32>} : memref<32x176xf32, #tpu.memory_space<vmem>>, vector<32x176xf32>,
    return
  }
  func.func @transform_0(%arg0: i32) -> (i32, i32) {
    %c0_i32 = arith.constant 0 : i32
    %c0_i32_0 = arith.constant 0 : i32
    return %arg0, %c0_i32 : i32, i32
  }
  func.func @transform_1(%arg0: i32) -> (i32, i32) {
    %c0_i32 = arith.constant 0 : i32
    %c0_i32_0 = arith.constant 0 : i32
    %c0_i32_1 = arith.constant 0 : i32
    return %c0_i32, %c0_i32_0 : i32, i32
  }
  func.func @transform_2(%arg0: i32) -> (i32, i32) {
    %c0_i32 = arith.constant 0 : i32
    %c0_i32_0 = arith.constant 0 : i32
    %c0_i32_1 = arith.constant 0 : i32
    return %c0_i32, %c0_i32_0 : i32, i32
  }
  func.func @transform_3(%arg0: i32) -> (i32, i32) {
    %c0_i32 = arith.constant 0 : i32
    %c0_i32_0 = arith.constant 0 : i32
    return %arg0, %c0_i32 : i32, i32
  }
}

module attributes {stable_mosaic.version = 11 : i64} {
  func.func @_matmul_bias_kernel(%arg0: i32, %arg1: memref<32x864xbf16, #tpu.memory_space<vmem>>, %arg2: memref<864x128xbf16, #tpu.memory_space<vmem>>, %arg3: memref<1x128xf32, #tpu.memory_space<vmem>>, %arg4: memref<32x128xf32, #tpu.memory_space<vmem>>) attributes {dimension_semantics = [#tpu.dimension_semantics<parallel>], iteration_bounds = array<i64: 1>, scalar_prefetch = 0 : i64, scratch_operands = 0 : i64, tpu.core_type = #tpu.core_type<tc>, window_params = [{transform_indices = @transform_0, window_bounds = array<i64: 32, 864>}, {pipeline_mode = #tpu.pipeline_mode<synchronous>, transform_indices = @transform_1, window_bounds = array<i64: 864, 128>}, {pipeline_mode = #tpu.pipeline_mode<synchronous>, transform_indices = @transform_2, window_bounds = array<i64: 1, 128>}, {transform_indices = @transform_3, window_bounds = array<i64: 32, 128>}]} {
    %c0 = arith.constant 0 : index
    %c0_0 = arith.constant 0 : index
    %0 = vector.load %arg1[%c0, %c0_0] : memref<32x864xbf16, #tpu.memory_space<vmem>>, vector<32x864xbf16>
    %c0_1 = arith.constant 0 : index
    %c0_2 = arith.constant 0 : index
    %1 = vector.load %arg2[%c0_1, %c0_2] : memref<864x128xbf16, #tpu.memory_space<vmem>>, vector<864x128xbf16>
    %cst = arith.constant dense<0.000000e+00> : vector<32x128xf32>
    %2 = tpu.matmul %0, %1, %cst {dimension_numbers = #tpu.dot_dimension_numbers<[1], [0], [0], [1], [0, 0, 1, 1], [], []>} : vector<32x864xbf16>, vector<864x128xbf16>, vector<32x128xf32> -> vector<32x128xf32>
    %c0_3 = arith.constant 0 : index
    %c0_4 = arith.constant 0 : index
    %3 = vector.load %arg3[%c0_3, %c0_4] : memref<1x128xf32, #tpu.memory_space<vmem>>, vector<1x128xf32>
    %4 = vector.broadcast %3 : vector<1x128xf32> to vector<32x128xf32>
    %5 = arith.addf %2, %4 : vector<32x128xf32>
    %cst_5 = arith.constant 0.000000e+00 : f32
    %6 = vector.broadcast %cst_5 : f32 to vector<32x128xf32>
    %7 = arith.maximumf %5, %6 : vector<32x128xf32>
    %c0_6 = arith.constant 0 : index
    %c0_7 = arith.constant 0 : index
    %8 = vector.load %arg4[%c0_6, %c0_7] : memref<32x128xf32, #tpu.memory_space<vmem>>, vector<32x128xf32>
    tpu.vector_store %arg4[%c0_6, %c0_7], %7 {strides = array<i32>} : memref<32x128xf32, #tpu.memory_space<vmem>>, vector<32x128xf32>,
    return
  }
  func.func @transform_0(%arg0: i32) -> (i32, i32) {
    %c0_i32 = arith.constant 0 : i32
    %c0_i32_0 = arith.constant 0 : i32
    return %arg0, %c0_i32 : i32, i32
  }
  func.func @transform_1(%arg0: i32) -> (i32, i32) {
    %c0_i32 = arith.constant 0 : i32
    %c0_i32_0 = arith.constant 0 : i32
    %c0_i32_1 = arith.constant 0 : i32
    return %c0_i32, %c0_i32_0 : i32, i32
  }
  func.func @transform_2(%arg0: i32) -> (i32, i32) {
    %c0_i32 = arith.constant 0 : i32
    %c0_i32_0 = arith.constant 0 : i32
    %c0_i32_1 = arith.constant 0 : i32
    return %c0_i32, %c0_i32_0 : i32, i32
  }
  func.func @transform_3(%arg0: i32) -> (i32, i32) {
    %c0_i32 = arith.constant 0 : i32
    %c0_i32_0 = arith.constant 0 : i32
    return %arg0, %c0_i32 : i32, i32
  }
}

module attributes {stable_mosaic.version = 11 : i64} {
  func.func @_matmul_bias_kernel(%arg0: i32, %arg1: memref<32x144xbf16, #tpu.memory_space<vmem>>, %arg2: memref<144x32xbf16, #tpu.memory_space<vmem>>, %arg3: memref<1x32xf32, #tpu.memory_space<vmem>>, %arg4: memref<32x32xf32, #tpu.memory_space<vmem>>) attributes {dimension_semantics = [#tpu.dimension_semantics<parallel>], iteration_bounds = array<i64: 1>, scalar_prefetch = 0 : i64, scratch_operands = 0 : i64, tpu.core_type = #tpu.core_type<tc>, window_params = [{transform_indices = @transform_0, window_bounds = array<i64: 32, 144>}, {pipeline_mode = #tpu.pipeline_mode<synchronous>, transform_indices = @transform_1, window_bounds = array<i64: 144, 32>}, {pipeline_mode = #tpu.pipeline_mode<synchronous>, transform_indices = @transform_2, window_bounds = array<i64: 1, 32>}, {transform_indices = @transform_3, window_bounds = array<i64: 32, 32>}]} {
    %c0 = arith.constant 0 : index
    %c0_0 = arith.constant 0 : index
    %0 = vector.load %arg1[%c0, %c0_0] : memref<32x144xbf16, #tpu.memory_space<vmem>>, vector<32x144xbf16>
    %c0_1 = arith.constant 0 : index
    %c0_2 = arith.constant 0 : index
    %1 = vector.load %arg2[%c0_1, %c0_2] : memref<144x32xbf16, #tpu.memory_space<vmem>>, vector<144x32xbf16>
    %cst = arith.constant dense<0.000000e+00> : vector<32x32xf32>
    %2 = tpu.matmul %0, %1, %cst {dimension_numbers = #tpu.dot_dimension_numbers<[1], [0], [0], [1], [0, 0, 1, 1], [], []>} : vector<32x144xbf16>, vector<144x32xbf16>, vector<32x32xf32> -> vector<32x32xf32>
    %c0_3 = arith.constant 0 : index
    %c0_4 = arith.constant 0 : index
    %3 = vector.load %arg3[%c0_3, %c0_4] : memref<1x32xf32, #tpu.memory_space<vmem>>, vector<1x32xf32>
    %4 = vector.broadcast %3 : vector<1x32xf32> to vector<32x32xf32>
    %5 = arith.addf %2, %4 : vector<32x32xf32>
    %cst_5 = arith.constant 0.000000e+00 : f32
    %6 = vector.broadcast %cst_5 : f32 to vector<32x32xf32>
    %7 = arith.maximumf %5, %6 : vector<32x32xf32>
    %c0_6 = arith.constant 0 : index
    %c0_7 = arith.constant 0 : index
    %8 = vector.load %arg4[%c0_6, %c0_7] : memref<32x32xf32, #tpu.memory_space<vmem>>, vector<32x32xf32>
    tpu.vector_store %arg4[%c0_6, %c0_7], %7 {strides = array<i32>} : memref<32x32xf32, #tpu.memory_space<vmem>>, vector<32x32xf32>,
    return
  }
  func.func @transform_0(%arg0: i32) -> (i32, i32) {
    %c0_i32 = arith.constant 0 : i32
    %c0_i32_0 = arith.constant 0 : i32
    return %arg0, %c0_i32 : i32, i32
  }
  func.func @transform_1(%arg0: i32) -> (i32, i32) {
    %c0_i32 = arith.constant 0 : i32
    %c0_i32_0 = arith.constant 0 : i32
    %c0_i32_1 = arith.constant 0 : i32
    return %c0_i32, %c0_i32_0 : i32, i32
  }
  func.func @transform_2(%arg0: i32) -> (i32, i32) {
    %c0_i32 = arith.constant 0 : i32
    %c0_i32_0 = arith.constant 0 : i32
    %c0_i32_1 = arith.constant 0 : i32
    return %c0_i32, %c0_i32_0 : i32, i32
  }
  func.func @transform_3(%arg0: i32) -> (i32, i32) {
    %c0_i32 = arith.constant 0 : i32
    %c0_i32_0 = arith.constant 0 : i32
    return %arg0, %c0_i32 : i32, i32
  }
}

module attributes {stable_mosaic.version = 11 : i64} {
  func.func @_maxpool_s1_kernel(%arg0: i32, %arg1: memref<1x6x6x192xf32, #tpu.memory_space<vmem>>, %arg2: memref<1x4x4x192xf32, #tpu.memory_space<vmem>>) attributes {dimension_semantics = [#tpu.dimension_semantics<parallel>], iteration_bounds = array<i64: 2>, scalar_prefetch = 0 : i64, scratch_operands = 0 : i64, tpu.core_type = #tpu.core_type<tc>, window_params = [{transform_indices = @transform_0, window_bounds = array<i64: 1, 6, 6, 192>}, {transform_indices = @transform_1, window_bounds = array<i64: 1, 4, 4, 192>}]} {
    %c0 = arith.constant 0 : index
    %c0_0 = arith.constant 0 : index
    %c0_1 = arith.constant 0 : index
    %c0_2 = arith.constant 0 : index
    %0 = vector.load %arg1[%c0, %c0_0, %c0_1, %c0_2] : memref<1x6x6x192xf32, #tpu.memory_space<vmem>>, vector<1x4x4x192xf32>
    %c0_3 = arith.constant 0 : index
    %c0_4 = arith.constant 0 : index
    %c1 = arith.constant 1 : index
    %c0_5 = arith.constant 0 : index
    %1 = vector.load %arg1[%c0_3, %c0_4, %c1, %c0_5] : memref<1x6x6x192xf32, #tpu.memory_space<vmem>>, vector<1x4x4x192xf32>
    %2 = arith.maximumf %0, %1 : vector<1x4x4x192xf32>
    %c0_6 = arith.constant 0 : index
    %c0_7 = arith.constant 0 : index
    %c2 = arith.constant 2 : index
    %c0_8 = arith.constant 0 : index
    %3 = vector.load %arg1[%c0_6, %c0_7, %c2, %c0_8] : memref<1x6x6x192xf32, #tpu.memory_space<vmem>>, vector<1x4x4x192xf32>
    %4 = arith.maximumf %2, %3 : vector<1x4x4x192xf32>
    %c0_9 = arith.constant 0 : index
    %c1_10 = arith.constant 1 : index
    %c0_11 = arith.constant 0 : index
    %c0_12 = arith.constant 0 : index
    %5 = vector.load %arg1[%c0_9, %c1_10, %c0_11, %c0_12] : memref<1x6x6x192xf32, #tpu.memory_space<vmem>>, vector<1x4x4x192xf32>
    %6 = arith.maximumf %4, %5 : vector<1x4x4x192xf32>
    %c0_13 = arith.constant 0 : index
    %c1_14 = arith.constant 1 : index
    %c1_15 = arith.constant 1 : index
    %c0_16 = arith.constant 0 : index
    %7 = vector.load %arg1[%c0_13, %c1_14, %c1_15, %c0_16] : memref<1x6x6x192xf32, #tpu.memory_space<vmem>>, vector<1x4x4x192xf32>
    %8 = arith.maximumf %6, %7 : vector<1x4x4x192xf32>
    %c0_17 = arith.constant 0 : index
    %c1_18 = arith.constant 1 : index
    %c2_19 = arith.constant 2 : index
    %c0_20 = arith.constant 0 : index
    %9 = vector.load %arg1[%c0_17, %c1_18, %c2_19, %c0_20] : memref<1x6x6x192xf32, #tpu.memory_space<vmem>>, vector<1x4x4x192xf32>
    %10 = arith.maximumf %8, %9 : vector<1x4x4x192xf32>
    %c0_21 = arith.constant 0 : index
    %c2_22 = arith.constant 2 : index
    %c0_23 = arith.constant 0 : index
    %c0_24 = arith.constant 0 : index
    %11 = vector.load %arg1[%c0_21, %c2_22, %c0_23, %c0_24] : memref<1x6x6x192xf32, #tpu.memory_space<vmem>>, vector<1x4x4x192xf32>
    %12 = arith.maximumf %10, %11 : vector<1x4x4x192xf32>
    %c0_25 = arith.constant 0 : index
    %c2_26 = arith.constant 2 : index
    %c1_27 = arith.constant 1 : index
    %c0_28 = arith.constant 0 : index
    %13 = vector.load %arg1[%c0_25, %c2_26, %c1_27, %c0_28] : memref<1x6x6x192xf32, #tpu.memory_space<vmem>>, vector<1x4x4x192xf32>
    %14 = arith.maximumf %12, %13 : vector<1x4x4x192xf32>
    %c0_29 = arith.constant 0 : index
    %c2_30 = arith.constant 2 : index
    %c2_31 = arith.constant 2 : index
    %c0_32 = arith.constant 0 : index
    %15 = vector.load %arg1[%c0_29, %c2_30, %c2_31, %c0_32] : memref<1x6x6x192xf32, #tpu.memory_space<vmem>>, vector<1x4x4x192xf32>
    %16 = arith.maximumf %14, %15 : vector<1x4x4x192xf32>
    %c0_33 = arith.constant 0 : index
    %c0_34 = arith.constant 0 : index
    %c0_35 = arith.constant 0 : index
    %c0_36 = arith.constant 0 : index
    %17 = vector.load %arg2[%c0_33, %c0_34, %c0_35, %c0_36] : memref<1x4x4x192xf32, #tpu.memory_space<vmem>>, vector<1x4x4x192xf32>
    tpu.vector_store %arg2[%c0_33, %c0_34, %c0_35, %c0_36], %16 {strides = array<i32>} : memref<1x4x4x192xf32, #tpu.memory_space<vmem>>, vector<1x4x4x192xf32>,
    return
  }
  func.func @transform_0(%arg0: i32) -> (i32, i32, i32, i32) {
    %c0_i32 = arith.constant 0 : i32
    %c0_i32_0 = arith.constant 0 : i32
    %c0_i32_1 = arith.constant 0 : i32
    %c0_i32_2 = arith.constant 0 : i32
    return %arg0, %c0_i32, %c0_i32_0, %c0_i32_1 : i32, i32, i32, i32
  }
  func.func @transform_1(%arg0: i32) -> (i32, i32, i32, i32) {
    %c0_i32 = arith.constant 0 : i32
    %c0_i32_0 = arith.constant 0 : i32
    %c0_i32_1 = arith.constant 0 : i32
    %c0_i32_2 = arith.constant 0 : i32
    return %arg0, %c0_i32, %c0_i32_0, %c0_i32_1 : i32, i32, i32, i32
  }
}

module attributes {stable_mosaic.version = 11 : i64} {
  func.func @_matmul_bias_kernel(%arg0: i32, %arg1: memref<32x192xbf16, #tpu.memory_space<vmem>>, %arg2: memref<192x32xbf16, #tpu.memory_space<vmem>>, %arg3: memref<1x32xf32, #tpu.memory_space<vmem>>, %arg4: memref<32x32xf32, #tpu.memory_space<vmem>>) attributes {dimension_semantics = [#tpu.dimension_semantics<parallel>], iteration_bounds = array<i64: 1>, scalar_prefetch = 0 : i64, scratch_operands = 0 : i64, tpu.core_type = #tpu.core_type<tc>, window_params = [{transform_indices = @transform_0, window_bounds = array<i64: 32, 192>}, {pipeline_mode = #tpu.pipeline_mode<synchronous>, transform_indices = @transform_1, window_bounds = array<i64: 192, 32>}, {pipeline_mode = #tpu.pipeline_mode<synchronous>, transform_indices = @transform_2, window_bounds = array<i64: 1, 32>}, {transform_indices = @transform_3, window_bounds = array<i64: 32, 32>}]} {
    %c0 = arith.constant 0 : index
    %c0_0 = arith.constant 0 : index
    %0 = vector.load %arg1[%c0, %c0_0] : memref<32x192xbf16, #tpu.memory_space<vmem>>, vector<32x192xbf16>
    %c0_1 = arith.constant 0 : index
    %c0_2 = arith.constant 0 : index
    %1 = vector.load %arg2[%c0_1, %c0_2] : memref<192x32xbf16, #tpu.memory_space<vmem>>, vector<192x32xbf16>
    %cst = arith.constant dense<0.000000e+00> : vector<32x32xf32>
    %2 = tpu.matmul %0, %1, %cst {dimension_numbers = #tpu.dot_dimension_numbers<[1], [0], [0], [1], [0, 0, 1, 1], [], []>} : vector<32x192xbf16>, vector<192x32xbf16>, vector<32x32xf32> -> vector<32x32xf32>
    %c0_3 = arith.constant 0 : index
    %c0_4 = arith.constant 0 : index
    %3 = vector.load %arg3[%c0_3, %c0_4] : memref<1x32xf32, #tpu.memory_space<vmem>>, vector<1x32xf32>
    %4 = vector.broadcast %3 : vector<1x32xf32> to vector<32x32xf32>
    %5 = arith.addf %2, %4 : vector<32x32xf32>
    %cst_5 = arith.constant 0.000000e+00 : f32
    %6 = vector.broadcast %cst_5 : f32 to vector<32x32xf32>
    %7 = arith.maximumf %5, %6 : vector<32x32xf32>
    %c0_6 = arith.constant 0 : index
    %c0_7 = arith.constant 0 : index
    %8 = vector.load %arg4[%c0_6, %c0_7] : memref<32x32xf32, #tpu.memory_space<vmem>>, vector<32x32xf32>
    tpu.vector_store %arg4[%c0_6, %c0_7], %7 {strides = array<i32>} : memref<32x32xf32, #tpu.memory_space<vmem>>, vector<32x32xf32>,
    return
  }
  func.func @transform_0(%arg0: i32) -> (i32, i32) {
    %c0_i32 = arith.constant 0 : i32
    %c0_i32_0 = arith.constant 0 : i32
    return %arg0, %c0_i32 : i32, i32
  }
  func.func @transform_1(%arg0: i32) -> (i32, i32) {
    %c0_i32 = arith.constant 0 : i32
    %c0_i32_0 = arith.constant 0 : i32
    %c0_i32_1 = arith.constant 0 : i32
    return %c0_i32, %c0_i32_0 : i32, i32
  }
  func.func @transform_2(%arg0: i32) -> (i32, i32) {
    %c0_i32 = arith.constant 0 : i32
    %c0_i32_0 = arith.constant 0 : i32
    %c0_i32_1 = arith.constant 0 : i32
    return %c0_i32, %c0_i32_0 : i32, i32
  }
  func.func @transform_3(%arg0: i32) -> (i32, i32) {
    %c0_i32 = arith.constant 0 : i32
    %c0_i32_0 = arith.constant 0 : i32
    return %arg0, %c0_i32 : i32, i32
  }
}

module attributes {stable_mosaic.version = 11 : i64} {
  func.func @_matmul_bias_kernel(%arg0: i32, %arg1: memref<32x256xbf16, #tpu.memory_space<vmem>>, %arg2: memref<256x288xbf16, #tpu.memory_space<vmem>>, %arg3: memref<1x288xf32, #tpu.memory_space<vmem>>, %arg4: memref<32x288xf32, #tpu.memory_space<vmem>>) attributes {dimension_semantics = [#tpu.dimension_semantics<parallel>], iteration_bounds = array<i64: 1>, scalar_prefetch = 0 : i64, scratch_operands = 0 : i64, tpu.core_type = #tpu.core_type<tc>, window_params = [{transform_indices = @transform_0, window_bounds = array<i64: 32, 256>}, {pipeline_mode = #tpu.pipeline_mode<synchronous>, transform_indices = @transform_1, window_bounds = array<i64: 256, 288>}, {pipeline_mode = #tpu.pipeline_mode<synchronous>, transform_indices = @transform_2, window_bounds = array<i64: 1, 288>}, {transform_indices = @transform_3, window_bounds = array<i64: 32, 288>}]} {
    %c0 = arith.constant 0 : index
    %c0_0 = arith.constant 0 : index
    %0 = vector.load %arg1[%c0, %c0_0] : memref<32x256xbf16, #tpu.memory_space<vmem>>, vector<32x256xbf16>
    %c0_1 = arith.constant 0 : index
    %c0_2 = arith.constant 0 : index
    %1 = vector.load %arg2[%c0_1, %c0_2] : memref<256x288xbf16, #tpu.memory_space<vmem>>, vector<256x288xbf16>
    %cst = arith.constant dense<0.000000e+00> : vector<32x288xf32>
    %2 = tpu.matmul %0, %1, %cst {dimension_numbers = #tpu.dot_dimension_numbers<[1], [0], [0], [1], [0, 0, 1, 1], [], []>} : vector<32x256xbf16>, vector<256x288xbf16>, vector<32x288xf32> -> vector<32x288xf32>
    %c0_3 = arith.constant 0 : index
    %c0_4 = arith.constant 0 : index
    %3 = vector.load %arg3[%c0_3, %c0_4] : memref<1x288xf32, #tpu.memory_space<vmem>>, vector<1x288xf32>
    %4 = vector.broadcast %3 : vector<1x288xf32> to vector<32x288xf32>
    %5 = arith.addf %2, %4 : vector<32x288xf32>
    %cst_5 = arith.constant 0.000000e+00 : f32
    %6 = vector.broadcast %cst_5 : f32 to vector<32x288xf32>
    %7 = arith.maximumf %5, %6 : vector<32x288xf32>
    %c0_6 = arith.constant 0 : index
    %c0_7 = arith.constant 0 : index
    %8 = vector.load %arg4[%c0_6, %c0_7] : memref<32x288xf32, #tpu.memory_space<vmem>>, vector<32x288xf32>
    tpu.vector_store %arg4[%c0_6, %c0_7], %7 {strides = array<i32>} : memref<32x288xf32, #tpu.memory_space<vmem>>, vector<32x288xf32>,
    return
  }
  func.func @transform_0(%arg0: i32) -> (i32, i32) {
    %c0_i32 = arith.constant 0 : i32
    %c0_i32_0 = arith.constant 0 : i32
    return %arg0, %c0_i32 : i32, i32
  }
  func.func @transform_1(%arg0: i32) -> (i32, i32) {
    %c0_i32 = arith.constant 0 : i32
    %c0_i32_0 = arith.constant 0 : i32
    %c0_i32_1 = arith.constant 0 : i32
    return %c0_i32, %c0_i32_0 : i32, i32
  }
  func.func @transform_2(%arg0: i32) -> (i32, i32) {
    %c0_i32 = arith.constant 0 : i32
    %c0_i32_0 = arith.constant 0 : i32
    %c0_i32_1 = arith.constant 0 : i32
    return %c0_i32, %c0_i32_0 : i32, i32
  }
  func.func @transform_3(%arg0: i32) -> (i32, i32) {
    %c0_i32 = arith.constant 0 : i32
    %c0_i32_0 = arith.constant 0 : i32
    return %arg0, %c0_i32 : i32, i32
  }
}

module attributes {stable_mosaic.version = 11 : i64} {
  func.func @_matmul_bias_kernel(%arg0: i32, %arg1: memref<32x1152xbf16, #tpu.memory_space<vmem>>, %arg2: memref<1152x192xbf16, #tpu.memory_space<vmem>>, %arg3: memref<1x192xf32, #tpu.memory_space<vmem>>, %arg4: memref<32x192xf32, #tpu.memory_space<vmem>>) attributes {dimension_semantics = [#tpu.dimension_semantics<parallel>], iteration_bounds = array<i64: 1>, scalar_prefetch = 0 : i64, scratch_operands = 0 : i64, tpu.core_type = #tpu.core_type<tc>, window_params = [{transform_indices = @transform_0, window_bounds = array<i64: 32, 1152>}, {pipeline_mode = #tpu.pipeline_mode<synchronous>, transform_indices = @transform_1, window_bounds = array<i64: 1152, 192>}, {pipeline_mode = #tpu.pipeline_mode<synchronous>, transform_indices = @transform_2, window_bounds = array<i64: 1, 192>}, {transform_indices = @transform_3, window_bounds = array<i64: 32, 192>}]} {
    %c0 = arith.constant 0 : index
    %c0_0 = arith.constant 0 : index
    %0 = vector.load %arg1[%c0, %c0_0] : memref<32x1152xbf16, #tpu.memory_space<vmem>>, vector<32x1152xbf16>
    %c0_1 = arith.constant 0 : index
    %c0_2 = arith.constant 0 : index
    %1 = vector.load %arg2[%c0_1, %c0_2] : memref<1152x192xbf16, #tpu.memory_space<vmem>>, vector<1152x192xbf16>
    %cst = arith.constant dense<0.000000e+00> : vector<32x192xf32>
    %2 = tpu.matmul %0, %1, %cst {dimension_numbers = #tpu.dot_dimension_numbers<[1], [0], [0], [1], [0, 0, 1, 1], [], []>} : vector<32x1152xbf16>, vector<1152x192xbf16>, vector<32x192xf32> -> vector<32x192xf32>
    %c0_3 = arith.constant 0 : index
    %c0_4 = arith.constant 0 : index
    %3 = vector.load %arg3[%c0_3, %c0_4] : memref<1x192xf32, #tpu.memory_space<vmem>>, vector<1x192xf32>
    %4 = vector.broadcast %3 : vector<1x192xf32> to vector<32x192xf32>
    %5 = arith.addf %2, %4 : vector<32x192xf32>
    %cst_5 = arith.constant 0.000000e+00 : f32
    %6 = vector.broadcast %cst_5 : f32 to vector<32x192xf32>
    %7 = arith.maximumf %5, %6 : vector<32x192xf32>
    %c0_6 = arith.constant 0 : index
    %c0_7 = arith.constant 0 : index
    %8 = vector.load %arg4[%c0_6, %c0_7] : memref<32x192xf32, #tpu.memory_space<vmem>>, vector<32x192xf32>
    tpu.vector_store %arg4[%c0_6, %c0_7], %7 {strides = array<i32>} : memref<32x192xf32, #tpu.memory_space<vmem>>, vector<32x192xf32>,
    return
  }
  func.func @transform_0(%arg0: i32) -> (i32, i32) {
    %c0_i32 = arith.constant 0 : i32
    %c0_i32_0 = arith.constant 0 : i32
    return %arg0, %c0_i32 : i32, i32
  }
  func.func @transform_1(%arg0: i32) -> (i32, i32) {
    %c0_i32 = arith.constant 0 : i32
    %c0_i32_0 = arith.constant 0 : i32
    %c0_i32_1 = arith.constant 0 : i32
    return %c0_i32, %c0_i32_0 : i32, i32
  }
  func.func @transform_2(%arg0: i32) -> (i32, i32) {
    %c0_i32 = arith.constant 0 : i32
    %c0_i32_0 = arith.constant 0 : i32
    %c0_i32_1 = arith.constant 0 : i32
    return %c0_i32, %c0_i32_0 : i32, i32
  }
  func.func @transform_3(%arg0: i32) -> (i32, i32) {
    %c0_i32 = arith.constant 0 : i32
    %c0_i32_0 = arith.constant 0 : i32
    return %arg0, %c0_i32 : i32, i32
  }
}

module attributes {stable_mosaic.version = 11 : i64} {
  func.func @_matmul_bias_kernel(%arg0: i32, %arg1: memref<32x288xbf16, #tpu.memory_space<vmem>>, %arg2: memref<288x96xbf16, #tpu.memory_space<vmem>>, %arg3: memref<1x96xf32, #tpu.memory_space<vmem>>, %arg4: memref<32x96xf32, #tpu.memory_space<vmem>>) attributes {dimension_semantics = [#tpu.dimension_semantics<parallel>], iteration_bounds = array<i64: 1>, scalar_prefetch = 0 : i64, scratch_operands = 0 : i64, tpu.core_type = #tpu.core_type<tc>, window_params = [{transform_indices = @transform_0, window_bounds = array<i64: 32, 288>}, {pipeline_mode = #tpu.pipeline_mode<synchronous>, transform_indices = @transform_1, window_bounds = array<i64: 288, 96>}, {pipeline_mode = #tpu.pipeline_mode<synchronous>, transform_indices = @transform_2, window_bounds = array<i64: 1, 96>}, {transform_indices = @transform_3, window_bounds = array<i64: 32, 96>}]} {
    %c0 = arith.constant 0 : index
    %c0_0 = arith.constant 0 : index
    %0 = vector.load %arg1[%c0, %c0_0] : memref<32x288xbf16, #tpu.memory_space<vmem>>, vector<32x288xbf16>
    %c0_1 = arith.constant 0 : index
    %c0_2 = arith.constant 0 : index
    %1 = vector.load %arg2[%c0_1, %c0_2] : memref<288x96xbf16, #tpu.memory_space<vmem>>, vector<288x96xbf16>
    %cst = arith.constant dense<0.000000e+00> : vector<32x96xf32>
    %2 = tpu.matmul %0, %1, %cst {dimension_numbers = #tpu.dot_dimension_numbers<[1], [0], [0], [1], [0, 0, 1, 1], [], []>} : vector<32x288xbf16>, vector<288x96xbf16>, vector<32x96xf32> -> vector<32x96xf32>
    %c0_3 = arith.constant 0 : index
    %c0_4 = arith.constant 0 : index
    %3 = vector.load %arg3[%c0_3, %c0_4] : memref<1x96xf32, #tpu.memory_space<vmem>>, vector<1x96xf32>
    %4 = vector.broadcast %3 : vector<1x96xf32> to vector<32x96xf32>
    %5 = arith.addf %2, %4 : vector<32x96xf32>
    %cst_5 = arith.constant 0.000000e+00 : f32
    %6 = vector.broadcast %cst_5 : f32 to vector<32x96xf32>
    %7 = arith.maximumf %5, %6 : vector<32x96xf32>
    %c0_6 = arith.constant 0 : index
    %c0_7 = arith.constant 0 : index
    %8 = vector.load %arg4[%c0_6, %c0_7] : memref<32x96xf32, #tpu.memory_space<vmem>>, vector<32x96xf32>
    tpu.vector_store %arg4[%c0_6, %c0_7], %7 {strides = array<i32>} : memref<32x96xf32, #tpu.memory_space<vmem>>, vector<32x96xf32>,
    return
  }
  func.func @transform_0(%arg0: i32) -> (i32, i32) {
    %c0_i32 = arith.constant 0 : i32
    %c0_i32_0 = arith.constant 0 : i32
    return %arg0, %c0_i32 : i32, i32
  }
  func.func @transform_1(%arg0: i32) -> (i32, i32) {
    %c0_i32 = arith.constant 0 : i32
    %c0_i32_0 = arith.constant 0 : i32
    %c0_i32_1 = arith.constant 0 : i32
    return %c0_i32, %c0_i32_0 : i32, i32
  }
  func.func @transform_2(%arg0: i32) -> (i32, i32) {
    %c0_i32 = arith.constant 0 : i32
    %c0_i32_0 = arith.constant 0 : i32
    %c0_i32_1 = arith.constant 0 : i32
    return %c0_i32, %c0_i32_0 : i32, i32
  }
  func.func @transform_3(%arg0: i32) -> (i32, i32) {
    %c0_i32 = arith.constant 0 : i32
    %c0_i32_0 = arith.constant 0 : i32
    return %arg0, %c0_i32 : i32, i32
  }
}

module attributes {stable_mosaic.version = 11 : i64} {
  func.func @_maxpool_s1_kernel(%arg0: i32, %arg1: memref<1x6x6x256xf32, #tpu.memory_space<vmem>>, %arg2: memref<1x4x4x256xf32, #tpu.memory_space<vmem>>) attributes {dimension_semantics = [#tpu.dimension_semantics<parallel>], iteration_bounds = array<i64: 2>, scalar_prefetch = 0 : i64, scratch_operands = 0 : i64, tpu.core_type = #tpu.core_type<tc>, window_params = [{transform_indices = @transform_0, window_bounds = array<i64: 1, 6, 6, 256>}, {transform_indices = @transform_1, window_bounds = array<i64: 1, 4, 4, 256>}]} {
    %c0 = arith.constant 0 : index
    %c0_0 = arith.constant 0 : index
    %c0_1 = arith.constant 0 : index
    %c0_2 = arith.constant 0 : index
    %0 = vector.load %arg1[%c0, %c0_0, %c0_1, %c0_2] : memref<1x6x6x256xf32, #tpu.memory_space<vmem>>, vector<1x4x4x256xf32>
    %c0_3 = arith.constant 0 : index
    %c0_4 = arith.constant 0 : index
    %c1 = arith.constant 1 : index
    %c0_5 = arith.constant 0 : index
    %1 = vector.load %arg1[%c0_3, %c0_4, %c1, %c0_5] : memref<1x6x6x256xf32, #tpu.memory_space<vmem>>, vector<1x4x4x256xf32>
    %2 = arith.maximumf %0, %1 : vector<1x4x4x256xf32>
    %c0_6 = arith.constant 0 : index
    %c0_7 = arith.constant 0 : index
    %c2 = arith.constant 2 : index
    %c0_8 = arith.constant 0 : index
    %3 = vector.load %arg1[%c0_6, %c0_7, %c2, %c0_8] : memref<1x6x6x256xf32, #tpu.memory_space<vmem>>, vector<1x4x4x256xf32>
    %4 = arith.maximumf %2, %3 : vector<1x4x4x256xf32>
    %c0_9 = arith.constant 0 : index
    %c1_10 = arith.constant 1 : index
    %c0_11 = arith.constant 0 : index
    %c0_12 = arith.constant 0 : index
    %5 = vector.load %arg1[%c0_9, %c1_10, %c0_11, %c0_12] : memref<1x6x6x256xf32, #tpu.memory_space<vmem>>, vector<1x4x4x256xf32>
    %6 = arith.maximumf %4, %5 : vector<1x4x4x256xf32>
    %c0_13 = arith.constant 0 : index
    %c1_14 = arith.constant 1 : index
    %c1_15 = arith.constant 1 : index
    %c0_16 = arith.constant 0 : index
    %7 = vector.load %arg1[%c0_13, %c1_14, %c1_15, %c0_16] : memref<1x6x6x256xf32, #tpu.memory_space<vmem>>, vector<1x4x4x256xf32>
    %8 = arith.maximumf %6, %7 : vector<1x4x4x256xf32>
    %c0_17 = arith.constant 0 : index
    %c1_18 = arith.constant 1 : index
    %c2_19 = arith.constant 2 : index
    %c0_20 = arith.constant 0 : index
    %9 = vector.load %arg1[%c0_17, %c1_18, %c2_19, %c0_20] : memref<1x6x6x256xf32, #tpu.memory_space<vmem>>, vector<1x4x4x256xf32>
    %10 = arith.maximumf %8, %9 : vector<1x4x4x256xf32>
    %c0_21 = arith.constant 0 : index
    %c2_22 = arith.constant 2 : index
    %c0_23 = arith.constant 0 : index
    %c0_24 = arith.constant 0 : index
    %11 = vector.load %arg1[%c0_21, %c2_22, %c0_23, %c0_24] : memref<1x6x6x256xf32, #tpu.memory_space<vmem>>, vector<1x4x4x256xf32>
    %12 = arith.maximumf %10, %11 : vector<1x4x4x256xf32>
    %c0_25 = arith.constant 0 : index
    %c2_26 = arith.constant 2 : index
    %c1_27 = arith.constant 1 : index
    %c0_28 = arith.constant 0 : index
    %13 = vector.load %arg1[%c0_25, %c2_26, %c1_27, %c0_28] : memref<1x6x6x256xf32, #tpu.memory_space<vmem>>, vector<1x4x4x256xf32>
    %14 = arith.maximumf %12, %13 : vector<1x4x4x256xf32>
    %c0_29 = arith.constant 0 : index
    %c2_30 = arith.constant 2 : index
    %c2_31 = arith.constant 2 : index
    %c0_32 = arith.constant 0 : index
    %15 = vector.load %arg1[%c0_29, %c2_30, %c2_31, %c0_32] : memref<1x6x6x256xf32, #tpu.memory_space<vmem>>, vector<1x4x4x256xf32>
    %16 = arith.maximumf %14, %15 : vector<1x4x4x256xf32>
    %c0_33 = arith.constant 0 : index
    %c0_34 = arith.constant 0 : index
    %c0_35 = arith.constant 0 : index
    %c0_36 = arith.constant 0 : index
    %17 = vector.load %arg2[%c0_33, %c0_34, %c0_35, %c0_36] : memref<1x4x4x256xf32, #tpu.memory_space<vmem>>, vector<1x4x4x256xf32>
    tpu.vector_store %arg2[%c0_33, %c0_34, %c0_35, %c0_36], %16 {strides = array<i32>} : memref<1x4x4x256xf32, #tpu.memory_space<vmem>>, vector<1x4x4x256xf32>,
    return
  }
  func.func @transform_0(%arg0: i32) -> (i32, i32, i32, i32) {
    %c0_i32 = arith.constant 0 : i32
    %c0_i32_0 = arith.constant 0 : i32
    %c0_i32_1 = arith.constant 0 : i32
    %c0_i32_2 = arith.constant 0 : i32
    return %arg0, %c0_i32, %c0_i32_0, %c0_i32_1 : i32, i32, i32, i32
  }
  func.func @transform_1(%arg0: i32) -> (i32, i32, i32, i32) {
    %c0_i32 = arith.constant 0 : i32
    %c0_i32_0 = arith.constant 0 : i32
    %c0_i32_1 = arith.constant 0 : i32
    %c0_i32_2 = arith.constant 0 : i32
    return %arg0, %c0_i32, %c0_i32_0, %c0_i32_1 : i32, i32, i32, i32
  }
}

module attributes {stable_mosaic.version = 11 : i64} {
  func.func @_matmul_bias_kernel(%arg0: i32, %arg1: memref<32x256xbf16, #tpu.memory_space<vmem>>, %arg2: memref<256x64xbf16, #tpu.memory_space<vmem>>, %arg3: memref<1x64xf32, #tpu.memory_space<vmem>>, %arg4: memref<32x64xf32, #tpu.memory_space<vmem>>) attributes {dimension_semantics = [#tpu.dimension_semantics<parallel>], iteration_bounds = array<i64: 1>, scalar_prefetch = 0 : i64, scratch_operands = 0 : i64, tpu.core_type = #tpu.core_type<tc>, window_params = [{transform_indices = @transform_0, window_bounds = array<i64: 32, 256>}, {pipeline_mode = #tpu.pipeline_mode<synchronous>, transform_indices = @transform_1, window_bounds = array<i64: 256, 64>}, {pipeline_mode = #tpu.pipeline_mode<synchronous>, transform_indices = @transform_2, window_bounds = array<i64: 1, 64>}, {transform_indices = @transform_3, window_bounds = array<i64: 32, 64>}]} {
    %c0 = arith.constant 0 : index
    %c0_0 = arith.constant 0 : index
    %0 = vector.load %arg1[%c0, %c0_0] : memref<32x256xbf16, #tpu.memory_space<vmem>>, vector<32x256xbf16>
    %c0_1 = arith.constant 0 : index
    %c0_2 = arith.constant 0 : index
    %1 = vector.load %arg2[%c0_1, %c0_2] : memref<256x64xbf16, #tpu.memory_space<vmem>>, vector<256x64xbf16>
    %cst = arith.constant dense<0.000000e+00> : vector<32x64xf32>
    %2 = tpu.matmul %0, %1, %cst {dimension_numbers = #tpu.dot_dimension_numbers<[1], [0], [0], [1], [0, 0, 1, 1], [], []>} : vector<32x256xbf16>, vector<256x64xbf16>, vector<32x64xf32> -> vector<32x64xf32>
    %c0_3 = arith.constant 0 : index
    %c0_4 = arith.constant 0 : index
    %3 = vector.load %arg3[%c0_3, %c0_4] : memref<1x64xf32, #tpu.memory_space<vmem>>, vector<1x64xf32>
    %4 = vector.broadcast %3 : vector<1x64xf32> to vector<32x64xf32>
    %5 = arith.addf %2, %4 : vector<32x64xf32>
    %cst_5 = arith.constant 0.000000e+00 : f32
    %6 = vector.broadcast %cst_5 : f32 to vector<32x64xf32>
    %7 = arith.maximumf %5, %6 : vector<32x64xf32>
    %c0_6 = arith.constant 0 : index
    %c0_7 = arith.constant 0 : index
    %8 = vector.load %arg4[%c0_6, %c0_7] : memref<32x64xf32, #tpu.memory_space<vmem>>, vector<32x64xf32>
    tpu.vector_store %arg4[%c0_6, %c0_7], %7 {strides = array<i32>} : memref<32x64xf32, #tpu.memory_space<vmem>>, vector<32x64xf32>,
    return
  }
  func.func @transform_0(%arg0: i32) -> (i32, i32) {
    %c0_i32 = arith.constant 0 : i32
    %c0_i32_0 = arith.constant 0 : i32
    return %arg0, %c0_i32 : i32, i32
  }
  func.func @transform_1(%arg0: i32) -> (i32, i32) {
    %c0_i32 = arith.constant 0 : i32
    %c0_i32_0 = arith.constant 0 : i32
    %c0_i32_1 = arith.constant 0 : i32
    return %c0_i32, %c0_i32_0 : i32, i32
  }
  func.func @transform_2(%arg0: i32) -> (i32, i32) {
    %c0_i32 = arith.constant 0 : i32
    %c0_i32_0 = arith.constant 0 : i32
    %c0_i32_1 = arith.constant 0 : i32
    return %c0_i32, %c0_i32_0 : i32, i32
  }
  func.func @transform_3(%arg0: i32) -> (i32, i32) {
    %c0_i32 = arith.constant 0 : i32
    %c0_i32_0 = arith.constant 0 : i32
    return %arg0, %c0_i32 : i32, i32
  }
}

module attributes {stable_mosaic.version = 11 : i64} {
  func.func @_maxpool_s2_kernel(%arg0: i32, %arg1: memref<1x3x3x480xf32, #tpu.memory_space<vmem>>, %arg2: memref<1x3x2x480xf32, #tpu.memory_space<vmem>>, %arg3: memref<1x2x3x480xf32, #tpu.memory_space<vmem>>, %arg4: memref<1x2x2x480xf32, #tpu.memory_space<vmem>>, %arg5: memref<1x2x2x480xf32, #tpu.memory_space<vmem>>) attributes {dimension_semantics = [#tpu.dimension_semantics<parallel>], iteration_bounds = array<i64: 2>, scalar_prefetch = 0 : i64, scratch_operands = 0 : i64, tpu.core_type = #tpu.core_type<tc>, window_params = [{transform_indices = @transform_0, window_bounds = array<i64: 1, 3, 3, 480>}, {transform_indices = @transform_1, window_bounds = array<i64: 1, 3, 2, 480>}, {transform_indices = @transform_2, window_bounds = array<i64: 1, 2, 3, 480>}, {transform_indices = @transform_3, window_bounds = array<i64: 1, 2, 2, 480>}, {transform_indices = @transform_4, window_bounds = array<i64: 1, 2, 2, 480>}]} {
    %c0 = arith.constant 0 : index
    %c0_0 = arith.constant 0 : index
    %c0_1 = arith.constant 0 : index
    %c0_2 = arith.constant 0 : index
    %0 = vector.load %arg1[%c0, %c0_0, %c0_1, %c0_2] : memref<1x3x3x480xf32, #tpu.memory_space<vmem>>, vector<1x2x2x480xf32>
    %c0_3 = arith.constant 0 : index
    %c0_4 = arith.constant 0 : index
    %c1 = arith.constant 1 : index
    %c0_5 = arith.constant 0 : index
    %1 = vector.load %arg1[%c0_3, %c0_4, %c1, %c0_5] : memref<1x3x3x480xf32, #tpu.memory_space<vmem>>, vector<1x2x2x480xf32>
    %2 = arith.maximumf %0, %1 : vector<1x2x2x480xf32>
    %c0_6 = arith.constant 0 : index
    %c1_7 = arith.constant 1 : index
    %c0_8 = arith.constant 0 : index
    %c0_9 = arith.constant 0 : index
    %3 = vector.load %arg1[%c0_6, %c1_7, %c0_8, %c0_9] : memref<1x3x3x480xf32, #tpu.memory_space<vmem>>, vector<1x2x2x480xf32>
    %4 = arith.maximumf %2, %3 : vector<1x2x2x480xf32>
    %c0_10 = arith.constant 0 : index
    %c1_11 = arith.constant 1 : index
    %c1_12 = arith.constant 1 : index
    %c0_13 = arith.constant 0 : index
    %5 = vector.load %arg1[%c0_10, %c1_11, %c1_12, %c0_13] : memref<1x3x3x480xf32, #tpu.memory_space<vmem>>, vector<1x2x2x480xf32>
    %6 = arith.maximumf %4, %5 : vector<1x2x2x480xf32>
    %c0_14 = arith.constant 0 : index
    %c0_15 = arith.constant 0 : index
    %c0_16 = arith.constant 0 : index
    %c0_17 = arith.constant 0 : index
    %7 = vector.load %arg2[%c0_14, %c0_15, %c0_16, %c0_17] : memref<1x3x2x480xf32, #tpu.memory_space<vmem>>, vector<1x2x2x480xf32>
    %8 = arith.maximumf %6, %7 : vector<1x2x2x480xf32>
    %c0_18 = arith.constant 0 : index
    %c1_19 = arith.constant 1 : index
    %c0_20 = arith.constant 0 : index
    %c0_21 = arith.constant 0 : index
    %9 = vector.load %arg2[%c0_18, %c1_19, %c0_20, %c0_21] : memref<1x3x2x480xf32, #tpu.memory_space<vmem>>, vector<1x2x2x480xf32>
    %10 = arith.maximumf %8, %9 : vector<1x2x2x480xf32>
    %c0_22 = arith.constant 0 : index
    %c0_23 = arith.constant 0 : index
    %c0_24 = arith.constant 0 : index
    %c0_25 = arith.constant 0 : index
    %11 = vector.load %arg3[%c0_22, %c0_23, %c0_24, %c0_25] : memref<1x2x3x480xf32, #tpu.memory_space<vmem>>, vector<1x2x2x480xf32>
    %12 = arith.maximumf %10, %11 : vector<1x2x2x480xf32>
    %c0_26 = arith.constant 0 : index
    %c0_27 = arith.constant 0 : index
    %c1_28 = arith.constant 1 : index
    %c0_29 = arith.constant 0 : index
    %13 = vector.load %arg3[%c0_26, %c0_27, %c1_28, %c0_29] : memref<1x2x3x480xf32, #tpu.memory_space<vmem>>, vector<1x2x2x480xf32>
    %14 = arith.maximumf %12, %13 : vector<1x2x2x480xf32>
    %c0_30 = arith.constant 0 : index
    %c0_31 = arith.constant 0 : index
    %c0_32 = arith.constant 0 : index
    %c0_33 = arith.constant 0 : index
    %15 = vector.load %arg4[%c0_30, %c0_31, %c0_32, %c0_33] : memref<1x2x2x480xf32, #tpu.memory_space<vmem>>, vector<1x2x2x480xf32>
    %16 = arith.maximumf %14, %15 : vector<1x2x2x480xf32>
    %c0_34 = arith.constant 0 : index
    %c0_35 = arith.constant 0 : index
    %c0_36 = arith.constant 0 : index
    %c0_37 = arith.constant 0 : index
    %17 = vector.load %arg5[%c0_34, %c0_35, %c0_36, %c0_37] : memref<1x2x2x480xf32, #tpu.memory_space<vmem>>, vector<1x2x2x480xf32>
    tpu.vector_store %arg5[%c0_34, %c0_35, %c0_36, %c0_37], %16 {strides = array<i32>} : memref<1x2x2x480xf32, #tpu.memory_space<vmem>>, vector<1x2x2x480xf32>,
    return
  }
  func.func @transform_0(%arg0: i32) -> (i32, i32, i32, i32) {
    %c0_i32 = arith.constant 0 : i32
    %c0_i32_0 = arith.constant 0 : i32
    %c0_i32_1 = arith.constant 0 : i32
    %c0_i32_2 = arith.constant 0 : i32
    return %arg0, %c0_i32, %c0_i32_0, %c0_i32_1 : i32, i32, i32, i32
  }
  func.func @transform_1(%arg0: i32) -> (i32, i32, i32, i32) {
    %c0_i32 = arith.constant 0 : i32
    %c0_i32_0 = arith.constant 0 : i32
    %c0_i32_1 = arith.constant 0 : i32
    %c0_i32_2 = arith.constant 0 : i32
    return %arg0, %c0_i32, %c0_i32_0, %c0_i32_1 : i32, i32, i32, i32
  }
  func.func @transform_2(%arg0: i32) -> (i32, i32, i32, i32) {
    %c0_i32 = arith.constant 0 : i32
    %c0_i32_0 = arith.constant 0 : i32
    %c0_i32_1 = arith.constant 0 : i32
    %c0_i32_2 = arith.constant 0 : i32
    return %arg0, %c0_i32, %c0_i32_0, %c0_i32_1 : i32, i32, i32, i32
  }
  func.func @transform_3(%arg0: i32) -> (i32, i32, i32, i32) {
    %c0_i32 = arith.constant 0 : i32
    %c0_i32_0 = arith.constant 0 : i32
    %c0_i32_1 = arith.constant 0 : i32
    %c0_i32_2 = arith.constant 0 : i32
    return %arg0, %c0_i32, %c0_i32_0, %c0_i32_1 : i32, i32, i32, i32
  }
  func.func @transform_4(%arg0: i32) -> (i32, i32, i32, i32) {
    %c0_i32 = arith.constant 0 : i32
    %c0_i32_0 = arith.constant 0 : i32
    %c0_i32_1 = arith.constant 0 : i32
    %c0_i32_2 = arith.constant 0 : i32
    return %arg0, %c0_i32, %c0_i32_0, %c0_i32_1 : i32, i32, i32, i32
  }
}

</mosaic_0001>

<llo_original>
// kernel: googlenet_forward.17
$region0: #{googlenet_forward.17}
  #allocation0 [shape = 'u32[]', space=smem, size = 0x4, offset = 0x4, fixed_abs, tag = 'smem constant byte address 0x4 - core index']
  #allocation1 [shape = 'u32[144,128]{1,0:T(1,128)}', space=vmem, size = 0x12000, scoped, tag = 'internal scratch']
  %s0 = inlined_call_operand.vmem [shape: f32[2,9,9,64], index: 0, kind: input, shape index: {}]
  %s1 = inlined_call_operand.vmem [shape: f32[2,9,8,64], index: 1, kind: input, shape index: {}]
  %s2 = inlined_call_operand.vmem [shape: f32[2,8,9,64], index: 2, kind: input, shape index: {}]
  %s3 = inlined_call_operand.vmem [shape: f32[2,8,8,64], index: 3, kind: input, shape index: {}]
  %s4 = inlined_call_operand.vmem [shape: f32[2,8,8,64], index: 4, kind: output, shape index: {}]
  %s5 = sld [smem:[#allocation0]]
  $region49: #{googlenet_forward.17} parent=0
    _
  %s7 = ssub.s32 1, %s5
  %s8 = scalar_select 0, %s7, %s5
  loop: start=0, step=1, limit=4
  $region2: #{googlenet_forward.17} parent=0 // loop_pre_header
    _
  $region3: #{googlenet_forward.17} parent=0 // loop_header
    %s10 = sphi 0, %s14
    %p11 = scmp.ge.s32.totalorder %s10, 4
    %s20 = sphi 0, %s22
    %s23 = sphi 0, %s20
    %s24 = sphi 0, %s23
    %s40 = sphi 0, %s24
    %s46 = sphi 0, %s48
    %s49 = sphi 0, %s46
    %s50 = sphi 0, %s49
    %s66 = sphi 0, %s50
    %s72 = sphi 0, %s74
    %s75 = sphi 0, %s72
    %s76 = sphi 0, %s75
    %s92 = sphi 0, %s76
    %s98 = sphi 0, %s100
    %s101 = sphi 0, %s98
    %s102 = sphi 0, %s101
    %s118 = sphi 0, %s102
    %s124 = sphi 0, %s126
    %s127 = sphi 0, %s124
    %s128 = sphi 0, %s127
    %s144 = sphi 0, %s128
  $region4: #{googlenet_forward.17} parent=0 // loop_header_branch
    %13 = sbr.rel (%p11) target = $region8
  $region5: #{googlenet_forward.17} parent=0 // loop_body
    %s15 = ssub.s32 %s10, 1
    %s16 = ssub.s32 %s10, 2
    %s17 = sadd.s32 %s10, 1
    %s18 = ssub.s32 %s10, %s17
    %p19 = scmp.eq.s32.totalorder %s18, 0
    %s21 = sadd.s32 %s20, 1
    %s22 = scalar_select %p19, %s20, %s21
    %p25 = pneg %p19
    %p26 = scmp.eq.s32.totalorder %s10, 1
    %p27 = por %p25, %p26
    %p28 = scmp.ne.s32.totalorder %s20, %s23
    %p29 = scmp.eq.s32.totalorder %s10, 0
    %p30 = por %p28, %p29
    %p31 = scmp.ne.s32.totalorder %s20, %s23
    %p32 = scmp.eq.s32.totalorder %s15, 1
    %p33 = por %p31, %p32
    %p34 = scmp.ne.s32.totalorder %s23, %s24
    %p35 = scmp.eq.s32.totalorder %s15, 0
    %p36 = por %p34, %p35
    %p37 = scmp.ne.s32.totalorder %s23, %s24
    %p38 = scmp.eq.s32.totalorder %s16, 1
    %p39 = por %p37, %p38
    %p41 = scmp.ne.s32.totalorder %s24, %s40
    %p42 = scmp.eq.s32.totalorder %s16, 0
    %p43 = por %p41, %p42
    %s44 = ssub.s32 %s10, %s17
    %p45 = scmp.eq.s32.totalorder %s44, 0
    %s47 = sadd.s32 %s46, 1
    %s48 = scalar_select %p45, %s46, %s47
    %p51 = pneg %p45
    %p52 = scmp.eq.s32.totalorder %s10, 1
    %p53 = por %p51, %p52
    %p54 = scmp.ne.s32.totalorder %s46, %s49
    %p55 = scmp.eq.s32.totalorder %s10, 0
    %p56 = por %p54, %p55
    %p57 = scmp.ne.s32.totalorder %s46, %s49
    %p58 = scmp.eq.s32.totalorder %s15, 1
    %p59 = por %p57, %p58
    %p60 = scmp.ne.s32.totalorder %s49, %s50
    %p61 = scmp.eq.s32.totalorder %s15, 0
    %p62 = por %p60, %p61
    %p63 = scmp.ne.s32.totalorder %s49, %s50
    %p64 = scmp.eq.s32.totalorder %s16, 1
    %p65 = por %p63, %p64
    %p67 = scmp.ne.s32.totalorder %s50, %s66
    %p68 = scmp.eq.s32.totalorder %s16, 0
    %p69 = por %p67, %p68
    %s70 = ssub.s32 %s10, %s17
    %p71 = scmp.eq.s32.totalorder %s70, 0
    %s73 = sadd.s32 %s72, 1
    %s74 = scalar_select %p71, %s72, %s73
    %p77 = pneg %p71
    %p78 = scmp.eq.s32.totalorder %s10, 1
    %p79 = por %p77, %p78
    %p80 = scmp.ne.s32.totalorder %s72, %s75
    %p81 = scmp.eq.s32.totalorder %s10, 0
    %p82 = por %p80, %p81
    %p83 = scmp.ne.s32.totalorder %s72, %s75
    %p84 = scmp.eq.s32.totalorder %s15, 1
    %p85 = por %p83, %p84
    %p86 = scmp.ne.s32.totalorder %s75, %s76
    %p87 = scmp.eq.s32.totalorder %s15, 0
    %p88 = por %p86, %p87
    %p89 = scmp.ne.s32.totalorder %s75, %s76
    %p90 = scmp.eq.s32.totalorder %s16, 1
    %p91 = por %p89, %p90
    %p93 = scmp.ne.s32.totalorder %s76, %s92
    %p94 = scmp.eq.s32.totalorder %s16, 0
    %p95 = por %p93, %p94
    %s96 = ssub.s32 %s10, %s17
    %p97 = scmp.eq.s32.totalorder %s96, 0
    %s99 = sadd.s32 %s98, 1
    %s100 = scalar_select %p97, %s98, %s99
    %p103 = pneg %p97
    %p104 = scmp.eq.s32.totalorder %s10, 1
    %p105 = por %p103, %p104
    %p106 = scmp.ne.s32.totalorder %s98, %s101
    %p107 = scmp.eq.s32.totalorder %s10, 0
    %p108 = por %p106, %p107
    %p109 = scmp.ne.s32.totalorder %s98, %s101
    %p110 = scmp.eq.s32.totalorder %s15, 1
    %p111 = por %p109, %p110
    %p112 = scmp.ne.s32.totalorder %s101, %s102
    %p113 = scmp.eq.s32.totalorder %s15, 0
    %p114 = por %p112, %p113
    %p115 = scmp.ne.s32.totalorder %s101, %s102
    %p116 = scmp.eq.s32.totalorder %s16, 1
    %p117 = por %p115, %p116
    %p119 = scmp.ne.s32.totalorder %s102, %s118
    %p120 = scmp.eq.s32.totalorder %s16, 0
    %p121 = por %p119, %p120
    %s122 = ssub.s32 %s10, %s17
    %p123 = scmp.eq.s32.totalorder %s122, 0
    %s125 = sadd.s32 %s124, 1
    %s126 = scalar_select %p123, %s124, %s125
    %p129 = pneg %p123
    %p130 = scmp.eq.s32.totalorder %s10, 1
    %p131 = por %p129, %p130
    %p132 = scmp.ne.s32.totalorder %s124, %s127
    %p133 = scmp.eq.s32.totalorder %s10, 0
    %p134 = por %p132, %p133
    %p135 = scmp.ne.s32.totalorder %s124, %s127
    %p136 = scmp.eq.s32.totalorder %s15, 1
    %p137 = por %p135, %p136
    %p138 = scmp.ne.s32.totalorder %s127, %s128
    %p139 = scmp.eq.s32.totalorder %s15, 0
    %p140 = por %p138, %p139
    %p141 = scmp.ne.s32.totalorder %s127, %s128
    %p142 = scmp.eq.s32.totalorder %s16, 1
    %p143 = por %p141, %p142
    %p145 = scmp.ne.s32.totalorder %s128, %s144
    %p146 = scmp.eq.s32.totalorder %s16, 0
    %p147 = por %p145, %p146
    %p148 = scmp.le.s32.totalorder 1, %s10
    %p149 = scmp.lt.s32.totalorder %s10, 3
    %p150 = pnand %p148, %p149
    %p151 = pneg %p150
    // Predicated region
    $region9: #{googlenet_forward.17} parent=5 // pred_check
      _
    $region10: #{googlenet_forward.17} parent=5 // pred_check_branch
      %153 = sbr.rel (%p150) target = $region12
    $region11: #{googlenet_forward.17} parent=5 // pred_region
      %s154 = ssub.s32 %s10, 1
    $region12: #{googlenet_forward.17} parent=5 // pred_fallthru
      _
    %p155 = scmp.lt.s32.totalorder %s10, 2
    // Predicated region
    $region13: #{googlenet_forward.17} parent=5 // pred_check
      %p156 = pneg %p155
    $region14: #{googlenet_forward.17} parent=5 // pred_check_branch
      %158 = sbr.rel (%p156) target = $region16
    $region15: #{googlenet_forward.17} parent=5 // pred_region
      // Predicated region
      $region17: #{googlenet_forward.17} parent=15 // pred_check
        %p159 = pneg %p30
      $region18: #{googlenet_forward.17} parent=15 // pred_check_branch
        %161 = sbr.rel (%p159) target = $region20
      $region19: #{googlenet_forward.17} parent=15 // pred_region
        %p162 = scmp.lt.s32.totalorder %s10, 1
        %s163 = scalar_select %p162, %s10, 1
        %s164 = smul.addr %s163, 18
        %s165 = smul.addr %s164, 8
        %s166 = scalar_lea.vmem %s0, %s165
      $region20: #{googlenet_forward.17} parent=15 // pred_fallthru
        _
      // Predicated region
      $region21: #{googlenet_forward.17} parent=15 // pred_check
        %p167 = pneg %p56
      $region22: #{googlenet_forward.17} parent=15 // pred_check_branch
        %169 = sbr.rel (%p167) target = $region24
      $region23: #{googlenet_forward.17} parent=15 // pred_region
        %p170 = scmp.lt.s32.totalorder %s10, 1
        %s171 = scalar_select %p170, %s10, 1
        %s172 = smul.addr %s171, 9
        %s173 = smul.addr %s172, 8
        %s174 = scalar_lea.vmem %s1, %s173
      $region24: #{googlenet_forward.17} parent=15 // pred_fallthru
        _
      // Predicated region
      $region25: #{googlenet_forward.17} parent=15 // pred_check
        %p175 = pneg %p82
      $region26: #{googlenet_forward.17} parent=15 // pred_check_branch
        %177 = sbr.rel (%p175) target = $region28
      $region27: #{googlenet_forward.17} parent=15 // pred_region
        %p178 = scmp.lt.s32.totalorder %s10, 1
        %s179 = scalar_select %p178, %s10, 1
        %s180 = smul.addr %s179, 16
        %s181 = smul.addr %s180, 8
        %s182 = scalar_lea.vmem %s2, %s181
      $region28: #{googlenet_forward.17} parent=15 // pred_fallthru
        _
      // Predicated region
      $region29: #{googlenet_forward.17} parent=15 // pred_check
        %p183 = pneg %p108
      $region30: #{googlenet_forward.17} parent=15 // pred_check_branch
        %185 = sbr.rel (%p183) target = $region32
      $region31: #{googlenet_forward.17} parent=15 // pred_region
        %p186 = scmp.lt.s32.totalorder %s10, 1
        %s187 = scalar_select %p186, %s10, 1
        %s188 = smul.addr %s187, 8
        %s189 = smul.addr %s188, 8
        %s190 = scalar_lea.vmem %s3, %s189
      $region32: #{googlenet_forward.17} parent=15 // pred_fallthru
        _
    $region16: #{googlenet_forward.17} parent=5 // pred_fallthru
      _
    %p191 = scmp.le.s32.totalorder 1, %s10
    %p192 = scmp.lt.s32.totalorder %s10, 3
    %p193 = pnand %p191, %p192
    %p194 = pneg %p193
    // Predicated region
    $region33: #{googlenet_forward.17} parent=5 // pred_check
      _
    $region34: #{googlenet_forward.17} parent=5 // pred_check_branch
      %196 = sbr.rel (%p193) target = $region36
    $region35: #{googlenet_forward.17} parent=5 // pred_region
      %s197 = ssub.s32 %s10, 1
      %p198 = scmp.lt.s32.totalorder %s15, 1
      %s199 = scalar_select %p198, %s15, 1
      %s200 = smul.addr %s199, 18
      %s201 = smul.addr %s200, 8
      %s202 = scalar_lea.vmem %s0, %s201
      %p203 = pneg %p36
      %p204 = pneg %p33
      %p205 = scmp.lt.s32.totalorder %s15, 1
      %s206 = scalar_select %p205, %s15, 1
      %s207 = smul.addr %s206, 9
      %s208 = smul.addr %s207, 8
      %s209 = scalar_lea.vmem %s1, %s208
      %p210 = pneg %p62
      %p211 = pneg %p59
      %p212 = scmp.lt.s32.totalorder %s15, 1
      %s213 = scalar_select %p212, %s15, 1
      %s214 = smul.addr %s213, 16
      %s215 = smul.addr %s214, 8
      %s216 = scalar_lea.vmem %s2, %s215
      %p217 = pneg %p88
      %p218 = pneg %p85
      %p219 = scmp.lt.s32.totalorder %s15, 1
      %s220 = scalar_select %p219, %s15, 1
      %s221 = smul.addr %s220, 8
      %s222 = smul.addr %s221, 8
      %s223 = scalar_lea.vmem %s3, %s222
      %p224 = pneg %p114
      %p225 = pneg %p111
      %p226 = pneg %p140
      %p227 = pneg %p137
      %p228 = scmp.lt.s32.totalorder %s15, 1
      %s229 = scalar_select %p228, %s15, 1
      %s230 = smul.addr %s229, 8
      %s231 = smul.addr %s230, 8
      %s232 = scalar_lea.vmem %s4, %s231
      %p233 = scmp.lt.s32.totalorder %s15, 1
      %s234 = scalar_select %p233, %s15, 1
      %s235 = smul.addr %s234, 18
      %s236 = smul.addr %s235, 8
      %s237 = scalar_lea.vmem %s0, %s236
      %p238 = scmp.lt.s32.totalorder %s15, 1
      %s239 = scalar_select %p238, %s15, 1
      %s240 = smul.addr %s239, 9
      %s241 = smul.addr %s240, 8
      %s242 = scalar_lea.vmem %s1, %s241
      %p243 = scmp.lt.s32.totalorder %s15, 1
      %s244 = scalar_select %p243, %s15, 1
      %s245 = smul.addr %s244, 16
      %s246 = smul.addr %s245, 8
      %s247 = scalar_lea.vmem %s2, %s246
      %p248 = scmp.lt.s32.totalorder %s15, 1
      %s249 = scalar_select %p248, %s15, 1
      %s250 = smul.addr %s249, 8
      %s251 = smul.addr %s250, 8
      %s252 = scalar_lea.vmem %s3, %s251
      %p253 = scmp.lt.s32.totalorder %s15, 1
      %s254 = scalar_select %p253, %s15, 1
      %s255 = smul.addr %s254, 8
      %s256 = smul.addr %s255, 8
      %s257 = scalar_lea.vmem %s4, %s256
      %v258 = vld [vmem:[%s237] sm:$0xff]
      %v259 = vld [vmem:[%s237 + $0x10] sm:$0xff]
      %v260 = vld [vmem:[%s237 + $0x20] sm:$0xff]
      %v261 = vld [vmem:[%s237 + $0x30] sm:$0xff]
      %v262 = vld [vmem:[%s237 + $0x40] sm:$0xff]
      %v263 = vld [vmem:[%s237 + $0x50] sm:$0xff]
      %v264 = vld [vmem:[%s237 + $0x60] sm:$0xff]
      %v265 = vld [vmem:[%s237 + $0x70] sm:$0xff]
      %v266 = vld [vmem:[%s237 + $0x1] sm:$0xff]
      %v267 = vld [vmem:[%s237 + $0x11] sm:$0xff]
      %v268 = vld [vmem:[%s237 + $0x21] sm:$0xff]
      %v269 = vld [vmem:[%s237 + $0x31] sm:$0xff]
      %v270 = vld [vmem:[%s237 + $0x41] sm:$0xff]
      %v271 = vld [vmem:[%s237 + $0x51] sm:$0xff]
      %v272 = vld [vmem:[%s237 + $0x61] sm:$0xff]
      %v273 = vld [vmem:[%s237 + $0x71] sm:$0xff]
      %v274 = vmax.f32 %v258, %v266
      %v275 = vmax.f32 %v259, %v267
      %v276 = vmax.f32 %v260, %v268
      %v277 = vmax.f32 %v261, %v269
      %v278 = vmax.f32 %v262, %v270
      %v279 = vmax.f32 %v263, %v271
      %v280 = vmax.f32 %v264, %v272
      %v281 = vmax.f32 %v265, %v273
      %s282 = scalar_lea.vmem %s237, 16
      %v283 = vld [vmem:[%s282] sm:$0xff]
      %v284 = vld [vmem:[%s282 + $0x10] sm:$0xff]
      %v285 = vld [vmem:[%s282 + $0x20] sm:$0xff]
      %v286 = vld [vmem:[%s282 + $0x30] sm:$0xff]
      %v287 = vld [vmem:[%s282 + $0x40] sm:$0xff]
      %v288 = vld [vmem:[%s282 + $0x50] sm:$0xff]
      %v289 = vld [vmem:[%s282 + $0x60] sm:$0xff]
      %v290 = vld [vmem:[%s282 + $0x70] sm:$0xff]
      %v291 = vmax.f32 %v274, %v283
      %v292 = vmax.f32 %v275, %v284
      %v293 = vmax.f32 %v276, %v285
      %v294 = vmax.f32 %v277, %v286
      %v295 = vmax.f32 %v278, %v287
      %v296 = vmax.f32 %v279, %v288
      %v297 = vmax.f32 %v280, %v289
      %v298 = vmax.f32 %v281, %v290
      %v299 = vld [vmem:[%s282 + $0x1] sm:$0xff]
      %v300 = vld [vmem:[%s282 + $0x11] sm:$0xff]
      %v301 = vld [vmem:[%s282 + $0x21] sm:$0xff]
      %v302 = vld [vmem:[%s282 + $0x31] sm:$0xff]
      %v303 = vld [vmem:[%s282 + $0x41] sm:$0xff]
      %v304 = vld [vmem:[%s282 + $0x51] sm:$0xff]
      %v305 = vld [vmem:[%s282 + $0x61] sm:$0xff]
      %v306 = vld [vmem:[%s282 + $0x71] sm:$0xff]
      %v307 = vmax.f32 %v291, %v299
      %v308 = vmax.f32 %v292, %v300
      %v309 = vmax.f32 %v293, %v301
      %v310 = vmax.f32 %v294, %v302
      %v311 = vmax.f32 %v295, %v303
      %v312 = vmax.f32 %v296, %v304
      %v313 = vmax.f32 %v297, %v305
      %v314 = vmax.f32 %v298, %v306
      %v315 = vld [vmem:[%s242] sm:$0xff]
      %v316 = vld [vmem:[%s242 + $0x8] sm:$0xff]
      %v317 = vld [vmem:[%s242 + $0x10] sm:$0xff]
      %v318 = vld [vmem:[%s242 + $0x18] sm:$0xff]
      %v319 = vld [vmem:[%s242 + $0x20] sm:$0xff]
      %v320 = vld [vmem:[%s242 + $0x28] sm:$0xff]
      %v321 = vld [vmem:[%s242 + $0x30] sm:$0xff]
      %v322 = vld [vmem:[%s242 + $0x38] sm:$0xff]
      %v323 = vmax.f32 %v307, %v315
      %v324 = vmax.f32 %v308, %v316
      %v325 = vmax.f32 %v309, %v317
      %v326 = vmax.f32 %v310, %v318
      %v327 = vmax.f32 %v311, %v319
      %v328 = vmax.f32 %v312, %v320
      %v329 = vmax.f32 %v313, %v321
      %v330 = vmax.f32 %v314, %v322
      %s331 = scalar_lea.vmem %s242, 8
      %v332 = vld [vmem:[%s331] sm:$0xff]
      %v333 = vld [vmem:[%s331 + $0x8] sm:$0xff]
      %v334 = vld [vmem:[%s331 + $0x10] sm:$0xff]
      %v335 = vld [vmem:[%s331 + $0x18] sm:$0xff]
      %v336 = vld [vmem:[%s331 + $0x20] sm:$0xff]
      %v337 = vld [vmem:[%s331 + $0x28] sm:$0xff]
      %v338 = vld [vmem:[%s331 + $0x30] sm:$0xff]
      %v339 = vld [vmem:[%s331 + $0x38] sm:$0xff]
      %v340 = vmax.f32 %v323, %v332
      %v341 = vmax.f32 %v324, %v333
      %v342 = vmax.f32 %v325, %v334
      %v343 = vmax.f32 %v326, %v335
      %v344 = vmax.f32 %v327, %v336
      %v345 = vmax.f32 %v328, %v337
      %v346 = vmax.f32 %v329, %v338
      %v347 = vmax.f32 %v330, %v339
      %v348 = vld [vmem:[%s247] sm:$0xff]
      %v349 = vld [vmem:[%s247 + $0x10] sm:$0xff]
      %v350 = vld [vmem:[%s247 + $0x20] sm:$0xff]
      %v351 = vld [vmem:[%s247 + $0x30] sm:$0xff]
      %v352 = vld [vmem:[%s247 + $0x40] sm:$0xff]
      %v353 = vld [vmem:[%s247 + $0x50] sm:$0xff]
      %v354 = vld [vmem:[%s247 + $0x60] sm:$0xff]
      %v355 = vld [vmem:[%s247 + $0x70] sm:$0xff]
      %v356 = vmax.f32 %v340, %v348
      %v357 = vmax.f32 %v341, %v349
      %v358 = vmax.f32 %v342, %v350
      %v359 = vmax.f32 %v343, %v351
      %v360 = vmax.f32 %v344, %v352
      %v361 = vmax.f32 %v345, %v353
      %v362 = vmax.f32 %v346, %v354
      %v363 = vmax.f32 %v347, %v355
      %v364 = vld [vmem:[%s247 + $0x1] sm:$0xff]
      %v365 = vld [vmem:[%s247 + $0x11] sm:$0xff]
      %v366 = vld [vmem:[%s247 + $0x21] sm:$0xff]
      %v367 = vld [vmem:[%s247 + $0x31] sm:$0xff]
      %v368 = vld [vmem:[%s247 + $0x41] sm:$0xff]
      %v369 = vld [vmem:[%s247 + $0x51] sm:$0xff]
      %v370 = vld [vmem:[%s247 + $0x61] sm:$0xff]
      %v371 = vld [vmem:[%s247 + $0x71] sm:$0xff]
      %v372 = vmax.f32 %v356, %v364
      %v373 = vmax.f32 %v357, %v365
      %v374 = vmax.f32 %v358, %v366
      %v375 = vmax.f32 %v359, %v367
      %v376 = vmax.f32 %v360, %v368
      %v377 = vmax.f32 %v361, %v369
      %v378 = vmax.f32 %v362, %v370
      %v379 = vmax.f32 %v363, %v371
      %v380 = vld [vmem:[%s252] sm:$0xff]
      %v381 = vld [vmem:[%s252 + $0x8] sm:$0xff]
      %v382 = vld [vmem:[%s252 + $0x10] sm:$0xff]
      %v383 = vld [vmem:[%s252 + $0x18] sm:$0xff]
      %v384 = vld [vmem:[%s252 + $0x20] sm:$0xff]
      %v385 = vld [vmem:[%s252 + $0x28] sm:$0xff]
      %v386 = vld [vmem:[%s252 + $0x30] sm:$0xff]
      %v387 = vld [vmem:[%s252 + $0x38] sm:$0xff]
      %v388 = vmax.f32 %v372, %v380
      %v389 = vmax.f32 %v373, %v381
      %v390 = vmax.f32 %v374, %v382
      %v391 = vmax.f32 %v375, %v383
      %v392 = vmax.f32 %v376, %v384
      %v393 = vmax.f32 %v377, %v385
      %v394 = vmax.f32 %v378, %v386
      %v395 = vmax.f32 %v379, %v387
      %vm396 = vcmask 523264
      %397 = vst.msk [vmem:[%s257] sm:$0xff] %vm396, %v388
      %398 = vst.msk [vmem:[%s257 + $0x8] sm:$0xff] %vm396, %v389
      %399 = vst.msk [vmem:[%s257 + $0x10] sm:$0xff] %vm396, %v390
      %400 = vst.msk [vmem:[%s257 + $0x18] sm:$0xff] %vm396, %v391
      %401 = vst.msk [vmem:[%s257 + $0x20] sm:$0xff] %vm396, %v392
      %402 = vst.msk [vmem:[%s257 + $0x28] sm:$0xff] %vm396, %v393
      %403 = vst.msk [vmem:[%s257 + $0x30] sm:$0xff] %vm396, %v394
      %404 = vst.msk [vmem:[%s257 + $0x38] sm:$0xff] %vm396, %v395
      %p405 = scmp.lt.s32.totalorder %s15, 1
      %s406 = scalar_select %p405, %s15, 1
      %s407 = smul.addr %s406, 8
      %s408 = smul.addr %s407, 8
      %s409 = scalar_lea.vmem %s4, %s408
      // Predicated region
      $region37: #{googlenet_forward.17} parent=35 // pred_check
        %p410 = pneg %p137
      $region38: #{googlenet_forward.17} parent=35 // pred_check_branch
        %412 = sbr.rel (%p410) target = $region40
      $region39: #{googlenet_forward.17} parent=35 // pred_region
        _
      $region40: #{googlenet_forward.17} parent=35 // pred_fallthru
        _
    $region36: #{googlenet_forward.17} parent=5 // pred_fallthru
      _
    %p413 = scmp.le.s32.totalorder 2, %s10
    // Predicated region
    $region41: #{googlenet_forward.17} parent=5 // pred_check
      %p414 = pneg %p413
    $region42: #{googlenet_forward.17} parent=5 // pred_check_branch
      %416 = sbr.rel (%p414) target = $region44
    $region43: #{googlenet_forward.17} parent=5 // pred_region
      %s417 = ssub.s32 %s10, 2
      // Predicated region
      $region45: #{googlenet_forward.17} parent=43 // pred_check
        %p418 = pneg %p143
      $region46: #{googlenet_forward.17} parent=43 // pred_check_branch
        %420 = sbr.rel (%p418) target = $region48
      $region47: #{googlenet_forward.17} parent=43 // pred_region
        %p421 = scmp.lt.s32.totalorder %s16, 1
        %s422 = scalar_select %p421, %s16, 1
        %s423 = smul.addr %s422, 8
        %s424 = smul.addr %s423, 8
        %s425 = scalar_lea.vmem %s4, %s424
      $region48: #{googlenet_forward.17} parent=43 // pred_fallthru
        _
    $region44: #{googlenet_forward.17} parent=5 // pred_fallthru
      _
  $region6: #{googlenet_forward.17} parent=0 // loop_footer
    %s14 = sadd.s32 1, %s10
  $region7: #{googlenet_forward.17} parent=0 // loop_footer_branch
    %9 = sbr.rel target = $region3
  $region8: #{googlenet_forward.17} parent=0 // loop_exit
    _

// kernel: googlenet_forward.16
$region0: #{googlenet_forward.16}
  #allocation0 [shape = 'u32[]', space=smem, size = 0x4, offset = 0x4, fixed_abs, tag = 'smem constant byte address 0x4 - core index']
  #allocation1 [shape = 'u32[144,128]{1,0:T(1,128)}', space=vmem, size = 0x12000, scoped, tag = 'internal scratch']
  %s0 = inlined_call_operand.vmem [shape: bf16[512,147], index: 0, kind: input, shape index: {}]
  %s1 = inlined_call_operand.vmem [shape: bf16[147,64], index: 1, kind: input, shape index: {}]
  %s2 = inlined_call_operand.vmem [shape: f32[1,64], index: 2, kind: input, shape index: {}]
  %s3 = inlined_call_operand.vmem [shape: f32[512,64], index: 3, kind: output, shape index: {}]
  %s4 = sld [smem:[#allocation0]]
  $region22: #{googlenet_forward.16} parent=0
    _
  %s6 = ssub.s32 1, %s4
  %s7 = scalar_select 0, %s6, %s4
  // Predicated region
  $region2: #{googlenet_forward.16} parent=0 // pred_check
    _
  $region3: #{googlenet_forward.16} parent=0 // pred_check_branch
    %9 = sbr.rel (0) target = $region5
  $region4: #{googlenet_forward.16} parent=0 // pred_region
    _
  $region5: #{googlenet_forward.16} parent=0 // pred_fallthru
    _
  // Predicated region
  $region6: #{googlenet_forward.16} parent=0 // pred_check
    _
  $region7: #{googlenet_forward.16} parent=0 // pred_check_branch
    %11 = sbr.rel (0) target = $region9
  $region8: #{googlenet_forward.16} parent=0 // pred_region
    _
  $region9: #{googlenet_forward.16} parent=0 // pred_fallthru
    _
  // Predicated region
  $region10: #{googlenet_forward.16} parent=0 // pred_check
    _
  $region11: #{googlenet_forward.16} parent=0 // pred_check_branch
    %13 = sbr.rel (0) target = $region13
  $region12: #{googlenet_forward.16} parent=0 // pred_region
    _
  $region13: #{googlenet_forward.16} parent=0 // pred_fallthru
    _
  %v15 = vld [vmem:[%s0] sm:$0xff]
  %v16 = vld [vmem:[%s0 + $0x8] sm:$0xff]
  %v17 = vld [vmem:[%s0 + $0x10] sm:$0xff]
  %v18 = vld [vmem:[%s0 + $0x18] sm:$0xff]
  %v19 = vld [vmem:[%s0 + $0x20] sm:$0xff]
  %v20 = vld [vmem:[%s0 + $0x28] sm:$0xff]
  %v21 = vld [vmem:[%s0 + $0x30] sm:$0xff]
  %v22 = vld [vmem:[%s0 + $0x38] sm:$0xff]
  %v23 = vld [vmem:[%s0 + $0x40] sm:$0xff]
  %v24 = vld [vmem:[%s0 + $0x48] sm:$0xff]
  %v25 = vld [vmem:[%s0 + $0x50] sm:$0xff]
  %v26 = vld [vmem:[%s0 + $0x58] sm:$0xff]
  %v27 = vld [vmem:[%s0 + $0x60] sm:$0xff]
  %v28 = vld [vmem:[%s0 + $0x68] sm:$0xff]
  %v29 = vld [vmem:[%s0 + $0x70] sm:$0xff]
  %v30 = vld [vmem:[%s0 + $0x78] sm:$0xff]
  %v31 = vld [vmem:[%s0 + $0x80] sm:$0xff]
  %v32 = vld [vmem:[%s0 + $0x88] sm:$0xff]
  %v33 = vld [vmem:[%s0 + $0x90] sm:$0xff]
  %v34 = vld [vmem:[%s0 + $0x98] sm:$0xff]
  %v35 = vld [vmem:[%s0 + $0xa0] sm:$0xff]
  %v36 = vld [vmem:[%s0 + $0xa8] sm:$0xff]
  %v37 = vld [vmem:[%s0 + $0xb0] sm:$0xff]
  %v38 = vld [vmem:[%s0 + $0xb8] sm:$0xff]
  %v39 = vld [vmem:[%s0 + $0xc0] sm:$0xff]
  %v40 = vld [vmem:[%s0 + $0xc8] sm:$0xff]
  %v41 = vld [vmem:[%s0 + $0xd0] sm:$0xff]
  %v42 = vld [vmem:[%s0 + $0xd8] sm:$0xff]
  %v43 = vld [vmem:[%s0 + $0xe0] sm:$0xff]
  %v44 = vld [vmem:[%s0 + $0xe8] sm:$0xff]
  %v45 = vld [vmem:[%s0 + $0xf0] sm:$0xff]
  %v46 = vld [vmem:[%s0 + $0xf8] sm:$0xff]
  %v47 = vld [vmem:[%s0 + $0x100] sm:$0xff]
  %v48 = vld [vmem:[%s0 + $0x108] sm:$0xff]
  %v49 = vld [vmem:[%s0 + $0x110] sm:$0xff]
  %v50 = vld [vmem:[%s0 + $0x118] sm:$0xff]
  %v51 = vld [vmem:[%s0 + $0x120] sm:$0xff]
  %v52 = vld [vmem:[%s0 + $0x128] sm:$0xff]
  %v53 = vld [vmem:[%s0 + $0x130] sm:$0xff]
  %v54 = vld [vmem:[%s0 + $0x138] sm:$0xff]
  %v55 = vld [vmem:[%s0 + $0x140] sm:$0xff]
  %v56 = vld [vmem:[%s0 + $0x148] sm:$0xff]
  %v57 = vld [vmem:[%s0 + $0x150] sm:$0xff]
  %v58 = vld [vmem:[%s0 + $0x158] sm:$0xff]
  %v59 = vld [vmem:[%s0 + $0x160] sm:$0xff]
  %v60 = vld [vmem:[%s0 + $0x168] sm:$0xff]
  %v61 = vld [vmem:[%s0 + $0x170] sm:$0xff]
  %v62 = vld [vmem:[%s0 + $0x178] sm:$0xff]
  %v63 = vld [vmem:[%s0 + $0x180] sm:$0xff]
  %v64 = vld [vmem:[%s0 + $0x188] sm:$0xff]
  %v65 = vld [vmem:[%s0 + $0x190] sm:$0xff]
  %v66 = vld [vmem:[%s0 + $0x198] sm:$0xff]
  %v67 = vld [vmem:[%s0 + $0x1a0] sm:$0xff]
  %v68 = vld [vmem:[%s0 + $0x1a8] sm:$0xff]
  %v69 = vld [vmem:[%s0 + $0x1b0] sm:$0xff]
  %v70 = vld [vmem:[%s0 + $0x1b8] sm:$0xff]
  %v71 = vld [vmem:[%s0 + $0x1c0] sm:$0xff]
  %v72 = vld [vmem:[%s0 + $0x1c8] sm:$0xff]
  %v73 = vld [vmem:[%s0 + $0x1d0] sm:$0xff]
  %v74 = vld [vmem:[%s0 + $0x1d8] sm:$0xff]
  %v75 = vld [vmem:[%s0 + $0x1e0] sm:$0xff]
  %v76 = vld [vmem:[%s0 + $0x1e8] sm:$0xff]
  %v77 = vld [vmem:[%s0 + $0x1f0] sm:$0xff]
  %v78 = vld [vmem:[%s0 + $0x1f8] sm:$0xff]
  %v79 = vld [vmem:[%s1] sm:$0xf]
  %v80 = vld [vmem:[%s1 + $0x4] sm:$0xf]
  %v81 = vld [vmem:[%s1 + $0x8] sm:$0xf]
  %v82 = vld [vmem:[%s1 + $0xc] sm:$0xf]
  %v83 = vld [vmem:[%s1 + $0x10] sm:$0xf]
  %v84 = vld [vmem:[%s1 + $0x14] sm:$0xf]
  %v85 = vld [vmem:[%s1 + $0x18] sm:$0xf]
  %v86 = vld [vmem:[%s1 + $0x1c] sm:$0xf]
  %v87 = vld [vmem:[%s1 + $0x20] sm:$0xf]
  %v88 = vld [vmem:[%s1 + $0x24] sm:$0xf]
  %v89 = vld [vmem:[%s1 + $0x28] sm:$0xf]
  %v90 = vld [vmem:[%s1 + $0x2c] sm:$0xf]
  %v91 = vld [vmem:[%s1 + $0x30] sm:$0xf]
  %v92 = vld [vmem:[%s1 + $0x34] sm:$0xf]
  %v93 = vld [vmem:[%s1 + $0x38] sm:$0xf]
  %v94 = vld [vmem:[%s1 + $0x3c] sm:$0xf]
  %v95 = vld [vmem:[%s1 + $0x40] sm:$0xf]
  %v96 = vld [vmem:[%s1 + $0x44] sm:$0xf]
  %v97 = vld [vmem:[%s1 + $0x48] sm:$0x3]
  %v98 = vld [vmem:[%s2] sm:$0x1]
  %v100 = vlaneseq
  %v101 = vshrl.u32 %v100, 7
  %v102 = vsub.s32 0, %v101
  %v103 = vrot.slane %v98, %v102
  %v169 = vunpack.c.l.b16 %v15
  %v170 = vunpack.c.h.b16 %v15
  %v171 = vunpack.c.l.b16 %v16
  %v172 = vunpack.c.h.b16 %v16
  %v173 = vunpack.c.l.b16 %v17
  %v174 = vunpack.c.h.b16 %v17
  %v175 = vunpack.c.l.b16 %v18
  %v176 = vunpack.c.h.b16 %v18
  %v177 = vunpack.c.l.b16 %v19
  %v178 = vunpack.c.h.b16 %v19
  %v179 = vunpack.c.l.b16 %v20
  %v180 = vunpack.c.h.b16 %v20
  %v181 = vunpack.c.l.b16 %v21
  %v182 = vunpack.c.h.b16 %v21
  %v183 = vunpack.c.l.b16 %v22
  %v184 = vunpack.c.h.b16 %v22
  %v185 = vunpack.c.l.b16 %v23
  %v186 = vunpack.c.h.b16 %v23
  %v187 = vunpack.c.l.b16 %v24
  %v188 = vunpack.c.h.b16 %v24
  %v189 = vunpack.c.l.b16 %v25
  %v190 = vunpack.c.h.b16 %v25
  %v191 = vunpack.c.l.b16 %v26
  %v192 = vunpack.c.h.b16 %v26
  %v193 = vunpack.c.l.b16 %v27
  %v194 = vunpack.c.h.b16 %v27
  %v195 = vunpack.c.l.b16 %v28
  %v196 = vunpack.c.h.b16 %v28
  %v197 = vunpack.c.l.b16 %v29
  %v198 = vunpack.c.h.b16 %v29
  %v199 = vunpack.c.l.b16 %v30
  %v200 = vunpack.c.h.b16 %v30
  %v201 = vunpack.c.l.b16 %v31
  %v202 = vunpack.c.h.b16 %v31
  %v203 = vunpack.c.l.b16 %v32
  %v204 = vunpack.c.h.b16 %v32
  %v205 = vunpack.c.l.b16 %v33
  %v206 = vunpack.c.h.b16 %v33
  %v207 = vunpack.c.l.b16 %v34
  %v208 = vunpack.c.h.b16 %v34
  %v209 = vunpack.c.l.b16 %v35
  %v210 = vunpack.c.h.b16 %v35
  %v211 = vunpack.c.l.b16 %v36
  %v212 = vunpack.c.h.b16 %v36
  %v213 = vunpack.c.l.b16 %v37
  %v214 = vunpack.c.h.b16 %v37
  %v215 = vunpack.c.l.b16 %v38
  %v216 = vunpack.c.h.b16 %v38
  %v217 = vunpack.c.l.b16 %v39
  %v218 = vunpack.c.h.b16 %v39
  %v219 = vunpack.c.l.b16 %v40
  %v220 = vunpack.c.h.b16 %v40
  %v221 = vunpack.c.l.b16 %v41
  %v222 = vunpack.c.h.b16 %v41
  %v223 = vunpack.c.l.b16 %v42
  %v224 = vunpack.c.h.b16 %v42
  %v225 = vunpack.c.l.b16 %v43
  %v226 = vunpack.c.h.b16 %v43
  %v227 = vunpack.c.l.b16 %v44
  %v228 = vunpack.c.h.b16 %v44
  %v229 = vunpack.c.l.b16 %v45
  %v230 = vunpack.c.h.b16 %v45
  %v231 = vunpack.c.l.b16 %v46
  %v232 = vunpack.c.h.b16 %v46
  %v233 = vunpack.c.l.b16 %v47
  %v234 = vunpack.c.h.b16 %v47
  %v235 = vunpack.c.l.b16 %v48
  %v236 = vunpack.c.h.b16 %v48
  %v237 = vunpack.c.l.b16 %v49
  %v238 = vunpack.c.h.b16 %v49
  %v239 = vunpack.c.l.b16 %v50
  %v240 = vunpack.c.h.b16 %v50
  %v241 = vunpack.c.l.b16 %v51
  %v242 = vunpack.c.h.b16 %v51
  %v243 = vunpack.c.l.b16 %v52
  %v244 = vunpack.c.h.b16 %v52
  %v245 = vunpack.c.l.b16 %v53
  %v246 = vunpack.c.h.b16 %v53
  %v247 = vunpack.c.l.b16 %v54
  %v248 = vunpack.c.h.b16 %v54
  %v249 = vunpack.c.l.b16 %v55
  %v250 = vunpack.c.h.b16 %v55
  %v251 = vunpack.c.l.b16 %v56
  %v252 = vunpack.c.h.b16 %v56
  %v253 = vunpack.c.l.b16 %v57
  %v254 = vunpack.c.h.b16 %v57
  %v255 = vunpack.c.l.b16 %v58
  %v256 = vunpack.c.h.b16 %v58
  %v257 = vunpack.c.l.b16 %v59
  %v258 = vunpack.c.h.b16 %v59
  %v259 = vunpack.c.l.b16 %v60
  %v260 = vunpack.c.h.b16 %v60
  %v261 = vunpack.c.l.b16 %v61
  %v262 = vunpack.c.h.b16 %v61
  %v263 = vunpack.c.l.b16 %v62
  %v264 = vunpack.c.h.b16 %v62
  %v265 = vunpack.c.l.b16 %v63
  %v266 = vunpack.c.h.b16 %v63
  %v267 = vunpack.c.l.b16 %v64
  %v268 = vunpack.c.h.b16 %v64
  %v269 = vunpack.c.l.b16 %v65
  %v270 = vunpack.c.h.b16 %v65
  %v271 = vunpack.c.l.b16 %v66
  %v272 = vunpack.c.h.b16 %v66
  %v273 = vunpack.c.l.b16 %v67
  %v274 = vunpack.c.h.b16 %v67
  %v275 = vunpack.c.l.b16 %v68
  %v276 = vunpack.c.h.b16 %v68
  %v277 = vunpack.c.l.b16 %v69
  %v278 = vunpack.c.h.b16 %v69
  %v279 = vunpack.c.l.b16 %v70
  %v280 = vunpack.c.h.b16 %v70
  %v281 = vunpack.c.l.b16 %v71
  %v282 = vunpack.c.h.b16 %v71
  %v283 = vunpack.c.l.b16 %v72
  %v284 = vunpack.c.h.b16 %v72
  %v285 = vunpack.c.l.b16 %v73
  %v286 = vunpack.c.h.b16 %v73
  %v287 = vunpack.c.l.b16 %v74
  %v288 = vunpack.c.h.b16 %v74
  %v289 = vunpack.c.l.b16 %v75
  %v290 = vunpack.c.h.b16 %v75
  %v291 = vunpack.c.l.b16 %v76
  %v292 = vunpack.c.h.b16 %v76
  %v293 = vunpack.c.l.b16 %v77
  %v294 = vunpack.c.h.b16 %v77
  %v295 = vunpack.c.l.b16 %v78
  %v296 = vunpack.c.h.b16 %v78
  %v297 = vpack.c.b16 %v171, %v169
  %v298 = vpack.c.b16 %v172, %v170
  %v299 = vpack.c.b16 %v175, %v173
  %v300 = vpack.c.b16 %v176, %v174
  %v301 = vpack.c.b16 %v179, %v177
  %v302 = vpack.c.b16 %v180, %v178
  %v303 = vpack.c.b16 %v183, %v181
  %v304 = vpack.c.b16 %v184, %v182
  %v305 = vpack.c.b16 %v187, %v185
  %v306 = vpack.c.b16 %v188, %v186
  %v307 = vpack.c.b16 %v191, %v189
  %v308 = vpack.c.b16 %v192, %v190
  %v309 = vpack.c.b16 %v195, %v193
  %v310 = vpack.c.b16 %v196, %v194
  %v311 = vpack.c.b16 %v199, %v197
  %v312 = vpack.c.b16 %v200, %v198
  %v313 = vpack.c.b16 %v203, %v201
  %v314 = vpack.c.b16 %v204, %v202
  %v315 = vpack.c.b16 %v207, %v205
  %v316 = vpack.c.b16 %v208, %v206
  %v317 = vpack.c.b16 %v211, %v209
  %v318 = vpack.c.b16 %v212, %v210
  %v319 = vpack.c.b16 %v215, %v213
  %v320 = vpack.c.b16 %v216, %v214
  %v321 = vpack.c.b16 %v219, %v217
  %v322 = vpack.c.b16 %v220, %v218
  %v323 = vpack.c.b16 %v223, %v221
  %v324 = vpack.c.b16 %v224, %v222
  %v325 = vpack.c.b16 %v227, %v225
  %v326 = vpack.c.b16 %v228, %v226
  %v327 = vpack.c.b16 %v231, %v229
  %v328 = vpack.c.b16 %v232, %v230
  %v329 = vpack.c.b16 %v235, %v233
  %v330 = vpack.c.b16 %v236, %v234
  %v331 = vpack.c.b16 %v239, %v237
  %v332 = vpack.c.b16 %v240, %v238
  %v333 = vpack.c.b16 %v243, %v241
  %v334 = vpack.c.b16 %v244, %v242
  %v335 = vpack.c.b16 %v247, %v245
  %v336 = vpack.c.b16 %v248, %v246
  %v337 = vpack.c.b16 %v251, %v249
  %v338 = vpack.c.b16 %v252, %v250
  %v339 = vpack.c.b16 %v255, %v253
  %v340 = vpack.c.b16 %v256, %v254
  %v341 = vpack.c.b16 %v259, %v257
  %v342 = vpack.c.b16 %v260, %v258
  %v343 = vpack.c.b16 %v263, %v261
  %v344 = vpack.c.b16 %v264, %v262
  %v345 = vpack.c.b16 %v267, %v265
  %v346 = vpack.c.b16 %v268, %v266
  %v347 = vpack.c.b16 %v271, %v269
  %v348 = vpack.c.b16 %v272, %v270
  %v349 = vpack.c.b16 %v275, %v273
  %v350 = vpack.c.b16 %v276, %v274
  %v351 = vpack.c.b16 %v279, %v277
  %v352 = vpack.c.b16 %v280, %v278
  %v353 = vpack.c.b16 %v283, %v281
  %v354 = vpack.c.b16 %v284, %v282
  %v355 = vpack.c.b16 %v287, %v285
  %v356 = vpack.c.b16 %v288, %v286
  %v357 = vpack.c.b16 %v291, %v289
  %v358 = vpack.c.b16 %v292, %v290
  %v359 = vpack.c.b16 %v295, %v293
  %v360 = vpack.c.b16 %v296, %v294
  %v412 = vunpack.c.l.b16 %v79
  %v413 = vunpack.c.l.b16 %v80
  %v414 = vunpack.c.l.b16 %v81
  %v415 = vunpack.c.l.b16 %v82
  %v416 = vunpack.c.l.b16 %v83
  %v417 = vunpack.c.l.b16 %v84
  %v418 = vunpack.c.l.b16 %v85
  %v419 = vunpack.c.l.b16 %v86
  %v420 = vunpack.c.l.b16 %v87
  %v421 = vunpack.c.l.b16 %v88
  %v422 = vunpack.c.l.b16 %v89
  %v423 = vunpack.c.l.b16 %v90
  %v424 = vunpack.c.l.b16 %v91
  %v425 = vunpack.c.l.b16 %v92
  %v426 = vunpack.c.l.b16 %v93
  %v427 = vunpack.c.l.b16 %v94
  %v428 = vunpack.c.l.b16 %v95
  %v429 = vunpack.c.l.b16 %v96
  %v430 = vunpack.c.l.b16 %v97
  %v431 = vpack.c.b16 %v413, %v412
  %v432 = vpack.c.b16 %v415, %v414
  %v433 = vpack.c.b16 %v417, %v416
  %v434 = vpack.c.b16 %v419, %v418
  %v435 = vpack.c.b16 %v421, %v420
  %v436 = vpack.c.b16 %v423, %v422
  %v437 = vpack.c.b16 %v425, %v424
  %v438 = vpack.c.b16 %v427, %v426
  %v439 = vpack.c.b16 %v429, %v428
  %v440 = vpack.c.b16 %v430, %v430
  %vm450 = vcmask 154624
  %v452 = vsel %vm450, %v298, 0
  %v455 = vsel %vm450, %v300, 0
  %v458 = vsel %vm450, %v302, 0
  %v461 = vsel %vm450, %v304, 0
  %v464 = vsel %vm450, %v306, 0
  %v467 = vsel %vm450, %v308, 0
  %v470 = vsel %vm450, %v310, 0
  %v473 = vsel %vm450, %v312, 0
  %v476 = vsel %vm450, %v314, 0
  %v479 = vsel %vm450, %v316, 0
  %v482 = vsel %vm450, %v318, 0
  %v485 = vsel %vm450, %v320, 0
  %v488 = vsel %vm450, %v322, 0
  %v491 = vsel %vm450, %v324, 0
  %v494 = vsel %vm450, %v326, 0
  %v497 = vsel %vm450, %v328, 0
  %v500 = vsel %vm450, %v330, 0
  %v503 = vsel %vm450, %v332, 0
  %v506 = vsel %vm450, %v334, 0
  %v509 = vsel %vm450, %v336, 0
  %v512 = vsel %vm450, %v338, 0
  %v515 = vsel %vm450, %v340, 0
  %v518 = vsel %vm450, %v342, 0
  %v521 = vsel %vm450, %v344, 0
  %v524 = vsel %vm450, %v346, 0
  %v527 = vsel %vm450, %v348, 0
  %v530 = vsel %vm450, %v350, 0
  %v533 = vsel %vm450, %v352, 0
  %v536 = vsel %vm450, %v354, 0
  %v539 = vsel %vm450, %v356, 0
  %v542 = vsel %vm450, %v358, 0
  %v545 = vsel %vm450, %v360, 0
  %vm547 = vcmask 1040384
  %vm548 = vcmask 1041408
  %v549 = vsel %vm547, 4294967295, 65535
  %v550 = vsel %vm548, %v549, 0
  %v552 = vand.u32 %v440, %v550
  %554 = vmatprep.subr.bf16.mxu0 0
  %555 = vmatpush1.bf16.msra.mxu0 %v431
  %556 = vmatprep.subr.bf16.mxu0 0
  %557 = vmatpush1.bf16.msra.mxu0 %v432
  %558 = vmatprep.subr.bf16.mxu0 0
  %559 = vmatpush1.bf16.msra.mxu0 %v433
  %560 = vmatprep.subr.bf16.mxu0 0
  %561 = vmatpush1.bf16.msra.mxu0 %v434
  %562 = vmatprep.subr.bf16.mxu0 0
  %563 = vmatpush1.bf16.msra.mxu0 %v435
  %564 = vmatprep.subr.bf16.mxu0 0
  %565 = vmatpush1.bf16.msra.mxu0 %v436
  %566 = vmatprep.subr.bf16.mxu0 0
  %567 = vmatpush1.bf16.msra.mxu0 %v437
  %568 = vmatprep.subr.bf16.mxu0 0
  %569 = vmatpush1.bf16.msra.mxu0 %v438
  %570 = vmatprep.subr.bf16.mxu0 0
  %571 = vmatpush1.bf16.msra.mxu0 %v439
  %572 = vmatprep.subr.bf16.mxu0 0
  %573 = vmatpush1.bf16.msra.mxu0 %v552
  %574 = vmatprep.subr.bf16.mxu0 0
  %575 = vmatpush1.bf16.msra.mxu0 0
  %576 = vmatprep.subr.bf16.mxu0 0
  %577 = vmatpush1.bf16.msra.mxu0 0
  %578 = vmatprep.subr.bf16.mxu0 0
  %579 = vmatpush1.bf16.msra.mxu0 0
  %580 = vmatprep.subr.bf16.mxu0 0
  %581 = vmatpush1.bf16.msra.mxu0 0
  %582 = vmatprep.subr.bf16.mxu0 0
  %583 = vmatpush1.bf16.msra.mxu0 0
  %584 = vmatprep.subr.bf16.mxu0 0
  %585 = vmatpush1.bf16.msra.mxu0 0
  %586 = vmatprep.mubr.bf16.mxu0 %v452
  %587 = vmatmul.mubr.bf16.gmra.mrb[0].mxu0 %v297
  %v588 = vpop.f32.mrb[0].mxu0
  %v589 = vadd.f32 %v103, %v588
  %v590 = vpop.f32.mrb[0].mxu0
  %v591 = vpop.f32.mrb[0].mxu0
  %v592 = vadd.f32 %v103, %v591
  %v593 = vpop.f32.mrb[0].mxu0
  %594 = vmatprep.mubr.bf16.mxu0 %v455
  %595 = vmatmul.mubr.bf16.gmra.mrb[0].mxu0 %v299
  %v596 = vpop.f32.mrb[0].mxu0
  %v597 = vadd.f32 %v103, %v596
  %v598 = vpop.f32.mrb[0].mxu0
  %v599 = vpop.f32.mrb[0].mxu0
  %v600 = vadd.f32 %v103, %v599
  %v601 = vpop.f32.mrb[0].mxu0
  %602 = vmatprep.mubr.bf16.mxu0 %v458
  %603 = vmatmul.mubr.bf16.gmra.mrb[0].mxu0 %v301
  %v604 = vpop.f32.mrb[0].mxu0
  %v605 = vadd.f32 %v103, %v604
  %v606 = vpop.f32.mrb[0].mxu0
  %v607 = vpop.f32.mrb[0].mxu0
  %v608 = vadd.f32 %v103, %v607
  %v609 = vpop.f32.mrb[0].mxu0
  %610 = vmatprep.mubr.bf16.mxu0 %v461
  %611 = vmatmul.mubr.bf16.gmra.mrb[0].mxu0 %v303
  %v612 = vpop.f32.mrb[0].mxu0
  %v613 = vadd.f32 %v103, %v612
  %v614 = vpop.f32.mrb[0].mxu0
  %v615 = vpop.f32.mrb[0].mxu0
  %v616 = vadd.f32 %v103, %v615
  %v617 = vpop.f32.mrb[0].mxu0
  %618 = vmatprep.mubr.bf16.mxu0 %v464
  %619 = vmatmul.mubr.bf16.gmra.mrb[0].mxu0 %v305
  %v620 = vpop.f32.mrb[0].mxu0
  %v621 = vadd.f32 %v103, %v620
  %v622 = vpop.f32.mrb[0].mxu0
  %v623 = vpop.f32.mrb[0].mxu0
  %v624 = vadd.f32 %v103, %v623
  %v625 = vpop.f32.mrb[0].mxu0
  %626 = vmatprep.mubr.bf16.mxu0 %v467
  %627 = vmatmul.mubr.bf16.gmra.mrb[0].mxu0 %v307
  %v628 = vpop.f32.mrb[0].mxu0
  %v629 = vadd.f32 %v103, %v628
  %v630 = vpop.f32.mrb[0].mxu0
  %v631 = vpop.f32.mrb[0].mxu0
  %v632 = vadd.f32 %v103, %v631
  %v633 = vpop.f32.mrb[0].mxu0
  %634 = vmatprep.mubr.bf16.mxu0 %v470
  %635 = vmatmul.mubr.bf16.gmra.mrb[0].mxu0 %v309
  %v636 = vpop.f32.mrb[0].mxu0
  %v637 = vadd.f32 %v103, %v636
  %v638 = vpop.f32.mrb[0].mxu0
  %v639 = vpop.f32.mrb[0].mxu0
  %v640 = vadd.f32 %v103, %v639
  %v641 = vpop.f32.mrb[0].mxu0
  %642 = vmatprep.mubr.bf16.mxu0 %v473
  %643 = vmatmul.mubr.bf16.gmra.mrb[0].mxu0 %v311
  %v644 = vpop.f32.mrb[0].mxu0
  %v645 = vadd.f32 %v103, %v644
  %v646 = vpop.f32.mrb[0].mxu0
  %v647 = vpop.f32.mrb[0].mxu0
  %v648 = vadd.f32 %v103, %v647
  %v649 = vpop.f32.mrb[0].mxu0
  %650 = vmatprep.mubr.bf16.mxu0 %v476
  %651 = vmatmul.mubr.bf16.gmra.mrb[0].mxu0 %v313
  %v652 = vpop.f32.mrb[0].mxu0
  %v653 = vadd.f32 %v103, %v652
  %v654 = vpop.f32.mrb[0].mxu0
  %v655 = vpop.f32.mrb[0].mxu0
  %v656 = vadd.f32 %v103, %v655
  %v657 = vpop.f32.mrb[0].mxu0
  %658 = vmatprep.mubr.bf16.mxu0 %v479
  %659 = vmatmul.mubr.bf16.gmra.mrb[0].mxu0 %v315
  %v660 = vpop.f32.mrb[0].mxu0
  %v661 = vadd.f32 %v103, %v660
  %v662 = vpop.f32.mrb[0].mxu0
  %v663 = vpop.f32.mrb[0].mxu0
  %v664 = vadd.f32 %v103, %v663
  %v665 = vpop.f32.mrb[0].mxu0
  %666 = vmatprep.mubr.bf16.mxu0 %v482
  %667 = vmatmul.mubr.bf16.gmra.mrb[0].mxu0 %v317
  %v668 = vpop.f32.mrb[0].mxu0
  %v669 = vadd.f32 %v103, %v668
  %v670 = vpop.f32.mrb[0].mxu0
  %v671 = vpop.f32.mrb[0].mxu0
  %v672 = vadd.f32 %v103, %v671
  %v673 = vpop.f32.mrb[0].mxu0
  %674 = vmatprep.mubr.bf16.mxu0 %v485
  %675 = vmatmul.mubr.bf16.gmra.mrb[0].mxu0 %v319
  %v676 = vpop.f32.mrb[0].mxu0
  %v677 = vadd.f32 %v103, %v676
  %v678 = vpop.f32.mrb[0].mxu0
  %v679 = vpop.f32.mrb[0].mxu0
  %v680 = vadd.f32 %v103, %v679
  %v681 = vpop.f32.mrb[0].mxu0
  %682 = vmatprep.mubr.bf16.mxu0 %v488
  %683 = vmatmul.mubr.bf16.gmra.mrb[0].mxu0 %v321
  %v684 = vpop.f32.mrb[0].mxu0
  %v685 = vadd.f32 %v103, %v684
  %v686 = vpop.f32.mrb[0].mxu0
  %v687 = vpop.f32.mrb[0].mxu0
  %v688 = vadd.f32 %v103, %v687
  %v689 = vpop.f32.mrb[0].mxu0
  %690 = vmatprep.mubr.bf16.mxu0 %v491
  %691 = vmatmul.mubr.bf16.gmra.mrb[0].mxu0 %v323
  %v692 = vpop.f32.mrb[0].mxu0
  %v693 = vadd.f32 %v103, %v692
  %v694 = vpop.f32.mrb[0].mxu0
  %v695 = vpop.f32.mrb[0].mxu0
  %v696 = vadd.f32 %v103, %v695
  %v697 = vpop.f32.mrb[0].mxu0
  %698 = vmatprep.mubr.bf16.mxu0 %v494
  %699 = vmatmul.mubr.bf16.gmra.mrb[0].mxu0 %v325
  %v700 = vpop.f32.mrb[0].mxu0
  %v701 = vadd.f32 %v103, %v700
  %v702 = vpop.f32.mrb[0].mxu0
  %v703 = vpop.f32.mrb[0].mxu0
  %v704 = vadd.f32 %v103, %v703
  %v705 = vpop.f32.mrb[0].mxu0
  %706 = vmatprep.mubr.bf16.mxu0 %v497
  %707 = vmatmul.mubr.bf16.gmra.mrb[0].mxu0 %v327
  %v708 = vpop.f32.mrb[0].mxu0
  %v709 = vadd.f32 %v103, %v708
  %v710 = vpop.f32.mrb[0].mxu0
  %v711 = vpop.f32.mrb[0].mxu0
  %v712 = vadd.f32 %v103, %v711
  %v713 = vpop.f32.mrb[0].mxu0
  %714 = vmatprep.mubr.bf16.mxu0 %v500
  %715 = vmatmul.mubr.bf16.gmra.mrb[0].mxu0 %v329
  %v716 = vpop.f32.mrb[0].mxu0
  %v717 = vadd.f32 %v103, %v716
  %v718 = vpop.f32.mrb[0].mxu0
  %v719 = vpop.f32.mrb[0].mxu0
  %v720 = vadd.f32 %v103, %v719
  %v721 = vpop.f32.mrb[0].mxu0
  %722 = vmatprep.mubr.bf16.mxu0 %v503
  %723 = vmatmul.mubr.bf16.gmra.mrb[0].mxu0 %v331
  %v724 = vpop.f32.mrb[0].mxu0
  %v725 = vadd.f32 %v103, %v724
  %v726 = vpop.f32.mrb[0].mxu0
  %v727 = vpop.f32.mrb[0].mxu0
  %v728 = vadd.f32 %v103, %v727
  %v729 = vpop.f32.mrb[0].mxu0
  %730 = vmatprep.mubr.bf16.mxu0 %v506
  %731 = vmatmul.mubr.bf16.gmra.mrb[0].mxu0 %v333
  %v732 = vpop.f32.mrb[0].mxu0
  %v733 = vadd.f32 %v103, %v732
  %v734 = vpop.f32.mrb[0].mxu0
  %v735 = vpop.f32.mrb[0].mxu0
  %v736 = vadd.f32 %v103, %v735
  %v737 = vpop.f32.mrb[0].mxu0
  %738 = vmatprep.mubr.bf16.mxu0 %v509
  %739 = vmatmul.mubr.bf16.gmra.mrb[0].mxu0 %v335
  %v740 = vpop.f32.mrb[0].mxu0
  %v741 = vadd.f32 %v103, %v740
  %v742 = vpop.f32.mrb[0].mxu0
  %v743 = vpop.f32.mrb[0].mxu0
  %v744 = vadd.f32 %v103, %v743
  %v745 = vpop.f32.mrb[0].mxu0
  %746 = vmatprep.mubr.bf16.mxu0 %v512
  %747 = vmatmul.mubr.bf16.gmra.mrb[0].mxu0 %v337
  %v748 = vpop.f32.mrb[0].mxu0
  %v749 = vadd.f32 %v103, %v748
  %v750 = vpop.f32.mrb[0].mxu0
  %v751 = vpop.f32.mrb[0].mxu0
  %v752 = vadd.f32 %v103, %v751
  %v753 = vpop.f32.mrb[0].mxu0
  %754 = vmatprep.mubr.bf16.mxu0 %v515
  %755 = vmatmul.mubr.bf16.gmra.mrb[0].mxu0 %v339
  %v756 = vpop.f32.mrb[0].mxu0
  %v757 = vadd.f32 %v103, %v756
  %v758 = vpop.f32.mrb[0].mxu0
  %v759 = vpop.f32.mrb[0].mxu0
  %v760 = vadd.f32 %v103, %v759
  %v761 = vpop.f32.mrb[0].mxu0
  %762 = vmatprep.mubr.bf16.mxu0 %v518
  %763 = vmatmul.mubr.bf16.gmra.mrb[0].mxu0 %v341
  %v764 = vpop.f32.mrb[0].mxu0
  %v765 = vadd.f32 %v103, %v764
  %v766 = vpop.f32.mrb[0].mxu0
  %v767 = vpop.f32.mrb[0].mxu0
  %v768 = vadd.f32 %v103, %v767
  %v769 = vpop.f32.mrb[0].mxu0
  %770 = vmatprep.mubr.bf16.mxu0 %v521
  %771 = vmatmul.mubr.bf16.gmra.mrb[0].mxu0 %v343
  %v772 = vpop.f32.mrb[0].mxu0
  %v773 = vadd.f32 %v103, %v772
  %v774 = vpop.f32.mrb[0].mxu0
  %v775 = vpop.f32.mrb[0].mxu0
  %v776 = vadd.f32 %v103, %v775
  %v777 = vpop.f32.mrb[0].mxu0
  %778 = vmatprep.mubr.bf16.mxu0 %v524
  %779 = vmatmul.mubr.bf16.gmra.mrb[0].mxu0 %v345
  %v780 = vpop.f32.mrb[0].mxu0
  %v781 = vadd.f32 %v103, %v780
  %v782 = vpop.f32.mrb[0].mxu0
  %v783 = vpop.f32.mrb[0].mxu0
  %v784 = vadd.f32 %v103, %v783
  %v785 = vpop.f32.mrb[0].mxu0
  %786 = vmatprep.mubr.bf16.mxu0 %v527
  %787 = vmatmul.mubr.bf16.gmra.mrb[0].mxu0 %v347
  %v788 = vpop.f32.mrb[0].mxu0
  %v789 = vadd.f32 %v103, %v788
  %v790 = vpop.f32.mrb[0].mxu0
  %v791 = vpop.f32.mrb[0].mxu0
  %v792 = vadd.f32 %v103, %v791
  %v793 = vpop.f32.mrb[0].mxu0
  %794 = vmatprep.mubr.bf16.mxu0 %v530
  %795 = vmatmul.mubr.bf16.gmra.mrb[0].mxu0 %v349
  %v796 = vpop.f32.mrb[0].mxu0
  %v797 = vadd.f32 %v103, %v796
  %v798 = vpop.f32.mrb[0].mxu0
  %v799 = vpop.f32.mrb[0].mxu0
  %v800 = vadd.f32 %v103, %v799
  %v801 = vpop.f32.mrb[0].mxu0
  %802 = vmatprep.mubr.bf16.mxu0 %v533
  %803 = vmatmul.mubr.bf16.gmra.mrb[0].mxu0 %v351
  %v804 = vpop.f32.mrb[0].mxu0
  %v805 = vadd.f32 %v103, %v804
  %v806 = vpop.f32.mrb[0].mxu0
  %v807 = vpop.f32.mrb[0].mxu0
  %v808 = vadd.f32 %v103, %v807
  %v809 = vpop.f32.mrb[0].mxu0
  %810 = vmatprep.mubr.bf16.mxu0 %v536
  %811 = vmatmul.mubr.bf16.gmra.mrb[0].mxu0 %v353
  %v812 = vpop.f32.mrb[0].mxu0
  %v813 = vadd.f32 %v103, %v812
  %v814 = vpop.f32.mrb[0].mxu0
  %v815 = vpop.f32.mrb[0].mxu0
  %v816 = vadd.f32 %v103, %v815
  %v817 = vpop.f32.mrb[0].mxu0
  %818 = vmatprep.mubr.bf16.mxu0 %v539
  %819 = vmatmul.mubr.bf16.gmra.mrb[0].mxu0 %v355
  %v820 = vpop.f32.mrb[0].mxu0
  %v821 = vadd.f32 %v103, %v820
  %v822 = vpop.f32.mrb[0].mxu0
  %v823 = vpop.f32.mrb[0].mxu0
  %v824 = vadd.f32 %v103, %v823
  %v825 = vpop.f32.mrb[0].mxu0
  %826 = vmatprep.mubr.bf16.mxu0 %v542
  %827 = vmatmul.mubr.bf16.gmra.mrb[0].mxu0 %v357
  %v828 = vpop.f32.mrb[0].mxu0
  %v829 = vadd.f32 %v103, %v828
  %v830 = vpop.f32.mrb[0].mxu0
  %v831 = vpop.f32.mrb[0].mxu0
  %v832 = vadd.f32 %v103, %v831
  %v833 = vpop.f32.mrb[0].mxu0
  %834 = vmatprep.mubr.bf16.mxu0 %v545
  %835 = vmatmul.mubr.bf16.gmra.mrb[0].mxu0 %v359
  %v836 = vpop.f32.mrb[0].mxu0
  %v837 = vadd.f32 %v103, %v836
  %v838 = vpop.f32.mrb[0].mxu0
  %v839 = vpop.f32.mrb[0].mxu0
  %v840 = vadd.f32 %v103, %v839
  %v841 = vpop.f32.mrb[0].mxu0
  %842 = vdwg.mxu0
  %v843 = vmax.f32 %v589, 0.0
  %v844 = vmax.f32 %v592, 0.0
  %v845 = vmax.f32 %v597, 0.0
  %v846 = vmax.f32 %v600, 0.0
  %v847 = vmax.f32 %v605, 0.0
  %v848 = vmax.f32 %v608, 0.0
  %v849 = vmax.f32 %v613, 0.0
  %v850 = vmax.f32 %v616, 0.0
  %v851 = vmax.f32 %v621, 0.0
  %v852 = vmax.f32 %v624, 0.0
  %v853 = vmax.f32 %v629, 0.0
  %v854 = vmax.f32 %v632, 0.0
  %v855 = vmax.f32 %v637, 0.0
  %v856 = vmax.f32 %v640, 0.0
  %v857 = vmax.f32 %v645, 0.0
  %v858 = vmax.f32 %v648, 0.0
  %v859 = vmax.f32 %v653, 0.0
  %v860 = vmax.f32 %v656, 0.0
  %v861 = vmax.f32 %v661, 0.0
  %v862 = vmax.f32 %v664, 0.0
  %v863 = vmax.f32 %v669, 0.0
  %v864 = vmax.f32 %v672, 0.0
  %v865 = vmax.f32 %v677, 0.0
  %v866 = vmax.f32 %v680, 0.0
  %v867 = vmax.f32 %v685, 0.0
  %v868 = vmax.f32 %v688, 0.0
  %v869 = vmax.f32 %v693, 0.0
  %v870 = vmax.f32 %v696, 0.0
  %v871 = vmax.f32 %v701, 0.0
  %v872 = vmax.f32 %v704, 0.0
  %v873 = vmax.f32 %v709, 0.0
  %v874 = vmax.f32 %v712, 0.0
  %v875 = vmax.f32 %v717, 0.0
  %v876 = vmax.f32 %v720, 0.0
  %v877 = vmax.f32 %v725, 0.0
  %v878 = vmax.f32 %v728, 0.0
  %v879 = vmax.f32 %v733, 0.0
  %v880 = vmax.f32 %v736, 0.0
  %v881 = vmax.f32 %v741, 0.0
  %v882 = vmax.f32 %v744, 0.0
  %v883 = vmax.f32 %v749, 0.0
  %v884 = vmax.f32 %v752, 0.0
  %v885 = vmax.f32 %v757, 0.0
  %v886 = vmax.f32 %v760, 0.0
  %v887 = vmax.f32 %v765, 0.0
  %v888 = vmax.f32 %v768, 0.0
  %v889 = vmax.f32 %v773, 0.0
  %v890 = vmax.f32 %v776, 0.0
  %v891 = vmax.f32 %v781, 0.0
  %v892 = vmax.f32 %v784, 0.0
  %v893 = vmax.f32 %v789, 0.0
  %v894 = vmax.f32 %v792, 0.0
  %v895 = vmax.f32 %v797, 0.0
  %v896 = vmax.f32 %v800, 0.0
  %v897 = vmax.f32 %v805, 0.0
  %v898 = vmax.f32 %v808, 0.0
  %v899 = vmax.f32 %v813, 0.0
  %v900 = vmax.f32 %v816, 0.0
  %v901 = vmax.f32 %v821, 0.0
  %v902 = vmax.f32 %v824, 0.0
  %v903 = vmax.f32 %v829, 0.0
  %v904 = vmax.f32 %v832, 0.0
  %v905 = vmax.f32 %v837, 0.0
  %v906 = vmax.f32 %v840, 0.0
  %vm907 = vcmask 523264
  %908 = vst.msk [vmem:[%s3] sm:$0xff] %vm907, %v843
  %909 = vst.msk [vmem:[%s3 + $0x8] sm:$0xff] %vm907, %v844
  %910 = vst.msk [vmem:[%s3 + $0x10] sm:$0xff] %vm907, %v845
  %911 = vst.msk [vmem:[%s3 + $0x18] sm:$0xff] %vm907, %v846
  %912 = vst.msk [vmem:[%s3 + $0x20] sm:$0xff] %vm907, %v847
  %913 = vst.msk [vmem:[%s3 + $0x28] sm:$0xff] %vm907, %v848
  %914 = vst.msk [vmem:[%s3 + $0x30] sm:$0xff] %vm907, %v849
  %915 = vst.msk [vmem:[%s3 + $0x38] sm:$0xff] %vm907, %v850
  %916 = vst.msk [vmem:[%s3 + $0x40] sm:$0xff] %vm907, %v851
  %917 = vst.msk [vmem:[%s3 + $0x48] sm:$0xff] %vm907, %v852
  %918 = vst.msk [vmem:[%s3 + $0x50] sm:$0xff] %vm907, %v853
  %919 = vst.msk [vmem:[%s3 + $0x58] sm:$0xff] %vm907, %v854
  %920 = vst.msk [vmem:[%s3 + $0x60] sm:$0xff] %vm907, %v855
  %921 = vst.msk [vmem:[%s3 + $0x68] sm:$0xff] %vm907, %v856
  %922 = vst.msk [vmem:[%s3 + $0x70] sm:$0xff] %vm907, %v857
  %923 = vst.msk [vmem:[%s3 + $0x78] sm:$0xff] %vm907, %v858
  %924 = vst.msk [vmem:[%s3 + $0x80] sm:$0xff] %vm907, %v859
  %925 = vst.msk [vmem:[%s3 + $0x88] sm:$0xff] %vm907, %v860
  %926 = vst.msk [vmem:[%s3 + $0x90] sm:$0xff] %vm907, %v861
  %927 = vst.msk [vmem:[%s3 + $0x98] sm:$0xff] %vm907, %v862
  %928 = vst.msk [vmem:[%s3 + $0xa0] sm:$0xff] %vm907, %v863
  %929 = vst.msk [vmem:[%s3 + $0xa8] sm:$0xff] %vm907, %v864
  %930 = vst.msk [vmem:[%s3 + $0xb0] sm:$0xff] %vm907, %v865
  %931 = vst.msk [vmem:[%s3 + $0xb8] sm:$0xff] %vm907, %v866
  %932 = vst.msk [vmem:[%s3 + $0xc0] sm:$0xff] %vm907, %v867
  %933 = vst.msk [vmem:[%s3 + $0xc8] sm:$0xff] %vm907, %v868
  %934 = vst.msk [vmem:[%s3 + $0xd0] sm:$0xff] %vm907, %v869
  %935 = vst.msk [vmem:[%s3 + $0xd8] sm:$0xff] %vm907, %v870
  %936 = vst.msk [vmem:[%s3 + $0xe0] sm:$0xff] %vm907, %v871
  %937 = vst.msk [vmem:[%s3 + $0xe8] sm:$0xff] %vm907, %v872
  %938 = vst.msk [vmem:[%s3 + $0xf0] sm:$0xff] %vm907, %v873
  %939 = vst.msk [vmem:[%s3 + $0xf8] sm:$0xff] %vm907, %v874
  %940 = vst.msk [vmem:[%s3 + $0x100] sm:$0xff] %vm907, %v875
  %941 = vst.msk [vmem:[%s3 + $0x108] sm:$0xff] %vm907, %v876
  %942 = vst.msk [vmem:[%s3 + $0x110] sm:$0xff] %vm907, %v877
  %943 = vst.msk [vmem:[%s3 + $0x118] sm:$0xff] %vm907, %v878
  %944 = vst.msk [vmem:[%s3 + $0x120] sm:$0xff] %vm907, %v879
  %945 = vst.msk [vmem:[%s3 + $0x128] sm:$0xff] %vm907, %v880
  %946 = vst.msk [vmem:[%s3 + $0x130] sm:$0xff] %vm907, %v881
  %947 = vst.msk [vmem:[%s3 + $0x138] sm:$0xff] %vm907, %v882
  %948 = vst.msk [vmem:[%s3 + $0x140] sm:$0xff] %vm907, %v883
  %949 = vst.msk [vmem:[%s3 + $0x148] sm:$0xff] %vm907, %v884
  %950 = vst.msk [vmem:[%s3 + $0x150] sm:$0xff] %vm907, %v885
  %951 = vst.msk [vmem:[%s3 + $0x158] sm:$0xff] %vm907, %v886
  %952 = vst.msk [vmem:[%s3 + $0x160] sm:$0xff] %vm907, %v887
  %953 = vst.msk [vmem:[%s3 + $0x168] sm:$0xff] %vm907, %v888
  %954 = vst.msk [vmem:[%s3 + $0x170] sm:$0xff] %vm907, %v889
  %955 = vst.msk [vmem:[%s3 + $0x178] sm:$0xff] %vm907, %v890
  %956 = vst.msk [vmem:[%s3 + $0x180] sm:$0xff] %vm907, %v891
  %957 = vst.msk [vmem:[%s3 + $0x188] sm:$0xff] %vm907, %v892
  %958 = vst.msk [vmem:[%s3 + $0x190] sm:$0xff] %vm907, %v893
  %959 = vst.msk [vmem:[%s3 + $0x198] sm:$0xff] %vm907, %v894
  %960 = vst.msk [vmem:[%s3 + $0x1a0] sm:$0xff] %vm907, %v895
  %961 = vst.msk [vmem:[%s3 + $0x1a8] sm:$0xff] %vm907, %v896
  %962 = vst.msk [vmem:[%s3 + $0x1b0] sm:$0xff] %vm907, %v897
  %963 = vst.msk [vmem:[%s3 + $0x1b8] sm:$0xff] %vm907, %v898
  %964 = vst.msk [vmem:[%s3 + $0x1c0] sm:$0xff] %vm907, %v899
  %965 = vst.msk [vmem:[%s3 + $0x1c8] sm:$0xff] %vm907, %v900
  %966 = vst.msk [vmem:[%s3 + $0x1d0] sm:$0xff] %vm907, %v901
  %967 = vst.msk [vmem:[%s3 + $0x1d8] sm:$0xff] %vm907, %v902
  %968 = vst.msk [vmem:[%s3 + $0x1e0] sm:$0xff] %vm907, %v903
  %969 = vst.msk [vmem:[%s3 + $0x1e8] sm:$0xff] %vm907, %v904
  %970 = vst.msk [vmem:[%s3 + $0x1f0] sm:$0xff] %vm907, %v905
  %971 = vst.msk [vmem:[%s3 + $0x1f8] sm:$0xff] %vm907, %v906
  // Predicated region
  $region14: #{googlenet_forward.16} parent=0 // pred_check
    _
  $region15: #{googlenet_forward.16} parent=0 // pred_check_branch
    %973 = sbr.rel (0) target = $region17
  $region16: #{googlenet_forward.16} parent=0 // pred_region
    _
  $region17: #{googlenet_forward.16} parent=0 // pred_fallthru
    _
  // Predicated region
  $region18: #{googlenet_forward.16} parent=0 // pred_check
    _
  $region19: #{googlenet_forward.16} parent=0 // pred_check_branch
    %975 = sbr.rel (0) target = $region21
  $region20: #{googlenet_forward.16} parent=0 // pred_region
    _
  $region21: #{googlenet_forward.16} parent=0 // pred_fallthru
    _

// kernel: googlenet_forward.18
$region0: #{googlenet_forward.18}
  #allocation0 [shape = 'u32[]', space=smem, size = 0x4, offset = 0x4, fixed_abs, tag = 'smem constant byte address 0x4 - core index']
  #allocation1 [shape = 'u32[144,128]{1,0:T(1,128)}', space=vmem, size = 0x12000, scoped, tag = 'internal scratch']
  %s0 = inlined_call_operand.vmem [shape: bf16[128,64], index: 0, kind: input, shape index: {}]
  %s1 = inlined_call_operand.vmem [shape: bf16[64,64], index: 1, kind: input, shape index: {}]
  %s2 = inlined_call_operand.vmem [shape: f32[1,64], index: 2, kind: input, shape index: {}]
  %s3 = inlined_call_operand.vmem [shape: f32[128,64], index: 3, kind: output, shape index: {}]
  %s4 = sld [smem:[#allocation0]]
  $region22: #{googlenet_forward.18} parent=0
    _
  %s6 = ssub.s32 1, %s4
  %s7 = scalar_select 0, %s6, %s4
  // Predicated region
  $region2: #{googlenet_forward.18} parent=0 // pred_check
    _
  $region3: #{googlenet_forward.18} parent=0 // pred_check_branch
    %9 = sbr.rel (0) target = $region5
  $region4: #{googlenet_forward.18} parent=0 // pred_region
    _
  $region5: #{googlenet_forward.18} parent=0 // pred_fallthru
    _
  // Predicated region
  $region6: #{googlenet_forward.18} parent=0 // pred_check
    _
  $region7: #{googlenet_forward.18} parent=0 // pred_check_branch
    %11 = sbr.rel (0) target = $region9
  $region8: #{googlenet_forward.18} parent=0 // pred_region
    _
  $region9: #{googlenet_forward.18} parent=0 // pred_fallthru
    _
  // Predicated region
  $region10: #{googlenet_forward.18} parent=0 // pred_check
    _
  $region11: #{googlenet_forward.18} parent=0 // pred_check_branch
    %13 = sbr.rel (0) target = $region13
  $region12: #{googlenet_forward.18} parent=0 // pred_region
    _
  $region13: #{googlenet_forward.18} parent=0 // pred_fallthru
    _
  %v15 = vld [vmem:[%s0] sm:$0xf]
  %v16 = vld [vmem:[%s0 + $0x4] sm:$0xf]
  %v17 = vld [vmem:[%s0 + $0x8] sm:$0xf]
  %v18 = vld [vmem:[%s0 + $0xc] sm:$0xf]
  %v19 = vld [vmem:[%s0 + $0x10] sm:$0xf]
  %v20 = vld [vmem:[%s0 + $0x14] sm:$0xf]
  %v21 = vld [vmem:[%s0 + $0x18] sm:$0xf]
  %v22 = vld [vmem:[%s0 + $0x1c] sm:$0xf]
  %v23 = vld [vmem:[%s0 + $0x20] sm:$0xf]
  %v24 = vld [vmem:[%s0 + $0x24] sm:$0xf]
  %v25 = vld [vmem:[%s0 + $0x28] sm:$0xf]
  %v26 = vld [vmem:[%s0 + $0x2c] sm:$0xf]
  %v27 = vld [vmem:[%s0 + $0x30] sm:$0xf]
  %v28 = vld [vmem:[%s0 + $0x34] sm:$0xf]
  %v29 = vld [vmem:[%s0 + $0x38] sm:$0xf]
  %v30 = vld [vmem:[%s0 + $0x3c] sm:$0xf]
  %v31 = vld [vmem:[%s1] sm:$0xf]
  %v32 = vld [vmem:[%s1 + $0x4] sm:$0xf]
  %v33 = vld [vmem:[%s1 + $0x8] sm:$0xf]
  %v34 = vld [vmem:[%s1 + $0xc] sm:$0xf]
  %v35 = vld [vmem:[%s1 + $0x10] sm:$0xf]
  %v36 = vld [vmem:[%s1 + $0x14] sm:$0xf]
  %v37 = vld [vmem:[%s1 + $0x18] sm:$0xf]
  %v38 = vld [vmem:[%s1 + $0x1c] sm:$0xf]
  %v39 = vld [vmem:[%s2] sm:$0x1]
  %v41 = vlaneseq
  %v42 = vshrl.u32 %v41, 7
  %v43 = vsub.s32 0, %v42
  %v44 = vrot.slane %v39, %v43
  %v62 = vunpack.c.l.b16 %v15
  %v63 = vunpack.c.l.b16 %v16
  %v64 = vunpack.c.l.b16 %v17
  %v65 = vunpack.c.l.b16 %v18
  %v66 = vunpack.c.l.b16 %v19
  %v67 = vunpack.c.l.b16 %v20
  %v68 = vunpack.c.l.b16 %v21
  %v69 = vunpack.c.l.b16 %v22
  %v70 = vunpack.c.l.b16 %v23
  %v71 = vunpack.c.l.b16 %v24
  %v72 = vunpack.c.l.b16 %v25
  %v73 = vunpack.c.l.b16 %v26
  %v74 = vunpack.c.l.b16 %v27
  %v75 = vunpack.c.l.b16 %v28
  %v76 = vunpack.c.l.b16 %v29
  %v77 = vunpack.c.l.b16 %v30
  %v78 = vpack.c.b16 %v63, %v62
  %v79 = vpack.c.b16 %v65, %v64
  %v80 = vpack.c.b16 %v67, %v66
  %v81 = vpack.c.b16 %v69, %v68
  %v82 = vpack.c.b16 %v71, %v70
  %v83 = vpack.c.b16 %v73, %v72
  %v84 = vpack.c.b16 %v75, %v74
  %v85 = vpack.c.b16 %v77, %v76
  %v94 = vunpack.c.l.b16 %v31
  %v95 = vunpack.c.l.b16 %v32
  %v96 = vunpack.c.l.b16 %v33
  %v97 = vunpack.c.l.b16 %v34
  %v98 = vunpack.c.l.b16 %v35
  %v99 = vunpack.c.l.b16 %v36
  %v100 = vunpack.c.l.b16 %v37
  %v101 = vunpack.c.l.b16 %v38
  %v102 = vpack.c.b16 %v95, %v94
  %v103 = vpack.c.b16 %v97, %v96
  %v104 = vpack.c.b16 %v99, %v98
  %v105 = vpack.c.b16 %v101, %v100
  %vm110 = vcmask 523264
  %v112 = vsel %vm110, %v78, 0
  %v115 = vsel %vm110, %v79, 0
  %v118 = vsel %vm110, %v80, 0
  %v121 = vsel %vm110, %v81, 0
  %v124 = vsel %vm110, %v82, 0
  %v127 = vsel %vm110, %v83, 0
  %v130 = vsel %vm110, %v84, 0
  %v133 = vsel %vm110, %v85, 0
  %135 = vmatprep.subr.bf16.mxu0 0
  %136 = vmatpush1.bf16.msra.mxu0 %v102
  %137 = vmatprep.subr.bf16.mxu0 0
  %138 = vmatpush1.bf16.msra.mxu0 %v103
  %139 = vmatprep.subr.bf16.mxu0 0
  %140 = vmatpush1.bf16.msra.mxu0 %v104
  %141 = vmatprep.subr.bf16.mxu0 0
  %142 = vmatpush1.bf16.msra.mxu0 %v105
  %143 = vmatprep.subr.bf16.mxu0 0
  %144 = vmatpush1.bf16.msra.mxu0 0
  %145 = vmatprep.subr.bf16.mxu0 0
  %146 = vmatpush1.bf16.msra.mxu0 0
  %147 = vmatprep.subr.bf16.mxu0 0
  %148 = vmatpush1.bf16.msra.mxu0 0
  %149 = vmatprep.subr.bf16.mxu0 0
  %150 = vmatpush1.bf16.msra.mxu0 0
  %151 = vmatprep.subr.bf16.mxu0 0
  %152 = vmatpush1.bf16.msra.mxu0 0
  %153 = vmatprep.subr.bf16.mxu0 0
  %154 = vmatpush1.bf16.msra.mxu0 0
  %155 = vmatprep.subr.bf16.mxu0 0
  %156 = vmatpush1.bf16.msra.mxu0 0
  %157 = vmatprep.subr.bf16.mxu0 0
  %158 = vmatpush1.bf16.msra.mxu0 0
  %159 = vmatprep.subr.bf16.mxu0 0
  %160 = vmatpush1.bf16.msra.mxu0 0
  %161 = vmatprep.subr.bf16.mxu0 0
  %162 = vmatpush1.bf16.msra.mxu0 0
  %163 = vmatprep.subr.bf16.mxu0 0
  %164 = vmatpush1.bf16.msra.mxu0 0
  %165 = vmatprep.subr.bf16.mxu0 0
  %166 = vmatpush1.bf16.msra.mxu0 0
  %167 = vmatprep.mubr.bf16.mxu0 0
  %168 = vmatmul.mubr.bf16.gmra.mrb[0].mxu0 %v112
  %v169 = vpop.f32.mrb[0].mxu0
  %v170 = vadd.f32 %v44, %v169
  %v171 = vpop.f32.mrb[0].mxu0
  %v172 = vpop.f32.mrb[0].mxu0
  %v173 = vadd.f32 %v44, %v172
  %v174 = vpop.f32.mrb[0].mxu0
  %175 = vmatprep.mubr.bf16.mxu0 0
  %176 = vmatmul.mubr.bf16.gmra.mrb[0].mxu0 %v115
  %v177 = vpop.f32.mrb[0].mxu0
  %v178 = vadd.f32 %v44, %v177
  %v179 = vpop.f32.mrb[0].mxu0
  %v180 = vpop.f32.mrb[0].mxu0
  %v181 = vadd.f32 %v44, %v180
  %v182 = vpop.f32.mrb[0].mxu0
  %183 = vmatprep.mubr.bf16.mxu0 0
  %184 = vmatmul.mubr.bf16.gmra.mrb[0].mxu0 %v118
  %v185 = vpop.f32.mrb[0].mxu0
  %v186 = vadd.f32 %v44, %v185
  %v187 = vpop.f32.mrb[0].mxu0
  %v188 = vpop.f32.mrb[0].mxu0
  %v189 = vadd.f32 %v44, %v188
  %v190 = vpop.f32.mrb[0].mxu0
  %191 = vmatprep.mubr.bf16.mxu0 0
  %192 = vmatmul.mubr.bf16.gmra.mrb[0].mxu0 %v121
  %v193 = vpop.f32.mrb[0].mxu0
  %v194 = vadd.f32 %v44, %v193
  %v195 = vpop.f32.mrb[0].mxu0
  %v196 = vpop.f32.mrb[0].mxu0
  %v197 = vadd.f32 %v44, %v196
  %v198 = vpop.f32.mrb[0].mxu0
  %199 = vmatprep.mubr.bf16.mxu0 0
  %200 = vmatmul.mubr.bf16.gmra.mrb[0].mxu0 %v124
  %v201 = vpop.f32.mrb[0].mxu0
  %v202 = vadd.f32 %v44, %v201
  %v203 = vpop.f32.mrb[0].mxu0
  %v204 = vpop.f32.mrb[0].mxu0
  %v205 = vadd.f32 %v44, %v204
  %v206 = vpop.f32.mrb[0].mxu0
  %207 = vmatprep.mubr.bf16.mxu0 0
  %208 = vmatmul.mubr.bf16.gmra.mrb[0].mxu0 %v127
  %v209 = vpop.f32.mrb[0].mxu0
  %v210 = vadd.f32 %v44, %v209
  %v211 = vpop.f32.mrb[0].mxu0
  %v212 = vpop.f32.mrb[0].mxu0
  %v213 = vadd.f32 %v44, %v212
  %v214 = vpop.f32.mrb[0].mxu0
  %215 = vmatprep.mubr.bf16.mxu0 0
  %216 = vmatmul.mubr.bf16.gmra.mrb[0].mxu0 %v130
  %v217 = vpop.f32.mrb[0].mxu0
  %v218 = vadd.f32 %v44, %v217
  %v219 = vpop.f32.mrb[0].mxu0
  %v220 = vpop.f32.mrb[0].mxu0
  %v221 = vadd.f32 %v44, %v220
  %v222 = vpop.f32.mrb[0].mxu0
  %223 = vmatprep.mubr.bf16.mxu0 0
  %224 = vmatmul.mubr.bf16.gmra.mrb[0].mxu0 %v133
  %v225 = vpop.f32.mrb[0].mxu0
  %v226 = vadd.f32 %v44, %v225
  %v227 = vpop.f32.mrb[0].mxu0
  %v228 = vpop.f32.mrb[0].mxu0
  %v229 = vadd.f32 %v44, %v228
  %v230 = vpop.f32.mrb[0].mxu0
  %231 = vdwg.mxu0
  %v232 = vmax.f32 %v170, 0.0
  %v233 = vmax.f32 %v173, 0.0
  %v234 = vmax.f32 %v178, 0.0
  %v235 = vmax.f32 %v181, 0.0
  %v236 = vmax.f32 %v186, 0.0
  %v237 = vmax.f32 %v189, 0.0
  %v238 = vmax.f32 %v194, 0.0
  %v239 = vmax.f32 %v197, 0.0
  %v240 = vmax.f32 %v202, 0.0
  %v241 = vmax.f32 %v205, 0.0
  %v242 = vmax.f32 %v210, 0.0
  %v243 = vmax.f32 %v213, 0.0
  %v244 = vmax.f32 %v218, 0.0
  %v245 = vmax.f32 %v221, 0.0
  %v246 = vmax.f32 %v226, 0.0
  %v247 = vmax.f32 %v229, 0.0
  %248 = vst.msk [vmem:[%s3] sm:$0xff] %vm110, %v232
  %249 = vst.msk [vmem:[%s3 + $0x8] sm:$0xff] %vm110, %v233
  %250 = vst.msk [vmem:[%s3 + $0x10] sm:$0xff] %vm110, %v234
  %251 = vst.msk [vmem:[%s3 + $0x18] sm:$0xff] %vm110, %v235
  %252 = vst.msk [vmem:[%s3 + $0x20] sm:$0xff] %vm110, %v236
  %253 = vst.msk [vmem:[%s3 + $0x28] sm:$0xff] %vm110, %v237
  %254 = vst.msk [vmem:[%s3 + $0x30] sm:$0xff] %vm110, %v238
  %255 = vst.msk [vmem:[%s3 + $0x38] sm:$0xff] %vm110, %v239
  %256 = vst.msk [vmem:[%s3 + $0x40] sm:$0xff] %vm110, %v240
  %257 = vst.msk [vmem:[%s3 + $0x48] sm:$0xff] %vm110, %v241
  %258 = vst.msk [vmem:[%s3 + $0x50] sm:$0xff] %vm110, %v242
  %259 = vst.msk [vmem:[%s3 + $0x58] sm:$0xff] %vm110, %v243
  %260 = vst.msk [vmem:[%s3 + $0x60] sm:$0xff] %vm110, %v244
  %261 = vst.msk [vmem:[%s3 + $0x68] sm:$0xff] %vm110, %v245
  %262 = vst.msk [vmem:[%s3 + $0x70] sm:$0xff] %vm110, %v246
  %263 = vst.msk [vmem:[%s3 + $0x78] sm:$0xff] %vm110, %v247
  // Predicated region
  $region14: #{googlenet_forward.18} parent=0 // pred_check
    _
  $region15: #{googlenet_forward.18} parent=0 // pred_check_branch
    %265 = sbr.rel (0) target = $region17
  $region16: #{googlenet_forward.18} parent=0 // pred_region
    _
  $region17: #{googlenet_forward.18} parent=0 // pred_fallthru
    _
  // Predicated region
  $region18: #{googlenet_forward.18} parent=0 // pred_check
    _
  $region19: #{googlenet_forward.18} parent=0 // pred_check_branch
    %267 = sbr.rel (0) target = $region21
  $region20: #{googlenet_forward.18} parent=0 // pred_region
    _
  $region21: #{googlenet_forward.18} parent=0 // pred_fallthru
    _

// kernel: googlenet_forward.19
$region0: #{googlenet_forward.19}
  #allocation0 [shape = 'u32[]', space=smem, size = 0x4, offset = 0x4, fixed_abs, tag = 'smem constant byte address 0x4 - core index']
  #allocation1 [shape = 'u32[144,128]{1,0:T(1,128)}', space=vmem, size = 0x12000, scoped, tag = 'internal scratch']
  %s0 = inlined_call_operand.vmem [shape: bf16[128,576], index: 0, kind: input, shape index: {}]
  %s1 = inlined_call_operand.vmem [shape: bf16[576,192], index: 1, kind: input, shape index: {}]
  %s2 = inlined_call_operand.vmem [shape: f32[1,192], index: 2, kind: input, shape index: {}]
  %s3 = inlined_call_operand.vmem [shape: f32[128,192], index: 3, kind: output, shape index: {}]
  %s4 = sld [smem:[#allocation0]]
  $region22: #{googlenet_forward.19} parent=0
    _
  %s6 = ssub.s32 1, %s4
  %s7 = scalar_select 0, %s6, %s4
  // Predicated region
  $region2: #{googlenet_forward.19} parent=0 // pred_check
    _
  $region3: #{googlenet_forward.19} parent=0 // pred_check_branch
    %9 = sbr.rel (0) target = $region5
  $region4: #{googlenet_forward.19} parent=0 // pred_region
    _
  $region5: #{googlenet_forward.19} parent=0 // pred_fallthru
    _
  // Predicated region
  $region6: #{googlenet_forward.19} parent=0 // pred_check
    _
  $region7: #{googlenet_forward.19} parent=0 // pred_check_branch
    %11 = sbr.rel (0) target = $region9
  $region8: #{googlenet_forward.19} parent=0 // pred_region
    _
  $region9: #{googlenet_forward.19} parent=0 // pred_fallthru
    _
  // Predicated region
  $region10: #{googlenet_forward.19} parent=0 // pred_check
    _
  $region11: #{googlenet_forward.19} parent=0 // pred_check_branch
    %13 = sbr.rel (0) target = $region13
  $region12: #{googlenet_forward.19} parent=0 // pred_region
    _
  $region13: #{googlenet_forward.19} parent=0 // pred_fallthru
    _
  %v15 = vld [vmem:[%s0] sm:$0xff]
  %v16 = vld [vmem:[%s0 + $0x8] sm:$0xff]
  %v17 = vld [vmem:[%s0 + $0x10] sm:$0xf]
  %v18 = vld [vmem:[%s0 + $0x14] sm:$0xff]
  %v19 = vld [vmem:[%s0 + $0x1c] sm:$0xff]
  %v20 = vld [vmem:[%s0 + $0x24] sm:$0xf]
  %v21 = vld [vmem:[%s0 + $0x28] sm:$0xff]
  %v22 = vld [vmem:[%s0 + $0x30] sm:$0xff]
  %v23 = vld [vmem:[%s0 + $0x38] sm:$0xf]
  %v24 = vld [vmem:[%s0 + $0x3c] sm:$0xff]
  %v25 = vld [vmem:[%s0 + $0x44] sm:$0xff]
  %v26 = vld [vmem:[%s0 + $0x4c] sm:$0xf]
  %v27 = vld [vmem:[%s0 + $0x50] sm:$0xff]
  %v28 = vld [vmem:[%s0 + $0x58] sm:$0xff]
  %v29 = vld [vmem:[%s0 + $0x60] sm:$0xf]
  %v30 = vld [vmem:[%s0 + $0x64] sm:$0xff]
  %v31 = vld [vmem:[%s0 + $0x6c] sm:$0xff]
  %v32 = vld [vmem:[%s0 + $0x74] sm:$0xf]
  %v33 = vld [vmem:[%s0 + $0x78] sm:$0xff]
  %v34 = vld [vmem:[%s0 + $0x80] sm:$0xff]
  %v35 = vld [vmem:[%s0 + $0x88] sm:$0xf]
  %v36 = vld [vmem:[%s0 + $0x8c] sm:$0xff]
  %v37 = vld [vmem:[%s0 + $0x94] sm:$0xff]
  %v38 = vld [vmem:[%s0 + $0x9c] sm:$0xf]
  %v39 = vld [vmem:[%s0 + $0xa0] sm:$0xff]
  %v40 = vld [vmem:[%s0 + $0xa8] sm:$0xff]
  %v41 = vld [vmem:[%s0 + $0xb0] sm:$0xf]
  %v42 = vld [vmem:[%s0 + $0xb4] sm:$0xff]
  %v43 = vld [vmem:[%s0 + $0xbc] sm:$0xff]
  %v44 = vld [vmem:[%s0 + $0xc4] sm:$0xf]
  %v45 = vld [vmem:[%s0 + $0xc8] sm:$0xff]
  %v46 = vld [vmem:[%s0 + $0xd0] sm:$0xff]
  %v47 = vld [vmem:[%s0 + $0xd8] sm:$0xf]
  %v48 = vld [vmem:[%s0 + $0xdc] sm:$0xff]
  %v49 = vld [vmem:[%s0 + $0xe4] sm:$0xff]
  %v50 = vld [vmem:[%s0 + $0xec] sm:$0xf]
  %v51 = vld [vmem:[%s0 + $0xf0] sm:$0xff]
  %v52 = vld [vmem:[%s0 + $0xf8] sm:$0xff]
  %v53 = vld [vmem:[%s0 + $0x100] sm:$0xf]
  %v54 = vld [vmem:[%s0 + $0x104] sm:$0xff]
  %v55 = vld [vmem:[%s0 + $0x10c] sm:$0xff]
  %v56 = vld [vmem:[%s0 + $0x114] sm:$0xf]
  %v57 = vld [vmem:[%s0 + $0x118] sm:$0xff]
  %v58 = vld [vmem:[%s0 + $0x120] sm:$0xff]
  %v59 = vld [vmem:[%s0 + $0x128] sm:$0xf]
  %v60 = vld [vmem:[%s0 + $0x12c] sm:$0xff]
  %v61 = vld [vmem:[%s0 + $0x134] sm:$0xff]
  %v62 = vld [vmem:[%s0 + $0x13c] sm:$0xf]
  %v63 = vld [vmem:[%s1] sm:$0xff]
  %v64 = vld [vmem:[%s1 + $0x8] sm:$0xff]
  %v65 = vld [vmem:[%s1 + $0x10] sm:$0xff]
  %v66 = vld [vmem:[%s1 + $0x18] sm:$0xff]
  %v67 = vld [vmem:[%s1 + $0x20] sm:$0xff]
  %v68 = vld [vmem:[%s1 + $0x28] sm:$0xff]
  %v69 = vld [vmem:[%s1 + $0x30] sm:$0xff]
  %v70 = vld [vmem:[%s1 + $0x38] sm:$0xff]
  %v71 = vld [vmem:[%s1 + $0x40] sm:$0xff]
  %v72 = vld [vmem:[%s1 + $0x48] sm:$0xff]
  %v73 = vld [vmem:[%s1 + $0x50] sm:$0xff]
  %v74 = vld [vmem:[%s1 + $0x58] sm:$0xff]
  %v75 = vld [vmem:[%s1 + $0x60] sm:$0xff]
  %v76 = vld [vmem:[%s1 + $0x68] sm:$0xff]
  %v77 = vld [vmem:[%s1 + $0x70] sm:$0xff]
  %v78 = vld [vmem:[%s1 + $0x78] sm:$0xff]
  %v79 = vld [vmem:[%s1 + $0x80] sm:$0xff]
  %v80 = vld [vmem:[%s1 + $0x88] sm:$0xff]
  %v81 = vld [vmem:[%s1 + $0x90] sm:$0xff]
  %v82 = vld [vmem:[%s1 + $0x98] sm:$0xff]
  %v83 = vld [vmem:[%s1 + $0xa0] sm:$0xff]
  %v84 = vld [vmem:[%s1 + $0xa8] sm:$0xff]
  %v85 = vld [vmem:[%s1 + $0xb0] sm:$0xff]
  %v86 = vld [vmem:[%s1 + $0xb8] sm:$0xff]
  %v87 = vld [vmem:[%s1 + $0xc0] sm:$0xff]
  %v88 = vld [vmem:[%s1 + $0xc8] sm:$0xff]
  %v89 = vld [vmem:[%s1 + $0xd0] sm:$0xff]
  %v90 = vld [vmem:[%s1 + $0xd8] sm:$0xff]
  %v91 = vld [vmem:[%s1 + $0xe0] sm:$0xff]
  %v92 = vld [vmem:[%s1 + $0xe8] sm:$0xff]
  %v93 = vld [vmem:[%s1 + $0xf0] sm:$0xff]
  %v94 = vld [vmem:[%s1 + $0xf8] sm:$0xff]
  %v95 = vld [vmem:[%s1 + $0x100] sm:$0xff]
  %v96 = vld [vmem:[%s1 + $0x108] sm:$0xff]
  %v97 = vld [vmem:[%s1 + $0x110] sm:$0xff]
  %v98 = vld [vmem:[%s1 + $0x118] sm:$0xff]
  %v99 = vld [vmem:[%s1 + $0x120] sm:$0xff]
  %v100 = vld [vmem:[%s1 + $0x128] sm:$0xff]
  %v101 = vld [vmem:[%s1 + $0x130] sm:$0xff]
  %v102 = vld [vmem:[%s1 + $0x138] sm:$0xff]
  %v103 = vld [vmem:[%s1 + $0x140] sm:$0xff]
  %v104 = vld [vmem:[%s1 + $0x148] sm:$0xff]
  %v105 = vld [vmem:[%s1 + $0x150] sm:$0xff]
  %v106 = vld [vmem:[%s1 + $0x158] sm:$0xff]
  %v107 = vld [vmem:[%s1 + $0x160] sm:$0xff]
  %v108 = vld [vmem:[%s1 + $0x168] sm:$0xff]
  %v109 = vld [vmem:[%s1 + $0x170] sm:$0xff]
  %v110 = vld [vmem:[%s1 + $0x178] sm:$0xff]
  %v111 = vld [vmem:[%s1 + $0x180] sm:$0xff]
  %v112 = vld [vmem:[%s1 + $0x188] sm:$0xff]
  %v113 = vld [vmem:[%s1 + $0x190] sm:$0xff]
  %v114 = vld [vmem:[%s1 + $0x198] sm:$0xff]
  %v115 = vld [vmem:[%s1 + $0x1a0] sm:$0xff]
  %v116 = vld [vmem:[%s1 + $0x1a8] sm:$0xff]
  %v117 = vld [vmem:[%s1 + $0x1b0] sm:$0xff]
  %v118 = vld [vmem:[%s1 + $0x1b8] sm:$0xff]
  %v119 = vld [vmem:[%s1 + $0x1c0] sm:$0xff]
  %v120 = vld [vmem:[%s1 + $0x1c8] sm:$0xff]
  %v121 = vld [vmem:[%s1 + $0x1d0] sm:$0xff]
  %v122 = vld [vmem:[%s1 + $0x1d8] sm:$0xff]
  %v123 = vld [vmem:[%s1 + $0x1e0] sm:$0xff]
  %v124 = vld [vmem:[%s1 + $0x1e8] sm:$0xff]
  %v125 = vld [vmem:[%s1 + $0x1f0] sm:$0xff]
  %v126 = vld [vmem:[%s1 + $0x1f8] sm:$0xff]
  %v127 = vld [vmem:[%s1 + $0x200] sm:$0xff]
  %v128 = vld [vmem:[%s1 + $0x208] sm:$0xff]
  %v129 = vld [vmem:[%s1 + $0x210] sm:$0xff]
  %v130 = vld [vmem:[%s1 + $0x218] sm:$0xff]
  %v131 = vld [vmem:[%s1 + $0x220] sm:$0xff]
  %v132 = vld [vmem:[%s1 + $0x228] sm:$0xff]
  %v133 = vld [vmem:[%s1 + $0x230] sm:$0xff]
  %v134 = vld [vmem:[%s1 + $0x238] sm:$0xff]
  %v135 = vld [vmem:[%s2] sm:$0x3]
  %v137 = vlaneseq
  %v138 = vshrl.u32 %v137, 7
  %v139 = vsub.s32 0, %v138
  %v140 = vrot.slane %v135, %v139
  %v141 = vlaneseq
  %v142 = vshrl.u32 %v141, 7
  %v143 = vsub.s32 1, %v142
  %v144 = vrot.slane %v135, %v143
  %v195 = vunpack.c.l.b16 %v15
  %v196 = vunpack.c.h.b16 %v15
  %v197 = vunpack.c.l.b16 %v16
  %v198 = vunpack.c.h.b16 %v16
  %v199 = vunpack.c.l.b16 %v17
  %v200 = vunpack.c.l.b16 %v18
  %v201 = vunpack.c.h.b16 %v18
  %v202 = vunpack.c.l.b16 %v19
  %v203 = vunpack.c.h.b16 %v19
  %v204 = vunpack.c.l.b16 %v20
  %v205 = vunpack.c.l.b16 %v21
  %v206 = vunpack.c.h.b16 %v21
  %v207 = vunpack.c.l.b16 %v22
  %v208 = vunpack.c.h.b16 %v22
  %v209 = vunpack.c.l.b16 %v23
  %v210 = vunpack.c.l.b16 %v24
  %v211 = vunpack.c.h.b16 %v24
  %v212 = vunpack.c.l.b16 %v25
  %v213 = vunpack.c.h.b16 %v25
  %v214 = vunpack.c.l.b16 %v26
  %v215 = vunpack.c.l.b16 %v27
  %v216 = vunpack.c.h.b16 %v27
  %v217 = vunpack.c.l.b16 %v28
  %v218 = vunpack.c.h.b16 %v28
  %v219 = vunpack.c.l.b16 %v29
  %v220 = vunpack.c.l.b16 %v30
  %v221 = vunpack.c.h.b16 %v30
  %v222 = vunpack.c.l.b16 %v31
  %v223 = vunpack.c.h.b16 %v31
  %v224 = vunpack.c.l.b16 %v32
  %v225 = vunpack.c.l.b16 %v33
  %v226 = vunpack.c.h.b16 %v33
  %v227 = vunpack.c.l.b16 %v34
  %v228 = vunpack.c.h.b16 %v34
  %v229 = vunpack.c.l.b16 %v35
  %v230 = vunpack.c.l.b16 %v36
  %v231 = vunpack.c.h.b16 %v36
  %v232 = vunpack.c.l.b16 %v37
  %v233 = vunpack.c.h.b16 %v37
  %v234 = vunpack.c.l.b16 %v38
  %v235 = vunpack.c.l.b16 %v39
  %v236 = vunpack.c.h.b16 %v39
  %v237 = vunpack.c.l.b16 %v40
  %v238 = vunpack.c.h.b16 %v40
  %v239 = vunpack.c.l.b16 %v41
  %v240 = vunpack.c.l.b16 %v42
  %v241 = vunpack.c.h.b16 %v42
  %v242 = vunpack.c.l.b16 %v43
  %v243 = vunpack.c.h.b16 %v43
  %v244 = vunpack.c.l.b16 %v44
  %v245 = vunpack.c.l.b16 %v45
  %v246 = vunpack.c.h.b16 %v45
  %v247 = vunpack.c.l.b16 %v46
  %v248 = vunpack.c.h.b16 %v46
  %v249 = vunpack.c.l.b16 %v47
  %v250 = vunpack.c.l.b16 %v48
  %v251 = vunpack.c.h.b16 %v48
  %v252 = vunpack.c.l.b16 %v49
  %v253 = vunpack.c.h.b16 %v49
  %v254 = vunpack.c.l.b16 %v50
  %v255 = vunpack.c.l.b16 %v51
  %v256 = vunpack.c.h.b16 %v51
  %v257 = vunpack.c.l.b16 %v52
  %v258 = vunpack.c.h.b16 %v52
  %v259 = vunpack.c.l.b16 %v53
  %v260 = vunpack.c.l.b16 %v54
  %v261 = vunpack.c.h.b16 %v54
  %v262 = vunpack.c.l.b16 %v55
  %v263 = vunpack.c.h.b16 %v55
  %v264 = vunpack.c.l.b16 %v56
  %v265 = vunpack.c.l.b16 %v57
  %v266 = vunpack.c.h.b16 %v57
  %v267 = vunpack.c.l.b16 %v58
  %v268 = vunpack.c.h.b16 %v58
  %v269 = vunpack.c.l.b16 %v59
  %v270 = vunpack.c.l.b16 %v60
  %v271 = vunpack.c.h.b16 %v60
  %v272 = vunpack.c.l.b16 %v61
  %v273 = vunpack.c.h.b16 %v61
  %v274 = vunpack.c.l.b16 %v62
  %v275 = vpack.c.b16 %v200, %v195
  %v276 = vpack.c.b16 %v201, %v196
  %v277 = vpack.c.b16 %v202, %v197
  %v278 = vpack.c.b16 %v203, %v198
  %v279 = vpack.c.b16 %v204, %v199
  %v280 = vpack.c.b16 %v210, %v205
  %v281 = vpack.c.b16 %v211, %v206
  %v282 = vpack.c.b16 %v212, %v207
  %v283 = vpack.c.b16 %v213, %v208
  %v284 = vpack.c.b16 %v214, %v209
  %v285 = vpack.c.b16 %v220, %v215
  %v286 = vpack.c.b16 %v221, %v216
  %v287 = vpack.c.b16 %v222, %v217
  %v288 = vpack.c.b16 %v223, %v218
  %v289 = vpack.c.b16 %v224, %v219
  %v290 = vpack.c.b16 %v230, %v225
  %v291 = vpack.c.b16 %v231, %v226
  %v292 = vpack.c.b16 %v232, %v227
  %v293 = vpack.c.b16 %v233, %v228
  %v294 = vpack.c.b16 %v234, %v229
  %v295 = vpack.c.b16 %v240, %v235
  %v296 = vpack.c.b16 %v241, %v236
  %v297 = vpack.c.b16 %v242, %v237
  %v298 = vpack.c.b16 %v243, %v238
  %v299 = vpack.c.b16 %v244, %v239
  %v300 = vpack.c.b16 %v250, %v245
  %v301 = vpack.c.b16 %v251, %v246
  %v302 = vpack.c.b16 %v252, %v247
  %v303 = vpack.c.b16 %v253, %v248
  %v304 = vpack.c.b16 %v254, %v249
  %v305 = vpack.c.b16 %v260, %v255
  %v306 = vpack.c.b16 %v261, %v256
  %v307 = vpack.c.b16 %v262, %v257
  %v308 = vpack.c.b16 %v263, %v258
  %v309 = vpack.c.b16 %v264, %v259
  %v310 = vpack.c.b16 %v270, %v265
  %v311 = vpack.c.b16 %v271, %v266
  %v312 = vpack.c.b16 %v272, %v267
  %v313 = vpack.c.b16 %v273, %v268
  %v314 = vpack.c.b16 %v274, %v269
  %v419 = vunpack.c.l.b16 %v63
  %v420 = vunpack.c.h.b16 %v63
  %v421 = vunpack.c.l.b16 %v64
  %v422 = vunpack.c.h.b16 %v64
  %v423 = vunpack.c.l.b16 %v65
  %v424 = vunpack.c.h.b16 %v65
  %v425 = vunpack.c.l.b16 %v66
  %v426 = vunpack.c.h.b16 %v66
  %v427 = vunpack.c.l.b16 %v67
  %v428 = vunpack.c.h.b16 %v67
  %v429 = vunpack.c.l.b16 %v68
  %v430 = vunpack.c.h.b16 %v68
  %v431 = vunpack.c.l.b16 %v69
  %v432 = vunpack.c.h.b16 %v69
  %v433 = vunpack.c.l.b16 %v70
  %v434 = vunpack.c.h.b16 %v70
  %v435 = vunpack.c.l.b16 %v71
  %v436 = vunpack.c.h.b16 %v71
  %v437 = vunpack.c.l.b16 %v72
  %v438 = vunpack.c.h.b16 %v72
  %v439 = vunpack.c.l.b16 %v73
  %v440 = vunpack.c.h.b16 %v73
  %v441 = vunpack.c.l.b16 %v74
  %v442 = vunpack.c.h.b16 %v74
  %v443 = vunpack.c.l.b16 %v75
  %v444 = vunpack.c.h.b16 %v75
  %v445 = vunpack.c.l.b16 %v76
  %v446 = vunpack.c.h.b16 %v76
  %v447 = vunpack.c.l.b16 %v77
  %v448 = vunpack.c.h.b16 %v77
  %v449 = vunpack.c.l.b16 %v78
  %v450 = vunpack.c.h.b16 %v78
  %v451 = vunpack.c.l.b16 %v79
  %v452 = vunpack.c.h.b16 %v79
  %v453 = vunpack.c.l.b16 %v80
  %v454 = vunpack.c.h.b16 %v80
  %v455 = vunpack.c.l.b16 %v81
  %v456 = vunpack.c.h.b16 %v81
  %v457 = vunpack.c.l.b16 %v82
  %v458 = vunpack.c.h.b16 %v82
  %v459 = vunpack.c.l.b16 %v83
  %v460 = vunpack.c.h.b16 %v83
  %v461 = vunpack.c.l.b16 %v84
  %v462 = vunpack.c.h.b16 %v84
  %v463 = vunpack.c.l.b16 %v85
  %v464 = vunpack.c.h.b16 %v85
  %v465 = vunpack.c.l.b16 %v86
  %v466 = vunpack.c.h.b16 %v86
  %v467 = vunpack.c.l.b16 %v87
  %v468 = vunpack.c.h.b16 %v87
  %v469 = vunpack.c.l.b16 %v88
  %v470 = vunpack.c.h.b16 %v88
  %v471 = vunpack.c.l.b16 %v89
  %v472 = vunpack.c.h.b16 %v89
  %v473 = vunpack.c.l.b16 %v90
  %v474 = vunpack.c.h.b16 %v90
  %v475 = vunpack.c.l.b16 %v91
  %v476 = vunpack.c.h.b16 %v91
  %v477 = vunpack.c.l.b16 %v92
  %v478 = vunpack.c.h.b16 %v92
  %v479 = vunpack.c.l.b16 %v93
  %v480 = vunpack.c.h.b16 %v93
  %v481 = vunpack.c.l.b16 %v94
  %v482 = vunpack.c.h.b16 %v94
  %v483 = vunpack.c.l.b16 %v95
  %v484 = vunpack.c.h.b16 %v95
  %v485 = vunpack.c.l.b16 %v96
  %v486 = vunpack.c.h.b16 %v96
  %v487 = vunpack.c.l.b16 %v97
  %v488 = vunpack.c.h.b16 %v97
  %v489 = vunpack.c.l.b16 %v98
  %v490 = vunpack.c.h.b16 %v98
  %v491 = vunpack.c.l.b16 %v99
  %v492 = vunpack.c.h.b16 %v99
  %v493 = vunpack.c.l.b16 %v100
  %v494 = vunpack.c.h.b16 %v100
  %v495 = vunpack.c.l.b16 %v101
  %v496 = vunpack.c.h.b16 %v101
  %v497 = vunpack.c.l.b16 %v102
  %v498 = vunpack.c.h.b16 %v102
  %v499 = vunpack.c.l.b16 %v103
  %v500 = vunpack.c.h.b16 %v103
  %v501 = vunpack.c.l.b16 %v104
  %v502 = vunpack.c.h.b16 %v104
  %v503 = vunpack.c.l.b16 %v105
  %v504 = vunpack.c.h.b16 %v105
  %v505 = vunpack.c.l.b16 %v106
  %v506 = vunpack.c.h.b16 %v106
  %v507 = vunpack.c.l.b16 %v107
  %v508 = vunpack.c.h.b16 %v107
  %v509 = vunpack.c.l.b16 %v108
  %v510 = vunpack.c.h.b16 %v108
  %v511 = vunpack.c.l.b16 %v109
  %v512 = vunpack.c.h.b16 %v109
  %v513 = vunpack.c.l.b16 %v110
  %v514 = vunpack.c.h.b16 %v110
  %v515 = vunpack.c.l.b16 %v111
  %v516 = vunpack.c.h.b16 %v111
  %v517 = vunpack.c.l.b16 %v112
  %v518 = vunpack.c.h.b16 %v112
  %v519 = vunpack.c.l.b16 %v113
  %v520 = vunpack.c.h.b16 %v113
  %v521 = vunpack.c.l.b16 %v114
  %v522 = vunpack.c.h.b16 %v114
  %v523 = vunpack.c.l.b16 %v115
  %v524 = vunpack.c.h.b16 %v115
  %v525 = vunpack.c.l.b16 %v116
  %v526 = vunpack.c.h.b16 %v116
  %v527 = vunpack.c.l.b16 %v117
  %v528 = vunpack.c.h.b16 %v117
  %v529 = vunpack.c.l.b16 %v118
  %v530 = vunpack.c.h.b16 %v118
  %v531 = vunpack.c.l.b16 %v119
  %v532 = vunpack.c.h.b16 %v119
  %v533 = vunpack.c.l.b16 %v120
  %v534 = vunpack.c.h.b16 %v120
  %v535 = vunpack.c.l.b16 %v121
  %v536 = vunpack.c.h.b16 %v121
  %v537 = vunpack.c.l.b16 %v122
  %v538 = vunpack.c.h.b16 %v122
  %v539 = vunpack.c.l.b16 %v123
  %v540 = vunpack.c.h.b16 %v123
  %v541 = vunpack.c.l.b16 %v124
  %v542 = vunpack.c.h.b16 %v124
  %v543 = vunpack.c.l.b16 %v125
  %v544 = vunpack.c.h.b16 %v125
  %v545 = vunpack.c.l.b16 %v126
  %v546 = vunpack.c.h.b16 %v126
  %v547 = vunpack.c.l.b16 %v127
  %v548 = vunpack.c.h.b16 %v127
  %v549 = vunpack.c.l.b16 %v128
  %v550 = vunpack.c.h.b16 %v128
  %v551 = vunpack.c.l.b16 %v129
  %v552 = vunpack.c.h.b16 %v129
  %v553 = vunpack.c.l.b16 %v130
  %v554 = vunpack.c.h.b16 %v130
  %v555 = vunpack.c.l.b16 %v131
  %v556 = vunpack.c.h.b16 %v131
  %v557 = vunpack.c.l.b16 %v132
  %v558 = vunpack.c.h.b16 %v132
  %v559 = vunpack.c.l.b16 %v133
  %v560 = vunpack.c.h.b16 %v133
  %v561 = vunpack.c.l.b16 %v134
  %v562 = vunpack.c.h.b16 %v134
  %v563 = vpack.c.b16 %v421, %v419
  %v564 = vpack.c.b16 %v422, %v420
  %v565 = vpack.c.b16 %v425, %v423
  %v566 = vpack.c.b16 %v426, %v424
  %v567 = vpack.c.b16 %v429, %v427
  %v568 = vpack.c.b16 %v430, %v428
  %v569 = vpack.c.b16 %v433, %v431
  %v570 = vpack.c.b16 %v434, %v432
  %v571 = vpack.c.b16 %v437, %v435
  %v572 = vpack.c.b16 %v438, %v436
  %v573 = vpack.c.b16 %v441, %v439
  %v574 = vpack.c.b16 %v442, %v440
  %v575 = vpack.c.b16 %v445, %v443
  %v576 = vpack.c.b16 %v446, %v444
  %v577 = vpack.c.b16 %v449, %v447
  %v578 = vpack.c.b16 %v450, %v448
  %v579 = vpack.c.b16 %v453, %v451
  %v580 = vpack.c.b16 %v454, %v452
  %v581 = vpack.c.b16 %v457, %v455
  %v582 = vpack.c.b16 %v458, %v456
  %v583 = vpack.c.b16 %v461, %v459
  %v584 = vpack.c.b16 %v462, %v460
  %v585 = vpack.c.b16 %v465, %v463
  %v586 = vpack.c.b16 %v466, %v464
  %v587 = vpack.c.b16 %v469, %v467
  %v588 = vpack.c.b16 %v470, %v468
  %v589 = vpack.c.b16 %v473, %v471
  %v590 = vpack.c.b16 %v474, %v472
  %v591 = vpack.c.b16 %v477, %v475
  %v592 = vpack.c.b16 %v478, %v476
  %v593 = vpack.c.b16 %v481, %v479
  %v594 = vpack.c.b16 %v482, %v480
  %v595 = vpack.c.b16 %v485, %v483
  %v596 = vpack.c.b16 %v486, %v484
  %v597 = vpack.c.b16 %v489, %v487
  %v598 = vpack.c.b16 %v490, %v488
  %v599 = vpack.c.b16 %v493, %v491
  %v600 = vpack.c.b16 %v494, %v492
  %v601 = vpack.c.b16 %v497, %v495
  %v602 = vpack.c.b16 %v498, %v496
  %v603 = vpack.c.b16 %v501, %v499
  %v604 = vpack.c.b16 %v502, %v500
  %v605 = vpack.c.b16 %v505, %v503
  %v606 = vpack.c.b16 %v506, %v504
  %v607 = vpack.c.b16 %v509, %v507
  %v608 = vpack.c.b16 %v510, %v508
  %v609 = vpack.c.b16 %v513, %v511
  %v610 = vpack.c.b16 %v514, %v512
  %v611 = vpack.c.b16 %v517, %v515
  %v612 = vpack.c.b16 %v518, %v516
  %v613 = vpack.c.b16 %v521, %v519
  %v614 = vpack.c.b16 %v522, %v520
  %v615 = vpack.c.b16 %v525, %v523
  %v616 = vpack.c.b16 %v526, %v524
  %v617 = vpack.c.b16 %v529, %v527
  %v618 = vpack.c.b16 %v530, %v528
  %v619 = vpack.c.b16 %v533, %v531
  %v620 = vpack.c.b16 %v534, %v532
  %v621 = vpack.c.b16 %v537, %v535
  %v622 = vpack.c.b16 %v538, %v536
  %v623 = vpack.c.b16 %v541, %v539
  %v624 = vpack.c.b16 %v542, %v540
  %v625 = vpack.c.b16 %v545, %v543
  %v626 = vpack.c.b16 %v546, %v544
  %v627 = vpack.c.b16 %v549, %v547
  %v628 = vpack.c.b16 %v550, %v548
  %v629 = vpack.c.b16 %v553, %v551
  %v630 = vpack.c.b16 %v554, %v552
  %v631 = vpack.c.b16 %v557, %v555
  %v632 = vpack.c.b16 %v558, %v556
  %v633 = vpack.c.b16 %v561, %v559
  %v634 = vpack.c.b16 %v562, %v560
  %vm707 = vcmask 523264
  %v709 = vsel %vm707, %v279, 0
  %v712 = vsel %vm707, %v284, 0
  %v715 = vsel %vm707, %v289, 0
  %v718 = vsel %vm707, %v294, 0
  %v721 = vsel %vm707, %v299, 0
  %v724 = vsel %vm707, %v304, 0
  %v727 = vsel %vm707, %v309, 0
  %v730 = vsel %vm707, %v314, 0
  %732 = vmatprep.subr.bf16.mxu0 %v564
  %733 = vmatpush1.bf16.msra.mxu0 %v563
  %734 = vmatprep.subr.bf16.mxu0 %v566
  %735 = vmatpush1.bf16.msra.mxu0 %v565
  %736 = vmatprep.subr.bf16.mxu0 %v568
  %737 = vmatpush1.bf16.msra.mxu0 %v567
  %738 = vmatprep.subr.bf16.mxu0 %v570
  %739 = vmatpush1.bf16.msra.mxu0 %v569
  %740 = vmatprep.subr.bf16.mxu0 %v572
  %741 = vmatpush1.bf16.msra.mxu0 %v571
  %742 = vmatprep.subr.bf16.mxu0 %v574
  %743 = vmatpush1.bf16.msra.mxu0 %v573
  %744 = vmatprep.subr.bf16.mxu0 %v576
  %745 = vmatpush1.bf16.msra.mxu0 %v575
  %746 = vmatprep.subr.bf16.mxu0 %v578
  %747 = vmatpush1.bf16.msra.mxu0 %v577
  %748 = vmatprep.subr.bf16.mxu0 %v580
  %749 = vmatpush1.bf16.msra.mxu0 %v579
  %750 = vmatprep.subr.bf16.mxu0 %v582
  %751 = vmatpush1.bf16.msra.mxu0 %v581
  %752 = vmatprep.subr.bf16.mxu0 %v584
  %753 = vmatpush1.bf16.msra.mxu0 %v583
  %754 = vmatprep.subr.bf16.mxu0 %v586
  %755 = vmatpush1.bf16.msra.mxu0 %v585
  %756 = vmatprep.subr.bf16.mxu0 %v588
  %757 = vmatpush1.bf16.msra.mxu0 %v587
  %758 = vmatprep.subr.bf16.mxu0 %v590
  %759 = vmatpush1.bf16.msra.mxu0 %v589
  %760 = vmatprep.subr.bf16.mxu0 %v592
  %761 = vmatpush1.bf16.msra.mxu0 %v591
  %762 = vmatprep.subr.bf16.mxu0 %v594
  %763 = vmatpush1.bf16.msra.mxu0 %v593
  %764 = vmatprep.mubr.bf16.mxu0 %v276
  %765 = vmatmul.mubr.bf16.gmra.mrb[0].mxu0 %v275
  %v766 = vpop.f32.mrb[0].mxu0
  %v767 = vadd.f32 %v140, %v766
  %v768 = vpop.f32.mrb[0].mxu0
  %v769 = vadd.f32 %v144, %v768
  %v770 = vpop.f32.mrb[0].mxu0
  %v771 = vadd.f32 %v140, %v770
  %v772 = vpop.f32.mrb[0].mxu0
  %v773 = vadd.f32 %v144, %v772
  %774 = vmatprep.mubr.bf16.mxu0 %v281
  %775 = vmatmul.mubr.bf16.gmra.mrb[0].mxu0 %v280
  %v776 = vpop.f32.mrb[0].mxu0
  %v777 = vadd.f32 %v140, %v776
  %v778 = vpop.f32.mrb[0].mxu0
  %v779 = vadd.f32 %v144, %v778
  %v780 = vpop.f32.mrb[0].mxu0
  %v781 = vadd.f32 %v140, %v780
  %v782 = vpop.f32.mrb[0].mxu0
  %v783 = vadd.f32 %v144, %v782
  %784 = vmatprep.mubr.bf16.mxu0 %v286
  %785 = vmatmul.mubr.bf16.gmra.mrb[0].mxu0 %v285
  %v786 = vpop.f32.mrb[0].mxu0
  %v787 = vadd.f32 %v140, %v786
  %v788 = vpop.f32.mrb[0].mxu0
  %v789 = vadd.f32 %v144, %v788
  %v790 = vpop.f32.mrb[0].mxu0
  %v791 = vadd.f32 %v140, %v790
  %v792 = vpop.f32.mrb[0].mxu0
  %v793 = vadd.f32 %v144, %v792
  %794 = vmatprep.mubr.bf16.mxu0 %v291
  %795 = vmatmul.mubr.bf16.gmra.mrb[0].mxu0 %v290
  %v796 = vpop.f32.mrb[0].mxu0
  %v797 = vadd.f32 %v140, %v796
  %v798 = vpop.f32.mrb[0].mxu0
  %v799 = vadd.f32 %v144, %v798
  %v800 = vpop.f32.mrb[0].mxu0
  %v801 = vadd.f32 %v140, %v800
  %v802 = vpop.f32.mrb[0].mxu0
  %v803 = vadd.f32 %v144, %v802
  %804 = vmatprep.mubr.bf16.mxu0 %v296
  %805 = vmatmul.mubr.bf16.gmra.mrb[0].mxu0 %v295
  %v806 = vpop.f32.mrb[0].mxu0
  %v807 = vadd.f32 %v140, %v806
  %v808 = vpop.f32.mrb[0].mxu0
  %v809 = vadd.f32 %v144, %v808
  %v810 = vpop.f32.mrb[0].mxu0
  %v811 = vadd.f32 %v140, %v810
  %v812 = vpop.f32.mrb[0].mxu0
  %v813 = vadd.f32 %v144, %v812
  %814 = vmatprep.mubr.bf16.mxu0 %v301
  %815 = vmatmul.mubr.bf16.gmra.mrb[0].mxu0 %v300
  %v816 = vpop.f32.mrb[0].mxu0
  %v817 = vadd.f32 %v140, %v816
  %v818 = vpop.f32.mrb[0].mxu0
  %v819 = vadd.f32 %v144, %v818
  %v820 = vpop.f32.mrb[0].mxu0
  %v821 = vadd.f32 %v140, %v820
  %v822 = vpop.f32.mrb[0].mxu0
  %v823 = vadd.f32 %v144, %v822
  %824 = vmatprep.mubr.bf16.mxu0 %v306
  %825 = vmatmul.mubr.bf16.gmra.mrb[0].mxu0 %v305
  %v826 = vpop.f32.mrb[0].mxu0
  %v827 = vadd.f32 %v140, %v826
  %v828 = vpop.f32.mrb[0].mxu0
  %v829 = vadd.f32 %v144, %v828
  %v830 = vpop.f32.mrb[0].mxu0
  %v831 = vadd.f32 %v140, %v830
  %v832 = vpop.f32.mrb[0].mxu0
  %v833 = vadd.f32 %v144, %v832
  %834 = vmatprep.mubr.bf16.mxu0 %v311
  %835 = vmatmul.mubr.bf16.gmra.mrb[0].mxu0 %v310
  %v836 = vpop.f32.mrb[0].mxu0
  %v837 = vadd.f32 %v140, %v836
  %v838 = vpop.f32.mrb[0].mxu0
  %v839 = vadd.f32 %v144, %v838
  %v840 = vpop.f32.mrb[0].mxu0
  %v841 = vadd.f32 %v140, %v840
  %v842 = vpop.f32.mrb[0].mxu0
  %v843 = vadd.f32 %v144, %v842
  %844 = vdwg.mxu0
  %845 = vmatprep.subr.bf16.mxu0 %v596
  %846 = vmatpush1.bf16.msra.mxu0 %v595
  %847 = vmatprep.subr.bf16.mxu0 %v598
  %848 = vmatpush1.bf16.msra.mxu0 %v597
  %849 = vmatprep.subr.bf16.mxu0 %v600
  %850 = vmatpush1.bf16.msra.mxu0 %v599
  %851 = vmatprep.subr.bf16.mxu0 %v602
  %852 = vmatpush1.bf16.msra.mxu0 %v601
  %853 = vmatprep.subr.bf16.mxu0 %v604
  %854 = vmatpush1.bf16.msra.mxu0 %v603
  %855 = vmatprep.subr.bf16.mxu0 %v606
  %856 = vmatpush1.bf16.msra.mxu0 %v605
  %857 = vmatprep.subr.bf16.mxu0 %v608
  %858 = vmatpush1.bf16.msra.mxu0 %v607
  %859 = vmatprep.subr.bf16.mxu0 %v610
  %860 = vmatpush1.bf16.msra.mxu0 %v609
  %861 = vmatprep.subr.bf16.mxu0 %v612
  %862 = vmatpush1.bf16.msra.mxu0 %v611
  %863 = vmatprep.subr.bf16.mxu0 %v614
  %864 = vmatpush1.bf16.msra.mxu0 %v613
  %865 = vmatprep.subr.bf16.mxu0 %v616
  %866 = vmatpush1.bf16.msra.mxu0 %v615
  %867 = vmatprep.subr.bf16.mxu0 %v618
  %868 = vmatpush1.bf16.msra.mxu0 %v617
  %869 = vmatprep.subr.bf16.mxu0 %v620
  %870 = vmatpush1.bf16.msra.mxu0 %v619
  %871 = vmatprep.subr.bf16.mxu0 %v622
  %872 = vmatpush1.bf16.msra.mxu0 %v621
  %873 = vmatprep.subr.bf16.mxu0 %v624
  %874 = vmatpush1.bf16.msra.mxu0 %v623
  %875 = vmatprep.subr.bf16.mxu0 %v626
  %876 = vmatpush1.bf16.msra.mxu0 %v625
  %877 = vmatprep.mubr.bf16.mxu0 %v278
  %878 = vmatmul.mubr.bf16.gmra.mrb[0].mxu0 %v277
  %v879 = vpop.f32.mrb[0].mxu0
  %v880 = vadd.f32 %v767, %v879
  %v881 = vpop.f32.mrb[0].mxu0
  %v882 = vadd.f32 %v769, %v881
  %v883 = vpop.f32.mrb[0].mxu0
  %v884 = vadd.f32 %v771, %v883
  %v885 = vpop.f32.mrb[0].mxu0
  %v886 = vadd.f32 %v773, %v885
  %887 = vmatprep.mubr.bf16.mxu0 %v283
  %888 = vmatmul.mubr.bf16.gmra.mrb[0].mxu0 %v282
  %v889 = vpop.f32.mrb[0].mxu0
  %v890 = vadd.f32 %v777, %v889
  %v891 = vpop.f32.mrb[0].mxu0
  %v892 = vadd.f32 %v779, %v891
  %v893 = vpop.f32.mrb[0].mxu0
  %v894 = vadd.f32 %v781, %v893
  %v895 = vpop.f32.mrb[0].mxu0
  %v896 = vadd.f32 %v783, %v895
  %897 = vmatprep.mubr.bf16.mxu0 %v288
  %898 = vmatmul.mubr.bf16.gmra.mrb[0].mxu0 %v287
  %v899 = vpop.f32.mrb[0].mxu0
  %v900 = vadd.f32 %v787, %v899
  %v901 = vpop.f32.mrb[0].mxu0
  %v902 = vadd.f32 %v789, %v901
  %v903 = vpop.f32.mrb[0].mxu0
  %v904 = vadd.f32 %v791, %v903
  %v905 = vpop.f32.mrb[0].mxu0
  %v906 = vadd.f32 %v793, %v905
  %907 = vmatprep.mubr.bf16.mxu0 %v293
  %908 = vmatmul.mubr.bf16.gmra.mrb[0].mxu0 %v292
  %v909 = vpop.f32.mrb[0].mxu0
  %v910 = vadd.f32 %v797, %v909
  %v911 = vpop.f32.mrb[0].mxu0
  %v912 = vadd.f32 %v799, %v911
  %v913 = vpop.f32.mrb[0].mxu0
  %v914 = vadd.f32 %v801, %v913
  %v915 = vpop.f32.mrb[0].mxu0
  %v916 = vadd.f32 %v803, %v915
  %917 = vmatprep.mubr.bf16.mxu0 %v298
  %918 = vmatmul.mubr.bf16.gmra.mrb[0].mxu0 %v297
  %v919 = vpop.f32.mrb[0].mxu0
  %v920 = vadd.f32 %v807, %v919
  %v921 = vpop.f32.mrb[0].mxu0
  %v922 = vadd.f32 %v809, %v921
  %v923 = vpop.f32.mrb[0].mxu0
  %v924 = vadd.f32 %v811, %v923
  %v925 = vpop.f32.mrb[0].mxu0
  %v926 = vadd.f32 %v813, %v925
  %927 = vmatprep.mubr.bf16.mxu0 %v303
  %928 = vmatmul.mubr.bf16.gmra.mrb[0].mxu0 %v302
  %v929 = vpop.f32.mrb[0].mxu0
  %v930 = vadd.f32 %v817, %v929
  %v931 = vpop.f32.mrb[0].mxu0
  %v932 = vadd.f32 %v819, %v931
  %v933 = vpop.f32.mrb[0].mxu0
  %v934 = vadd.f32 %v821, %v933
  %v935 = vpop.f32.mrb[0].mxu0
  %v936 = vadd.f32 %v823, %v935
  %937 = vmatprep.mubr.bf16.mxu0 %v308
  %938 = vmatmul.mubr.bf16.gmra.mrb[0].mxu0 %v307
  %v939 = vpop.f32.mrb[0].mxu0
  %v940 = vadd.f32 %v827, %v939
  %v941 = vpop.f32.mrb[0].mxu0
  %v942 = vadd.f32 %v829, %v941
  %v943 = vpop.f32.mrb[0].mxu0
  %v944 = vadd.f32 %v831, %v943
  %v945 = vpop.f32.mrb[0].mxu0
  %v946 = vadd.f32 %v833, %v945
  %947 = vmatprep.mubr.bf16.mxu0 %v313
  %948 = vmatmul.mubr.bf16.gmra.mrb[0].mxu0 %v312
  %v949 = vpop.f32.mrb[0].mxu0
  %v950 = vadd.f32 %v837, %v949
  %v951 = vpop.f32.mrb[0].mxu0
  %v952 = vadd.f32 %v839, %v951
  %v953 = vpop.f32.mrb[0].mxu0
  %v954 = vadd.f32 %v841, %v953
  %v955 = vpop.f32.mrb[0].mxu0
  %v956 = vadd.f32 %v843, %v955
  %957 = vdwg.mxu0
  %958 = vmatprep.subr.bf16.mxu0 %v628
  %959 = vmatpush1.bf16.msra.mxu0 %v627
  %960 = vmatprep.subr.bf16.mxu0 %v630
  %961 = vmatpush1.bf16.msra.mxu0 %v629
  %962 = vmatprep.subr.bf16.mxu0 %v632
  %963 = vmatpush1.bf16.msra.mxu0 %v631
  %964 = vmatprep.subr.bf16.mxu0 %v634
  %965 = vmatpush1.bf16.msra.mxu0 %v633
  %966 = vmatprep.subr.bf16.mxu0 0
  %967 = vmatpush1.bf16.msra.mxu0 0
  %968 = vmatprep.subr.bf16.mxu0 0
  %969 = vmatpush1.bf16.msra.mxu0 0
  %970 = vmatprep.subr.bf16.mxu0 0
  %971 = vmatpush1.bf16.msra.mxu0 0
  %972 = vmatprep.subr.bf16.mxu0 0
  %973 = vmatpush1.bf16.msra.mxu0 0
  %974 = vmatprep.subr.bf16.mxu0 0
  %975 = vmatpush1.bf16.msra.mxu0 0
  %976 = vmatprep.subr.bf16.mxu0 0
  %977 = vmatpush1.bf16.msra.mxu0 0
  %978 = vmatprep.subr.bf16.mxu0 0
  %979 = vmatpush1.bf16.msra.mxu0 0
  %980 = vmatprep.subr.bf16.mxu0 0
  %981 = vmatpush1.bf16.msra.mxu0 0
  %982 = vmatprep.subr.bf16.mxu0 0
  %983 = vmatpush1.bf16.msra.mxu0 0
  %984 = vmatprep.subr.bf16.mxu0 0
  %985 = vmatpush1.bf16.msra.mxu0 0
  %986 = vmatprep.subr.bf16.mxu0 0
  %987 = vmatpush1.bf16.msra.mxu0 0
  %988 = vmatprep.subr.bf16.mxu0 0
  %989 = vmatpush1.bf16.msra.mxu0 0
  %990 = vmatprep.mubr.bf16.mxu0 0
  %991 = vmatmul.mubr.bf16.gmra.mrb[0].mxu0 %v709
  %v992 = vpop.f32.mrb[0].mxu0
  %v993 = vadd.f32 %v880, %v992
  %v994 = vpop.f32.mrb[0].mxu0
  %v995 = vadd.f32 %v882, %v994
  %v996 = vpop.f32.mrb[0].mxu0
  %v997 = vadd.f32 %v884, %v996
  %v998 = vpop.f32.mrb[0].mxu0
  %v999 = vadd.f32 %v886, %v998
  %1000 = vmatprep.mubr.bf16.mxu0 0
  %1001 = vmatmul.mubr.bf16.gmra.mrb[0].mxu0 %v712
  %v1002 = vpop.f32.mrb[0].mxu0
  %v1003 = vadd.f32 %v890, %v1002
  %v1004 = vpop.f32.mrb[0].mxu0
  %v1005 = vadd.f32 %v892, %v1004
  %v1006 = vpop.f32.mrb[0].mxu0
  %v1007 = vadd.f32 %v894, %v1006
  %v1008 = vpop.f32.mrb[0].mxu0
  %v1009 = vadd.f32 %v896, %v1008
  %1010 = vmatprep.mubr.bf16.mxu0 0
  %1011 = vmatmul.mubr.bf16.gmra.mrb[0].mxu0 %v715
  %v1012 = vpop.f32.mrb[0].mxu0
  %v1013 = vadd.f32 %v900, %v1012
  %v1014 = vpop.f32.mrb[0].mxu0
  %v1015 = vadd.f32 %v902, %v1014
  %v1016 = vpop.f32.mrb[0].mxu0
  %v1017 = vadd.f32 %v904, %v1016
  %v1018 = vpop.f32.mrb[0].mxu0
  %v1019 = vadd.f32 %v906, %v1018
  %1020 = vmatprep.mubr.bf16.mxu0 0
  %1021 = vmatmul.mubr.bf16.gmra.mrb[0].mxu0 %v718
  %v1022 = vpop.f32.mrb[0].mxu0
  %v1023 = vadd.f32 %v910, %v1022
  %v1024 = vpop.f32.mrb[0].mxu0
  %v1025 = vadd.f32 %v912, %v1024
  %v1026 = vpop.f32.mrb[0].mxu0
  %v1027 = vadd.f32 %v914, %v1026
  %v1028 = vpop.f32.mrb[0].mxu0
  %v1029 = vadd.f32 %v916, %v1028
  %1030 = vmatprep.mubr.bf16.mxu0 0
  %1031 = vmatmul.mubr.bf16.gmra.mrb[0].mxu0 %v721
  %v1032 = vpop.f32.mrb[0].mxu0
  %v1033 = vadd.f32 %v920, %v1032
  %v1034 = vpop.f32.mrb[0].mxu0
  %v1035 = vadd.f32 %v922, %v1034
  %v1036 = vpop.f32.mrb[0].mxu0
  %v1037 = vadd.f32 %v924, %v1036
  %v1038 = vpop.f32.mrb[0].mxu0
  %v1039 = vadd.f32 %v926, %v1038
  %1040 = vmatprep.mubr.bf16.mxu0 0
  %1041 = vmatmul.mubr.bf16.gmra.mrb[0].mxu0 %v724
  %v1042 = vpop.f32.mrb[0].mxu0
  %v1043 = vadd.f32 %v930, %v1042
  %v1044 = vpop.f32.mrb[0].mxu0
  %v1045 = vadd.f32 %v932, %v1044
  %v1046 = vpop.f32.mrb[0].mxu0
  %v1047 = vadd.f32 %v934, %v1046
  %v1048 = vpop.f32.mrb[0].mxu0
  %v1049 = vadd.f32 %v936, %v1048
  %1050 = vmatprep.mubr.bf16.mxu0 0
  %1051 = vmatmul.mubr.bf16.gmra.mrb[0].mxu0 %v727
  %v1052 = vpop.f32.mrb[0].mxu0
  %v1053 = vadd.f32 %v940, %v1052
  %v1054 = vpop.f32.mrb[0].mxu0
  %v1055 = vadd.f32 %v942, %v1054
  %v1056 = vpop.f32.mrb[0].mxu0
  %v1057 = vadd.f32 %v944, %v1056
  %v1058 = vpop.f32.mrb[0].mxu0
  %v1059 = vadd.f32 %v946, %v1058
  %1060 = vmatprep.mubr.bf16.mxu0 0
  %1061 = vmatmul.mubr.bf16.gmra.mrb[0].mxu0 %v730
  %v1062 = vpop.f32.mrb[0].mxu0
  %v1063 = vadd.f32 %v950, %v1062
  %v1064 = vpop.f32.mrb[0].mxu0
  %v1065 = vadd.f32 %v952, %v1064
  %v1066 = vpop.f32.mrb[0].mxu0
  %v1067 = vadd.f32 %v954, %v1066
  %v1068 = vpop.f32.mrb[0].mxu0
  %v1069 = vadd.f32 %v956, %v1068
  %1070 = vdwg.mxu0
  %v1071 = vmax.f32 %v993, 0.0
  %v1072 = vmax.f32 %v995, 0.0
  %v1073 = vmax.f32 %v997, 0.0
  %v1074 = vmax.f32 %v999, 0.0
  %v1075 = vmax.f32 %v1003, 0.0
  %v1076 = vmax.f32 %v1005, 0.0
  %v1077 = vmax.f32 %v1007, 0.0
  %v1078 = vmax.f32 %v1009, 0.0
  %v1079 = vmax.f32 %v1013, 0.0
  %v1080 = vmax.f32 %v1015, 0.0
  %v1081 = vmax.f32 %v1017, 0.0
  %v1082 = vmax.f32 %v1019, 0.0
  %v1083 = vmax.f32 %v1023, 0.0
  %v1084 = vmax.f32 %v1025, 0.0
  %v1085 = vmax.f32 %v1027, 0.0
  %v1086 = vmax.f32 %v1029, 0.0
  %v1087 = vmax.f32 %v1033, 0.0
  %v1088 = vmax.f32 %v1035, 0.0
  %v1089 = vmax.f32 %v1037, 0.0
  %v1090 = vmax.f32 %v1039, 0.0
  %v1091 = vmax.f32 %v1043, 0.0
  %v1092 = vmax.f32 %v1045, 0.0
  %v1093 = vmax.f32 %v1047, 0.0
  %v1094 = vmax.f32 %v1049, 0.0
  %v1095 = vmax.f32 %v1053, 0.0
  %v1096 = vmax.f32 %v1055, 0.0
  %v1097 = vmax.f32 %v1057, 0.0
  %v1098 = vmax.f32 %v1059, 0.0
  %v1099 = vmax.f32 %v1063, 0.0
  %v1100 = vmax.f32 %v1065, 0.0
  %v1101 = vmax.f32 %v1067, 0.0
  %v1102 = vmax.f32 %v1069, 0.0
  %1103 = vst [vmem:[%s3] sm:$0xff] %v1071
  %1104 = vst.msk [vmem:[%s3 + $0x8] sm:$0xff] %vm707, %v1072
  %1105 = vst [vmem:[%s3 + $0x10] sm:$0xff] %v1073
  %1106 = vst.msk [vmem:[%s3 + $0x18] sm:$0xff] %vm707, %v1074
  %1107 = vst [vmem:[%s3 + $0x20] sm:$0xff] %v1075
  %1108 = vst.msk [vmem:[%s3 + $0x28] sm:$0xff] %vm707, %v1076
  %1109 = vst [vmem:[%s3 + $0x30] sm:$0xff] %v1077
  %1110 = vst.msk [vmem:[%s3 + $0x38] sm:$0xff] %vm707, %v1078
  %1111 = vst [vmem:[%s3 + $0x40] sm:$0xff] %v1079
  %1112 = vst.msk [vmem:[%s3 + $0x48] sm:$0xff] %vm707, %v1080
  %1113 = vst [vmem:[%s3 + $0x50] sm:$0xff] %v1081
  %1114 = vst.msk [vmem:[%s3 + $0x58] sm:$0xff] %vm707, %v1082
  %1115 = vst [vmem:[%s3 + $0x60] sm:$0xff] %v1083
  %1116 = vst.msk [vmem:[%s3 + $0x68] sm:$0xff] %vm707, %v1084
  %1117 = vst [vmem:[%s3 + $0x70] sm:$0xff] %v1085
  %1118 = vst.msk [vmem:[%s3 + $0x78] sm:$0xff] %vm707, %v1086
  %1119 = vst [vmem:[%s3 + $0x80] sm:$0xff] %v1087
  %1120 = vst.msk [vmem:[%s3 + $0x88] sm:$0xff] %vm707, %v1088
  %1121 = vst [vmem:[%s3 + $0x90] sm:$0xff] %v1089
  %1122 = vst.msk [vmem:[%s3 + $0x98] sm:$0xff] %vm707, %v1090
  %1123 = vst [vmem:[%s3 + $0xa0] sm:$0xff] %v1091
  %1124 = vst.msk [vmem:[%s3 + $0xa8] sm:$0xff] %vm707, %v1092
  %1125 = vst [vmem:[%s3 + $0xb0] sm:$0xff] %v1093
  %1126 = vst.msk [vmem:[%s3 + $0xb8] sm:$0xff] %vm707, %v1094
  %1127 = vst [vmem:[%s3 + $0xc0] sm:$0xff] %v1095
  %1128 = vst.msk [vmem:[%s3 + $0xc8] sm:$0xff] %vm707, %v1096
  %1129 = vst [vmem:[%s3 + $0xd0] sm:$0xff] %v1097
  %1130 = vst.msk [vmem:[%s3 + $0xd8] sm:$0xff] %vm707, %v1098
  %1131 = vst [vmem:[%s3 + $0xe0] sm:$0xff] %v1099
  %1132 = vst.msk [vmem:[%s3 + $0xe8] sm:$0xff] %vm707, %v1100
  %1133 = vst [vmem:[%s3 + $0xf0] sm:$0xff] %v1101
  %1134 = vst.msk [vmem:[%s3 + $0xf8] sm:$0xff] %vm707, %v1102
  // Predicated region
  $region14: #{googlenet_forward.19} parent=0 // pred_check
    _
  $region15: #{googlenet_forward.19} parent=0 // pred_check_branch
    %1136 = sbr.rel (0) target = $region17
  $region16: #{googlenet_forward.19} parent=0 // pred_region
    _
  $region17: #{googlenet_forward.19} parent=0 // pred_fallthru
    _
  // Predicated region
  $region18: #{googlenet_forward.19} parent=0 // pred_check
    _
  $region19: #{googlenet_forward.19} parent=0 // pred_check_branch
    %1138 = sbr.rel (0) target = $region21
  $region20: #{googlenet_forward.19} parent=0 // pred_region
    _
  $region21: #{googlenet_forward.19} parent=0 // pred_fallthru
    _

// kernel: googlenet_forward.20
$region0: #{googlenet_forward.20}
  #allocation0 [shape = 'u32[]', space=smem, size = 0x4, offset = 0x4, fixed_abs, tag = 'smem constant byte address 0x4 - core index']
  #allocation1 [shape = 'u32[144,128]{1,0:T(1,128)}', space=vmem, size = 0x12000, scoped, tag = 'internal scratch']
  %s0 = inlined_call_operand.vmem [shape: f32[2,5,5,192], index: 0, kind: input, shape index: {}]
  %s1 = inlined_call_operand.vmem [shape: f32[2,5,4,192], index: 1, kind: input, shape index: {}]
  %s2 = inlined_call_operand.vmem [shape: f32[2,4,5,192], index: 2, kind: input, shape index: {}]
  %s3 = inlined_call_operand.vmem [shape: f32[2,4,4,192], index: 3, kind: input, shape index: {}]
  %s4 = inlined_call_operand.vmem [shape: f32[2,4,4,192], index: 4, kind: output, shape index: {}]
  %s5 = sld [smem:[#allocation0]]
  $region49: #{googlenet_forward.20} parent=0
    _
  %s7 = ssub.s32 1, %s5
  %s8 = scalar_select 0, %s7, %s5
  loop: start=0, step=1, limit=4
  $region2: #{googlenet_forward.20} parent=0 // loop_pre_header
    _
  $region3: #{googlenet_forward.20} parent=0 // loop_header
    %s10 = sphi 0, %s14
    %p11 = scmp.ge.s32.totalorder %s10, 4
    %s20 = sphi 0, %s22
    %s23 = sphi 0, %s20
    %s24 = sphi 0, %s23
    %s40 = sphi 0, %s24
    %s46 = sphi 0, %s48
    %s49 = sphi 0, %s46
    %s50 = sphi 0, %s49
    %s66 = sphi 0, %s50
    %s72 = sphi 0, %s74
    %s75 = sphi 0, %s72
    %s76 = sphi 0, %s75
    %s92 = sphi 0, %s76
    %s98 = sphi 0, %s100
    %s101 = sphi 0, %s98
    %s102 = sphi 0, %s101
    %s118 = sphi 0, %s102
    %s124 = sphi 0, %s126
    %s127 = sphi 0, %s124
    %s128 = sphi 0, %s127
    %s144 = sphi 0, %s128
  $region4: #{googlenet_forward.20} parent=0 // loop_header_branch
    %13 = sbr.rel (%p11) target = $region8
  $region5: #{googlenet_forward.20} parent=0 // loop_body
    %s15 = ssub.s32 %s10, 1
    %s16 = ssub.s32 %s10, 2
    %s17 = sadd.s32 %s10, 1
    %s18 = ssub.s32 %s10, %s17
    %p19 = scmp.eq.s32.totalorder %s18, 0
    %s21 = sadd.s32 %s20, 1
    %s22 = scalar_select %p19, %s20, %s21
    %p25 = pneg %p19
    %p26 = scmp.eq.s32.totalorder %s10, 1
    %p27 = por %p25, %p26
    %p28 = scmp.ne.s32.totalorder %s20, %s23
    %p29 = scmp.eq.s32.totalorder %s10, 0
    %p30 = por %p28, %p29
    %p31 = scmp.ne.s32.totalorder %s20, %s23
    %p32 = scmp.eq.s32.totalorder %s15, 1
    %p33 = por %p31, %p32
    %p34 = scmp.ne.s32.totalorder %s23, %s24
    %p35 = scmp.eq.s32.totalorder %s15, 0
    %p36 = por %p34, %p35
    %p37 = scmp.ne.s32.totalorder %s23, %s24
    %p38 = scmp.eq.s32.totalorder %s16, 1
    %p39 = por %p37, %p38
    %p41 = scmp.ne.s32.totalorder %s24, %s40
    %p42 = scmp.eq.s32.totalorder %s16, 0
    %p43 = por %p41, %p42
    %s44 = ssub.s32 %s10, %s17
    %p45 = scmp.eq.s32.totalorder %s44, 0
    %s47 = sadd.s32 %s46, 1
    %s48 = scalar_select %p45, %s46, %s47
    %p51 = pneg %p45
    %p52 = scmp.eq.s32.totalorder %s10, 1
    %p53 = por %p51, %p52
    %p54 = scmp.ne.s32.totalorder %s46, %s49
    %p55 = scmp.eq.s32.totalorder %s10, 0
    %p56 = por %p54, %p55
    %p57 = scmp.ne.s32.totalorder %s46, %s49
    %p58 = scmp.eq.s32.totalorder %s15, 1
    %p59 = por %p57, %p58
    %p60 = scmp.ne.s32.totalorder %s49, %s50
    %p61 = scmp.eq.s32.totalorder %s15, 0
    %p62 = por %p60, %p61
    %p63 = scmp.ne.s32.totalorder %s49, %s50
    %p64 = scmp.eq.s32.totalorder %s16, 1
    %p65 = por %p63, %p64
    %p67 = scmp.ne.s32.totalorder %s50, %s66
    %p68 = scmp.eq.s32.totalorder %s16, 0
    %p69 = por %p67, %p68
    %s70 = ssub.s32 %s10, %s17
    %p71 = scmp.eq.s32.totalorder %s70, 0
    %s73 = sadd.s32 %s72, 1
    %s74 = scalar_select %p71, %s72, %s73
    %p77 = pneg %p71
    %p78 = scmp.eq.s32.totalorder %s10, 1
    %p79 = por %p77, %p78
    %p80 = scmp.ne.s32.totalorder %s72, %s75
    %p81 = scmp.eq.s32.totalorder %s10, 0
    %p82 = por %p80, %p81
    %p83 = scmp.ne.s32.totalorder %s72, %s75
    %p84 = scmp.eq.s32.totalorder %s15, 1
    %p85 = por %p83, %p84
    %p86 = scmp.ne.s32.totalorder %s75, %s76
    %p87 = scmp.eq.s32.totalorder %s15, 0
    %p88 = por %p86, %p87
    %p89 = scmp.ne.s32.totalorder %s75, %s76
    %p90 = scmp.eq.s32.totalorder %s16, 1
    %p91 = por %p89, %p90
    %p93 = scmp.ne.s32.totalorder %s76, %s92
    %p94 = scmp.eq.s32.totalorder %s16, 0
    %p95 = por %p93, %p94
    %s96 = ssub.s32 %s10, %s17
    %p97 = scmp.eq.s32.totalorder %s96, 0
    %s99 = sadd.s32 %s98, 1
    %s100 = scalar_select %p97, %s98, %s99
    %p103 = pneg %p97
    %p104 = scmp.eq.s32.totalorder %s10, 1
    %p105 = por %p103, %p104
    %p106 = scmp.ne.s32.totalorder %s98, %s101
    %p107 = scmp.eq.s32.totalorder %s10, 0
    %p108 = por %p106, %p107
    %p109 = scmp.ne.s32.totalorder %s98, %s101
    %p110 = scmp.eq.s32.totalorder %s15, 1
    %p111 = por %p109, %p110
    %p112 = scmp.ne.s32.totalorder %s101, %s102
    %p113 = scmp.eq.s32.totalorder %s15, 0
    %p114 = por %p112, %p113
    %p115 = scmp.ne.s32.totalorder %s101, %s102
    %p116 = scmp.eq.s32.totalorder %s16, 1
    %p117 = por %p115, %p116
    %p119 = scmp.ne.s32.totalorder %s102, %s118
    %p120 = scmp.eq.s32.totalorder %s16, 0
    %p121 = por %p119, %p120
    %s122 = ssub.s32 %s10, %s17
    %p123 = scmp.eq.s32.totalorder %s122, 0
    %s125 = sadd.s32 %s124, 1
    %s126 = scalar_select %p123, %s124, %s125
    %p129 = pneg %p123
    %p130 = scmp.eq.s32.totalorder %s10, 1
    %p131 = por %p129, %p130
    %p132 = scmp.ne.s32.totalorder %s124, %s127
    %p133 = scmp.eq.s32.totalorder %s10, 0
    %p134 = por %p132, %p133
    %p135 = scmp.ne.s32.totalorder %s124, %s127
    %p136 = scmp.eq.s32.totalorder %s15, 1
    %p137 = por %p135, %p136
    %p138 = scmp.ne.s32.totalorder %s127, %s128
    %p139 = scmp.eq.s32.totalorder %s15, 0
    %p140 = por %p138, %p139
    %p141 = scmp.ne.s32.totalorder %s127, %s128
    %p142 = scmp.eq.s32.totalorder %s16, 1
    %p143 = por %p141, %p142
    %p145 = scmp.ne.s32.totalorder %s128, %s144
    %p146 = scmp.eq.s32.totalorder %s16, 0
    %p147 = por %p145, %p146
    %p148 = scmp.le.s32.totalorder 1, %s10
    %p149 = scmp.lt.s32.totalorder %s10, 3
    %p150 = pnand %p148, %p149
    %p151 = pneg %p150
    // Predicated region
    $region9: #{googlenet_forward.20} parent=5 // pred_check
      _
    $region10: #{googlenet_forward.20} parent=5 // pred_check_branch
      %153 = sbr.rel (%p150) target = $region12
    $region11: #{googlenet_forward.20} parent=5 // pred_region
      %s154 = ssub.s32 %s10, 1
    $region12: #{googlenet_forward.20} parent=5 // pred_fallthru
      _
    %p155 = scmp.lt.s32.totalorder %s10, 2
    // Predicated region
    $region13: #{googlenet_forward.20} parent=5 // pred_check
      %p156 = pneg %p155
    $region14: #{googlenet_forward.20} parent=5 // pred_check_branch
      %158 = sbr.rel (%p156) target = $region16
    $region15: #{googlenet_forward.20} parent=5 // pred_region
      // Predicated region
      $region17: #{googlenet_forward.20} parent=15 // pred_check
        %p159 = pneg %p30
      $region18: #{googlenet_forward.20} parent=15 // pred_check_branch
        %161 = sbr.rel (%p159) target = $region20
      $region19: #{googlenet_forward.20} parent=15 // pred_region
        %p162 = scmp.lt.s32.totalorder %s10, 1
        %s163 = scalar_select %p162, %s10, 1
        %s164 = smul.addr %s163, 10
        %s165 = smul.addr %s164, 8
        %s166 = scalar_lea.vmem %s0, %s165
      $region20: #{googlenet_forward.20} parent=15 // pred_fallthru
        _
      // Predicated region
      $region21: #{googlenet_forward.20} parent=15 // pred_check
        %p167 = pneg %p56
      $region22: #{googlenet_forward.20} parent=15 // pred_check_branch
        %169 = sbr.rel (%p167) target = $region24
      $region23: #{googlenet_forward.20} parent=15 // pred_region
        %p170 = scmp.lt.s32.totalorder %s10, 1
        %s171 = scalar_select %p170, %s10, 1
        %s172 = smul.addr %s171, 10
        %s173 = smul.addr %s172, 4
        %s174 = scalar_lea.vmem %s1, %s173
      $region24: #{googlenet_forward.20} parent=15 // pred_fallthru
        _
      // Predicated region
      $region25: #{googlenet_forward.20} parent=15 // pred_check
        %p175 = pneg %p82
      $region26: #{googlenet_forward.20} parent=15 // pred_check_branch
        %177 = sbr.rel (%p175) target = $region28
      $region27: #{googlenet_forward.20} parent=15 // pred_region
        %p178 = scmp.lt.s32.totalorder %s10, 1
        %s179 = scalar_select %p178, %s10, 1
        %s180 = smul.addr %s179, 8
        %s181 = smul.addr %s180, 8
        %s182 = scalar_lea.vmem %s2, %s181
      $region28: #{googlenet_forward.20} parent=15 // pred_fallthru
        _
      // Predicated region
      $region29: #{googlenet_forward.20} parent=15 // pred_check
        %p183 = pneg %p108
      $region30: #{googlenet_forward.20} parent=15 // pred_check_branch
        %185 = sbr.rel (%p183) target = $region32
      $region31: #{googlenet_forward.20} parent=15 // pred_region
        %p186 = scmp.lt.s32.totalorder %s10, 1
        %s187 = scalar_select %p186, %s10, 1
        %s188 = smul.addr %s187, 8
        %s189 = smul.addr %s188, 4
        %s190 = scalar_lea.vmem %s3, %s189
      $region32: #{googlenet_forward.20} parent=15 // pred_fallthru
        _
    $region16: #{googlenet_forward.20} parent=5 // pred_fallthru
      _
    %p191 = scmp.le.s32.totalorder 1, %s10
    %p192 = scmp.lt.s32.totalorder %s10, 3
    %p193 = pnand %p191, %p192
    %p194 = pneg %p193
    // Predicated region
    $region33: #{googlenet_forward.20} parent=5 // pred_check
      _
    $region34: #{googlenet_forward.20} parent=5 // pred_check_branch
      %196 = sbr.rel (%p193) target = $region36
    $region35: #{googlenet_forward.20} parent=5 // pred_region
      %s197 = ssub.s32 %s10, 1
      %p198 = scmp.lt.s32.totalorder %s15, 1
      %s199 = scalar_select %p198, %s15, 1
      %s200 = smul.addr %s199, 10
      %s201 = smul.addr %s200, 8
      %s202 = scalar_lea.vmem %s0, %s201
      %p203 = pneg %p36
      %p204 = pneg %p33
      %p205 = scmp.lt.s32.totalorder %s15, 1
      %s206 = scalar_select %p205, %s15, 1
      %s207 = smul.addr %s206, 10
      %s208 = smul.addr %s207, 4
      %s209 = scalar_lea.vmem %s1, %s208
      %p210 = pneg %p62
      %p211 = pneg %p59
      %p212 = scmp.lt.s32.totalorder %s15, 1
      %s213 = scalar_select %p212, %s15, 1
      %s214 = smul.addr %s213, 8
      %s215 = smul.addr %s214, 8
      %s216 = scalar_lea.vmem %s2, %s215
      %p217 = pneg %p88
      %p218 = pneg %p85
      %p219 = scmp.lt.s32.totalorder %s15, 1
      %s220 = scalar_select %p219, %s15, 1
      %s221 = smul.addr %s220, 8
      %s222 = smul.addr %s221, 4
      %s223 = scalar_lea.vmem %s3, %s222
      %p224 = pneg %p114
      %p225 = pneg %p111
      %p226 = pneg %p140
      %p227 = pneg %p137
      %p228 = scmp.lt.s32.totalorder %s15, 1
      %s229 = scalar_select %p228, %s15, 1
      %s230 = smul.addr %s229, 8
      %s231 = smul.addr %s230, 4
      %s232 = scalar_lea.vmem %s4, %s231
      %p233 = scmp.lt.s32.totalorder %s15, 1
      %s234 = scalar_select %p233, %s15, 1
      %s235 = smul.addr %s234, 10
      %s236 = smul.addr %s235, 8
      %s237 = scalar_lea.vmem %s0, %s236
      %p238 = scmp.lt.s32.totalorder %s15, 1
      %s239 = scalar_select %p238, %s15, 1
      %s240 = smul.addr %s239, 10
      %s241 = smul.addr %s240, 4
      %s242 = scalar_lea.vmem %s1, %s241
      %p243 = scmp.lt.s32.totalorder %s15, 1
      %s244 = scalar_select %p243, %s15, 1
      %s245 = smul.addr %s244, 8
      %s246 = smul.addr %s245, 8
      %s247 = scalar_lea.vmem %s2, %s246
      %p248 = scmp.lt.s32.totalorder %s15, 1
      %s249 = scalar_select %p248, %s15, 1
      %s250 = smul.addr %s249, 8
      %s251 = smul.addr %s250, 4
      %s252 = scalar_lea.vmem %s3, %s251
      %p253 = scmp.lt.s32.totalorder %s15, 1
      %s254 = scalar_select %p253, %s15, 1
      %s255 = smul.addr %s254, 8
      %s256 = smul.addr %s255, 4
      %s257 = scalar_lea.vmem %s4, %s256
      %v258 = vld [vmem:[%s237] sm:$0xf]
      %v259 = vld [vmem:[%s237 + $0x8] sm:$0xf]
      %v260 = vld [vmem:[%s237 + $0x10] sm:$0xf]
      %v261 = vld [vmem:[%s237 + $0x18] sm:$0xf]
      %v262 = vld [vmem:[%s237 + $0x20] sm:$0xf]
      %v263 = vld [vmem:[%s237 + $0x28] sm:$0xf]
      %v264 = vld [vmem:[%s237 + $0x30] sm:$0xf]
      %v265 = vld [vmem:[%s237 + $0x38] sm:$0xf]
      %v266 = vld [vmem:[%s237] sm:$0x1e]
      %v267 = vld [vmem:[%s237 + $0x8] sm:$0x1e]
      %v268 = vld [vmem:[%s237 + $0x10] sm:$0x1e]
      %v269 = vld [vmem:[%s237 + $0x18] sm:$0x1e]
      %v270 = vld [vmem:[%s237 + $0x20] sm:$0x1e]
      %v271 = vld [vmem:[%s237 + $0x28] sm:$0x1e]
      %v272 = vld [vmem:[%s237 + $0x30] sm:$0x1e]
      %v273 = vld [vmem:[%s237 + $0x38] sm:$0x1e]
      %v282 = vrot.slane %v266, 1
      %v283 = vrot.slane %v267, 1
      %v284 = vrot.slane %v268, 1
      %v285 = vrot.slane %v269, 1
      %v286 = vrot.slane %v270, 1
      %v287 = vrot.slane %v271, 1
      %v288 = vrot.slane %v272, 1
      %v289 = vrot.slane %v273, 1
      %v298 = vmax.f32 %v258, %v282
      %v299 = vmax.f32 %v259, %v283
      %v300 = vmax.f32 %v260, %v284
      %v301 = vmax.f32 %v261, %v285
      %v302 = vmax.f32 %v262, %v286
      %v303 = vmax.f32 %v263, %v287
      %v304 = vmax.f32 %v264, %v288
      %v305 = vmax.f32 %v265, %v289
      %s306 = scalar_lea.vmem %s237, 16
      %v307 = vld [vmem:[%s306] sm:$0xf]
      %v308 = vld [vmem:[%s306 + $0x8] sm:$0xf]
      %v309 = vld [vmem:[%s306 + $0x10] sm:$0xf]
      %v310 = vld [vmem:[%s306 + $0x18] sm:$0xf]
      %v311 = vld [vmem:[%s306 + $0x20] sm:$0xf]
      %v312 = vld [vmem:[%s306 + $0x28] sm:$0xf]
      %v313 = vld [vmem:[%s306 + $0x30] sm:$0xf]
      %v314 = vld [vmem:[%s306 + $0x38] sm:$0xf]
      %v315 = vmax.f32 %v298, %v307
      %v316 = vmax.f32 %v299, %v308
      %v317 = vmax.f32 %v300, %v309
      %v318 = vmax.f32 %v301, %v310
      %v319 = vmax.f32 %v302, %v311
      %v320 = vmax.f32 %v303, %v312
      %v321 = vmax.f32 %v304, %v313
      %v322 = vmax.f32 %v305, %v314
      %v323 = vld [vmem:[%s306] sm:$0x1e]
      %v324 = vld [vmem:[%s306 + $0x8] sm:$0x1e]
      %v325 = vld [vmem:[%s306 + $0x10] sm:$0x1e]
      %v326 = vld [vmem:[%s306 + $0x18] sm:$0x1e]
      %v327 = vld [vmem:[%s306 + $0x20] sm:$0x1e]
      %v328 = vld [vmem:[%s306 + $0x28] sm:$0x1e]
      %v329 = vld [vmem:[%s306 + $0x30] sm:$0x1e]
      %v330 = vld [vmem:[%s306 + $0x38] sm:$0x1e]
      %v339 = vrot.slane %v323, 1
      %v340 = vrot.slane %v324, 1
      %v341 = vrot.slane %v325, 1
      %v342 = vrot.slane %v326, 1
      %v343 = vrot.slane %v327, 1
      %v344 = vrot.slane %v328, 1
      %v345 = vrot.slane %v329, 1
      %v346 = vrot.slane %v330, 1
      %v355 = vmax.f32 %v315, %v339
      %v356 = vmax.f32 %v316, %v340
      %v357 = vmax.f32 %v317, %v341
      %v358 = vmax.f32 %v318, %v342
      %v359 = vmax.f32 %v319, %v343
      %v360 = vmax.f32 %v320, %v344
      %v361 = vmax.f32 %v321, %v345
      %v362 = vmax.f32 %v322, %v346
      %v363 = vld [vmem:[%s242] sm:$0xff]
      %v364 = vld [vmem:[%s242 + $0x8] sm:$0xff]
      %v365 = vld [vmem:[%s242 + $0x10] sm:$0xff]
      %v366 = vld [vmem:[%s242 + $0x18] sm:$0xff]
      %v371 = vcombine.high %v363, %v363
      %v372 = vcombine.high %v364, %v364
      %v373 = vcombine.high %v365, %v365
      %v374 = vcombine.high %v366, %v366
      %v379 = vmax.f32 %v355, %v363
      %v380 = vmax.f32 %v356, %v371
      %v381 = vmax.f32 %v357, %v364
      %v382 = vmax.f32 %v358, %v372
      %v383 = vmax.f32 %v359, %v365
      %v384 = vmax.f32 %v360, %v373
      %v385 = vmax.f32 %v361, %v366
      %v386 = vmax.f32 %v362, %v374
      %s387 = scalar_lea.vmem %s242, 8
      %v388 = vld [vmem:[%s387] sm:$0xff]
      %v389 = vld [vmem:[%s387 + $0x8] sm:$0xff]
      %v390 = vld [vmem:[%s387 + $0x10] sm:$0xff]
      %v391 = vld [vmem:[%s387 + $0x18] sm:$0xff]
      %v396 = vcombine.high %v388, %v388
      %v397 = vcombine.high %v389, %v389
      %v398 = vcombine.high %v390, %v390
      %v399 = vcombine.high %v391, %v391
      %v404 = vmax.f32 %v379, %v388
      %v405 = vmax.f32 %v380, %v396
      %v406 = vmax.f32 %v381, %v389
      %v407 = vmax.f32 %v382, %v397
      %v408 = vmax.f32 %v383, %v390
      %v409 = vmax.f32 %v384, %v398
      %v410 = vmax.f32 %v385, %v391
      %v411 = vmax.f32 %v386, %v399
      %v412 = vld [vmem:[%s247] sm:$0xf]
      %v413 = vld [vmem:[%s247 + $0x8] sm:$0xf]
      %v414 = vld [vmem:[%s247 + $0x10] sm:$0xf]
      %v415 = vld [vmem:[%s247 + $0x18] sm:$0xf]
      %v416 = vld [vmem:[%s247 + $0x20] sm:$0xf]
      %v417 = vld [vmem:[%s247 + $0x28] sm:$0xf]
      %v418 = vld [vmem:[%s247 + $0x30] sm:$0xf]
      %v419 = vld [vmem:[%s247 + $0x38] sm:$0xf]
      %v420 = vmax.f32 %v404, %v412
      %v421 = vmax.f32 %v405, %v413
      %v422 = vmax.f32 %v406, %v414
      %v423 = vmax.f32 %v407, %v415
      %v424 = vmax.f32 %v408, %v416
      %v425 = vmax.f32 %v409, %v417
      %v426 = vmax.f32 %v410, %v418
      %v427 = vmax.f32 %v411, %v419
      %v428 = vld [vmem:[%s247] sm:$0x1e]
      %v429 = vld [vmem:[%s247 + $0x8] sm:$0x1e]
      %v430 = vld [vmem:[%s247 + $0x10] sm:$0x1e]
      %v431 = vld [vmem:[%s247 + $0x18] sm:$0x1e]
      %v432 = vld [vmem:[%s247 + $0x20] sm:$0x1e]
      %v433 = vld [vmem:[%s247 + $0x28] sm:$0x1e]
      %v434 = vld [vmem:[%s247 + $0x30] sm:$0x1e]
      %v435 = vld [vmem:[%s247 + $0x38] sm:$0x1e]
      %v444 = vrot.slane %v428, 1
      %v445 = vrot.slane %v429, 1
      %v446 = vrot.slane %v430, 1
      %v447 = vrot.slane %v431, 1
      %v448 = vrot.slane %v432, 1
      %v449 = vrot.slane %v433, 1
      %v450 = vrot.slane %v434, 1
      %v451 = vrot.slane %v435, 1
      %v460 = vmax.f32 %v420, %v444
      %v461 = vmax.f32 %v421, %v445
      %v462 = vmax.f32 %v422, %v446
      %v463 = vmax.f32 %v423, %v447
      %v464 = vmax.f32 %v424, %v448
      %v465 = vmax.f32 %v425, %v449
      %v466 = vmax.f32 %v426, %v450
      %v467 = vmax.f32 %v427, %v451
      %v468 = vld [vmem:[%s252] sm:$0xff]
      %v469 = vld [vmem:[%s252 + $0x8] sm:$0xff]
      %v470 = vld [vmem:[%s252 + $0x10] sm:$0xff]
      %v471 = vld [vmem:[%s252 + $0x18] sm:$0xff]
      %v476 = vcombine.high %v468, %v468
      %v477 = vcombine.high %v469, %v469
      %v478 = vcombine.high %v470, %v470
      %v479 = vcombine.high %v471, %v471
      %v484 = vmax.f32 %v460, %v468
      %v485 = vmax.f32 %v461, %v476
      %v486 = vmax.f32 %v462, %v469
      %v487 = vmax.f32 %v463, %v477
      %v488 = vmax.f32 %v464, %v470
      %v489 = vmax.f32 %v465, %v478
      %v490 = vmax.f32 %v466, %v471
      %v491 = vmax.f32 %v467, %v479
      %v500 = vcombine.low %v484, %v485
      %v501 = vcombine.low %v486, %v487
      %v502 = vcombine.low %v488, %v489
      %v503 = vcombine.low %v490, %v491
      %vm508 = vcmask 1043456
      %vm509 = vcmask 523268
      %vm510 = vmor %vm509, %vm508
      %511 = vst.msk [vmem:[%s257] sm:$0xff] %vm510, %v500
      %512 = vst.msk [vmem:[%s257 + $0x8] sm:$0xff] %vm510, %v501
      %513 = vst.msk [vmem:[%s257 + $0x10] sm:$0xff] %vm510, %v502
      %514 = vst.msk [vmem:[%s257 + $0x18] sm:$0xff] %vm510, %v503
      %p515 = scmp.lt.s32.totalorder %s15, 1
      %s516 = scalar_select %p515, %s15, 1
      %s517 = smul.addr %s516, 8
      %s518 = smul.addr %s517, 4
      %s519 = scalar_lea.vmem %s4, %s518
      // Predicated region
      $region37: #{googlenet_forward.20} parent=35 // pred_check
        %p520 = pneg %p137
      $region38: #{googlenet_forward.20} parent=35 // pred_check_branch
        %522 = sbr.rel (%p520) target = $region40
      $region39: #{googlenet_forward.20} parent=35 // pred_region
        _
      $region40: #{googlenet_forward.20} parent=35 // pred_fallthru
        _
    $region36: #{googlenet_forward.20} parent=5 // pred_fallthru
      _
    %p523 = scmp.le.s32.totalorder 2, %s10
    // Predicated region
    $region41: #{googlenet_forward.20} parent=5 // pred_check
      %p524 = pneg %p523
    $region42: #{googlenet_forward.20} parent=5 // pred_check_branch
      %526 = sbr.rel (%p524) target = $region44
    $region43: #{googlenet_forward.20} parent=5 // pred_region
      %s527 = ssub.s32 %s10, 2
      // Predicated region
      $region45: #{googlenet_forward.20} parent=43 // pred_check
        %p528 = pneg %p143
      $region46: #{googlenet_forward.20} parent=43 // pred_check_branch
        %530 = sbr.rel (%p528) target = $region48
      $region47: #{googlenet_forward.20} parent=43 // pred_region
        %p531 = scmp.lt.s32.totalorder %s16, 1
        %s532 = scalar_select %p531, %s16, 1
        %s533 = smul.addr %s532, 8
        %s534 = smul.addr %s533, 4
        %s535 = scalar_lea.vmem %s4, %s534
      $region48: #{googlenet_forward.20} parent=43 // pred_fallthru
        _
    $region44: #{googlenet_forward.20} parent=5 // pred_fallthru
      _
  $region6: #{googlenet_forward.20} parent=0 // loop_footer
    %s14 = sadd.s32 1, %s10
  $region7: #{googlenet_forward.20} parent=0 // loop_footer_branch
    %9 = sbr.rel target = $region3
  $region8: #{googlenet_forward.20} parent=0 // loop_exit
    _

// kernel: googlenet_forward.21
$region0: #{googlenet_forward.21}
  #allocation0 [shape = 'u32[]', space=smem, size = 0x4, offset = 0x4, fixed_abs, tag = 'smem constant byte address 0x4 - core index']
  #allocation1 [shape = 'u32[144,128]{1,0:T(1,128)}', space=vmem, size = 0x12000, scoped, tag = 'internal scratch']
  %s0 = inlined_call_operand.vmem [shape: bf16[32,192], index: 0, kind: input, shape index: {}]
  %s1 = inlined_call_operand.vmem [shape: bf16[192,176], index: 1, kind: input, shape index: {}]
  %s2 = inlined_call_operand.vmem [shape: f32[1,176], index: 2, kind: input, shape index: {}]
  %s3 = inlined_call_operand.vmem [shape: f32[32,176], index: 3, kind: output, shape index: {}]
  %s4 = sld [smem:[#allocation0]]
  $region22: #{googlenet_forward.21} parent=0
    _
  %s6 = ssub.s32 1, %s4
  %s7 = scalar_select 0, %s6, %s4
  // Predicated region
  $region2: #{googlenet_forward.21} parent=0 // pred_check
    _
  $region3: #{googlenet_forward.21} parent=0 // pred_check_branch
    %9 = sbr.rel (0) target = $region5
  $region4: #{googlenet_forward.21} parent=0 // pred_region
    _
  $region5: #{googlenet_forward.21} parent=0 // pred_fallthru
    _
  // Predicated region
  $region6: #{googlenet_forward.21} parent=0 // pred_check
    _
  $region7: #{googlenet_forward.21} parent=0 // pred_check_branch
    %11 = sbr.rel (0) target = $region9
  $region8: #{googlenet_forward.21} parent=0 // pred_region
    _
  $region9: #{googlenet_forward.21} parent=0 // pred_fallthru
    _
  // Predicated region
  $region10: #{googlenet_forward.21} parent=0 // pred_check
    _
  $region11: #{googlenet_forward.21} parent=0 // pred_check_branch
    %13 = sbr.rel (0) target = $region13
  $region12: #{googlenet_forward.21} parent=0 // pred_region
    _
  $region13: #{googlenet_forward.21} parent=0 // pred_fallthru
    _
  %v15 = vld [vmem:[%s0] sm:$0xff]
  %v16 = vld [vmem:[%s0 + $0x8] sm:$0xff]
  %v17 = vld [vmem:[%s0 + $0x10] sm:$0xff]
  %v18 = vld [vmem:[%s0 + $0x18] sm:$0xff]
  %v19 = vld [vmem:[%s1] sm:$0xff]
  %v20 = vld [vmem:[%s1 + $0x8] sm:$0xff]
  %v21 = vld [vmem:[%s1 + $0x10] sm:$0xff]
  %v22 = vld [vmem:[%s1 + $0x18] sm:$0xff]
  %v23 = vld [vmem:[%s1 + $0x20] sm:$0xff]
  %v24 = vld [vmem:[%s1 + $0x28] sm:$0xff]
  %v25 = vld [vmem:[%s1 + $0x30] sm:$0xff]
  %v26 = vld [vmem:[%s1 + $0x38] sm:$0xff]
  %v27 = vld [vmem:[%s1 + $0x40] sm:$0xff]
  %v28 = vld [vmem:[%s1 + $0x48] sm:$0xff]
  %v29 = vld [vmem:[%s1 + $0x50] sm:$0xff]
  %v30 = vld [vmem:[%s1 + $0x58] sm:$0xff]
  %v31 = vld [vmem:[%s1 + $0x60] sm:$0xff]
  %v32 = vld [vmem:[%s1 + $0x68] sm:$0xff]
  %v33 = vld [vmem:[%s1 + $0x70] sm:$0xff]
  %v34 = vld [vmem:[%s1 + $0x78] sm:$0xff]
  %v35 = vld [vmem:[%s1 + $0x80] sm:$0xff]
  %v36 = vld [vmem:[%s1 + $0x88] sm:$0xff]
  %v37 = vld [vmem:[%s1 + $0x90] sm:$0xff]
  %v38 = vld [vmem:[%s1 + $0x98] sm:$0xff]
  %v39 = vld [vmem:[%s1 + $0xa0] sm:$0xff]
  %v40 = vld [vmem:[%s1 + $0xa8] sm:$0xff]
  %v41 = vld [vmem:[%s1 + $0xb0] sm:$0xff]
  %v42 = vld [vmem:[%s1 + $0xb8] sm:$0xff]
  %v43 = vld [vmem:[%s2] sm:$0x3]
  %v45 = vlaneseq
  %v46 = vshrl.u32 %v45, 7
  %v47 = vsub.s32 0, %v46
  %v48 = vrot.slane %v43, %v47
  %v49 = vlaneseq
  %v50 = vshrl.u32 %v49, 7
  %v51 = vsub.s32 1, %v50
  %v52 = vrot.slane %v43, %v51
  %v59 = vunpack.c.l.b16 %v15
  %v60 = vunpack.c.h.b16 %v15
  %v61 = vunpack.c.l.b16 %v16
  %v62 = vunpack.c.h.b16 %v16
  %v63 = vunpack.c.l.b16 %v17
  %v64 = vunpack.c.h.b16 %v17
  %v65 = vunpack.c.l.b16 %v18
  %v66 = vunpack.c.h.b16 %v18
  %v67 = vpack.c.b16 %v61, %v59
  %v68 = vpack.c.b16 %v62, %v60
  %v69 = vpack.c.b16 %v65, %v63
  %v70 = vpack.c.b16 %v66, %v64
  %v97 = vunpack.c.l.b16 %v19
  %v98 = vunpack.c.h.b16 %v19
  %v99 = vunpack.c.l.b16 %v20
  %v100 = vunpack.c.h.b16 %v20
  %v101 = vunpack.c.l.b16 %v21
  %v102 = vunpack.c.h.b16 %v21
  %v103 = vunpack.c.l.b16 %v22
  %v104 = vunpack.c.h.b16 %v22
  %v105 = vunpack.c.l.b16 %v23
  %v106 = vunpack.c.h.b16 %v23
  %v107 = vunpack.c.l.b16 %v24
  %v108 = vunpack.c.h.b16 %v24
  %v109 = vunpack.c.l.b16 %v25
  %v110 = vunpack.c.h.b16 %v25
  %v111 = vunpack.c.l.b16 %v26
  %v112 = vunpack.c.h.b16 %v26
  %v113 = vunpack.c.l.b16 %v27
  %v114 = vunpack.c.h.b16 %v27
  %v115 = vunpack.c.l.b16 %v28
  %v116 = vunpack.c.h.b16 %v28
  %v117 = vunpack.c.l.b16 %v29
  %v118 = vunpack.c.h.b16 %v29
  %v119 = vunpack.c.l.b16 %v30
  %v120 = vunpack.c.h.b16 %v30
  %v121 = vunpack.c.l.b16 %v31
  %v122 = vunpack.c.h.b16 %v31
  %v123 = vunpack.c.l.b16 %v32
  %v124 = vunpack.c.h.b16 %v32
  %v125 = vunpack.c.l.b16 %v33
  %v126 = vunpack.c.h.b16 %v33
  %v127 = vunpack.c.l.b16 %v34
  %v128 = vunpack.c.h.b16 %v34
  %v129 = vunpack.c.l.b16 %v35
  %v130 = vunpack.c.h.b16 %v35
  %v131 = vunpack.c.l.b16 %v36
  %v132 = vunpack.c.h.b16 %v36
  %v133 = vunpack.c.l.b16 %v37
  %v134 = vunpack.c.h.b16 %v37
  %v135 = vunpack.c.l.b16 %v38
  %v136 = vunpack.c.h.b16 %v38
  %v137 = vunpack.c.l.b16 %v39
  %v138 = vunpack.c.h.b16 %v39
  %v139 = vunpack.c.l.b16 %v40
  %v140 = vunpack.c.h.b16 %v40
  %v141 = vunpack.c.l.b16 %v41
  %v142 = vunpack.c.h.b16 %v41
  %v143 = vunpack.c.l.b16 %v42
  %v144 = vunpack.c.h.b16 %v42
  %v145 = vpack.c.b16 %v99, %v97
  %v146 = vpack.c.b16 %v100, %v98
  %v147 = vpack.c.b16 %v103, %v101
  %v148 = vpack.c.b16 %v104, %v102
  %v149 = vpack.c.b16 %v107, %v105
  %v150 = vpack.c.b16 %v108, %v106
  %v151 = vpack.c.b16 %v111, %v109
  %v152 = vpack.c.b16 %v112, %v110
  %v153 = vpack.c.b16 %v115, %v113
  %v154 = vpack.c.b16 %v116, %v114
  %v155 = vpack.c.b16 %v119, %v117
  %v156 = vpack.c.b16 %v120, %v118
  %v157 = vpack.c.b16 %v123, %v121
  %v158 = vpack.c.b16 %v124, %v122
  %v159 = vpack.c.b16 %v127, %v125
  %v160 = vpack.c.b16 %v128, %v126
  %v161 = vpack.c.b16 %v131, %v129
  %v162 = vpack.c.b16 %v132, %v130
  %v163 = vpack.c.b16 %v135, %v133
  %v164 = vpack.c.b16 %v136, %v134
  %v165 = vpack.c.b16 %v139, %v137
  %v166 = vpack.c.b16 %v140, %v138
  %v167 = vpack.c.b16 %v143, %v141
  %v168 = vpack.c.b16 %v144, %v142
  %vm193 = vcmask 523264
  %v195 = vsel %vm193, %v68, 0
  %v198 = vsel %vm193, %v70, 0
  %200 = vmatprep.subr.bf16.mxu0 %v146
  %201 = vmatpush1.bf16.msra.mxu0 %v145
  %202 = vmatprep.subr.bf16.mxu0 %v148
  %203 = vmatpush1.bf16.msra.mxu0 %v147
  %204 = vmatprep.subr.bf16.mxu0 %v150
  %205 = vmatpush1.bf16.msra.mxu0 %v149
  %206 = vmatprep.subr.bf16.mxu0 %v152
  %207 = vmatpush1.bf16.msra.mxu0 %v151
  %208 = vmatprep.subr.bf16.mxu0 %v154
  %209 = vmatpush1.bf16.msra.mxu0 %v153
  %210 = vmatprep.subr.bf16.mxu0 %v156
  %211 = vmatpush1.bf16.msra.mxu0 %v155
  %212 = vmatprep.subr.bf16.mxu0 %v158
  %213 = vmatpush1.bf16.msra.mxu0 %v157
  %214 = vmatprep.subr.bf16.mxu0 %v160
  %215 = vmatpush1.bf16.msra.mxu0 %v159
  %216 = vmatprep.subr.bf16.mxu0 %v162
  %217 = vmatpush1.bf16.msra.mxu0 %v161
  %218 = vmatprep.subr.bf16.mxu0 %v164
  %219 = vmatpush1.bf16.msra.mxu0 %v163
  %220 = vmatprep.subr.bf16.mxu0 %v166
  %221 = vmatpush1.bf16.msra.mxu0 %v165
  %222 = vmatprep.subr.bf16.mxu0 %v168
  %223 = vmatpush1.bf16.msra.mxu0 %v167
  %224 = vmatprep.subr.bf16.mxu0 0
  %225 = vmatpush1.bf16.msra.mxu0 0
  %226 = vmatprep.subr.bf16.mxu0 0
  %227 = vmatpush1.bf16.msra.mxu0 0
  %228 = vmatprep.subr.bf16.mxu0 0
  %229 = vmatpush1.bf16.msra.mxu0 0
  %230 = vmatprep.subr.bf16.mxu0 0
  %231 = vmatpush1.bf16.msra.mxu0 0
  %232 = vmatprep.mubr.bf16.mxu0 %v195
  %233 = vmatmul.mubr.bf16.gmra.mrb[0].mxu0 %v67
  %v234 = vpop.f32.mrb[0].mxu0
  %v235 = vadd.f32 %v48, %v234
  %v236 = vpop.f32.mrb[0].mxu0
  %v237 = vadd.f32 %v52, %v236
  %v238 = vpop.f32.mrb[0].mxu0
  %v239 = vadd.f32 %v48, %v238
  %v240 = vpop.f32.mrb[0].mxu0
  %v241 = vadd.f32 %v52, %v240
  %242 = vmatprep.mubr.bf16.mxu0 %v198
  %243 = vmatmul.mubr.bf16.gmra.mrb[0].mxu0 %v69
  %v244 = vpop.f32.mrb[0].mxu0
  %v245 = vadd.f32 %v48, %v244
  %v246 = vpop.f32.mrb[0].mxu0
  %v247 = vadd.f32 %v52, %v246
  %v248 = vpop.f32.mrb[0].mxu0
  %v249 = vadd.f32 %v48, %v248
  %v250 = vpop.f32.mrb[0].mxu0
  %v251 = vadd.f32 %v52, %v250
  %252 = vdwg.mxu0
  %v253 = vmax.f32 %v235, 0.0
  %v254 = vmax.f32 %v237, 0.0
  %v255 = vmax.f32 %v239, 0.0
  %v256 = vmax.f32 %v241, 0.0
  %v257 = vmax.f32 %v245, 0.0
  %v258 = vmax.f32 %v247, 0.0
  %v259 = vmax.f32 %v249, 0.0
  %v260 = vmax.f32 %v251, 0.0
  %261 = vst [vmem:[%s3] sm:$0xff] %v253
  %vm262 = vcmask 392192
  %263 = vst.msk [vmem:[%s3 + $0x8] sm:$0xff] %vm262, %v254
  %264 = vst [vmem:[%s3 + $0x10] sm:$0xff] %v255
  %265 = vst.msk [vmem:[%s3 + $0x18] sm:$0xff] %vm262, %v256
  %266 = vst [vmem:[%s3 + $0x20] sm:$0xff] %v257
  %267 = vst.msk [vmem:[%s3 + $0x28] sm:$0xff] %vm262, %v258
  %268 = vst [vmem:[%s3 + $0x30] sm:$0xff] %v259
  %269 = vst.msk [vmem:[%s3 + $0x38] sm:$0xff] %vm262, %v260
  // Predicated region
  $region14: #{googlenet_forward.21} parent=0 // pred_check
    _
  $region15: #{googlenet_forward.21} parent=0 // pred_check_branch
    %271 = sbr.rel (0) target = $region17
  $region16: #{googlenet_forward.21} parent=0 // pred_region
    _
  $region17: #{googlenet_forward.21} parent=0 // pred_fallthru
    _
  // Predicated region
  $region18: #{googlenet_forward.21} parent=0 // pred_check
    _
  $region19: #{googlenet_forward.21} parent=0 // pred_check_branch
    %273 = sbr.rel (0) target = $region21
  $region20: #{googlenet_forward.21} parent=0 // pred_region
    _
  $region21: #{googlenet_forward.21} parent=0 // pred_fallthru
    _

// kernel: googlenet_forward.22
$region0: #{googlenet_forward.22}
  #allocation0 [shape = 'u32[]', space=smem, size = 0x4, offset = 0x4, fixed_abs, tag = 'smem constant byte address 0x4 - core index']
  #allocation1 [shape = 'u32[144,128]{1,0:T(1,128)}', space=vmem, size = 0x12000, scoped, tag = 'internal scratch']
  %s0 = inlined_call_operand.vmem [shape: bf16[32,864], index: 0, kind: input, shape index: {}]
  %s1 = inlined_call_operand.vmem [shape: bf16[864,128], index: 1, kind: input, shape index: {}]
  %s2 = inlined_call_operand.vmem [shape: f32[1,128], index: 2, kind: input, shape index: {}]
  %s3 = inlined_call_operand.vmem [shape: f32[32,128], index: 3, kind: output, shape index: {}]
  %s4 = sld [smem:[#allocation0]]
  $region22: #{googlenet_forward.22} parent=0
    _
  %s6 = ssub.s32 1, %s4
  %s7 = scalar_select 0, %s6, %s4
  // Predicated region
  $region2: #{googlenet_forward.22} parent=0 // pred_check
    _
  $region3: #{googlenet_forward.22} parent=0 // pred_check_branch
    %9 = sbr.rel (0) target = $region5
  $region4: #{googlenet_forward.22} parent=0 // pred_region
    _
  $region5: #{googlenet_forward.22} parent=0 // pred_fallthru
    _
  // Predicated region
  $region6: #{googlenet_forward.22} parent=0 // pred_check
    _
  $region7: #{googlenet_forward.22} parent=0 // pred_check_branch
    %11 = sbr.rel (0) target = $region9
  $region8: #{googlenet_forward.22} parent=0 // pred_region
    _
  $region9: #{googlenet_forward.22} parent=0 // pred_fallthru
    _
  // Predicated region
  $region10: #{googlenet_forward.22} parent=0 // pred_check
    _
  $region11: #{googlenet_forward.22} parent=0 // pred_check_branch
    %13 = sbr.rel (0) target = $region13
  $region12: #{googlenet_forward.22} parent=0 // pred_region
    _
  $region13: #{googlenet_forward.22} parent=0 // pred_fallthru
    _
  %v15 = vld [vmem:[%s0] sm:$0xff]
  %v16 = vld [vmem:[%s0 + $0x8] sm:$0xff]
  %v17 = vld [vmem:[%s0 + $0x10] sm:$0xff]
  %v18 = vld [vmem:[%s0 + $0x18] sm:$0xf]
  %v19 = vld [vmem:[%s0 + $0x1c] sm:$0xff]
  %v20 = vld [vmem:[%s0 + $0x24] sm:$0xff]
  %v21 = vld [vmem:[%s0 + $0x2c] sm:$0xff]
  %v22 = vld [vmem:[%s0 + $0x34] sm:$0xf]
  %v23 = vld [vmem:[%s0 + $0x38] sm:$0xff]
  %v24 = vld [vmem:[%s0 + $0x40] sm:$0xff]
  %v25 = vld [vmem:[%s0 + $0x48] sm:$0xff]
  %v26 = vld [vmem:[%s0 + $0x50] sm:$0xf]
  %v27 = vld [vmem:[%s0 + $0x54] sm:$0xff]
  %v28 = vld [vmem:[%s0 + $0x5c] sm:$0xff]
  %v29 = vld [vmem:[%s0 + $0x64] sm:$0xff]
  %v30 = vld [vmem:[%s0 + $0x6c] sm:$0xf]
  %v31 = vld [vmem:[%s1] sm:$0xf]
  %v32 = vld [vmem:[%s1 + $0x4] sm:$0xf]
  %v33 = vld [vmem:[%s1 + $0x8] sm:$0xf]
  %v34 = vld [vmem:[%s1 + $0xc] sm:$0xf]
  %v35 = vld [vmem:[%s1 + $0x10] sm:$0xf]
  %v36 = vld [vmem:[%s1 + $0x14] sm:$0xf]
  %v37 = vld [vmem:[%s1 + $0x18] sm:$0xf]
  %v38 = vld [vmem:[%s1 + $0x1c] sm:$0xf]
  %v39 = vld [vmem:[%s1 + $0x20] sm:$0xf]
  %v40 = vld [vmem:[%s1 + $0x24] sm:$0xf]
  %v41 = vld [vmem:[%s1 + $0x28] sm:$0xf]
  %v42 = vld [vmem:[%s1 + $0x2c] sm:$0xf]
  %v43 = vld [vmem:[%s1 + $0x30] sm:$0xf]
  %v44 = vld [vmem:[%s1 + $0x34] sm:$0xf]
  %v45 = vld [vmem:[%s1 + $0x38] sm:$0xf]
  %v46 = vld [vmem:[%s1 + $0x3c] sm:$0xf]
  %v47 = vld [vmem:[%s1 + $0x40] sm:$0xf]
  %v48 = vld [vmem:[%s1 + $0x44] sm:$0xf]
  %v49 = vld [vmem:[%s1 + $0x48] sm:$0xf]
  %v50 = vld [vmem:[%s1 + $0x4c] sm:$0xf]
  %v51 = vld [vmem:[%s1 + $0x50] sm:$0xf]
  %v52 = vld [vmem:[%s1 + $0x54] sm:$0xf]
  %v53 = vld [vmem:[%s1 + $0x58] sm:$0xf]
  %v54 = vld [vmem:[%s1 + $0x5c] sm:$0xf]
  %v55 = vld [vmem:[%s1 + $0x60] sm:$0xf]
  %v56 = vld [vmem:[%s1 + $0x64] sm:$0xf]
  %v57 = vld [vmem:[%s1 + $0x68] sm:$0xf]
  %v58 = vld [vmem:[%s1 + $0x6c] sm:$0xf]
  %v59 = vld [vmem:[%s1 + $0x70] sm:$0xf]
  %v60 = vld [vmem:[%s1 + $0x74] sm:$0xf]
  %v61 = vld [vmem:[%s1 + $0x78] sm:$0xf]
  %v62 = vld [vmem:[%s1 + $0x7c] sm:$0xf]
  %v63 = vld [vmem:[%s1 + $0x80] sm:$0xf]
  %v64 = vld [vmem:[%s1 + $0x84] sm:$0xf]
  %v65 = vld [vmem:[%s1 + $0x88] sm:$0xf]
  %v66 = vld [vmem:[%s1 + $0x8c] sm:$0xf]
  %v67 = vld [vmem:[%s1 + $0x90] sm:$0xf]
  %v68 = vld [vmem:[%s1 + $0x94] sm:$0xf]
  %v69 = vld [vmem:[%s1 + $0x98] sm:$0xf]
  %v70 = vld [vmem:[%s1 + $0x9c] sm:$0xf]
  %v71 = vld [vmem:[%s1 + $0xa0] sm:$0xf]
  %v72 = vld [vmem:[%s1 + $0xa4] sm:$0xf]
  %v73 = vld [vmem:[%s1 + $0xa8] sm:$0xf]
  %v74 = vld [vmem:[%s1 + $0xac] sm:$0xf]
  %v75 = vld [vmem:[%s1 + $0xb0] sm:$0xf]
  %v76 = vld [vmem:[%s1 + $0xb4] sm:$0xf]
  %v77 = vld [vmem:[%s1 + $0xb8] sm:$0xf]
  %v78 = vld [vmem:[%s1 + $0xbc] sm:$0xf]
  %v79 = vld [vmem:[%s1 + $0xc0] sm:$0xf]
  %v80 = vld [vmem:[%s1 + $0xc4] sm:$0xf]
  %v81 = vld [vmem:[%s1 + $0xc8] sm:$0xf]
  %v82 = vld [vmem:[%s1 + $0xcc] sm:$0xf]
  %v83 = vld [vmem:[%s1 + $0xd0] sm:$0xf]
  %v84 = vld [vmem:[%s1 + $0xd4] sm:$0xf]
  %v85 = vld [vmem:[%s1 + $0xd8] sm:$0xf]
  %v86 = vld [vmem:[%s1 + $0xdc] sm:$0xf]
  %v87 = vld [vmem:[%s1 + $0xe0] sm:$0xf]
  %v88 = vld [vmem:[%s1 + $0xe4] sm:$0xf]
  %v89 = vld [vmem:[%s1 + $0xe8] sm:$0xf]
  %v90 = vld [vmem:[%s1 + $0xec] sm:$0xf]
  %v91 = vld [vmem:[%s1 + $0xf0] sm:$0xf]
  %v92 = vld [vmem:[%s1 + $0xf4] sm:$0xf]
  %v93 = vld [vmem:[%s1 + $0xf8] sm:$0xf]
  %v94 = vld [vmem:[%s1 + $0xfc] sm:$0xf]
  %v95 = vld [vmem:[%s1 + $0x100] sm:$0xf]
  %v96 = vld [vmem:[%s1 + $0x104] sm:$0xf]
  %v97 = vld [vmem:[%s1 + $0x108] sm:$0xf]
  %v98 = vld [vmem:[%s1 + $0x10c] sm:$0xf]
  %v99 = vld [vmem:[%s1 + $0x110] sm:$0xf]
  %v100 = vld [vmem:[%s1 + $0x114] sm:$0xf]
  %v101 = vld [vmem:[%s1 + $0x118] sm:$0xf]
  %v102 = vld [vmem:[%s1 + $0x11c] sm:$0xf]
  %v103 = vld [vmem:[%s1 + $0x120] sm:$0xf]
  %v104 = vld [vmem:[%s1 + $0x124] sm:$0xf]
  %v105 = vld [vmem:[%s1 + $0x128] sm:$0xf]
  %v106 = vld [vmem:[%s1 + $0x12c] sm:$0xf]
  %v107 = vld [vmem:[%s1 + $0x130] sm:$0xf]
  %v108 = vld [vmem:[%s1 + $0x134] sm:$0xf]
  %v109 = vld [vmem:[%s1 + $0x138] sm:$0xf]
  %v110 = vld [vmem:[%s1 + $0x13c] sm:$0xf]
  %v111 = vld [vmem:[%s1 + $0x140] sm:$0xf]
  %v112 = vld [vmem:[%s1 + $0x144] sm:$0xf]
  %v113 = vld [vmem:[%s1 + $0x148] sm:$0xf]
  %v114 = vld [vmem:[%s1 + $0x14c] sm:$0xf]
  %v115 = vld [vmem:[%s1 + $0x150] sm:$0xf]
  %v116 = vld [vmem:[%s1 + $0x154] sm:$0xf]
  %v117 = vld [vmem:[%s1 + $0x158] sm:$0xf]
  %v118 = vld [vmem:[%s1 + $0x15c] sm:$0xf]
  %v119 = vld [vmem:[%s1 + $0x160] sm:$0xf]
  %v120 = vld [vmem:[%s1 + $0x164] sm:$0xf]
  %v121 = vld [vmem:[%s1 + $0x168] sm:$0xf]
  %v122 = vld [vmem:[%s1 + $0x16c] sm:$0xf]
  %v123 = vld [vmem:[%s1 + $0x170] sm:$0xf]
  %v124 = vld [vmem:[%s1 + $0x174] sm:$0xf]
  %v125 = vld [vmem:[%s1 + $0x178] sm:$0xf]
  %v126 = vld [vmem:[%s1 + $0x17c] sm:$0xf]
  %v127 = vld [vmem:[%s1 + $0x180] sm:$0xf]
  %v128 = vld [vmem:[%s1 + $0x184] sm:$0xf]
  %v129 = vld [vmem:[%s1 + $0x188] sm:$0xf]
  %v130 = vld [vmem:[%s1 + $0x18c] sm:$0xf]
  %v131 = vld [vmem:[%s1 + $0x190] sm:$0xf]
  %v132 = vld [vmem:[%s1 + $0x194] sm:$0xf]
  %v133 = vld [vmem:[%s1 + $0x198] sm:$0xf]
  %v134 = vld [vmem:[%s1 + $0x19c] sm:$0xf]
  %v135 = vld [vmem:[%s1 + $0x1a0] sm:$0xf]
  %v136 = vld [vmem:[%s1 + $0x1a4] sm:$0xf]
  %v137 = vld [vmem:[%s1 + $0x1a8] sm:$0xf]
  %v138 = vld [vmem:[%s1 + $0x1ac] sm:$0xf]
  %v139 = vld [vmem:[%s2] sm:$0x1]
  %v141 = vlaneseq
  %v142 = vshrl.u32 %v141, 7
  %v143 = vsub.s32 0, %v142
  %v144 = vrot.slane %v139, %v143
  %v162 = vunpack.c.l.b16 %v15
  %v163 = vunpack.c.h.b16 %v15
  %v164 = vunpack.c.l.b16 %v16
  %v165 = vunpack.c.h.b16 %v16
  %v166 = vunpack.c.l.b16 %v17
  %v167 = vunpack.c.h.b16 %v17
  %v168 = vunpack.c.l.b16 %v18
  %v169 = vunpack.c.l.b16 %v19
  %v170 = vunpack.c.h.b16 %v19
  %v171 = vunpack.c.l.b16 %v20
  %v172 = vunpack.c.h.b16 %v20
  %v173 = vunpack.c.l.b16 %v21
  %v174 = vunpack.c.h.b16 %v21
  %v175 = vunpack.c.l.b16 %v22
  %v176 = vunpack.c.l.b16 %v23
  %v177 = vunpack.c.h.b16 %v23
  %v178 = vunpack.c.l.b16 %v24
  %v179 = vunpack.c.h.b16 %v24
  %v180 = vunpack.c.l.b16 %v25
  %v181 = vunpack.c.h.b16 %v25
  %v182 = vunpack.c.l.b16 %v26
  %v183 = vunpack.c.l.b16 %v27
  %v184 = vunpack.c.h.b16 %v27
  %v185 = vunpack.c.l.b16 %v28
  %v186 = vunpack.c.h.b16 %v28
  %v187 = vunpack.c.l.b16 %v29
  %v188 = vunpack.c.h.b16 %v29
  %v189 = vunpack.c.l.b16 %v30
  %v190 = vpack.c.b16 %v169, %v162
  %v191 = vpack.c.b16 %v170, %v163
  %v192 = vpack.c.b16 %v171, %v164
  %v193 = vpack.c.b16 %v172, %v165
  %v194 = vpack.c.b16 %v173, %v166
  %v195 = vpack.c.b16 %v174, %v167
  %v196 = vpack.c.b16 %v175, %v168
  %v197 = vpack.c.b16 %v183, %v176
  %v198 = vpack.c.b16 %v184, %v177
  %v199 = vpack.c.b16 %v185, %v178
  %v200 = vpack.c.b16 %v186, %v179
  %v201 = vpack.c.b16 %v187, %v180
  %v202 = vpack.c.b16 %v188, %v181
  %v203 = vpack.c.b16 %v189, %v182
  %v324 = vunpack.c.l.b16 %v31
  %v325 = vunpack.c.l.b16 %v32
  %v326 = vunpack.c.l.b16 %v33
  %v327 = vunpack.c.l.b16 %v34
  %v328 = vunpack.c.l.b16 %v35
  %v329 = vunpack.c.l.b16 %v36
  %v330 = vunpack.c.l.b16 %v37
  %v331 = vunpack.c.l.b16 %v38
  %v332 = vunpack.c.l.b16 %v39
  %v333 = vunpack.c.l.b16 %v40
  %v334 = vunpack.c.l.b16 %v41
  %v335 = vunpack.c.l.b16 %v42
  %v336 = vunpack.c.l.b16 %v43
  %v337 = vunpack.c.l.b16 %v44
  %v338 = vunpack.c.l.b16 %v45
  %v339 = vunpack.c.l.b16 %v46
  %v340 = vunpack.c.l.b16 %v47
  %v341 = vunpack.c.l.b16 %v48
  %v342 = vunpack.c.l.b16 %v49
  %v343 = vunpack.c.l.b16 %v50
  %v344 = vunpack.c.l.b16 %v51
  %v345 = vunpack.c.l.b16 %v52
  %v346 = vunpack.c.l.b16 %v53
  %v347 = vunpack.c.l.b16 %v54
  %v348 = vunpack.c.l.b16 %v55
  %v349 = vunpack.c.l.b16 %v56
  %v350 = vunpack.c.l.b16 %v57
  %v351 = vunpack.c.l.b16 %v58
  %v352 = vunpack.c.l.b16 %v59
  %v353 = vunpack.c.l.b16 %v60
  %v354 = vunpack.c.l.b16 %v61
  %v355 = vunpack.c.l.b16 %v62
  %v356 = vunpack.c.l.b16 %v63
  %v357 = vunpack.c.l.b16 %v64
  %v358 = vunpack.c.l.b16 %v65
  %v359 = vunpack.c.l.b16 %v66
  %v360 = vunpack.c.l.b16 %v67
  %v361 = vunpack.c.l.b16 %v68
  %v362 = vunpack.c.l.b16 %v69
  %v363 = vunpack.c.l.b16 %v70
  %v364 = vunpack.c.l.b16 %v71
  %v365 = vunpack.c.l.b16 %v72
  %v366 = vunpack.c.l.b16 %v73
  %v367 = vunpack.c.l.b16 %v74
  %v368 = vunpack.c.l.b16 %v75
  %v369 = vunpack.c.l.b16 %v76
  %v370 = vunpack.c.l.b16 %v77
  %v371 = vunpack.c.l.b16 %v78
  %v372 = vunpack.c.l.b16 %v79
  %v373 = vunpack.c.l.b16 %v80
  %v374 = vunpack.c.l.b16 %v81
  %v375 = vunpack.c.l.b16 %v82
  %v376 = vunpack.c.l.b16 %v83
  %v377 = vunpack.c.l.b16 %v84
  %v378 = vunpack.c.l.b16 %v85
  %v379 = vunpack.c.l.b16 %v86
  %v380 = vunpack.c.l.b16 %v87
  %v381 = vunpack.c.l.b16 %v88
  %v382 = vunpack.c.l.b16 %v89
  %v383 = vunpack.c.l.b16 %v90
  %v384 = vunpack.c.l.b16 %v91
  %v385 = vunpack.c.l.b16 %v92
  %v386 = vunpack.c.l.b16 %v93
  %v387 = vunpack.c.l.b16 %v94
  %v388 = vunpack.c.l.b16 %v95
  %v389 = vunpack.c.l.b16 %v96
  %v390 = vunpack.c.l.b16 %v97
  %v391 = vunpack.c.l.b16 %v98
  %v392 = vunpack.c.l.b16 %v99
  %v393 = vunpack.c.l.b16 %v100
  %v394 = vunpack.c.l.b16 %v101
  %v395 = vunpack.c.l.b16 %v102
  %v396 = vunpack.c.l.b16 %v103
  %v397 = vunpack.c.l.b16 %v104
  %v398 = vunpack.c.l.b16 %v105
  %v399 = vunpack.c.l.b16 %v106
  %v400 = vunpack.c.l.b16 %v107
  %v401 = vunpack.c.l.b16 %v108
  %v402 = vunpack.c.l.b16 %v109
  %v403 = vunpack.c.l.b16 %v110
  %v404 = vunpack.c.l.b16 %v111
  %v405 = vunpack.c.l.b16 %v112
  %v406 = vunpack.c.l.b16 %v113
  %v407 = vunpack.c.l.b16 %v114
  %v408 = vunpack.c.l.b16 %v115
  %v409 = vunpack.c.l.b16 %v116
  %v410 = vunpack.c.l.b16 %v117
  %v411 = vunpack.c.l.b16 %v118
  %v412 = vunpack.c.l.b16 %v119
  %v413 = vunpack.c.l.b16 %v120
  %v414 = vunpack.c.l.b16 %v121
  %v415 = vunpack.c.l.b16 %v122
  %v416 = vunpack.c.l.b16 %v123
  %v417 = vunpack.c.l.b16 %v124
  %v418 = vunpack.c.l.b16 %v125
  %v419 = vunpack.c.l.b16 %v126
  %v420 = vunpack.c.l.b16 %v127
  %v421 = vunpack.c.l.b16 %v128
  %v422 = vunpack.c.l.b16 %v129
  %v423 = vunpack.c.l.b16 %v130
  %v424 = vunpack.c.l.b16 %v131
  %v425 = vunpack.c.l.b16 %v132
  %v426 = vunpack.c.l.b16 %v133
  %v427 = vunpack.c.l.b16 %v134
  %v428 = vunpack.c.l.b16 %v135
  %v429 = vunpack.c.l.b16 %v136
  %v430 = vunpack.c.l.b16 %v137
  %v431 = vunpack.c.l.b16 %v138
  %v432 = vpack.c.b16 %v325, %v324
  %v433 = vpack.c.b16 %v327, %v326
  %v434 = vpack.c.b16 %v329, %v328
  %v435 = vpack.c.b16 %v331, %v330
  %v436 = vpack.c.b16 %v333, %v332
  %v437 = vpack.c.b16 %v335, %v334
  %v438 = vpack.c.b16 %v337, %v336
  %v439 = vpack.c.b16 %v339, %v338
  %v440 = vpack.c.b16 %v341, %v340
  %v441 = vpack.c.b16 %v343, %v342
  %v442 = vpack.c.b16 %v345, %v344
  %v443 = vpack.c.b16 %v347, %v346
  %v444 = vpack.c.b16 %v349, %v348
  %v445 = vpack.c.b16 %v351, %v350
  %v446 = vpack.c.b16 %v353, %v352
  %v447 = vpack.c.b16 %v355, %v354
  %v448 = vpack.c.b16 %v357, %v356
  %v449 = vpack.c.b16 %v359, %v358
  %v450 = vpack.c.b16 %v361, %v360
  %v451 = vpack.c.b16 %v363, %v362
  %v452 = vpack.c.b16 %v365, %v364
  %v453 = vpack.c.b16 %v367, %v366
  %v454 = vpack.c.b16 %v369, %v368
  %v455 = vpack.c.b16 %v371, %v370
  %v456 = vpack.c.b16 %v373, %v372
  %v457 = vpack.c.b16 %v375, %v374
  %v458 = vpack.c.b16 %v377, %v376
  %v459 = vpack.c.b16 %v379, %v378
  %v460 = vpack.c.b16 %v381, %v380
  %v461 = vpack.c.b16 %v383, %v382
  %v462 = vpack.c.b16 %v385, %v384
  %v463 = vpack.c.b16 %v387, %v386
  %v464 = vpack.c.b16 %v389, %v388
  %v465 = vpack.c.b16 %v391, %v390
  %v466 = vpack.c.b16 %v393, %v392
  %v467 = vpack.c.b16 %v395, %v394
  %v468 = vpack.c.b16 %v397, %v396
  %v469 = vpack.c.b16 %v399, %v398
  %v470 = vpack.c.b16 %v401, %v400
  %v471 = vpack.c.b16 %v403, %v402
  %v472 = vpack.c.b16 %v405, %v404
  %v473 = vpack.c.b16 %v407, %v406
  %v474 = vpack.c.b16 %v409, %v408
  %v475 = vpack.c.b16 %v411, %v410
  %v476 = vpack.c.b16 %v413, %v412
  %v477 = vpack.c.b16 %v415, %v414
  %v478 = vpack.c.b16 %v417, %v416
  %v479 = vpack.c.b16 %v419, %v418
  %v480 = vpack.c.b16 %v421, %v420
  %v481 = vpack.c.b16 %v423, %v422
  %v482 = vpack.c.b16 %v425, %v424
  %v483 = vpack.c.b16 %v427, %v426
  %v484 = vpack.c.b16 %v429, %v428
  %v485 = vpack.c.b16 %v431, %v430
  %vm540 = vcmask 785408
  %v542 = vsel %vm540, %v196, 0
  %v545 = vsel %vm540, %v203, 0
  %547 = vmatprep.subr.bf16.mxu0 0
  %548 = vmatpush1.bf16.msra.mxu0 %v432
  %549 = vmatprep.subr.bf16.mxu0 0
  %550 = vmatpush1.bf16.msra.mxu0 %v433
  %551 = vmatprep.subr.bf16.mxu0 0
  %552 = vmatpush1.bf16.msra.mxu0 %v434
  %553 = vmatprep.subr.bf16.mxu0 0
  %554 = vmatpush1.bf16.msra.mxu0 %v435
  %555 = vmatprep.subr.bf16.mxu0 0
  %556 = vmatpush1.bf16.msra.mxu0 %v436
  %557 = vmatprep.subr.bf16.mxu0 0
  %558 = vmatpush1.bf16.msra.mxu0 %v437
  %559 = vmatprep.subr.bf16.mxu0 0
  %560 = vmatpush1.bf16.msra.mxu0 %v438
  %561 = vmatprep.subr.bf16.mxu0 0
  %562 = vmatpush1.bf16.msra.mxu0 %v439
  %563 = vmatprep.subr.bf16.mxu0 0
  %564 = vmatpush1.bf16.msra.mxu0 %v440
  %565 = vmatprep.subr.bf16.mxu0 0
  %566 = vmatpush1.bf16.msra.mxu0 %v441
  %567 = vmatprep.subr.bf16.mxu0 0
  %568 = vmatpush1.bf16.msra.mxu0 %v442
  %569 = vmatprep.subr.bf16.mxu0 0
  %570 = vmatpush1.bf16.msra.mxu0 %v443
  %571 = vmatprep.subr.bf16.mxu0 0
  %572 = vmatpush1.bf16.msra.mxu0 %v444
  %573 = vmatprep.subr.bf16.mxu0 0
  %574 = vmatpush1.bf16.msra.mxu0 %v445
  %575 = vmatprep.subr.bf16.mxu0 0
  %576 = vmatpush1.bf16.msra.mxu0 %v446
  %577 = vmatprep.subr.bf16.mxu0 0
  %578 = vmatpush1.bf16.msra.mxu0 %v447
  %579 = vmatprep.mubr.bf16.mxu0 %v191
  %580 = vmatmul.mubr.bf16.gmra.mrb[0].mxu0 %v190
  %v581 = vpop.f32.mrb[0].mxu0
  %v582 = vadd.f32 %v144, %v581
  %v583 = vpop.f32.mrb[0].mxu0
  %v584 = vpop.f32.mrb[0].mxu0
  %v585 = vadd.f32 %v144, %v584
  %v586 = vpop.f32.mrb[0].mxu0
  %587 = vmatprep.mubr.bf16.mxu0 %v198
  %588 = vmatmul.mubr.bf16.gmra.mrb[0].mxu0 %v197
  %v589 = vpop.f32.mrb[0].mxu0
  %v590 = vadd.f32 %v144, %v589
  %v591 = vpop.f32.mrb[0].mxu0
  %v592 = vpop.f32.mrb[0].mxu0
  %v593 = vadd.f32 %v144, %v592
  %v594 = vpop.f32.mrb[0].mxu0
  %595 = vdwg.mxu0
  %596 = vmatprep.subr.bf16.mxu0 0
  %597 = vmatpush1.bf16.msra.mxu0 %v448
  %598 = vmatprep.subr.bf16.mxu0 0
  %599 = vmatpush1.bf16.msra.mxu0 %v449
  %600 = vmatprep.subr.bf16.mxu0 0
  %601 = vmatpush1.bf16.msra.mxu0 %v450
  %602 = vmatprep.subr.bf16.mxu0 0
  %603 = vmatpush1.bf16.msra.mxu0 %v451
  %604 = vmatprep.subr.bf16.mxu0 0
  %605 = vmatpush1.bf16.msra.mxu0 %v452
  %606 = vmatprep.subr.bf16.mxu0 0
  %607 = vmatpush1.bf16.msra.mxu0 %v453
  %608 = vmatprep.subr.bf16.mxu0 0
  %609 = vmatpush1.bf16.msra.mxu0 %v454
  %610 = vmatprep.subr.bf16.mxu0 0
  %611 = vmatpush1.bf16.msra.mxu0 %v455
  %612 = vmatprep.subr.bf16.mxu0 0
  %613 = vmatpush1.bf16.msra.mxu0 %v456
  %614 = vmatprep.subr.bf16.mxu0 0
  %615 = vmatpush1.bf16.msra.mxu0 %v457
  %616 = vmatprep.subr.bf16.mxu0 0
  %617 = vmatpush1.bf16.msra.mxu0 %v458
  %618 = vmatprep.subr.bf16.mxu0 0
  %619 = vmatpush1.bf16.msra.mxu0 %v459
  %620 = vmatprep.subr.bf16.mxu0 0
  %621 = vmatpush1.bf16.msra.mxu0 %v460
  %622 = vmatprep.subr.bf16.mxu0 0
  %623 = vmatpush1.bf16.msra.mxu0 %v461
  %624 = vmatprep.subr.bf16.mxu0 0
  %625 = vmatpush1.bf16.msra.mxu0 %v462
  %626 = vmatprep.subr.bf16.mxu0 0
  %627 = vmatpush1.bf16.msra.mxu0 %v463
  %628 = vmatprep.mubr.bf16.mxu0 %v193
  %629 = vmatmul.mubr.bf16.gmra.mrb[0].mxu0 %v192
  %v630 = vpop.f32.mrb[0].mxu0
  %v631 = vadd.f32 %v582, %v630
  %v632 = vpop.f32.mrb[0].mxu0
  %v633 = vpop.f32.mrb[0].mxu0
  %v634 = vadd.f32 %v585, %v633
  %v635 = vpop.f32.mrb[0].mxu0
  %636 = vmatprep.mubr.bf16.mxu0 %v200
  %637 = vmatmul.mubr.bf16.gmra.mrb[0].mxu0 %v199
  %v638 = vpop.f32.mrb[0].mxu0
  %v639 = vadd.f32 %v590, %v638
  %v640 = vpop.f32.mrb[0].mxu0
  %v641 = vpop.f32.mrb[0].mxu0
  %v642 = vadd.f32 %v593, %v641
  %v643 = vpop.f32.mrb[0].mxu0
  %644 = vdwg.mxu0
  %645 = vmatprep.subr.bf16.mxu0 0
  %646 = vmatpush1.bf16.msra.mxu0 %v464
  %647 = vmatprep.subr.bf16.mxu0 0
  %648 = vmatpush1.bf16.msra.mxu0 %v465
  %649 = vmatprep.subr.bf16.mxu0 0
  %650 = vmatpush1.bf16.msra.mxu0 %v466
  %651 = vmatprep.subr.bf16.mxu0 0
  %652 = vmatpush1.bf16.msra.mxu0 %v467
  %653 = vmatprep.subr.bf16.mxu0 0
  %654 = vmatpush1.bf16.msra.mxu0 %v468
  %655 = vmatprep.subr.bf16.mxu0 0
  %656 = vmatpush1.bf16.msra.mxu0 %v469
  %657 = vmatprep.subr.bf16.mxu0 0
  %658 = vmatpush1.bf16.msra.mxu0 %v470
  %659 = vmatprep.subr.bf16.mxu0 0
  %660 = vmatpush1.bf16.msra.mxu0 %v471
  %661 = vmatprep.subr.bf16.mxu0 0
  %662 = vmatpush1.bf16.msra.mxu0 %v472
  %663 = vmatprep.subr.bf16.mxu0 0
  %664 = vmatpush1.bf16.msra.mxu0 %v473
  %665 = vmatprep.subr.bf16.mxu0 0
  %666 = vmatpush1.bf16.msra.mxu0 %v474
  %667 = vmatprep.subr.bf16.mxu0 0
  %668 = vmatpush1.bf16.msra.mxu0 %v475
  %669 = vmatprep.subr.bf16.mxu0 0
  %670 = vmatpush1.bf16.msra.mxu0 %v476
  %671 = vmatprep.subr.bf16.mxu0 0
  %672 = vmatpush1.bf16.msra.mxu0 %v477
  %673 = vmatprep.subr.bf16.mxu0 0
  %674 = vmatpush1.bf16.msra.mxu0 %v478
  %675 = vmatprep.subr.bf16.mxu0 0
  %676 = vmatpush1.bf16.msra.mxu0 %v479
  %677 = vmatprep.mubr.bf16.mxu0 %v195
  %678 = vmatmul.mubr.bf16.gmra.mrb[0].mxu0 %v194
  %v679 = vpop.f32.mrb[0].mxu0
  %v680 = vadd.f32 %v631, %v679
  %v681 = vpop.f32.mrb[0].mxu0
  %v682 = vpop.f32.mrb[0].mxu0
  %v683 = vadd.f32 %v634, %v682
  %v684 = vpop.f32.mrb[0].mxu0
  %685 = vmatprep.mubr.bf16.mxu0 %v202
  %686 = vmatmul.mubr.bf16.gmra.mrb[0].mxu0 %v201
  %v687 = vpop.f32.mrb[0].mxu0
  %v688 = vadd.f32 %v639, %v687
  %v689 = vpop.f32.mrb[0].mxu0
  %v690 = vpop.f32.mrb[0].mxu0
  %v691 = vadd.f32 %v642, %v690
  %v692 = vpop.f32.mrb[0].mxu0
  %693 = vdwg.mxu0
  %694 = vmatprep.subr.bf16.mxu0 0
  %695 = vmatpush1.bf16.msra.mxu0 %v480
  %696 = vmatprep.subr.bf16.mxu0 0
  %697 = vmatpush1.bf16.msra.mxu0 %v481
  %698 = vmatprep.subr.bf16.mxu0 0
  %699 = vmatpush1.bf16.msra.mxu0 %v482
  %700 = vmatprep.subr.bf16.mxu0 0
  %701 = vmatpush1.bf16.msra.mxu0 %v483
  %702 = vmatprep.subr.bf16.mxu0 0
  %703 = vmatpush1.bf16.msra.mxu0 %v484
  %704 = vmatprep.subr.bf16.mxu0 0
  %705 = vmatpush1.bf16.msra.mxu0 %v485
  %706 = vmatprep.subr.bf16.mxu0 0
  %707 = vmatpush1.bf16.msra.mxu0 0
  %708 = vmatprep.subr.bf16.mxu0 0
  %709 = vmatpush1.bf16.msra.mxu0 0
  %710 = vmatprep.subr.bf16.mxu0 0
  %711 = vmatpush1.bf16.msra.mxu0 0
  %712 = vmatprep.subr.bf16.mxu0 0
  %713 = vmatpush1.bf16.msra.mxu0 0
  %714 = vmatprep.subr.bf16.mxu0 0
  %715 = vmatpush1.bf16.msra.mxu0 0
  %716 = vmatprep.subr.bf16.mxu0 0
  %717 = vmatpush1.bf16.msra.mxu0 0
  %718 = vmatprep.subr.bf16.mxu0 0
  %719 = vmatpush1.bf16.msra.mxu0 0
  %720 = vmatprep.subr.bf16.mxu0 0
  %721 = vmatpush1.bf16.msra.mxu0 0
  %722 = vmatprep.subr.bf16.mxu0 0
  %723 = vmatpush1.bf16.msra.mxu0 0
  %724 = vmatprep.subr.bf16.mxu0 0
  %725 = vmatpush1.bf16.msra.mxu0 0
  %726 = vmatprep.mubr.bf16.mxu0 0
  %727 = vmatmul.mubr.bf16.gmra.mrb[0].mxu0 %v542
  %v728 = vpop.f32.mrb[0].mxu0
  %v729 = vadd.f32 %v680, %v728
  %v730 = vpop.f32.mrb[0].mxu0
  %v731 = vpop.f32.mrb[0].mxu0
  %v732 = vadd.f32 %v683, %v731
  %v733 = vpop.f32.mrb[0].mxu0
  %734 = vmatprep.mubr.bf16.mxu0 0
  %735 = vmatmul.mubr.bf16.gmra.mrb[0].mxu0 %v545
  %v736 = vpop.f32.mrb[0].mxu0
  %v737 = vadd.f32 %v688, %v736
  %v738 = vpop.f32.mrb[0].mxu0
  %v739 = vpop.f32.mrb[0].mxu0
  %v740 = vadd.f32 %v691, %v739
  %v741 = vpop.f32.mrb[0].mxu0
  %742 = vdwg.mxu0
  %v743 = vmax.f32 %v729, 0.0
  %v744 = vmax.f32 %v732, 0.0
  %v745 = vmax.f32 %v737, 0.0
  %v746 = vmax.f32 %v740, 0.0
  %747 = vst [vmem:[%s3] sm:$0xff] %v743
  %748 = vst [vmem:[%s3 + $0x8] sm:$0xff] %v744
  %749 = vst [vmem:[%s3 + $0x10] sm:$0xff] %v745
  %750 = vst [vmem:[%s3 + $0x18] sm:$0xff] %v746
  // Predicated region
  $region14: #{googlenet_forward.22} parent=0 // pred_check
    _
  $region15: #{googlenet_forward.22} parent=0 // pred_check_branch
    %752 = sbr.rel (0) target = $region17
  $region16: #{googlenet_forward.22} parent=0 // pred_region
    _
  $region17: #{googlenet_forward.22} parent=0 // pred_fallthru
    _
  // Predicated region
  $region18: #{googlenet_forward.22} parent=0 // pred_check
    _
  $region19: #{googlenet_forward.22} parent=0 // pred_check_branch
    %754 = sbr.rel (0) target = $region21
  $region20: #{googlenet_forward.22} parent=0 // pred_region
    _
  $region21: #{googlenet_forward.22} parent=0 // pred_fallthru
    _

// kernel: googlenet_forward.23
$region0: #{googlenet_forward.23}
  #allocation0 [shape = 'u32[]', space=smem, size = 0x4, offset = 0x4, fixed_abs, tag = 'smem constant byte address 0x4 - core index']
  #allocation1 [shape = 'u32[144,128]{1,0:T(1,128)}', space=vmem, size = 0x12000, scoped, tag = 'internal scratch']
  %s0 = inlined_call_operand.vmem [shape: bf16[32,144], index: 0, kind: input, shape index: {}]
  %s1 = inlined_call_operand.vmem [shape: bf16[144,32], index: 1, kind: input, shape index: {}]
  %s2 = inlined_call_operand.vmem [shape: f32[1,32], index: 2, kind: input, shape index: {}]
  %s3 = inlined_call_operand.vmem [shape: f32[32,32], index: 3, kind: output, shape index: {}]
  %s4 = sld [smem:[#allocation0]]
  $region22: #{googlenet_forward.23} parent=0
    _
  %s6 = ssub.s32 1, %s4
  %s7 = scalar_select 0, %s6, %s4
  // Predicated region
  $region2: #{googlenet_forward.23} parent=0 // pred_check
    _
  $region3: #{googlenet_forward.23} parent=0 // pred_check_branch
    %9 = sbr.rel (0) target = $region5
  $region4: #{googlenet_forward.23} parent=0 // pred_region
    _
  $region5: #{googlenet_forward.23} parent=0 // pred_fallthru
    _
  // Predicated region
  $region6: #{googlenet_forward.23} parent=0 // pred_check
    _
  $region7: #{googlenet_forward.23} parent=0 // pred_check_branch
    %11 = sbr.rel (0) target = $region9
  $region8: #{googlenet_forward.23} parent=0 // pred_region
    _
  $region9: #{googlenet_forward.23} parent=0 // pred_fallthru
    _
  // Predicated region
  $region10: #{googlenet_forward.23} parent=0 // pred_check
    _
  $region11: #{googlenet_forward.23} parent=0 // pred_check_branch
    %13 = sbr.rel (0) target = $region13
  $region12: #{googlenet_forward.23} parent=0 // pred_region
    _
  $region13: #{googlenet_forward.23} parent=0 // pred_fallthru
    _
  %v15 = vld [vmem:[%s0] sm:$0xff]
  %v16 = vld [vmem:[%s0 + $0x8] sm:$0xff]
  %v17 = vld [vmem:[%s0 + $0x10] sm:$0xff]
  %v18 = vld [vmem:[%s0 + $0x18] sm:$0xff]
  %v19 = vld [vmem:[%s1] sm:$0xf]
  %v20 = vld [vmem:[%s1 + $0x4] sm:$0xf]
  %v21 = vld [vmem:[%s1 + $0x8] sm:$0xf]
  %v22 = vld [vmem:[%s1 + $0xc] sm:$0xf]
  %v23 = vld [vmem:[%s1 + $0x10] sm:$0xf]
  %v24 = vld [vmem:[%s1 + $0x14] sm:$0xf]
  %v25 = vld [vmem:[%s1 + $0x18] sm:$0xf]
  %v26 = vld [vmem:[%s1 + $0x1c] sm:$0xf]
  %v27 = vld [vmem:[%s1 + $0x20] sm:$0xf]
  %v28 = vld [vmem:[%s1 + $0x24] sm:$0xf]
  %v29 = vld [vmem:[%s1 + $0x28] sm:$0xf]
  %v30 = vld [vmem:[%s1 + $0x2c] sm:$0xf]
  %v31 = vld [vmem:[%s1 + $0x30] sm:$0xf]
  %v32 = vld [vmem:[%s1 + $0x34] sm:$0xf]
  %v33 = vld [vmem:[%s1 + $0x38] sm:$0xf]
  %v34 = vld [vmem:[%s1 + $0x3c] sm:$0xf]
  %v35 = vld [vmem:[%s1 + $0x40] sm:$0xf]
  %v36 = vld [vmem:[%s1 + $0x44] sm:$0xf]
  %v37 = vld [vmem:[%s2] sm:$0x1]
  %v39 = vlaneseq
  %v40 = vshrl.u32 %v39, 7
  %v41 = vsub.s32 0, %v40
  %v42 = vrot.slane %v37, %v41
  %v48 = vunpack.c.l.b16 %v15
  %v49 = vunpack.c.h.b16 %v15
  %v50 = vunpack.c.l.b16 %v16
  %v51 = vunpack.c.h.b16 %v16
  %v52 = vunpack.c.l.b16 %v17
  %v53 = vunpack.c.h.b16 %v17
  %v54 = vunpack.c.l.b16 %v18
  %v55 = vunpack.c.h.b16 %v18
  %v56 = vpack.c.b16 %v50, %v48
  %v57 = vpack.c.b16 %v51, %v49
  %v58 = vpack.c.b16 %v54, %v52
  %v59 = vpack.c.b16 %v55, %v53
  %v80 = vunpack.c.l.b16 %v19
  %v81 = vunpack.c.l.b16 %v20
  %v82 = vunpack.c.l.b16 %v21
  %v83 = vunpack.c.l.b16 %v22
  %v84 = vunpack.c.l.b16 %v23
  %v85 = vunpack.c.l.b16 %v24
  %v86 = vunpack.c.l.b16 %v25
  %v87 = vunpack.c.l.b16 %v26
  %v88 = vunpack.c.l.b16 %v27
  %v89 = vunpack.c.l.b16 %v28
  %v90 = vunpack.c.l.b16 %v29
  %v91 = vunpack.c.l.b16 %v30
  %v92 = vunpack.c.l.b16 %v31
  %v93 = vunpack.c.l.b16 %v32
  %v94 = vunpack.c.l.b16 %v33
  %v95 = vunpack.c.l.b16 %v34
  %v96 = vunpack.c.l.b16 %v35
  %v97 = vunpack.c.l.b16 %v36
  %v98 = vpack.c.b16 %v81, %v80
  %v99 = vpack.c.b16 %v83, %v82
  %v100 = vpack.c.b16 %v85, %v84
  %v101 = vpack.c.b16 %v87, %v86
  %v102 = vpack.c.b16 %v89, %v88
  %v103 = vpack.c.b16 %v91, %v90
  %v104 = vpack.c.b16 %v93, %v92
  %v105 = vpack.c.b16 %v95, %v94
  %v106 = vpack.c.b16 %v97, %v96
  %vm116 = vcmask 130048
  %v118 = vsel %vm116, %v57, 0
  %v121 = vsel %vm116, %v59, 0
  %123 = vmatprep.subr.bf16.mxu0 0
  %124 = vmatpush1.bf16.msra.mxu0 %v98
  %125 = vmatprep.subr.bf16.mxu0 0
  %126 = vmatpush1.bf16.msra.mxu0 %v99
  %127 = vmatprep.subr.bf16.mxu0 0
  %128 = vmatpush1.bf16.msra.mxu0 %v100
  %129 = vmatprep.subr.bf16.mxu0 0
  %130 = vmatpush1.bf16.msra.mxu0 %v101
  %131 = vmatprep.subr.bf16.mxu0 0
  %132 = vmatpush1.bf16.msra.mxu0 %v102
  %133 = vmatprep.subr.bf16.mxu0 0
  %134 = vmatpush1.bf16.msra.mxu0 %v103
  %135 = vmatprep.subr.bf16.mxu0 0
  %136 = vmatpush1.bf16.msra.mxu0 %v104
  %137 = vmatprep.subr.bf16.mxu0 0
  %138 = vmatpush1.bf16.msra.mxu0 %v105
  %139 = vmatprep.subr.bf16.mxu0 0
  %140 = vmatpush1.bf16.msra.mxu0 %v106
  %141 = vmatprep.subr.bf16.mxu0 0
  %142 = vmatpush1.bf16.msra.mxu0 0
  %143 = vmatprep.subr.bf16.mxu0 0
  %144 = vmatpush1.bf16.msra.mxu0 0
  %145 = vmatprep.subr.bf16.mxu0 0
  %146 = vmatpush1.bf16.msra.mxu0 0
  %147 = vmatprep.subr.bf16.mxu0 0
  %148 = vmatpush1.bf16.msra.mxu0 0
  %149 = vmatprep.subr.bf16.mxu0 0
  %150 = vmatpush1.bf16.msra.mxu0 0
  %151 = vmatprep.subr.bf16.mxu0 0
  %152 = vmatpush1.bf16.msra.mxu0 0
  %153 = vmatprep.subr.bf16.mxu0 0
  %154 = vmatpush1.bf16.msra.mxu0 0
  %155 = vmatprep.mubr.bf16.mxu0 %v118
  %156 = vmatmul.mubr.bf16.gmra.mrb[0].mxu0 %v56
  %v157 = vpop.f32.mrb[0].mxu0
  %v158 = vadd.f32 %v42, %v157
  %v159 = vpop.f32.mrb[0].mxu0
  %v160 = vpop.f32.mrb[0].mxu0
  %v161 = vadd.f32 %v42, %v160
  %v162 = vpop.f32.mrb[0].mxu0
  %163 = vmatprep.mubr.bf16.mxu0 %v121
  %164 = vmatmul.mubr.bf16.gmra.mrb[0].mxu0 %v58
  %v165 = vpop.f32.mrb[0].mxu0
  %v166 = vadd.f32 %v42, %v165
  %v167 = vpop.f32.mrb[0].mxu0
  %v168 = vpop.f32.mrb[0].mxu0
  %v169 = vadd.f32 %v42, %v168
  %v170 = vpop.f32.mrb[0].mxu0
  %171 = vdwg.mxu0
  %v172 = vmax.f32 %v158, 0.0
  %v173 = vmax.f32 %v161, 0.0
  %v174 = vmax.f32 %v166, 0.0
  %v175 = vmax.f32 %v169, 0.0
  %vm176 = vcmask 261120
  %177 = vst.msk [vmem:[%s3] sm:$0xff] %vm176, %v172
  %178 = vst.msk [vmem:[%s3 + $0x8] sm:$0xff] %vm176, %v173
  %179 = vst.msk [vmem:[%s3 + $0x10] sm:$0xff] %vm176, %v174
  %180 = vst.msk [vmem:[%s3 + $0x18] sm:$0xff] %vm176, %v175
  // Predicated region
  $region14: #{googlenet_forward.23} parent=0 // pred_check
    _
  $region15: #{googlenet_forward.23} parent=0 // pred_check_branch
    %182 = sbr.rel (0) target = $region17
  $region16: #{googlenet_forward.23} parent=0 // pred_region
    _
  $region17: #{googlenet_forward.23} parent=0 // pred_fallthru
    _
  // Predicated region
  $region18: #{googlenet_forward.23} parent=0 // pred_check
    _
  $region19: #{googlenet_forward.23} parent=0 // pred_check_branch
    %184 = sbr.rel (0) target = $region21
  $region20: #{googlenet_forward.23} parent=0 // pred_region
    _
  $region21: #{googlenet_forward.23} parent=0 // pred_fallthru
    _

// kernel: googlenet_forward.24
$region0: #{googlenet_forward.24}
  #allocation0 [shape = 'u32[]', space=smem, size = 0x4, offset = 0x4, fixed_abs, tag = 'smem constant byte address 0x4 - core index']
  #allocation1 [shape = 'u32[144,128]{1,0:T(1,128)}', space=vmem, size = 0x12000, scoped, tag = 'internal scratch']
  %s0 = inlined_call_operand.vmem [shape: f32[2,6,6,192], index: 0, kind: input, shape index: {}]
  %s1 = inlined_call_operand.vmem [shape: f32[2,4,4,192], index: 1, kind: output, shape index: {}]
  %s2 = sld [smem:[#allocation0]]
  $region37: #{googlenet_forward.24} parent=0
    _
  %s4 = ssub.s32 1, %s2
  %s5 = scalar_select 0, %s4, %s2
  loop: start=0, step=1, limit=4
  $region2: #{googlenet_forward.24} parent=0 // loop_pre_header
    _
  $region3: #{googlenet_forward.24} parent=0 // loop_header
    %s7 = sphi 0, %s11
    %p8 = scmp.ge.s32.totalorder %s7, 4
    %s17 = sphi 0, %s19
    %s20 = sphi 0, %s17
    %s21 = sphi 0, %s20
    %s37 = sphi 0, %s21
    %s43 = sphi 0, %s45
    %s46 = sphi 0, %s43
    %s47 = sphi 0, %s46
    %s63 = sphi 0, %s47
  $region4: #{googlenet_forward.24} parent=0 // loop_header_branch
    %10 = sbr.rel (%p8) target = $region8
  $region5: #{googlenet_forward.24} parent=0 // loop_body
    %s12 = ssub.s32 %s7, 1
    %s13 = ssub.s32 %s7, 2
    %s14 = sadd.s32 %s7, 1
    %s15 = ssub.s32 %s7, %s14
    %p16 = scmp.eq.s32.totalorder %s15, 0
    %s18 = sadd.s32 %s17, 1
    %s19 = scalar_select %p16, %s17, %s18
    %p22 = pneg %p16
    %p23 = scmp.eq.s32.totalorder %s7, 1
    %p24 = por %p22, %p23
    %p25 = scmp.ne.s32.totalorder %s17, %s20
    %p26 = scmp.eq.s32.totalorder %s7, 0
    %p27 = por %p25, %p26
    %p28 = scmp.ne.s32.totalorder %s17, %s20
    %p29 = scmp.eq.s32.totalorder %s12, 1
    %p30 = por %p28, %p29
    %p31 = scmp.ne.s32.totalorder %s20, %s21
    %p32 = scmp.eq.s32.totalorder %s12, 0
    %p33 = por %p31, %p32
    %p34 = scmp.ne.s32.totalorder %s20, %s21
    %p35 = scmp.eq.s32.totalorder %s13, 1
    %p36 = por %p34, %p35
    %p38 = scmp.ne.s32.totalorder %s21, %s37
    %p39 = scmp.eq.s32.totalorder %s13, 0
    %p40 = por %p38, %p39
    %s41 = ssub.s32 %s7, %s14
    %p42 = scmp.eq.s32.totalorder %s41, 0
    %s44 = sadd.s32 %s43, 1
    %s45 = scalar_select %p42, %s43, %s44
    %p48 = pneg %p42
    %p49 = scmp.eq.s32.totalorder %s7, 1
    %p50 = por %p48, %p49
    %p51 = scmp.ne.s32.totalorder %s43, %s46
    %p52 = scmp.eq.s32.totalorder %s7, 0
    %p53 = por %p51, %p52
    %p54 = scmp.ne.s32.totalorder %s43, %s46
    %p55 = scmp.eq.s32.totalorder %s12, 1
    %p56 = por %p54, %p55
    %p57 = scmp.ne.s32.totalorder %s46, %s47
    %p58 = scmp.eq.s32.totalorder %s12, 0
    %p59 = por %p57, %p58
    %p60 = scmp.ne.s32.totalorder %s46, %s47
    %p61 = scmp.eq.s32.totalorder %s13, 1
    %p62 = por %p60, %p61
    %p64 = scmp.ne.s32.totalorder %s47, %s63
    %p65 = scmp.eq.s32.totalorder %s13, 0
    %p66 = por %p64, %p65
    %p67 = scmp.le.s32.totalorder 1, %s7
    %p68 = scmp.lt.s32.totalorder %s7, 3
    %p69 = pnand %p67, %p68
    %p70 = pneg %p69
    // Predicated region
    $region9: #{googlenet_forward.24} parent=5 // pred_check
      _
    $region10: #{googlenet_forward.24} parent=5 // pred_check_branch
      %72 = sbr.rel (%p69) target = $region12
    $region11: #{googlenet_forward.24} parent=5 // pred_region
      %s73 = ssub.s32 %s7, 1
    $region12: #{googlenet_forward.24} parent=5 // pred_fallthru
      _
    %p74 = scmp.lt.s32.totalorder %s7, 2
    // Predicated region
    $region13: #{googlenet_forward.24} parent=5 // pred_check
      %p75 = pneg %p74
    $region14: #{googlenet_forward.24} parent=5 // pred_check_branch
      %77 = sbr.rel (%p75) target = $region16
    $region15: #{googlenet_forward.24} parent=5 // pred_region
      // Predicated region
      $region17: #{googlenet_forward.24} parent=15 // pred_check
        %p78 = pneg %p27
      $region18: #{googlenet_forward.24} parent=15 // pred_check_branch
        %80 = sbr.rel (%p78) target = $region20
      $region19: #{googlenet_forward.24} parent=15 // pred_region
        %p81 = scmp.lt.s32.totalorder %s7, 1
        %s82 = scalar_select %p81, %s7, 1
        %s83 = smul.addr %s82, 12
        %s84 = smul.addr %s83, 8
        %s85 = scalar_lea.vmem %s0, %s84
      $region20: #{googlenet_forward.24} parent=15 // pred_fallthru
        _
    $region16: #{googlenet_forward.24} parent=5 // pred_fallthru
      _
    %p86 = scmp.le.s32.totalorder 1, %s7
    %p87 = scmp.lt.s32.totalorder %s7, 3
    %p88 = pnand %p86, %p87
    %p89 = pneg %p88
    // Predicated region
    $region21: #{googlenet_forward.24} parent=5 // pred_check
      _
    $region22: #{googlenet_forward.24} parent=5 // pred_check_branch
      %91 = sbr.rel (%p88) target = $region24
    $region23: #{googlenet_forward.24} parent=5 // pred_region
      %s92 = ssub.s32 %s7, 1
      %p93 = scmp.lt.s32.totalorder %s12, 1
      %s94 = scalar_select %p93, %s12, 1
      %s95 = smul.addr %s94, 12
      %s96 = smul.addr %s95, 8
      %s97 = scalar_lea.vmem %s0, %s96
      %p98 = pneg %p33
      %p99 = pneg %p30
      %p100 = pneg %p59
      %p101 = pneg %p56
      %p102 = scmp.lt.s32.totalorder %s12, 1
      %s103 = scalar_select %p102, %s12, 1
      %s104 = smul.addr %s103, 8
      %s105 = smul.addr %s104, 4
      %s106 = scalar_lea.vmem %s1, %s105
      %p107 = scmp.lt.s32.totalorder %s12, 1
      %s108 = scalar_select %p107, %s12, 1
      %s109 = smul.addr %s108, 12
      %s110 = smul.addr %s109, 8
      %s111 = scalar_lea.vmem %s0, %s110
      %p112 = scmp.lt.s32.totalorder %s12, 1
      %s113 = scalar_select %p112, %s12, 1
      %s114 = smul.addr %s113, 8
      %s115 = smul.addr %s114, 4
      %s116 = scalar_lea.vmem %s1, %s115
      %v117 = vld [vmem:[%s111] sm:$0xf]
      %v118 = vld [vmem:[%s111 + $0x8] sm:$0xf]
      %v119 = vld [vmem:[%s111 + $0x10] sm:$0xf]
      %v120 = vld [vmem:[%s111 + $0x18] sm:$0xf]
      %v121 = vld [vmem:[%s111 + $0x20] sm:$0xf]
      %v122 = vld [vmem:[%s111 + $0x28] sm:$0xf]
      %v123 = vld [vmem:[%s111 + $0x30] sm:$0xf]
      %v124 = vld [vmem:[%s111 + $0x38] sm:$0xf]
      %v125 = vld [vmem:[%s111] sm:$0x1e]
      %v126 = vld [vmem:[%s111 + $0x8] sm:$0x1e]
      %v127 = vld [vmem:[%s111 + $0x10] sm:$0x1e]
      %v128 = vld [vmem:[%s111 + $0x18] sm:$0x1e]
      %v129 = vld [vmem:[%s111 + $0x20] sm:$0x1e]
      %v130 = vld [vmem:[%s111 + $0x28] sm:$0x1e]
      %v131 = vld [vmem:[%s111 + $0x30] sm:$0x1e]
      %v132 = vld [vmem:[%s111 + $0x38] sm:$0x1e]
      %v141 = vrot.slane %v125, 1
      %v142 = vrot.slane %v126, 1
      %v143 = vrot.slane %v127, 1
      %v144 = vrot.slane %v128, 1
      %v145 = vrot.slane %v129, 1
      %v146 = vrot.slane %v130, 1
      %v147 = vrot.slane %v131, 1
      %v148 = vrot.slane %v132, 1
      %v157 = vmax.f32 %v117, %v141
      %v158 = vmax.f32 %v118, %v142
      %v159 = vmax.f32 %v119, %v143
      %v160 = vmax.f32 %v120, %v144
      %v161 = vmax.f32 %v121, %v145
      %v162 = vmax.f32 %v122, %v146
      %v163 = vmax.f32 %v123, %v147
      %v164 = vmax.f32 %v124, %v148
      %v165 = vld [vmem:[%s111] sm:$0x3c]
      %v166 = vld [vmem:[%s111 + $0x8] sm:$0x3c]
      %v167 = vld [vmem:[%s111 + $0x10] sm:$0x3c]
      %v168 = vld [vmem:[%s111 + $0x18] sm:$0x3c]
      %v169 = vld [vmem:[%s111 + $0x20] sm:$0x3c]
      %v170 = vld [vmem:[%s111 + $0x28] sm:$0x3c]
      %v171 = vld [vmem:[%s111 + $0x30] sm:$0x3c]
      %v172 = vld [vmem:[%s111 + $0x38] sm:$0x3c]
      %v181 = vrot.slane %v165, 2
      %v182 = vrot.slane %v166, 2
      %v183 = vrot.slane %v167, 2
      %v184 = vrot.slane %v168, 2
      %v185 = vrot.slane %v169, 2
      %v186 = vrot.slane %v170, 2
      %v187 = vrot.slane %v171, 2
      %v188 = vrot.slane %v172, 2
      %v197 = vmax.f32 %v157, %v181
      %v198 = vmax.f32 %v158, %v182
      %v199 = vmax.f32 %v159, %v183
      %v200 = vmax.f32 %v160, %v184
      %v201 = vmax.f32 %v161, %v185
      %v202 = vmax.f32 %v162, %v186
      %v203 = vmax.f32 %v163, %v187
      %v204 = vmax.f32 %v164, %v188
      %s205 = scalar_lea.vmem %s111, 16
      %v206 = vld [vmem:[%s205] sm:$0xf]
      %v207 = vld [vmem:[%s205 + $0x8] sm:$0xf]
      %v208 = vld [vmem:[%s205 + $0x10] sm:$0xf]
      %v209 = vld [vmem:[%s205 + $0x18] sm:$0xf]
      %v210 = vld [vmem:[%s205 + $0x20] sm:$0xf]
      %v211 = vld [vmem:[%s205 + $0x28] sm:$0xf]
      %v212 = vld [vmem:[%s205 + $0x30] sm:$0xf]
      %v213 = vld [vmem:[%s205 + $0x38] sm:$0xf]
      %v214 = vmax.f32 %v197, %v206
      %v215 = vmax.f32 %v198, %v207
      %v216 = vmax.f32 %v199, %v208
      %v217 = vmax.f32 %v200, %v209
      %v218 = vmax.f32 %v201, %v210
      %v219 = vmax.f32 %v202, %v211
      %v220 = vmax.f32 %v203, %v212
      %v221 = vmax.f32 %v204, %v213
      %v222 = vld [vmem:[%s205] sm:$0x1e]
      %v223 = vld [vmem:[%s205 + $0x8] sm:$0x1e]
      %v224 = vld [vmem:[%s205 + $0x10] sm:$0x1e]
      %v225 = vld [vmem:[%s205 + $0x18] sm:$0x1e]
      %v226 = vld [vmem:[%s205 + $0x20] sm:$0x1e]
      %v227 = vld [vmem:[%s205 + $0x28] sm:$0x1e]
      %v228 = vld [vmem:[%s205 + $0x30] sm:$0x1e]
      %v229 = vld [vmem:[%s205 + $0x38] sm:$0x1e]
      %v238 = vrot.slane %v222, 1
      %v239 = vrot.slane %v223, 1
      %v240 = vrot.slane %v224, 1
      %v241 = vrot.slane %v225, 1
      %v242 = vrot.slane %v226, 1
      %v243 = vrot.slane %v227, 1
      %v244 = vrot.slane %v228, 1
      %v245 = vrot.slane %v229, 1
      %v254 = vmax.f32 %v214, %v238
      %v255 = vmax.f32 %v215, %v239
      %v256 = vmax.f32 %v216, %v240
      %v257 = vmax.f32 %v217, %v241
      %v258 = vmax.f32 %v218, %v242
      %v259 = vmax.f32 %v219, %v243
      %v260 = vmax.f32 %v220, %v244
      %v261 = vmax.f32 %v221, %v245
      %v262 = vld [vmem:[%s205] sm:$0x3c]
      %v263 = vld [vmem:[%s205 + $0x8] sm:$0x3c]
      %v264 = vld [vmem:[%s205 + $0x10] sm:$0x3c]
      %v265 = vld [vmem:[%s205 + $0x18] sm:$0x3c]
      %v266 = vld [vmem:[%s205 + $0x20] sm:$0x3c]
      %v267 = vld [vmem:[%s205 + $0x28] sm:$0x3c]
      %v268 = vld [vmem:[%s205 + $0x30] sm:$0x3c]
      %v269 = vld [vmem:[%s205 + $0x38] sm:$0x3c]
      %v278 = vrot.slane %v262, 2
      %v279 = vrot.slane %v263, 2
      %v280 = vrot.slane %v264, 2
      %v281 = vrot.slane %v265, 2
      %v282 = vrot.slane %v266, 2
      %v283 = vrot.slane %v267, 2
      %v284 = vrot.slane %v268, 2
      %v285 = vrot.slane %v269, 2
      %v294 = vmax.f32 %v254, %v278
      %v295 = vmax.f32 %v255, %v279
      %v296 = vmax.f32 %v256, %v280
      %v297 = vmax.f32 %v257, %v281
      %v298 = vmax.f32 %v258, %v282
      %v299 = vmax.f32 %v259, %v283
      %v300 = vmax.f32 %v260, %v284
      %v301 = vmax.f32 %v261, %v285
      %s302 = scalar_lea.vmem %s111, 32
      %v303 = vld [vmem:[%s302] sm:$0xf]
      %v304 = vld [vmem:[%s302 + $0x8] sm:$0xf]
      %v305 = vld [vmem:[%s302 + $0x10] sm:$0xf]
      %v306 = vld [vmem:[%s302 + $0x18] sm:$0xf]
      %v307 = vld [vmem:[%s302 + $0x20] sm:$0xf]
      %v308 = vld [vmem:[%s302 + $0x28] sm:$0xf]
      %v309 = vld [vmem:[%s302 + $0x30] sm:$0xf]
      %v310 = vld [vmem:[%s302 + $0x38] sm:$0xf]
      %v311 = vmax.f32 %v294, %v303
      %v312 = vmax.f32 %v295, %v304
      %v313 = vmax.f32 %v296, %v305
      %v314 = vmax.f32 %v297, %v306
      %v315 = vmax.f32 %v298, %v307
      %v316 = vmax.f32 %v299, %v308
      %v317 = vmax.f32 %v300, %v309
      %v318 = vmax.f32 %v301, %v310
      %v319 = vld [vmem:[%s302] sm:$0x1e]
      %v320 = vld [vmem:[%s302 + $0x8] sm:$0x1e]
      %v321 = vld [vmem:[%s302 + $0x10] sm:$0x1e]
      %v322 = vld [vmem:[%s302 + $0x18] sm:$0x1e]
      %v323 = vld [vmem:[%s302 + $0x20] sm:$0x1e]
      %v324 = vld [vmem:[%s302 + $0x28] sm:$0x1e]
      %v325 = vld [vmem:[%s302 + $0x30] sm:$0x1e]
      %v326 = vld [vmem:[%s302 + $0x38] sm:$0x1e]
      %v335 = vrot.slane %v319, 1
      %v336 = vrot.slane %v320, 1
      %v337 = vrot.slane %v321, 1
      %v338 = vrot.slane %v322, 1
      %v339 = vrot.slane %v323, 1
      %v340 = vrot.slane %v324, 1
      %v341 = vrot.slane %v325, 1
      %v342 = vrot.slane %v326, 1
      %v351 = vmax.f32 %v311, %v335
      %v352 = vmax.f32 %v312, %v336
      %v353 = vmax.f32 %v313, %v337
      %v354 = vmax.f32 %v314, %v338
      %v355 = vmax.f32 %v315, %v339
      %v356 = vmax.f32 %v316, %v340
      %v357 = vmax.f32 %v317, %v341
      %v358 = vmax.f32 %v318, %v342
      %v359 = vld [vmem:[%s302] sm:$0x3c]
      %v360 = vld [vmem:[%s302 + $0x8] sm:$0x3c]
      %v361 = vld [vmem:[%s302 + $0x10] sm:$0x3c]
      %v362 = vld [vmem:[%s302 + $0x18] sm:$0x3c]
      %v363 = vld [vmem:[%s302 + $0x20] sm:$0x3c]
      %v364 = vld [vmem:[%s302 + $0x28] sm:$0x3c]
      %v365 = vld [vmem:[%s302 + $0x30] sm:$0x3c]
      %v366 = vld [vmem:[%s302 + $0x38] sm:$0x3c]
      %v375 = vrot.slane %v359, 2
      %v376 = vrot.slane %v360, 2
      %v377 = vrot.slane %v361, 2
      %v378 = vrot.slane %v362, 2
      %v379 = vrot.slane %v363, 2
      %v380 = vrot.slane %v364, 2
      %v381 = vrot.slane %v365, 2
      %v382 = vrot.slane %v366, 2
      %v391 = vmax.f32 %v351, %v375
      %v392 = vmax.f32 %v352, %v376
      %v393 = vmax.f32 %v353, %v377
      %v394 = vmax.f32 %v354, %v378
      %v395 = vmax.f32 %v355, %v379
      %v396 = vmax.f32 %v356, %v380
      %v397 = vmax.f32 %v357, %v381
      %v398 = vmax.f32 %v358, %v382
      %v407 = vcombine.low %v391, %v392
      %v408 = vcombine.low %v393, %v394
      %v409 = vcombine.low %v395, %v396
      %v410 = vcombine.low %v397, %v398
      %vm415 = vcmask 1043456
      %vm416 = vcmask 523268
      %vm417 = vmor %vm416, %vm415
      %418 = vst.msk [vmem:[%s116] sm:$0xff] %vm417, %v407
      %419 = vst.msk [vmem:[%s116 + $0x8] sm:$0xff] %vm417, %v408
      %420 = vst.msk [vmem:[%s116 + $0x10] sm:$0xff] %vm417, %v409
      %421 = vst.msk [vmem:[%s116 + $0x18] sm:$0xff] %vm417, %v410
      %p422 = scmp.lt.s32.totalorder %s12, 1
      %s423 = scalar_select %p422, %s12, 1
      %s424 = smul.addr %s423, 8
      %s425 = smul.addr %s424, 4
      %s426 = scalar_lea.vmem %s1, %s425
      // Predicated region
      $region25: #{googlenet_forward.24} parent=23 // pred_check
        %p427 = pneg %p56
      $region26: #{googlenet_forward.24} parent=23 // pred_check_branch
        %429 = sbr.rel (%p427) target = $region28
      $region27: #{googlenet_forward.24} parent=23 // pred_region
        _
      $region28: #{googlenet_forward.24} parent=23 // pred_fallthru
        _
    $region24: #{googlenet_forward.24} parent=5 // pred_fallthru
      _
    %p430 = scmp.le.s32.totalorder 2, %s7
    // Predicated region
    $region29: #{googlenet_forward.24} parent=5 // pred_check
      %p431 = pneg %p430
    $region30: #{googlenet_forward.24} parent=5 // pred_check_branch
      %433 = sbr.rel (%p431) target = $region32
    $region31: #{googlenet_forward.24} parent=5 // pred_region
      %s434 = ssub.s32 %s7, 2
      // Predicated region
      $region33: #{googlenet_forward.24} parent=31 // pred_check
        %p435 = pneg %p62
      $region34: #{googlenet_forward.24} parent=31 // pred_check_branch
        %437 = sbr.rel (%p435) target = $region36
      $region35: #{googlenet_forward.24} parent=31 // pred_region
        %p438 = scmp.lt.s32.totalorder %s13, 1
        %s439 = scalar_select %p438, %s13, 1
        %s440 = smul.addr %s439, 8
        %s441 = smul.addr %s440, 4
        %s442 = scalar_lea.vmem %s1, %s441
      $region36: #{googlenet_forward.24} parent=31 // pred_fallthru
        _
    $region32: #{googlenet_forward.24} parent=5 // pred_fallthru
      _
  $region6: #{googlenet_forward.24} parent=0 // loop_footer
    %s11 = sadd.s32 1, %s7
  $region7: #{googlenet_forward.24} parent=0 // loop_footer_branch
    %6 = sbr.rel target = $region3
  $region8: #{googlenet_forward.24} parent=0 // loop_exit
    _

// kernel: googlenet_forward.25
$region0: #{googlenet_forward.25}
  #allocation0 [shape = 'u32[]', space=smem, size = 0x4, offset = 0x4, fixed_abs, tag = 'smem constant byte address 0x4 - core index']
  #allocation1 [shape = 'u32[144,128]{1,0:T(1,128)}', space=vmem, size = 0x12000, scoped, tag = 'internal scratch']
  %s0 = inlined_call_operand.vmem [shape: bf16[32,192], index: 0, kind: input, shape index: {}]
  %s1 = inlined_call_operand.vmem [shape: bf16[192,32], index: 1, kind: input, shape index: {}]
  %s2 = inlined_call_operand.vmem [shape: f32[1,32], index: 2, kind: input, shape index: {}]
  %s3 = inlined_call_operand.vmem [shape: f32[32,32], index: 3, kind: output, shape index: {}]
  %s4 = sld [smem:[#allocation0]]
  $region22: #{googlenet_forward.25} parent=0
    _
  %s6 = ssub.s32 1, %s4
  %s7 = scalar_select 0, %s6, %s4
  // Predicated region
  $region2: #{googlenet_forward.25} parent=0 // pred_check
    _
  $region3: #{googlenet_forward.25} parent=0 // pred_check_branch
    %9 = sbr.rel (0) target = $region5
  $region4: #{googlenet_forward.25} parent=0 // pred_region
    _
  $region5: #{googlenet_forward.25} parent=0 // pred_fallthru
    _
  // Predicated region
  $region6: #{googlenet_forward.25} parent=0 // pred_check
    _
  $region7: #{googlenet_forward.25} parent=0 // pred_check_branch
    %11 = sbr.rel (0) target = $region9
  $region8: #{googlenet_forward.25} parent=0 // pred_region
    _
  $region9: #{googlenet_forward.25} parent=0 // pred_fallthru
    _
  // Predicated region
  $region10: #{googlenet_forward.25} parent=0 // pred_check
    _
  $region11: #{googlenet_forward.25} parent=0 // pred_check_branch
    %13 = sbr.rel (0) target = $region13
  $region12: #{googlenet_forward.25} parent=0 // pred_region
    _
  $region13: #{googlenet_forward.25} parent=0 // pred_fallthru
    _
  %v15 = vld [vmem:[%s0] sm:$0xff]
  %v16 = vld [vmem:[%s0 + $0x8] sm:$0xff]
  %v17 = vld [vmem:[%s0 + $0x10] sm:$0xff]
  %v18 = vld [vmem:[%s0 + $0x18] sm:$0xff]
  %v19 = vld [vmem:[%s1] sm:$0xf]
  %v20 = vld [vmem:[%s1 + $0x4] sm:$0xf]
  %v21 = vld [vmem:[%s1 + $0x8] sm:$0xf]
  %v22 = vld [vmem:[%s1 + $0xc] sm:$0xf]
  %v23 = vld [vmem:[%s1 + $0x10] sm:$0xf]
  %v24 = vld [vmem:[%s1 + $0x14] sm:$0xf]
  %v25 = vld [vmem:[%s1 + $0x18] sm:$0xf]
  %v26 = vld [vmem:[%s1 + $0x1c] sm:$0xf]
  %v27 = vld [vmem:[%s1 + $0x20] sm:$0xf]
  %v28 = vld [vmem:[%s1 + $0x24] sm:$0xf]
  %v29 = vld [vmem:[%s1 + $0x28] sm:$0xf]
  %v30 = vld [vmem:[%s1 + $0x2c] sm:$0xf]
  %v31 = vld [vmem:[%s1 + $0x30] sm:$0xf]
  %v32 = vld [vmem:[%s1 + $0x34] sm:$0xf]
  %v33 = vld [vmem:[%s1 + $0x38] sm:$0xf]
  %v34 = vld [vmem:[%s1 + $0x3c] sm:$0xf]
  %v35 = vld [vmem:[%s1 + $0x40] sm:$0xf]
  %v36 = vld [vmem:[%s1 + $0x44] sm:$0xf]
  %v37 = vld [vmem:[%s1 + $0x48] sm:$0xf]
  %v38 = vld [vmem:[%s1 + $0x4c] sm:$0xf]
  %v39 = vld [vmem:[%s1 + $0x50] sm:$0xf]
  %v40 = vld [vmem:[%s1 + $0x54] sm:$0xf]
  %v41 = vld [vmem:[%s1 + $0x58] sm:$0xf]
  %v42 = vld [vmem:[%s1 + $0x5c] sm:$0xf]
  %v43 = vld [vmem:[%s2] sm:$0x1]
  %v45 = vlaneseq
  %v46 = vshrl.u32 %v45, 7
  %v47 = vsub.s32 0, %v46
  %v48 = vrot.slane %v43, %v47
  %v54 = vunpack.c.l.b16 %v15
  %v55 = vunpack.c.h.b16 %v15
  %v56 = vunpack.c.l.b16 %v16
  %v57 = vunpack.c.h.b16 %v16
  %v58 = vunpack.c.l.b16 %v17
  %v59 = vunpack.c.h.b16 %v17
  %v60 = vunpack.c.l.b16 %v18
  %v61 = vunpack.c.h.b16 %v18
  %v62 = vpack.c.b16 %v56, %v54
  %v63 = vpack.c.b16 %v57, %v55
  %v64 = vpack.c.b16 %v60, %v58
  %v65 = vpack.c.b16 %v61, %v59
  %v92 = vunpack.c.l.b16 %v19
  %v93 = vunpack.c.l.b16 %v20
  %v94 = vunpack.c.l.b16 %v21
  %v95 = vunpack.c.l.b16 %v22
  %v96 = vunpack.c.l.b16 %v23
  %v97 = vunpack.c.l.b16 %v24
  %v98 = vunpack.c.l.b16 %v25
  %v99 = vunpack.c.l.b16 %v26
  %v100 = vunpack.c.l.b16 %v27
  %v101 = vunpack.c.l.b16 %v28
  %v102 = vunpack.c.l.b16 %v29
  %v103 = vunpack.c.l.b16 %v30
  %v104 = vunpack.c.l.b16 %v31
  %v105 = vunpack.c.l.b16 %v32
  %v106 = vunpack.c.l.b16 %v33
  %v107 = vunpack.c.l.b16 %v34
  %v108 = vunpack.c.l.b16 %v35
  %v109 = vunpack.c.l.b16 %v36
  %v110 = vunpack.c.l.b16 %v37
  %v111 = vunpack.c.l.b16 %v38
  %v112 = vunpack.c.l.b16 %v39
  %v113 = vunpack.c.l.b16 %v40
  %v114 = vunpack.c.l.b16 %v41
  %v115 = vunpack.c.l.b16 %v42
  %v116 = vpack.c.b16 %v93, %v92
  %v117 = vpack.c.b16 %v95, %v94
  %v118 = vpack.c.b16 %v97, %v96
  %v119 = vpack.c.b16 %v99, %v98
  %v120 = vpack.c.b16 %v101, %v100
  %v121 = vpack.c.b16 %v103, %v102
  %v122 = vpack.c.b16 %v105, %v104
  %v123 = vpack.c.b16 %v107, %v106
  %v124 = vpack.c.b16 %v109, %v108
  %v125 = vpack.c.b16 %v111, %v110
  %v126 = vpack.c.b16 %v113, %v112
  %v127 = vpack.c.b16 %v115, %v114
  %vm140 = vcmask 523264
  %v142 = vsel %vm140, %v63, 0
  %v145 = vsel %vm140, %v65, 0
  %147 = vmatprep.subr.bf16.mxu0 0
  %148 = vmatpush1.bf16.msra.mxu0 %v116
  %149 = vmatprep.subr.bf16.mxu0 0
  %150 = vmatpush1.bf16.msra.mxu0 %v117
  %151 = vmatprep.subr.bf16.mxu0 0
  %152 = vmatpush1.bf16.msra.mxu0 %v118
  %153 = vmatprep.subr.bf16.mxu0 0
  %154 = vmatpush1.bf16.msra.mxu0 %v119
  %155 = vmatprep.subr.bf16.mxu0 0
  %156 = vmatpush1.bf16.msra.mxu0 %v120
  %157 = vmatprep.subr.bf16.mxu0 0
  %158 = vmatpush1.bf16.msra.mxu0 %v121
  %159 = vmatprep.subr.bf16.mxu0 0
  %160 = vmatpush1.bf16.msra.mxu0 %v122
  %161 = vmatprep.subr.bf16.mxu0 0
  %162 = vmatpush1.bf16.msra.mxu0 %v123
  %163 = vmatprep.subr.bf16.mxu0 0
  %164 = vmatpush1.bf16.msra.mxu0 %v124
  %165 = vmatprep.subr.bf16.mxu0 0
  %166 = vmatpush1.bf16.msra.mxu0 %v125
  %167 = vmatprep.subr.bf16.mxu0 0
  %168 = vmatpush1.bf16.msra.mxu0 %v126
  %169 = vmatprep.subr.bf16.mxu0 0
  %170 = vmatpush1.bf16.msra.mxu0 %v127
  %171 = vmatprep.subr.bf16.mxu0 0
  %172 = vmatpush1.bf16.msra.mxu0 0
  %173 = vmatprep.subr.bf16.mxu0 0
  %174 = vmatpush1.bf16.msra.mxu0 0
  %175 = vmatprep.subr.bf16.mxu0 0
  %176 = vmatpush1.bf16.msra.mxu0 0
  %177 = vmatprep.subr.bf16.mxu0 0
  %178 = vmatpush1.bf16.msra.mxu0 0
  %179 = vmatprep.mubr.bf16.mxu0 %v142
  %180 = vmatmul.mubr.bf16.gmra.mrb[0].mxu0 %v62
  %v181 = vpop.f32.mrb[0].mxu0
  %v182 = vadd.f32 %v48, %v181
  %v183 = vpop.f32.mrb[0].mxu0
  %v184 = vpop.f32.mrb[0].mxu0
  %v185 = vadd.f32 %v48, %v184
  %v186 = vpop.f32.mrb[0].mxu0
  %187 = vmatprep.mubr.bf16.mxu0 %v145
  %188 = vmatmul.mubr.bf16.gmra.mrb[0].mxu0 %v64
  %v189 = vpop.f32.mrb[0].mxu0
  %v190 = vadd.f32 %v48, %v189
  %v191 = vpop.f32.mrb[0].mxu0
  %v192 = vpop.f32.mrb[0].mxu0
  %v193 = vadd.f32 %v48, %v192
  %v194 = vpop.f32.mrb[0].mxu0
  %195 = vdwg.mxu0
  %v196 = vmax.f32 %v182, 0.0
  %v197 = vmax.f32 %v185, 0.0
  %v198 = vmax.f32 %v190, 0.0
  %v199 = vmax.f32 %v193, 0.0
  %vm200 = vcmask 261120
  %201 = vst.msk [vmem:[%s3] sm:$0xff] %vm200, %v196
  %202 = vst.msk [vmem:[%s3 + $0x8] sm:$0xff] %vm200, %v197
  %203 = vst.msk [vmem:[%s3 + $0x10] sm:$0xff] %vm200, %v198
  %204 = vst.msk [vmem:[%s3 + $0x18] sm:$0xff] %vm200, %v199
  // Predicated region
  $region14: #{googlenet_forward.25} parent=0 // pred_check
    _
  $region15: #{googlenet_forward.25} parent=0 // pred_check_branch
    %206 = sbr.rel (0) target = $region17
  $region16: #{googlenet_forward.25} parent=0 // pred_region
    _
  $region17: #{googlenet_forward.25} parent=0 // pred_fallthru
    _
  // Predicated region
  $region18: #{googlenet_forward.25} parent=0 // pred_check
    _
  $region19: #{googlenet_forward.25} parent=0 // pred_check_branch
    %208 = sbr.rel (0) target = $region21
  $region20: #{googlenet_forward.25} parent=0 // pred_region
    _
  $region21: #{googlenet_forward.25} parent=0 // pred_fallthru
    _

// kernel: googlenet_forward.26
$region0: #{googlenet_forward.26}
  #allocation0 [shape = 'u32[]', space=smem, size = 0x4, offset = 0x4, fixed_abs, tag = 'smem constant byte address 0x4 - core index']
  #allocation1 [shape = 'u32[144,128]{1,0:T(1,128)}', space=vmem, size = 0x12000, scoped, tag = 'internal scratch']
  %s0 = inlined_call_operand.vmem [shape: bf16[32,256], index: 0, kind: input, shape index: {}]
  %s1 = inlined_call_operand.vmem [shape: bf16[256,288], index: 1, kind: input, shape index: {}]
  %s2 = inlined_call_operand.vmem [shape: f32[1,288], index: 2, kind: input, shape index: {}]
  %s3 = inlined_call_operand.vmem [shape: f32[32,288], index: 3, kind: output, shape index: {}]
  %s4 = sld [smem:[#allocation0]]
  $region22: #{googlenet_forward.26} parent=0
    _
  %s6 = ssub.s32 1, %s4
  %s7 = scalar_select 0, %s6, %s4
  // Predicated region
  $region2: #{googlenet_forward.26} parent=0 // pred_check
    _
  $region3: #{googlenet_forward.26} parent=0 // pred_check_branch
    %9 = sbr.rel (0) target = $region5
  $region4: #{googlenet_forward.26} parent=0 // pred_region
    _
  $region5: #{googlenet_forward.26} parent=0 // pred_fallthru
    _
  // Predicated region
  $region6: #{googlenet_forward.26} parent=0 // pred_check
    _
  $region7: #{googlenet_forward.26} parent=0 // pred_check_branch
    %11 = sbr.rel (0) target = $region9
  $region8: #{googlenet_forward.26} parent=0 // pred_region
    _
  $region9: #{googlenet_forward.26} parent=0 // pred_fallthru
    _
  // Predicated region
  $region10: #{googlenet_forward.26} parent=0 // pred_check
    _
  $region11: #{googlenet_forward.26} parent=0 // pred_check_branch
    %13 = sbr.rel (0) target = $region13
  $region12: #{googlenet_forward.26} parent=0 // pred_region
    _
  $region13: #{googlenet_forward.26} parent=0 // pred_fallthru
    _
  %v15 = vld [vmem:[%s0] sm:$0xff]
  %v16 = vld [vmem:[%s0 + $0x8] sm:$0xff]
  %v17 = vld [vmem:[%s0 + $0x10] sm:$0xff]
  %v18 = vld [vmem:[%s0 + $0x18] sm:$0xff]
  %v19 = vld [vmem:[%s1] sm:$0xff]
  %v20 = vld [vmem:[%s1 + $0x8] sm:$0xf]
  %v21 = vld [vmem:[%s1 + $0xc] sm:$0xff]
  %v22 = vld [vmem:[%s1 + $0x14] sm:$0xf]
  %v23 = vld [vmem:[%s1 + $0x18] sm:$0xff]
  %v24 = vld [vmem:[%s1 + $0x20] sm:$0xf]
  %v25 = vld [vmem:[%s1 + $0x24] sm:$0xff]
  %v26 = vld [vmem:[%s1 + $0x2c] sm:$0xf]
  %v27 = vld [vmem:[%s1 + $0x30] sm:$0xff]
  %v28 = vld [vmem:[%s1 + $0x38] sm:$0xf]
  %v29 = vld [vmem:[%s1 + $0x3c] sm:$0xff]
  %v30 = vld [vmem:[%s1 + $0x44] sm:$0xf]
  %v31 = vld [vmem:[%s1 + $0x48] sm:$0xff]
  %v32 = vld [vmem:[%s1 + $0x50] sm:$0xf]
  %v33 = vld [vmem:[%s1 + $0x54] sm:$0xff]
  %v34 = vld [vmem:[%s1 + $0x5c] sm:$0xf]
  %v35 = vld [vmem:[%s1 + $0x60] sm:$0xff]
  %v36 = vld [vmem:[%s1 + $0x68] sm:$0xf]
  %v37 = vld [vmem:[%s1 + $0x6c] sm:$0xff]
  %v38 = vld [vmem:[%s1 + $0x74] sm:$0xf]
  %v39 = vld [vmem:[%s1 + $0x78] sm:$0xff]
  %v40 = vld [vmem:[%s1 + $0x80] sm:$0xf]
  %v41 = vld [vmem:[%s1 + $0x84] sm:$0xff]
  %v42 = vld [vmem:[%s1 + $0x8c] sm:$0xf]
  %v43 = vld [vmem:[%s1 + $0x90] sm:$0xff]
  %v44 = vld [vmem:[%s1 + $0x98] sm:$0xf]
  %v45 = vld [vmem:[%s1 + $0x9c] sm:$0xff]
  %v46 = vld [vmem:[%s1 + $0xa4] sm:$0xf]
  %v47 = vld [vmem:[%s1 + $0xa8] sm:$0xff]
  %v48 = vld [vmem:[%s1 + $0xb0] sm:$0xf]
  %v49 = vld [vmem:[%s1 + $0xb4] sm:$0xff]
  %v50 = vld [vmem:[%s1 + $0xbc] sm:$0xf]
  %v51 = vld [vmem:[%s1 + $0xc0] sm:$0xff]
  %v52 = vld [vmem:[%s1 + $0xc8] sm:$0xf]
  %v53 = vld [vmem:[%s1 + $0xcc] sm:$0xff]
  %v54 = vld [vmem:[%s1 + $0xd4] sm:$0xf]
  %v55 = vld [vmem:[%s1 + $0xd8] sm:$0xff]
  %v56 = vld [vmem:[%s1 + $0xe0] sm:$0xf]
  %v57 = vld [vmem:[%s1 + $0xe4] sm:$0xff]
  %v58 = vld [vmem:[%s1 + $0xec] sm:$0xf]
  %v59 = vld [vmem:[%s1 + $0xf0] sm:$0xff]
  %v60 = vld [vmem:[%s1 + $0xf8] sm:$0xf]
  %v61 = vld [vmem:[%s1 + $0xfc] sm:$0xff]
  %v62 = vld [vmem:[%s1 + $0x104] sm:$0xf]
  %v63 = vld [vmem:[%s1 + $0x108] sm:$0xff]
  %v64 = vld [vmem:[%s1 + $0x110] sm:$0xf]
  %v65 = vld [vmem:[%s1 + $0x114] sm:$0xff]
  %v66 = vld [vmem:[%s1 + $0x11c] sm:$0xf]
  %v67 = vld [vmem:[%s1 + $0x120] sm:$0xff]
  %v68 = vld [vmem:[%s1 + $0x128] sm:$0xf]
  %v69 = vld [vmem:[%s1 + $0x12c] sm:$0xff]
  %v70 = vld [vmem:[%s1 + $0x134] sm:$0xf]
  %v71 = vld [vmem:[%s1 + $0x138] sm:$0xff]
  %v72 = vld [vmem:[%s1 + $0x140] sm:$0xf]
  %v73 = vld [vmem:[%s1 + $0x144] sm:$0xff]
  %v74 = vld [vmem:[%s1 + $0x14c] sm:$0xf]
  %v75 = vld [vmem:[%s1 + $0x150] sm:$0xff]
  %v76 = vld [vmem:[%s1 + $0x158] sm:$0xf]
  %v77 = vld [vmem:[%s1 + $0x15c] sm:$0xff]
  %v78 = vld [vmem:[%s1 + $0x164] sm:$0xf]
  %v79 = vld [vmem:[%s1 + $0x168] sm:$0xff]
  %v80 = vld [vmem:[%s1 + $0x170] sm:$0xf]
  %v81 = vld [vmem:[%s1 + $0x174] sm:$0xff]
  %v82 = vld [vmem:[%s1 + $0x17c] sm:$0xf]
  %v83 = vld [vmem:[%s2] sm:$0x7]
  %v85 = vlaneseq
  %v86 = vshrl.u32 %v85, 7
  %v87 = vsub.s32 0, %v86
  %v88 = vrot.slane %v83, %v87
  %v89 = vlaneseq
  %v90 = vshrl.u32 %v89, 7
  %v91 = vsub.s32 1, %v90
  %v92 = vrot.slane %v83, %v91
  %v93 = vlaneseq
  %v94 = vshrl.u32 %v93, 7
  %v95 = vsub.s32 2, %v94
  %v96 = vrot.slane %v83, %v95
  %v104 = vunpack.c.l.b16 %v15
  %v105 = vunpack.c.h.b16 %v15
  %v106 = vunpack.c.l.b16 %v16
  %v107 = vunpack.c.h.b16 %v16
  %v108 = vunpack.c.l.b16 %v17
  %v109 = vunpack.c.h.b16 %v17
  %v110 = vunpack.c.l.b16 %v18
  %v111 = vunpack.c.h.b16 %v18
  %v112 = vpack.c.b16 %v106, %v104
  %v113 = vpack.c.b16 %v107, %v105
  %v114 = vpack.c.b16 %v110, %v108
  %v115 = vpack.c.b16 %v111, %v109
  %v184 = vunpack.c.l.b16 %v19
  %v185 = vunpack.c.h.b16 %v19
  %v186 = vunpack.c.l.b16 %v20
  %v187 = vunpack.c.l.b16 %v21
  %v188 = vunpack.c.h.b16 %v21
  %v189 = vunpack.c.l.b16 %v22
  %v190 = vunpack.c.l.b16 %v23
  %v191 = vunpack.c.h.b16 %v23
  %v192 = vunpack.c.l.b16 %v24
  %v193 = vunpack.c.l.b16 %v25
  %v194 = vunpack.c.h.b16 %v25
  %v195 = vunpack.c.l.b16 %v26
  %v196 = vunpack.c.l.b16 %v27
  %v197 = vunpack.c.h.b16 %v27
  %v198 = vunpack.c.l.b16 %v28
  %v199 = vunpack.c.l.b16 %v29
  %v200 = vunpack.c.h.b16 %v29
  %v201 = vunpack.c.l.b16 %v30
  %v202 = vunpack.c.l.b16 %v31
  %v203 = vunpack.c.h.b16 %v31
  %v204 = vunpack.c.l.b16 %v32
  %v205 = vunpack.c.l.b16 %v33
  %v206 = vunpack.c.h.b16 %v33
  %v207 = vunpack.c.l.b16 %v34
  %v208 = vunpack.c.l.b16 %v35
  %v209 = vunpack.c.h.b16 %v35
  %v210 = vunpack.c.l.b16 %v36
  %v211 = vunpack.c.l.b16 %v37
  %v212 = vunpack.c.h.b16 %v37
  %v213 = vunpack.c.l.b16 %v38
  %v214 = vunpack.c.l.b16 %v39
  %v215 = vunpack.c.h.b16 %v39
  %v216 = vunpack.c.l.b16 %v40
  %v217 = vunpack.c.l.b16 %v41
  %v218 = vunpack.c.h.b16 %v41
  %v219 = vunpack.c.l.b16 %v42
  %v220 = vunpack.c.l.b16 %v43
  %v221 = vunpack.c.h.b16 %v43
  %v222 = vunpack.c.l.b16 %v44
  %v223 = vunpack.c.l.b16 %v45
  %v224 = vunpack.c.h.b16 %v45
  %v225 = vunpack.c.l.b16 %v46
  %v226 = vunpack.c.l.b16 %v47
  %v227 = vunpack.c.h.b16 %v47
  %v228 = vunpack.c.l.b16 %v48
  %v229 = vunpack.c.l.b16 %v49
  %v230 = vunpack.c.h.b16 %v49
  %v231 = vunpack.c.l.b16 %v50
  %v232 = vunpack.c.l.b16 %v51
  %v233 = vunpack.c.h.b16 %v51
  %v234 = vunpack.c.l.b16 %v52
  %v235 = vunpack.c.l.b16 %v53
  %v236 = vunpack.c.h.b16 %v53
  %v237 = vunpack.c.l.b16 %v54
  %v238 = vunpack.c.l.b16 %v55
  %v239 = vunpack.c.h.b16 %v55
  %v240 = vunpack.c.l.b16 %v56
  %v241 = vunpack.c.l.b16 %v57
  %v242 = vunpack.c.h.b16 %v57
  %v243 = vunpack.c.l.b16 %v58
  %v244 = vunpack.c.l.b16 %v59
  %v245 = vunpack.c.h.b16 %v59
  %v246 = vunpack.c.l.b16 %v60
  %v247 = vunpack.c.l.b16 %v61
  %v248 = vunpack.c.h.b16 %v61
  %v249 = vunpack.c.l.b16 %v62
  %v250 = vunpack.c.l.b16 %v63
  %v251 = vunpack.c.h.b16 %v63
  %v252 = vunpack.c.l.b16 %v64
  %v253 = vunpack.c.l.b16 %v65
  %v254 = vunpack.c.h.b16 %v65
  %v255 = vunpack.c.l.b16 %v66
  %v256 = vunpack.c.l.b16 %v67
  %v257 = vunpack.c.h.b16 %v67
  %v258 = vunpack.c.l.b16 %v68
  %v259 = vunpack.c.l.b16 %v69
  %v260 = vunpack.c.h.b16 %v69
  %v261 = vunpack.c.l.b16 %v70
  %v262 = vunpack.c.l.b16 %v71
  %v263 = vunpack.c.h.b16 %v71
  %v264 = vunpack.c.l.b16 %v72
  %v265 = vunpack.c.l.b16 %v73
  %v266 = vunpack.c.h.b16 %v73
  %v267 = vunpack.c.l.b16 %v74
  %v268 = vunpack.c.l.b16 %v75
  %v269 = vunpack.c.h.b16 %v75
  %v270 = vunpack.c.l.b16 %v76
  %v271 = vunpack.c.l.b16 %v77
  %v272 = vunpack.c.h.b16 %v77
  %v273 = vunpack.c.l.b16 %v78
  %v274 = vunpack.c.l.b16 %v79
  %v275 = vunpack.c.h.b16 %v79
  %v276 = vunpack.c.l.b16 %v80
  %v277 = vunpack.c.l.b16 %v81
  %v278 = vunpack.c.h.b16 %v81
  %v279 = vunpack.c.l.b16 %v82
  %v280 = vpack.c.b16 %v187, %v184
  %v281 = vpack.c.b16 %v188, %v185
  %v282 = vpack.c.b16 %v189, %v186
  %v283 = vpack.c.b16 %v193, %v190
  %v284 = vpack.c.b16 %v194, %v191
  %v285 = vpack.c.b16 %v195, %v192
  %v286 = vpack.c.b16 %v199, %v196
  %v287 = vpack.c.b16 %v200, %v197
  %v288 = vpack.c.b16 %v201, %v198
  %v289 = vpack.c.b16 %v205, %v202
  %v290 = vpack.c.b16 %v206, %v203
  %v291 = vpack.c.b16 %v207, %v204
  %v292 = vpack.c.b16 %v211, %v208
  %v293 = vpack.c.b16 %v212, %v209
  %v294 = vpack.c.b16 %v213, %v210
  %v295 = vpack.c.b16 %v217, %v214
  %v296 = vpack.c.b16 %v218, %v215
  %v297 = vpack.c.b16 %v219, %v216
  %v298 = vpack.c.b16 %v223, %v220
  %v299 = vpack.c.b16 %v224, %v221
  %v300 = vpack.c.b16 %v225, %v222
  %v301 = vpack.c.b16 %v229, %v226
  %v302 = vpack.c.b16 %v230, %v227
  %v303 = vpack.c.b16 %v231, %v228
  %v304 = vpack.c.b16 %v235, %v232
  %v305 = vpack.c.b16 %v236, %v233
  %v306 = vpack.c.b16 %v237, %v234
  %v307 = vpack.c.b16 %v241, %v238
  %v308 = vpack.c.b16 %v242, %v239
  %v309 = vpack.c.b16 %v243, %v240
  %v310 = vpack.c.b16 %v247, %v244
  %v311 = vpack.c.b16 %v248, %v245
  %v312 = vpack.c.b16 %v249, %v246
  %v313 = vpack.c.b16 %v253, %v250
  %v314 = vpack.c.b16 %v254, %v251
  %v315 = vpack.c.b16 %v255, %v252
  %v316 = vpack.c.b16 %v259, %v256
  %v317 = vpack.c.b16 %v260, %v257
  %v318 = vpack.c.b16 %v261, %v258
  %v319 = vpack.c.b16 %v265, %v262
  %v320 = vpack.c.b16 %v266, %v263
  %v321 = vpack.c.b16 %v267, %v264
  %v322 = vpack.c.b16 %v271, %v268
  %v323 = vpack.c.b16 %v272, %v269
  %v324 = vpack.c.b16 %v273, %v270
  %v325 = vpack.c.b16 %v277, %v274
  %v326 = vpack.c.b16 %v278, %v275
  %v327 = vpack.c.b16 %v279, %v276
  %376 = vmatprep.subr.bf16.mxu0 %v281
  %377 = vmatpush1.bf16.msra.mxu0 %v280
  %378 = vmatprep.subr.bf16.mxu0 %v284
  %379 = vmatpush1.bf16.msra.mxu0 %v283
  %380 = vmatprep.subr.bf16.mxu0 %v287
  %381 = vmatpush1.bf16.msra.mxu0 %v286
  %382 = vmatprep.subr.bf16.mxu0 %v290
  %383 = vmatpush1.bf16.msra.mxu0 %v289
  %384 = vmatprep.subr.bf16.mxu0 %v293
  %385 = vmatpush1.bf16.msra.mxu0 %v292
  %386 = vmatprep.subr.bf16.mxu0 %v296
  %387 = vmatpush1.bf16.msra.mxu0 %v295
  %388 = vmatprep.subr.bf16.mxu0 %v299
  %389 = vmatpush1.bf16.msra.mxu0 %v298
  %390 = vmatprep.subr.bf16.mxu0 %v302
  %391 = vmatpush1.bf16.msra.mxu0 %v301
  %392 = vmatprep.subr.bf16.mxu0 %v305
  %393 = vmatpush1.bf16.msra.mxu0 %v304
  %394 = vmatprep.subr.bf16.mxu0 %v308
  %395 = vmatpush1.bf16.msra.mxu0 %v307
  %396 = vmatprep.subr.bf16.mxu0 %v311
  %397 = vmatpush1.bf16.msra.mxu0 %v310
  %398 = vmatprep.subr.bf16.mxu0 %v314
  %399 = vmatpush1.bf16.msra.mxu0 %v313
  %400 = vmatprep.subr.bf16.mxu0 %v317
  %401 = vmatpush1.bf16.msra.mxu0 %v316
  %402 = vmatprep.subr.bf16.mxu0 %v320
  %403 = vmatpush1.bf16.msra.mxu0 %v319
  %404 = vmatprep.subr.bf16.mxu0 %v323
  %405 = vmatpush1.bf16.msra.mxu0 %v322
  %406 = vmatprep.subr.bf16.mxu0 %v326
  %407 = vmatpush1.bf16.msra.mxu0 %v325
  %408 = vmatprep.mubr.bf16.mxu0 %v113
  %409 = vmatmul.mubr.bf16.gmra.mrb[0].mxu0 %v112
  %v410 = vpop.f32.mrb[0].mxu0
  %v411 = vadd.f32 %v88, %v410
  %v412 = vpop.f32.mrb[0].mxu0
  %v413 = vadd.f32 %v92, %v412
  %v414 = vpop.f32.mrb[0].mxu0
  %v415 = vadd.f32 %v88, %v414
  %v416 = vpop.f32.mrb[0].mxu0
  %v417 = vadd.f32 %v92, %v416
  %418 = vmatprep.mubr.bf16.mxu0 %v115
  %419 = vmatmul.mubr.bf16.gmra.mrb[0].mxu0 %v114
  %v420 = vpop.f32.mrb[0].mxu0
  %v421 = vadd.f32 %v88, %v420
  %v422 = vpop.f32.mrb[0].mxu0
  %v423 = vadd.f32 %v92, %v422
  %v424 = vpop.f32.mrb[0].mxu0
  %v425 = vadd.f32 %v88, %v424
  %v426 = vpop.f32.mrb[0].mxu0
  %v427 = vadd.f32 %v92, %v426
  %428 = vdwg.mxu0
  %429 = vmatprep.subr.bf16.mxu0 0
  %430 = vmatpush1.bf16.msra.mxu0 %v282
  %431 = vmatprep.subr.bf16.mxu0 0
  %432 = vmatpush1.bf16.msra.mxu0 %v285
  %433 = vmatprep.subr.bf16.mxu0 0
  %434 = vmatpush1.bf16.msra.mxu0 %v288
  %435 = vmatprep.subr.bf16.mxu0 0
  %436 = vmatpush1.bf16.msra.mxu0 %v291
  %437 = vmatprep.subr.bf16.mxu0 0
  %438 = vmatpush1.bf16.msra.mxu0 %v294
  %439 = vmatprep.subr.bf16.mxu0 0
  %440 = vmatpush1.bf16.msra.mxu0 %v297
  %441 = vmatprep.subr.bf16.mxu0 0
  %442 = vmatpush1.bf16.msra.mxu0 %v300
  %443 = vmatprep.subr.bf16.mxu0 0
  %444 = vmatpush1.bf16.msra.mxu0 %v303
  %445 = vmatprep.subr.bf16.mxu0 0
  %446 = vmatpush1.bf16.msra.mxu0 %v306
  %447 = vmatprep.subr.bf16.mxu0 0
  %448 = vmatpush1.bf16.msra.mxu0 %v309
  %449 = vmatprep.subr.bf16.mxu0 0
  %450 = vmatpush1.bf16.msra.mxu0 %v312
  %451 = vmatprep.subr.bf16.mxu0 0
  %452 = vmatpush1.bf16.msra.mxu0 %v315
  %453 = vmatprep.subr.bf16.mxu0 0
  %454 = vmatpush1.bf16.msra.mxu0 %v318
  %455 = vmatprep.subr.bf16.mxu0 0
  %456 = vmatpush1.bf16.msra.mxu0 %v321
  %457 = vmatprep.subr.bf16.mxu0 0
  %458 = vmatpush1.bf16.msra.mxu0 %v324
  %459 = vmatprep.subr.bf16.mxu0 0
  %460 = vmatpush1.bf16.msra.mxu0 %v327
  %461 = vmatprep.mubr.bf16.mxu0 %v113
  %462 = vmatmul.mubr.bf16.gmra.mrb[0].mxu0 %v112
  %v463 = vpop.f32.mrb[0].mxu0
  %v464 = vadd.f32 %v96, %v463
  %v465 = vpop.f32.mrb[0].mxu0
  %v466 = vpop.f32.mrb[0].mxu0
  %v467 = vadd.f32 %v96, %v466
  %v468 = vpop.f32.mrb[0].mxu0
  %469 = vmatprep.mubr.bf16.mxu0 %v115
  %470 = vmatmul.mubr.bf16.gmra.mrb[0].mxu0 %v114
  %v471 = vpop.f32.mrb[0].mxu0
  %v472 = vadd.f32 %v96, %v471
  %v473 = vpop.f32.mrb[0].mxu0
  %v474 = vpop.f32.mrb[0].mxu0
  %v475 = vadd.f32 %v96, %v474
  %v476 = vpop.f32.mrb[0].mxu0
  %477 = vdwg.mxu0
  %v478 = vmax.f32 %v411, 0.0
  %v479 = vmax.f32 %v413, 0.0
  %v480 = vmax.f32 %v464, 0.0
  %v481 = vmax.f32 %v415, 0.0
  %v482 = vmax.f32 %v417, 0.0
  %v483 = vmax.f32 %v467, 0.0
  %v484 = vmax.f32 %v421, 0.0
  %v485 = vmax.f32 %v423, 0.0
  %v486 = vmax.f32 %v472, 0.0
  %v487 = vmax.f32 %v425, 0.0
  %v488 = vmax.f32 %v427, 0.0
  %v489 = vmax.f32 %v475, 0.0
  %490 = vst [vmem:[%s3] sm:$0xff] %v478
  %491 = vst [vmem:[%s3 + $0x8] sm:$0xff] %v479
  %vm492 = vcmask 261120
  %493 = vst.msk [vmem:[%s3 + $0x10] sm:$0xff] %vm492, %v480
  %494 = vst [vmem:[%s3 + $0x18] sm:$0xff] %v481
  %495 = vst [vmem:[%s3 + $0x20] sm:$0xff] %v482
  %496 = vst.msk [vmem:[%s3 + $0x28] sm:$0xff] %vm492, %v483
  %497 = vst [vmem:[%s3 + $0x30] sm:$0xff] %v484
  %498 = vst [vmem:[%s3 + $0x38] sm:$0xff] %v485
  %499 = vst.msk [vmem:[%s3 + $0x40] sm:$0xff] %vm492, %v486
  %500 = vst [vmem:[%s3 + $0x48] sm:$0xff] %v487
  %501 = vst [vmem:[%s3 + $0x50] sm:$0xff] %v488
  %502 = vst.msk [vmem:[%s3 + $0x58] sm:$0xff] %vm492, %v489
  // Predicated region
  $region14: #{googlenet_forward.26} parent=0 // pred_check
    _
  $region15: #{googlenet_forward.26} parent=0 // pred_check_branch
    %504 = sbr.rel (0) target = $region17
  $region16: #{googlenet_forward.26} parent=0 // pred_region
    _
  $region17: #{googlenet_forward.26} parent=0 // pred_fallthru
    _
  // Predicated region
  $region18: #{googlenet_forward.26} parent=0 // pred_check
    _
  $region19: #{googlenet_forward.26} parent=0 // pred_check_branch
    %506 = sbr.rel (0) target = $region21
  $region20: #{googlenet_forward.26} parent=0 // pred_region
    _
  $region21: #{googlenet_forward.26} parent=0 // pred_fallthru
    _

// kernel: googlenet_forward.27
$region0: #{googlenet_forward.27}
  #allocation0 [shape = 'u32[]', space=smem, size = 0x4, offset = 0x4, fixed_abs, tag = 'smem constant byte address 0x4 - core index']
  #allocation1 [shape = 'u32[144,128]{1,0:T(1,128)}', space=vmem, size = 0x12000, scoped, tag = 'internal scratch']
  %s0 = inlined_call_operand.vmem [shape: bf16[32,1152], index: 0, kind: input, shape index: {}]
  %s1 = inlined_call_operand.vmem [shape: bf16[1152,192], index: 1, kind: input, shape index: {}]
  %s2 = inlined_call_operand.vmem [shape: f32[1,192], index: 2, kind: input, shape index: {}]
  %s3 = inlined_call_operand.vmem [shape: f32[32,192], index: 3, kind: output, shape index: {}]
  %s4 = sld [smem:[#allocation0]]
  $region22: #{googlenet_forward.27} parent=0
    _
  %s6 = ssub.s32 1, %s4
  %s7 = scalar_select 0, %s6, %s4
  // Predicated region
  $region2: #{googlenet_forward.27} parent=0 // pred_check
    _
  $region3: #{googlenet_forward.27} parent=0 // pred_check_branch
    %9 = sbr.rel (0) target = $region5
  $region4: #{googlenet_forward.27} parent=0 // pred_region
    _
  $region5: #{googlenet_forward.27} parent=0 // pred_fallthru
    _
  // Predicated region
  $region6: #{googlenet_forward.27} parent=0 // pred_check
    _
  $region7: #{googlenet_forward.27} parent=0 // pred_check_branch
    %11 = sbr.rel (0) target = $region9
  $region8: #{googlenet_forward.27} parent=0 // pred_region
    _
  $region9: #{googlenet_forward.27} parent=0 // pred_fallthru
    _
  // Predicated region
  $region10: #{googlenet_forward.27} parent=0 // pred_check
    _
  $region11: #{googlenet_forward.27} parent=0 // pred_check_branch
    %13 = sbr.rel (0) target = $region13
  $region12: #{googlenet_forward.27} parent=0 // pred_region
    _
  $region13: #{googlenet_forward.27} parent=0 // pred_fallthru
    _
  %v15 = vld [vmem:[%s0] sm:$0xff]
  %v16 = vld [vmem:[%s0 + $0x8] sm:$0xff]
  %v17 = vld [vmem:[%s0 + $0x10] sm:$0xff]
  %v18 = vld [vmem:[%s0 + $0x18] sm:$0xff]
  %v19 = vld [vmem:[%s0 + $0x20] sm:$0xf]
  %v20 = vld [vmem:[%s0 + $0x24] sm:$0xff]
  %v21 = vld [vmem:[%s0 + $0x2c] sm:$0xff]
  %v22 = vld [vmem:[%s0 + $0x34] sm:$0xff]
  %v23 = vld [vmem:[%s0 + $0x3c] sm:$0xff]
  %v24 = vld [vmem:[%s0 + $0x44] sm:$0xf]
  %v25 = vld [vmem:[%s0 + $0x48] sm:$0xff]
  %v26 = vld [vmem:[%s0 + $0x50] sm:$0xff]
  %v27 = vld [vmem:[%s0 + $0x58] sm:$0xff]
  %v28 = vld [vmem:[%s0 + $0x60] sm:$0xff]
  %v29 = vld [vmem:[%s0 + $0x68] sm:$0xf]
  %v30 = vld [vmem:[%s0 + $0x6c] sm:$0xff]
  %v31 = vld [vmem:[%s0 + $0x74] sm:$0xff]
  %v32 = vld [vmem:[%s0 + $0x7c] sm:$0xff]
  %v33 = vld [vmem:[%s0 + $0x84] sm:$0xff]
  %v34 = vld [vmem:[%s0 + $0x8c] sm:$0xf]
  %v35 = vld [vmem:[%s1] sm:$0xff]
  %v36 = vld [vmem:[%s1 + $0x8] sm:$0xff]
  %v37 = vld [vmem:[%s1 + $0x10] sm:$0xff]
  %v38 = vld [vmem:[%s1 + $0x18] sm:$0xff]
  %v39 = vld [vmem:[%s1 + $0x20] sm:$0xff]
  %v40 = vld [vmem:[%s1 + $0x28] sm:$0xff]
  %v41 = vld [vmem:[%s1 + $0x30] sm:$0xff]
  %v42 = vld [vmem:[%s1 + $0x38] sm:$0xff]
  %v43 = vld [vmem:[%s1 + $0x40] sm:$0xff]
  %v44 = vld [vmem:[%s1 + $0x48] sm:$0xff]
  %v45 = vld [vmem:[%s1 + $0x50] sm:$0xff]
  %v46 = vld [vmem:[%s1 + $0x58] sm:$0xff]
  %v47 = vld [vmem:[%s1 + $0x60] sm:$0xff]
  %v48 = vld [vmem:[%s1 + $0x68] sm:$0xff]
  %v49 = vld [vmem:[%s1 + $0x70] sm:$0xff]
  %v50 = vld [vmem:[%s1 + $0x78] sm:$0xff]
  %v51 = vld [vmem:[%s1 + $0x80] sm:$0xff]
  %v52 = vld [vmem:[%s1 + $0x88] sm:$0xff]
  %v53 = vld [vmem:[%s1 + $0x90] sm:$0xff]
  %v54 = vld [vmem:[%s1 + $0x98] sm:$0xff]
  %v55 = vld [vmem:[%s1 + $0xa0] sm:$0xff]
  %v56 = vld [vmem:[%s1 + $0xa8] sm:$0xff]
  %v57 = vld [vmem:[%s1 + $0xb0] sm:$0xff]
  %v58 = vld [vmem:[%s1 + $0xb8] sm:$0xff]
  %v59 = vld [vmem:[%s1 + $0xc0] sm:$0xff]
  %v60 = vld [vmem:[%s1 + $0xc8] sm:$0xff]
  %v61 = vld [vmem:[%s1 + $0xd0] sm:$0xff]
  %v62 = vld [vmem:[%s1 + $0xd8] sm:$0xff]
  %v63 = vld [vmem:[%s1 + $0xe0] sm:$0xff]
  %v64 = vld [vmem:[%s1 + $0xe8] sm:$0xff]
  %v65 = vld [vmem:[%s1 + $0xf0] sm:$0xff]
  %v66 = vld [vmem:[%s1 + $0xf8] sm:$0xff]
  %v67 = vld [vmem:[%s1 + $0x100] sm:$0xff]
  %v68 = vld [vmem:[%s1 + $0x108] sm:$0xff]
  %v69 = vld [vmem:[%s1 + $0x110] sm:$0xff]
  %v70 = vld [vmem:[%s1 + $0x118] sm:$0xff]
  %v71 = vld [vmem:[%s1 + $0x120] sm:$0xff]
  %v72 = vld [vmem:[%s1 + $0x128] sm:$0xff]
  %v73 = vld [vmem:[%s1 + $0x130] sm:$0xff]
  %v74 = vld [vmem:[%s1 + $0x138] sm:$0xff]
  %v75 = vld [vmem:[%s1 + $0x140] sm:$0xff]
  %v76 = vld [vmem:[%s1 + $0x148] sm:$0xff]
  %v77 = vld [vmem:[%s1 + $0x150] sm:$0xff]
  %v78 = vld [vmem:[%s1 + $0x158] sm:$0xff]
  %v79 = vld [vmem:[%s1 + $0x160] sm:$0xff]
  %v80 = vld [vmem:[%s1 + $0x168] sm:$0xff]
  %v81 = vld [vmem:[%s1 + $0x170] sm:$0xff]
  %v82 = vld [vmem:[%s1 + $0x178] sm:$0xff]
  %v83 = vld [vmem:[%s1 + $0x180] sm:$0xff]
  %v84 = vld [vmem:[%s1 + $0x188] sm:$0xff]
  %v85 = vld [vmem:[%s1 + $0x190] sm:$0xff]
  %v86 = vld [vmem:[%s1 + $0x198] sm:$0xff]
  %v87 = vld [vmem:[%s1 + $0x1a0] sm:$0xff]
  %v88 = vld [vmem:[%s1 + $0x1a8] sm:$0xff]
  %v89 = vld [vmem:[%s1 + $0x1b0] sm:$0xff]
  %v90 = vld [vmem:[%s1 + $0x1b8] sm:$0xff]
  %v91 = vld [vmem:[%s1 + $0x1c0] sm:$0xff]
  %v92 = vld [vmem:[%s1 + $0x1c8] sm:$0xff]
  %v93 = vld [vmem:[%s1 + $0x1d0] sm:$0xff]
  %v94 = vld [vmem:[%s1 + $0x1d8] sm:$0xff]
  %v95 = vld [vmem:[%s1 + $0x1e0] sm:$0xff]
  %v96 = vld [vmem:[%s1 + $0x1e8] sm:$0xff]
  %v97 = vld [vmem:[%s1 + $0x1f0] sm:$0xff]
  %v98 = vld [vmem:[%s1 + $0x1f8] sm:$0xff]
  %v99 = vld [vmem:[%s1 + $0x200] sm:$0xff]
  %v100 = vld [vmem:[%s1 + $0x208] sm:$0xff]
  %v101 = vld [vmem:[%s1 + $0x210] sm:$0xff]
  %v102 = vld [vmem:[%s1 + $0x218] sm:$0xff]
  %v103 = vld [vmem:[%s1 + $0x220] sm:$0xff]
  %v104 = vld [vmem:[%s1 + $0x228] sm:$0xff]
  %v105 = vld [vmem:[%s1 + $0x230] sm:$0xff]
  %v106 = vld [vmem:[%s1 + $0x238] sm:$0xff]
  %v107 = vld [vmem:[%s1 + $0x240] sm:$0xff]
  %v108 = vld [vmem:[%s1 + $0x248] sm:$0xff]
  %v109 = vld [vmem:[%s1 + $0x250] sm:$0xff]
  %v110 = vld [vmem:[%s1 + $0x258] sm:$0xff]
  %v111 = vld [vmem:[%s1 + $0x260] sm:$0xff]
  %v112 = vld [vmem:[%s1 + $0x268] sm:$0xff]
  %v113 = vld [vmem:[%s1 + $0x270] sm:$0xff]
  %v114 = vld [vmem:[%s1 + $0x278] sm:$0xff]
  %v115 = vld [vmem:[%s1 + $0x280] sm:$0xff]
  %v116 = vld [vmem:[%s1 + $0x288] sm:$0xff]
  %v117 = vld [vmem:[%s1 + $0x290] sm:$0xff]
  %v118 = vld [vmem:[%s1 + $0x298] sm:$0xff]
  %v119 = vld [vmem:[%s1 + $0x2a0] sm:$0xff]
  %v120 = vld [vmem:[%s1 + $0x2a8] sm:$0xff]
  %v121 = vld [vmem:[%s1 + $0x2b0] sm:$0xff]
  %v122 = vld [vmem:[%s1 + $0x2b8] sm:$0xff]
  %v123 = vld [vmem:[%s1 + $0x2c0] sm:$0xff]
  %v124 = vld [vmem:[%s1 + $0x2c8] sm:$0xff]
  %v125 = vld [vmem:[%s1 + $0x2d0] sm:$0xff]
  %v126 = vld [vmem:[%s1 + $0x2d8] sm:$0xff]
  %v127 = vld [vmem:[%s1 + $0x2e0] sm:$0xff]
  %v128 = vld [vmem:[%s1 + $0x2e8] sm:$0xff]
  %v129 = vld [vmem:[%s1 + $0x2f0] sm:$0xff]
  %v130 = vld [vmem:[%s1 + $0x2f8] sm:$0xff]
  %v131 = vld [vmem:[%s1 + $0x300] sm:$0xff]
  %v132 = vld [vmem:[%s1 + $0x308] sm:$0xff]
  %v133 = vld [vmem:[%s1 + $0x310] sm:$0xff]
  %v134 = vld [vmem:[%s1 + $0x318] sm:$0xff]
  %v135 = vld [vmem:[%s1 + $0x320] sm:$0xff]
  %v136 = vld [vmem:[%s1 + $0x328] sm:$0xff]
  %v137 = vld [vmem:[%s1 + $0x330] sm:$0xff]
  %v138 = vld [vmem:[%s1 + $0x338] sm:$0xff]
  %v139 = vld [vmem:[%s1 + $0x340] sm:$0xff]
  %v140 = vld [vmem:[%s1 + $0x348] sm:$0xff]
  %v141 = vld [vmem:[%s1 + $0x350] sm:$0xff]
  %v142 = vld [vmem:[%s1 + $0x358] sm:$0xff]
  %v143 = vld [vmem:[%s1 + $0x360] sm:$0xff]
  %v144 = vld [vmem:[%s1 + $0x368] sm:$0xff]
  %v145 = vld [vmem:[%s1 + $0x370] sm:$0xff]
  %v146 = vld [vmem:[%s1 + $0x378] sm:$0xff]
  %v147 = vld [vmem:[%s1 + $0x380] sm:$0xff]
  %v148 = vld [vmem:[%s1 + $0x388] sm:$0xff]
  %v149 = vld [vmem:[%s1 + $0x390] sm:$0xff]
  %v150 = vld [vmem:[%s1 + $0x398] sm:$0xff]
  %v151 = vld [vmem:[%s1 + $0x3a0] sm:$0xff]
  %v152 = vld [vmem:[%s1 + $0x3a8] sm:$0xff]
  %v153 = vld [vmem:[%s1 + $0x3b0] sm:$0xff]
  %v154 = vld [vmem:[%s1 + $0x3b8] sm:$0xff]
  %v155 = vld [vmem:[%s1 + $0x3c0] sm:$0xff]
  %v156 = vld [vmem:[%s1 + $0x3c8] sm:$0xff]
  %v157 = vld [vmem:[%s1 + $0x3d0] sm:$0xff]
  %v158 = vld [vmem:[%s1 + $0x3d8] sm:$0xff]
  %v159 = vld [vmem:[%s1 + $0x3e0] sm:$0xff]
  %v160 = vld [vmem:[%s1 + $0x3e8] sm:$0xff]
  %v161 = vld [vmem:[%s1 + $0x3f0] sm:$0xff]
  %v162 = vld [vmem:[%s1 + $0x3f8] sm:$0xff]
  %v163 = vld [vmem:[%s1 + $0x400] sm:$0xff]
  %v164 = vld [vmem:[%s1 + $0x408] sm:$0xff]
  %v165 = vld [vmem:[%s1 + $0x410] sm:$0xff]
  %v166 = vld [vmem:[%s1 + $0x418] sm:$0xff]
  %v167 = vld [vmem:[%s1 + $0x420] sm:$0xff]
  %v168 = vld [vmem:[%s1 + $0x428] sm:$0xff]
  %v169 = vld [vmem:[%s1 + $0x430] sm:$0xff]
  %v170 = vld [vmem:[%s1 + $0x438] sm:$0xff]
  %v171 = vld [vmem:[%s1 + $0x440] sm:$0xff]
  %v172 = vld [vmem:[%s1 + $0x448] sm:$0xff]
  %v173 = vld [vmem:[%s1 + $0x450] sm:$0xff]
  %v174 = vld [vmem:[%s1 + $0x458] sm:$0xff]
  %v175 = vld [vmem:[%s1 + $0x460] sm:$0xff]
  %v176 = vld [vmem:[%s1 + $0x468] sm:$0xff]
  %v177 = vld [vmem:[%s1 + $0x470] sm:$0xff]
  %v178 = vld [vmem:[%s1 + $0x478] sm:$0xff]
  %v179 = vld [vmem:[%s2] sm:$0x3]
  %v181 = vlaneseq
  %v182 = vshrl.u32 %v181, 7
  %v183 = vsub.s32 0, %v182
  %v184 = vrot.slane %v179, %v183
  %v185 = vlaneseq
  %v186 = vshrl.u32 %v185, 7
  %v187 = vsub.s32 1, %v186
  %v188 = vrot.slane %v179, %v187
  %v211 = vunpack.c.l.b16 %v15
  %v212 = vunpack.c.h.b16 %v15
  %v213 = vunpack.c.l.b16 %v16
  %v214 = vunpack.c.h.b16 %v16
  %v215 = vunpack.c.l.b16 %v17
  %v216 = vunpack.c.h.b16 %v17
  %v217 = vunpack.c.l.b16 %v18
  %v218 = vunpack.c.h.b16 %v18
  %v219 = vunpack.c.l.b16 %v19
  %v220 = vunpack.c.l.b16 %v20
  %v221 = vunpack.c.h.b16 %v20
  %v222 = vunpack.c.l.b16 %v21
  %v223 = vunpack.c.h.b16 %v21
  %v224 = vunpack.c.l.b16 %v22
  %v225 = vunpack.c.h.b16 %v22
  %v226 = vunpack.c.l.b16 %v23
  %v227 = vunpack.c.h.b16 %v23
  %v228 = vunpack.c.l.b16 %v24
  %v229 = vunpack.c.l.b16 %v25
  %v230 = vunpack.c.h.b16 %v25
  %v231 = vunpack.c.l.b16 %v26
  %v232 = vunpack.c.h.b16 %v26
  %v233 = vunpack.c.l.b16 %v27
  %v234 = vunpack.c.h.b16 %v27
  %v235 = vunpack.c.l.b16 %v28
  %v236 = vunpack.c.h.b16 %v28
  %v237 = vunpack.c.l.b16 %v29
  %v238 = vunpack.c.l.b16 %v30
  %v239 = vunpack.c.h.b16 %v30
  %v240 = vunpack.c.l.b16 %v31
  %v241 = vunpack.c.h.b16 %v31
  %v242 = vunpack.c.l.b16 %v32
  %v243 = vunpack.c.h.b16 %v32
  %v244 = vunpack.c.l.b16 %v33
  %v245 = vunpack.c.h.b16 %v33
  %v246 = vunpack.c.l.b16 %v34
  %v247 = vpack.c.b16 %v220, %v211
  %v248 = vpack.c.b16 %v221, %v212
  %v249 = vpack.c.b16 %v222, %v213
  %v250 = vpack.c.b16 %v223, %v214
  %v251 = vpack.c.b16 %v224, %v215
  %v252 = vpack.c.b16 %v225, %v216
  %v253 = vpack.c.b16 %v226, %v217
  %v254 = vpack.c.b16 %v227, %v218
  %v255 = vpack.c.b16 %v228, %v219
  %v256 = vpack.c.b16 %v238, %v229
  %v257 = vpack.c.b16 %v239, %v230
  %v258 = vpack.c.b16 %v240, %v231
  %v259 = vpack.c.b16 %v241, %v232
  %v260 = vpack.c.b16 %v242, %v233
  %v261 = vpack.c.b16 %v243, %v234
  %v262 = vpack.c.b16 %v244, %v235
  %v263 = vpack.c.b16 %v245, %v236
  %v264 = vpack.c.b16 %v246, %v237
  %v427 = vunpack.c.l.b16 %v35
  %v428 = vunpack.c.h.b16 %v35
  %v429 = vunpack.c.l.b16 %v36
  %v430 = vunpack.c.h.b16 %v36
  %v431 = vunpack.c.l.b16 %v37
  %v432 = vunpack.c.h.b16 %v37
  %v433 = vunpack.c.l.b16 %v38
  %v434 = vunpack.c.h.b16 %v38
  %v435 = vunpack.c.l.b16 %v39
  %v436 = vunpack.c.h.b16 %v39
  %v437 = vunpack.c.l.b16 %v40
  %v438 = vunpack.c.h.b16 %v40
  %v439 = vunpack.c.l.b16 %v41
  %v440 = vunpack.c.h.b16 %v41
  %v441 = vunpack.c.l.b16 %v42
  %v442 = vunpack.c.h.b16 %v42
  %v443 = vunpack.c.l.b16 %v43
  %v444 = vunpack.c.h.b16 %v43
  %v445 = vunpack.c.l.b16 %v44
  %v446 = vunpack.c.h.b16 %v44
  %v447 = vunpack.c.l.b16 %v45
  %v448 = vunpack.c.h.b16 %v45
  %v449 = vunpack.c.l.b16 %v46
  %v450 = vunpack.c.h.b16 %v46
  %v451 = vunpack.c.l.b16 %v47
  %v452 = vunpack.c.h.b16 %v47
  %v453 = vunpack.c.l.b16 %v48
  %v454 = vunpack.c.h.b16 %v48
  %v455 = vunpack.c.l.b16 %v49
  %v456 = vunpack.c.h.b16 %v49
  %v457 = vunpack.c.l.b16 %v50
  %v458 = vunpack.c.h.b16 %v50
  %v459 = vunpack.c.l.b16 %v51
  %v460 = vunpack.c.h.b16 %v51
  %v461 = vunpack.c.l.b16 %v52
  %v462 = vunpack.c.h.b16 %v52
  %v463 = vunpack.c.l.b16 %v53
  %v464 = vunpack.c.h.b16 %v53
  %v465 = vunpack.c.l.b16 %v54
  %v466 = vunpack.c.h.b16 %v54
  %v467 = vunpack.c.l.b16 %v55
  %v468 = vunpack.c.h.b16 %v55
  %v469 = vunpack.c.l.b16 %v56
  %v470 = vunpack.c.h.b16 %v56
  %v471 = vunpack.c.l.b16 %v57
  %v472 = vunpack.c.h.b16 %v57
  %v473 = vunpack.c.l.b16 %v58
  %v474 = vunpack.c.h.b16 %v58
  %v475 = vunpack.c.l.b16 %v59
  %v476 = vunpack.c.h.b16 %v59
  %v477 = vunpack.c.l.b16 %v60
  %v478 = vunpack.c.h.b16 %v60
  %v479 = vunpack.c.l.b16 %v61
  %v480 = vunpack.c.h.b16 %v61
  %v481 = vunpack.c.l.b16 %v62
  %v482 = vunpack.c.h.b16 %v62
  %v483 = vunpack.c.l.b16 %v63
  %v484 = vunpack.c.h.b16 %v63
  %v485 = vunpack.c.l.b16 %v64
  %v486 = vunpack.c.h.b16 %v64
  %v487 = vunpack.c.l.b16 %v65
  %v488 = vunpack.c.h.b16 %v65
  %v489 = vunpack.c.l.b16 %v66
  %v490 = vunpack.c.h.b16 %v66
  %v491 = vunpack.c.l.b16 %v67
  %v492 = vunpack.c.h.b16 %v67
  %v493 = vunpack.c.l.b16 %v68
  %v494 = vunpack.c.h.b16 %v68
  %v495 = vunpack.c.l.b16 %v69
  %v496 = vunpack.c.h.b16 %v69
  %v497 = vunpack.c.l.b16 %v70
  %v498 = vunpack.c.h.b16 %v70
  %v499 = vunpack.c.l.b16 %v71
  %v500 = vunpack.c.h.b16 %v71
  %v501 = vunpack.c.l.b16 %v72
  %v502 = vunpack.c.h.b16 %v72
  %v503 = vunpack.c.l.b16 %v73
  %v504 = vunpack.c.h.b16 %v73
  %v505 = vunpack.c.l.b16 %v74
  %v506 = vunpack.c.h.b16 %v74
  %v507 = vunpack.c.l.b16 %v75
  %v508 = vunpack.c.h.b16 %v75
  %v509 = vunpack.c.l.b16 %v76
  %v510 = vunpack.c.h.b16 %v76
  %v511 = vunpack.c.l.b16 %v77
  %v512 = vunpack.c.h.b16 %v77
  %v513 = vunpack.c.l.b16 %v78
  %v514 = vunpack.c.h.b16 %v78
  %v515 = vunpack.c.l.b16 %v79
  %v516 = vunpack.c.h.b16 %v79
  %v517 = vunpack.c.l.b16 %v80
  %v518 = vunpack.c.h.b16 %v80
  %v519 = vunpack.c.l.b16 %v81
  %v520 = vunpack.c.h.b16 %v81
  %v521 = vunpack.c.l.b16 %v82
  %v522 = vunpack.c.h.b16 %v82
  %v523 = vunpack.c.l.b16 %v83
  %v524 = vunpack.c.h.b16 %v83
  %v525 = vunpack.c.l.b16 %v84
  %v526 = vunpack.c.h.b16 %v84
  %v527 = vunpack.c.l.b16 %v85
  %v528 = vunpack.c.h.b16 %v85
  %v529 = vunpack.c.l.b16 %v86
  %v530 = vunpack.c.h.b16 %v86
  %v531 = vunpack.c.l.b16 %v87
  %v532 = vunpack.c.h.b16 %v87
  %v533 = vunpack.c.l.b16 %v88
  %v534 = vunpack.c.h.b16 %v88
  %v535 = vunpack.c.l.b16 %v89
  %v536 = vunpack.c.h.b16 %v89
  %v537 = vunpack.c.l.b16 %v90
  %v538 = vunpack.c.h.b16 %v90
  %v539 = vunpack.c.l.b16 %v91
  %v540 = vunpack.c.h.b16 %v91
  %v541 = vunpack.c.l.b16 %v92
  %v542 = vunpack.c.h.b16 %v92
  %v543 = vunpack.c.l.b16 %v93
  %v544 = vunpack.c.h.b16 %v93
  %v545 = vunpack.c.l.b16 %v94
  %v546 = vunpack.c.h.b16 %v94
  %v547 = vunpack.c.l.b16 %v95
  %v548 = vunpack.c.h.b16 %v95
  %v549 = vunpack.c.l.b16 %v96
  %v550 = vunpack.c.h.b16 %v96
  %v551 = vunpack.c.l.b16 %v97
  %v552 = vunpack.c.h.b16 %v97
  %v553 = vunpack.c.l.b16 %v98
  %v554 = vunpack.c.h.b16 %v98
  %v555 = vunpack.c.l.b16 %v99
  %v556 = vunpack.c.h.b16 %v99
  %v557 = vunpack.c.l.b16 %v100
  %v558 = vunpack.c.h.b16 %v100
  %v559 = vunpack.c.l.b16 %v101
  %v560 = vunpack.c.h.b16 %v101
  %v561 = vunpack.c.l.b16 %v102
  %v562 = vunpack.c.h.b16 %v102
  %v563 = vunpack.c.l.b16 %v103
  %v564 = vunpack.c.h.b16 %v103
  %v565 = vunpack.c.l.b16 %v104
  %v566 = vunpack.c.h.b16 %v104
  %v567 = vunpack.c.l.b16 %v105
  %v568 = vunpack.c.h.b16 %v105
  %v569 = vunpack.c.l.b16 %v106
  %v570 = vunpack.c.h.b16 %v106
  %v571 = vunpack.c.l.b16 %v107
  %v572 = vunpack.c.h.b16 %v107
  %v573 = vunpack.c.l.b16 %v108
  %v574 = vunpack.c.h.b16 %v108
  %v575 = vunpack.c.l.b16 %v109
  %v576 = vunpack.c.h.b16 %v109
  %v577 = vunpack.c.l.b16 %v110
  %v578 = vunpack.c.h.b16 %v110
  %v579 = vunpack.c.l.b16 %v111
  %v580 = vunpack.c.h.b16 %v111
  %v581 = vunpack.c.l.b16 %v112
  %v582 = vunpack.c.h.b16 %v112
  %v583 = vunpack.c.l.b16 %v113
  %v584 = vunpack.c.h.b16 %v113
  %v585 = vunpack.c.l.b16 %v114
  %v586 = vunpack.c.h.b16 %v114
  %v587 = vunpack.c.l.b16 %v115
  %v588 = vunpack.c.h.b16 %v115
  %v589 = vunpack.c.l.b16 %v116
  %v590 = vunpack.c.h.b16 %v116
  %v591 = vunpack.c.l.b16 %v117
  %v592 = vunpack.c.h.b16 %v117
  %v593 = vunpack.c.l.b16 %v118
  %v594 = vunpack.c.h.b16 %v118
  %v595 = vunpack.c.l.b16 %v119
  %v596 = vunpack.c.h.b16 %v119
  %v597 = vunpack.c.l.b16 %v120
  %v598 = vunpack.c.h.b16 %v120
  %v599 = vunpack.c.l.b16 %v121
  %v600 = vunpack.c.h.b16 %v121
  %v601 = vunpack.c.l.b16 %v122
  %v602 = vunpack.c.h.b16 %v122
  %v603 = vunpack.c.l.b16 %v123
  %v604 = vunpack.c.h.b16 %v123
  %v605 = vunpack.c.l.b16 %v124
  %v606 = vunpack.c.h.b16 %v124
  %v607 = vunpack.c.l.b16 %v125
  %v608 = vunpack.c.h.b16 %v125
  %v609 = vunpack.c.l.b16 %v126
  %v610 = vunpack.c.h.b16 %v126
  %v611 = vunpack.c.l.b16 %v127
  %v612 = vunpack.c.h.b16 %v127
  %v613 = vunpack.c.l.b16 %v128
  %v614 = vunpack.c.h.b16 %v128
  %v615 = vunpack.c.l.b16 %v129
  %v616 = vunpack.c.h.b16 %v129
  %v617 = vunpack.c.l.b16 %v130
  %v618 = vunpack.c.h.b16 %v130
  %v619 = vunpack.c.l.b16 %v131
  %v620 = vunpack.c.h.b16 %v131
  %v621 = vunpack.c.l.b16 %v132
  %v622 = vunpack.c.h.b16 %v132
  %v623 = vunpack.c.l.b16 %v133
  %v624 = vunpack.c.h.b16 %v133
  %v625 = vunpack.c.l.b16 %v134
  %v626 = vunpack.c.h.b16 %v134
  %v627 = vunpack.c.l.b16 %v135
  %v628 = vunpack.c.h.b16 %v135
  %v629 = vunpack.c.l.b16 %v136
  %v630 = vunpack.c.h.b16 %v136
  %v631 = vunpack.c.l.b16 %v137
  %v632 = vunpack.c.h.b16 %v137
  %v633 = vunpack.c.l.b16 %v138
  %v634 = vunpack.c.h.b16 %v138
  %v635 = vunpack.c.l.b16 %v139
  %v636 = vunpack.c.h.b16 %v139
  %v637 = vunpack.c.l.b16 %v140
  %v638 = vunpack.c.h.b16 %v140
  %v639 = vunpack.c.l.b16 %v141
  %v640 = vunpack.c.h.b16 %v141
  %v641 = vunpack.c.l.b16 %v142
  %v642 = vunpack.c.h.b16 %v142
  %v643 = vunpack.c.l.b16 %v143
  %v644 = vunpack.c.h.b16 %v143
  %v645 = vunpack.c.l.b16 %v144
  %v646 = vunpack.c.h.b16 %v144
  %v647 = vunpack.c.l.b16 %v145
  %v648 = vunpack.c.h.b16 %v145
  %v649 = vunpack.c.l.b16 %v146
  %v650 = vunpack.c.h.b16 %v146
  %v651 = vunpack.c.l.b16 %v147
  %v652 = vunpack.c.h.b16 %v147
  %v653 = vunpack.c.l.b16 %v148
  %v654 = vunpack.c.h.b16 %v148
  %v655 = vunpack.c.l.b16 %v149
  %v656 = vunpack.c.h.b16 %v149
  %v657 = vunpack.c.l.b16 %v150
  %v658 = vunpack.c.h.b16 %v150
  %v659 = vunpack.c.l.b16 %v151
  %v660 = vunpack.c.h.b16 %v151
  %v661 = vunpack.c.l.b16 %v152
  %v662 = vunpack.c.h.b16 %v152
  %v663 = vunpack.c.l.b16 %v153
  %v664 = vunpack.c.h.b16 %v153
  %v665 = vunpack.c.l.b16 %v154
  %v666 = vunpack.c.h.b16 %v154
  %v667 = vunpack.c.l.b16 %v155
  %v668 = vunpack.c.h.b16 %v155
  %v669 = vunpack.c.l.b16 %v156
  %v670 = vunpack.c.h.b16 %v156
  %v671 = vunpack.c.l.b16 %v157
  %v672 = vunpack.c.h.b16 %v157
  %v673 = vunpack.c.l.b16 %v158
  %v674 = vunpack.c.h.b16 %v158
  %v675 = vunpack.c.l.b16 %v159
  %v676 = vunpack.c.h.b16 %v159
  %v677 = vunpack.c.l.b16 %v160
  %v678 = vunpack.c.h.b16 %v160
  %v679 = vunpack.c.l.b16 %v161
  %v680 = vunpack.c.h.b16 %v161
  %v681 = vunpack.c.l.b16 %v162
  %v682 = vunpack.c.h.b16 %v162
  %v683 = vunpack.c.l.b16 %v163
  %v684 = vunpack.c.h.b16 %v163
  %v685 = vunpack.c.l.b16 %v164
  %v686 = vunpack.c.h.b16 %v164
  %v687 = vunpack.c.l.b16 %v165
  %v688 = vunpack.c.h.b16 %v165
  %v689 = vunpack.c.l.b16 %v166
  %v690 = vunpack.c.h.b16 %v166
  %v691 = vunpack.c.l.b16 %v167
  %v692 = vunpack.c.h.b16 %v167
  %v693 = vunpack.c.l.b16 %v168
  %v694 = vunpack.c.h.b16 %v168
  %v695 = vunpack.c.l.b16 %v169
  %v696 = vunpack.c.h.b16 %v169
  %v697 = vunpack.c.l.b16 %v170
  %v698 = vunpack.c.h.b16 %v170
  %v699 = vunpack.c.l.b16 %v171
  %v700 = vunpack.c.h.b16 %v171
  %v701 = vunpack.c.l.b16 %v172
  %v702 = vunpack.c.h.b16 %v172
  %v703 = vunpack.c.l.b16 %v173
  %v704 = vunpack.c.h.b16 %v173
  %v705 = vunpack.c.l.b16 %v174
  %v706 = vunpack.c.h.b16 %v174
  %v707 = vunpack.c.l.b16 %v175
  %v708 = vunpack.c.h.b16 %v175
  %v709 = vunpack.c.l.b16 %v176
  %v710 = vunpack.c.h.b16 %v176
  %v711 = vunpack.c.l.b16 %v177
  %v712 = vunpack.c.h.b16 %v177
  %v713 = vunpack.c.l.b16 %v178
  %v714 = vunpack.c.h.b16 %v178
  %v715 = vpack.c.b16 %v429, %v427
  %v716 = vpack.c.b16 %v430, %v428
  %v717 = vpack.c.b16 %v433, %v431
  %v718 = vpack.c.b16 %v434, %v432
  %v719 = vpack.c.b16 %v437, %v435
  %v720 = vpack.c.b16 %v438, %v436
  %v721 = vpack.c.b16 %v441, %v439
  %v722 = vpack.c.b16 %v442, %v440
  %v723 = vpack.c.b16 %v445, %v443
  %v724 = vpack.c.b16 %v446, %v444
  %v725 = vpack.c.b16 %v449, %v447
  %v726 = vpack.c.b16 %v450, %v448
  %v727 = vpack.c.b16 %v453, %v451
  %v728 = vpack.c.b16 %v454, %v452
  %v729 = vpack.c.b16 %v457, %v455
  %v730 = vpack.c.b16 %v458, %v456
  %v731 = vpack.c.b16 %v461, %v459
  %v732 = vpack.c.b16 %v462, %v460
  %v733 = vpack.c.b16 %v465, %v463
  %v734 = vpack.c.b16 %v466, %v464
  %v735 = vpack.c.b16 %v469, %v467
  %v736 = vpack.c.b16 %v470, %v468
  %v737 = vpack.c.b16 %v473, %v471
  %v738 = vpack.c.b16 %v474, %v472
  %v739 = vpack.c.b16 %v477, %v475
  %v740 = vpack.c.b16 %v478, %v476
  %v741 = vpack.c.b16 %v481, %v479
  %v742 = vpack.c.b16 %v482, %v480
  %v743 = vpack.c.b16 %v485, %v483
  %v744 = vpack.c.b16 %v486, %v484
  %v745 = vpack.c.b16 %v489, %v487
  %v746 = vpack.c.b16 %v490, %v488
  %v747 = vpack.c.b16 %v493, %v491
  %v748 = vpack.c.b16 %v494, %v492
  %v749 = vpack.c.b16 %v497, %v495
  %v750 = vpack.c.b16 %v498, %v496
  %v751 = vpack.c.b16 %v501, %v499
  %v752 = vpack.c.b16 %v502, %v500
  %v753 = vpack.c.b16 %v505, %v503
  %v754 = vpack.c.b16 %v506, %v504
  %v755 = vpack.c.b16 %v509, %v507
  %v756 = vpack.c.b16 %v510, %v508
  %v757 = vpack.c.b16 %v513, %v511
  %v758 = vpack.c.b16 %v514, %v512
  %v759 = vpack.c.b16 %v517, %v515
  %v760 = vpack.c.b16 %v518, %v516
  %v761 = vpack.c.b16 %v521, %v519
  %v762 = vpack.c.b16 %v522, %v520
  %v763 = vpack.c.b16 %v525, %v523
  %v764 = vpack.c.b16 %v526, %v524
  %v765 = vpack.c.b16 %v529, %v527
  %v766 = vpack.c.b16 %v530, %v528
  %v767 = vpack.c.b16 %v533, %v531
  %v768 = vpack.c.b16 %v534, %v532
  %v769 = vpack.c.b16 %v537, %v535
  %v770 = vpack.c.b16 %v538, %v536
  %v771 = vpack.c.b16 %v541, %v539
  %v772 = vpack.c.b16 %v542, %v540
  %v773 = vpack.c.b16 %v545, %v543
  %v774 = vpack.c.b16 %v546, %v544
  %v775 = vpack.c.b16 %v549, %v547
  %v776 = vpack.c.b16 %v550, %v548
  %v777 = vpack.c.b16 %v553, %v551
  %v778 = vpack.c.b16 %v554, %v552
  %v779 = vpack.c.b16 %v557, %v555
  %v780 = vpack.c.b16 %v558, %v556
  %v781 = vpack.c.b16 %v561, %v559
  %v782 = vpack.c.b16 %v562, %v560
  %v783 = vpack.c.b16 %v565, %v563
  %v784 = vpack.c.b16 %v566, %v564
  %v785 = vpack.c.b16 %v569, %v567
  %v786 = vpack.c.b16 %v570, %v568
  %v787 = vpack.c.b16 %v573, %v571
  %v788 = vpack.c.b16 %v574, %v572
  %v789 = vpack.c.b16 %v577, %v575
  %v790 = vpack.c.b16 %v578, %v576
  %v791 = vpack.c.b16 %v581, %v579
  %v792 = vpack.c.b16 %v582, %v580
  %v793 = vpack.c.b16 %v585, %v583
  %v794 = vpack.c.b16 %v586, %v584
  %v795 = vpack.c.b16 %v589, %v587
  %v796 = vpack.c.b16 %v590, %v588
  %v797 = vpack.c.b16 %v593, %v591
  %v798 = vpack.c.b16 %v594, %v592
  %v799 = vpack.c.b16 %v597, %v595
  %v800 = vpack.c.b16 %v598, %v596
  %v801 = vpack.c.b16 %v601, %v599
  %v802 = vpack.c.b16 %v602, %v600
  %v803 = vpack.c.b16 %v605, %v603
  %v804 = vpack.c.b16 %v606, %v604
  %v805 = vpack.c.b16 %v609, %v607
  %v806 = vpack.c.b16 %v610, %v608
  %v807 = vpack.c.b16 %v613, %v611
  %v808 = vpack.c.b16 %v614, %v612
  %v809 = vpack.c.b16 %v617, %v615
  %v810 = vpack.c.b16 %v618, %v616
  %v811 = vpack.c.b16 %v621, %v619
  %v812 = vpack.c.b16 %v622, %v620
  %v813 = vpack.c.b16 %v625, %v623
  %v814 = vpack.c.b16 %v626, %v624
  %v815 = vpack.c.b16 %v629, %v627
  %v816 = vpack.c.b16 %v630, %v628
  %v817 = vpack.c.b16 %v633, %v631
  %v818 = vpack.c.b16 %v634, %v632
  %v819 = vpack.c.b16 %v637, %v635
  %v820 = vpack.c.b16 %v638, %v636
  %v821 = vpack.c.b16 %v641, %v639
  %v822 = vpack.c.b16 %v642, %v640
  %v823 = vpack.c.b16 %v645, %v643
  %v824 = vpack.c.b16 %v646, %v644
  %v825 = vpack.c.b16 %v649, %v647
  %v826 = vpack.c.b16 %v650, %v648
  %v827 = vpack.c.b16 %v653, %v651
  %v828 = vpack.c.b16 %v654, %v652
  %v829 = vpack.c.b16 %v657, %v655
  %v830 = vpack.c.b16 %v658, %v656
  %v831 = vpack.c.b16 %v661, %v659
  %v832 = vpack.c.b16 %v662, %v660
  %v833 = vpack.c.b16 %v665, %v663
  %v834 = vpack.c.b16 %v666, %v664
  %v835 = vpack.c.b16 %v669, %v667
  %v836 = vpack.c.b16 %v670, %v668
  %v837 = vpack.c.b16 %v673, %v671
  %v838 = vpack.c.b16 %v674, %v672
  %v839 = vpack.c.b16 %v677, %v675
  %v840 = vpack.c.b16 %v678, %v676
  %v841 = vpack.c.b16 %v681, %v679
  %v842 = vpack.c.b16 %v682, %v680
  %v843 = vpack.c.b16 %v685, %v683
  %v844 = vpack.c.b16 %v686, %v684
  %v845 = vpack.c.b16 %v689, %v687
  %v846 = vpack.c.b16 %v690, %v688
  %v847 = vpack.c.b16 %v693, %v691
  %v848 = vpack.c.b16 %v694, %v692
  %v849 = vpack.c.b16 %v697, %v695
  %v850 = vpack.c.b16 %v698, %v696
  %v851 = vpack.c.b16 %v701, %v699
  %v852 = vpack.c.b16 %v702, %v700
  %v853 = vpack.c.b16 %v705, %v703
  %v854 = vpack.c.b16 %v706, %v704
  %v855 = vpack.c.b16 %v709, %v707
  %v856 = vpack.c.b16 %v710, %v708
  %v857 = vpack.c.b16 %v713, %v711
  %v858 = vpack.c.b16 %v714, %v712
  %1003 = vmatprep.subr.bf16.mxu0 %v716
  %1004 = vmatpush1.bf16.msra.mxu0 %v715
  %1005 = vmatprep.subr.bf16.mxu0 %v718
  %1006 = vmatpush1.bf16.msra.mxu0 %v717
  %1007 = vmatprep.subr.bf16.mxu0 %v720
  %1008 = vmatpush1.bf16.msra.mxu0 %v719
  %1009 = vmatprep.subr.bf16.mxu0 %v722
  %1010 = vmatpush1.bf16.msra.mxu0 %v721
  %1011 = vmatprep.subr.bf16.mxu0 %v724
  %1012 = vmatpush1.bf16.msra.mxu0 %v723
  %1013 = vmatprep.subr.bf16.mxu0 %v726
  %1014 = vmatpush1.bf16.msra.mxu0 %v725
  %1015 = vmatprep.subr.bf16.mxu0 %v728
  %1016 = vmatpush1.bf16.msra.mxu0 %v727
  %1017 = vmatprep.subr.bf16.mxu0 %v730
  %1018 = vmatpush1.bf16.msra.mxu0 %v729
  %1019 = vmatprep.subr.bf16.mxu0 %v732
  %1020 = vmatpush1.bf16.msra.mxu0 %v731
  %1021 = vmatprep.subr.bf16.mxu0 %v734
  %1022 = vmatpush1.bf16.msra.mxu0 %v733
  %1023 = vmatprep.subr.bf16.mxu0 %v736
  %1024 = vmatpush1.bf16.msra.mxu0 %v735
  %1025 = vmatprep.subr.bf16.mxu0 %v738
  %1026 = vmatpush1.bf16.msra.mxu0 %v737
  %1027 = vmatprep.subr.bf16.mxu0 %v740
  %1028 = vmatpush1.bf16.msra.mxu0 %v739
  %1029 = vmatprep.subr.bf16.mxu0 %v742
  %1030 = vmatpush1.bf16.msra.mxu0 %v741
  %1031 = vmatprep.subr.bf16.mxu0 %v744
  %1032 = vmatpush1.bf16.msra.mxu0 %v743
  %1033 = vmatprep.subr.bf16.mxu0 %v746
  %1034 = vmatpush1.bf16.msra.mxu0 %v745
  %1035 = vmatprep.mubr.bf16.mxu0 %v248
  %1036 = vmatmul.mubr.bf16.gmra.mrb[0].mxu0 %v247
  %v1037 = vpop.f32.mrb[0].mxu0
  %v1038 = vadd.f32 %v184, %v1037
  %v1039 = vpop.f32.mrb[0].mxu0
  %v1040 = vadd.f32 %v188, %v1039
  %v1041 = vpop.f32.mrb[0].mxu0
  %v1042 = vadd.f32 %v184, %v1041
  %v1043 = vpop.f32.mrb[0].mxu0
  %v1044 = vadd.f32 %v188, %v1043
  %1045 = vmatprep.mubr.bf16.mxu0 %v257
  %1046 = vmatmul.mubr.bf16.gmra.mrb[0].mxu0 %v256
  %v1047 = vpop.f32.mrb[0].mxu0
  %v1048 = vadd.f32 %v184, %v1047
  %v1049 = vpop.f32.mrb[0].mxu0
  %v1050 = vadd.f32 %v188, %v1049
  %v1051 = vpop.f32.mrb[0].mxu0
  %v1052 = vadd.f32 %v184, %v1051
  %v1053 = vpop.f32.mrb[0].mxu0
  %v1054 = vadd.f32 %v188, %v1053
  %1055 = vdwg.mxu0
  %1056 = vmatprep.subr.bf16.mxu0 %v748
  %1057 = vmatpush1.bf16.msra.mxu0 %v747
  %1058 = vmatprep.subr.bf16.mxu0 %v750
  %1059 = vmatpush1.bf16.msra.mxu0 %v749
  %1060 = vmatprep.subr.bf16.mxu0 %v752
  %1061 = vmatpush1.bf16.msra.mxu0 %v751
  %1062 = vmatprep.subr.bf16.mxu0 %v754
  %1063 = vmatpush1.bf16.msra.mxu0 %v753
  %1064 = vmatprep.subr.bf16.mxu0 %v756
  %1065 = vmatpush1.bf16.msra.mxu0 %v755
  %1066 = vmatprep.subr.bf16.mxu0 %v758
  %1067 = vmatpush1.bf16.msra.mxu0 %v757
  %1068 = vmatprep.subr.bf16.mxu0 %v760
  %1069 = vmatpush1.bf16.msra.mxu0 %v759
  %1070 = vmatprep.subr.bf16.mxu0 %v762
  %1071 = vmatpush1.bf16.msra.mxu0 %v761
  %1072 = vmatprep.subr.bf16.mxu0 %v764
  %1073 = vmatpush1.bf16.msra.mxu0 %v763
  %1074 = vmatprep.subr.bf16.mxu0 %v766
  %1075 = vmatpush1.bf16.msra.mxu0 %v765
  %1076 = vmatprep.subr.bf16.mxu0 %v768
  %1077 = vmatpush1.bf16.msra.mxu0 %v767
  %1078 = vmatprep.subr.bf16.mxu0 %v770
  %1079 = vmatpush1.bf16.msra.mxu0 %v769
  %1080 = vmatprep.subr.bf16.mxu0 %v772
  %1081 = vmatpush1.bf16.msra.mxu0 %v771
  %1082 = vmatprep.subr.bf16.mxu0 %v774
  %1083 = vmatpush1.bf16.msra.mxu0 %v773
  %1084 = vmatprep.subr.bf16.mxu0 %v776
  %1085 = vmatpush1.bf16.msra.mxu0 %v775
  %1086 = vmatprep.subr.bf16.mxu0 %v778
  %1087 = vmatpush1.bf16.msra.mxu0 %v777
  %1088 = vmatprep.mubr.bf16.mxu0 %v250
  %1089 = vmatmul.mubr.bf16.gmra.mrb[0].mxu0 %v249
  %v1090 = vpop.f32.mrb[0].mxu0
  %v1091 = vadd.f32 %v1038, %v1090
  %v1092 = vpop.f32.mrb[0].mxu0
  %v1093 = vadd.f32 %v1040, %v1092
  %v1094 = vpop.f32.mrb[0].mxu0
  %v1095 = vadd.f32 %v1042, %v1094
  %v1096 = vpop.f32.mrb[0].mxu0
  %v1097 = vadd.f32 %v1044, %v1096
  %1098 = vmatprep.mubr.bf16.mxu0 %v259
  %1099 = vmatmul.mubr.bf16.gmra.mrb[0].mxu0 %v258
  %v1100 = vpop.f32.mrb[0].mxu0
  %v1101 = vadd.f32 %v1048, %v1100
  %v1102 = vpop.f32.mrb[0].mxu0
  %v1103 = vadd.f32 %v1050, %v1102
  %v1104 = vpop.f32.mrb[0].mxu0
  %v1105 = vadd.f32 %v1052, %v1104
  %v1106 = vpop.f32.mrb[0].mxu0
  %v1107 = vadd.f32 %v1054, %v1106
  %1108 = vdwg.mxu0
  %1109 = vmatprep.subr.bf16.mxu0 %v780
  %1110 = vmatpush1.bf16.msra.mxu0 %v779
  %1111 = vmatprep.subr.bf16.mxu0 %v782
  %1112 = vmatpush1.bf16.msra.mxu0 %v781
  %1113 = vmatprep.subr.bf16.mxu0 %v784
  %1114 = vmatpush1.bf16.msra.mxu0 %v783
  %1115 = vmatprep.subr.bf16.mxu0 %v786
  %1116 = vmatpush1.bf16.msra.mxu0 %v785
  %1117 = vmatprep.subr.bf16.mxu0 %v788
  %1118 = vmatpush1.bf16.msra.mxu0 %v787
  %1119 = vmatprep.subr.bf16.mxu0 %v790
  %1120 = vmatpush1.bf16.msra.mxu0 %v789
  %1121 = vmatprep.subr.bf16.mxu0 %v792
  %1122 = vmatpush1.bf16.msra.mxu0 %v791
  %1123 = vmatprep.subr.bf16.mxu0 %v794
  %1124 = vmatpush1.bf16.msra.mxu0 %v793
  %1125 = vmatprep.subr.bf16.mxu0 %v796
  %1126 = vmatpush1.bf16.msra.mxu0 %v795
  %1127 = vmatprep.subr.bf16.mxu0 %v798
  %1128 = vmatpush1.bf16.msra.mxu0 %v797
  %1129 = vmatprep.subr.bf16.mxu0 %v800
  %1130 = vmatpush1.bf16.msra.mxu0 %v799
  %1131 = vmatprep.subr.bf16.mxu0 %v802
  %1132 = vmatpush1.bf16.msra.mxu0 %v801
  %1133 = vmatprep.subr.bf16.mxu0 %v804
  %1134 = vmatpush1.bf16.msra.mxu0 %v803
  %1135 = vmatprep.subr.bf16.mxu0 %v806
  %1136 = vmatpush1.bf16.msra.mxu0 %v805
  %1137 = vmatprep.subr.bf16.mxu0 %v808
  %1138 = vmatpush1.bf16.msra.mxu0 %v807
  %1139 = vmatprep.subr.bf16.mxu0 %v810
  %1140 = vmatpush1.bf16.msra.mxu0 %v809
  %1141 = vmatprep.mubr.bf16.mxu0 %v252
  %1142 = vmatmul.mubr.bf16.gmra.mrb[0].mxu0 %v251
  %v1143 = vpop.f32.mrb[0].mxu0
  %v1144 = vadd.f32 %v1091, %v1143
  %v1145 = vpop.f32.mrb[0].mxu0
  %v1146 = vadd.f32 %v1093, %v1145
  %v1147 = vpop.f32.mrb[0].mxu0
  %v1148 = vadd.f32 %v1095, %v1147
  %v1149 = vpop.f32.mrb[0].mxu0
  %v1150 = vadd.f32 %v1097, %v1149
  %1151 = vmatprep.mubr.bf16.mxu0 %v261
  %1152 = vmatmul.mubr.bf16.gmra.mrb[0].mxu0 %v260
  %v1153 = vpop.f32.mrb[0].mxu0
  %v1154 = vadd.f32 %v1101, %v1153
  %v1155 = vpop.f32.mrb[0].mxu0
  %v1156 = vadd.f32 %v1103, %v1155
  %v1157 = vpop.f32.mrb[0].mxu0
  %v1158 = vadd.f32 %v1105, %v1157
  %v1159 = vpop.f32.mrb[0].mxu0
  %v1160 = vadd.f32 %v1107, %v1159
  %1161 = vdwg.mxu0
  %1162 = vmatprep.subr.bf16.mxu0 %v812
  %1163 = vmatpush1.bf16.msra.mxu0 %v811
  %1164 = vmatprep.subr.bf16.mxu0 %v814
  %1165 = vmatpush1.bf16.msra.mxu0 %v813
  %1166 = vmatprep.subr.bf16.mxu0 %v816
  %1167 = vmatpush1.bf16.msra.mxu0 %v815
  %1168 = vmatprep.subr.bf16.mxu0 %v818
  %1169 = vmatpush1.bf16.msra.mxu0 %v817
  %1170 = vmatprep.subr.bf16.mxu0 %v820
  %1171 = vmatpush1.bf16.msra.mxu0 %v819
  %1172 = vmatprep.subr.bf16.mxu0 %v822
  %1173 = vmatpush1.bf16.msra.mxu0 %v821
  %1174 = vmatprep.subr.bf16.mxu0 %v824
  %1175 = vmatpush1.bf16.msra.mxu0 %v823
  %1176 = vmatprep.subr.bf16.mxu0 %v826
  %1177 = vmatpush1.bf16.msra.mxu0 %v825
  %1178 = vmatprep.subr.bf16.mxu0 %v828
  %1179 = vmatpush1.bf16.msra.mxu0 %v827
  %1180 = vmatprep.subr.bf16.mxu0 %v830
  %1181 = vmatpush1.bf16.msra.mxu0 %v829
  %1182 = vmatprep.subr.bf16.mxu0 %v832
  %1183 = vmatpush1.bf16.msra.mxu0 %v831
  %1184 = vmatprep.subr.bf16.mxu0 %v834
  %1185 = vmatpush1.bf16.msra.mxu0 %v833
  %1186 = vmatprep.subr.bf16.mxu0 %v836
  %1187 = vmatpush1.bf16.msra.mxu0 %v835
  %1188 = vmatprep.subr.bf16.mxu0 %v838
  %1189 = vmatpush1.bf16.msra.mxu0 %v837
  %1190 = vmatprep.subr.bf16.mxu0 %v840
  %1191 = vmatpush1.bf16.msra.mxu0 %v839
  %1192 = vmatprep.subr.bf16.mxu0 %v842
  %1193 = vmatpush1.bf16.msra.mxu0 %v841
  %1194 = vmatprep.mubr.bf16.mxu0 %v254
  %1195 = vmatmul.mubr.bf16.gmra.mrb[0].mxu0 %v253
  %v1196 = vpop.f32.mrb[0].mxu0
  %v1197 = vadd.f32 %v1144, %v1196
  %v1198 = vpop.f32.mrb[0].mxu0
  %v1199 = vadd.f32 %v1146, %v1198
  %v1200 = vpop.f32.mrb[0].mxu0
  %v1201 = vadd.f32 %v1148, %v1200
  %v1202 = vpop.f32.mrb[0].mxu0
  %v1203 = vadd.f32 %v1150, %v1202
  %1204 = vmatprep.mubr.bf16.mxu0 %v263
  %1205 = vmatmul.mubr.bf16.gmra.mrb[0].mxu0 %v262
  %v1206 = vpop.f32.mrb[0].mxu0
  %v1207 = vadd.f32 %v1154, %v1206
  %v1208 = vpop.f32.mrb[0].mxu0
  %v1209 = vadd.f32 %v1156, %v1208
  %v1210 = vpop.f32.mrb[0].mxu0
  %v1211 = vadd.f32 %v1158, %v1210
  %v1212 = vpop.f32.mrb[0].mxu0
  %v1213 = vadd.f32 %v1160, %v1212
  %1214 = vdwg.mxu0
  %1215 = vmatprep.subr.bf16.mxu0 %v844
  %1216 = vmatpush1.bf16.msra.mxu0 %v843
  %1217 = vmatprep.subr.bf16.mxu0 %v846
  %1218 = vmatpush1.bf16.msra.mxu0 %v845
  %1219 = vmatprep.subr.bf16.mxu0 %v848
  %1220 = vmatpush1.bf16.msra.mxu0 %v847
  %1221 = vmatprep.subr.bf16.mxu0 %v850
  %1222 = vmatpush1.bf16.msra.mxu0 %v849
  %1223 = vmatprep.subr.bf16.mxu0 %v852
  %1224 = vmatpush1.bf16.msra.mxu0 %v851
  %1225 = vmatprep.subr.bf16.mxu0 %v854
  %1226 = vmatpush1.bf16.msra.mxu0 %v853
  %1227 = vmatprep.subr.bf16.mxu0 %v856
  %1228 = vmatpush1.bf16.msra.mxu0 %v855
  %1229 = vmatprep.subr.bf16.mxu0 %v858
  %1230 = vmatpush1.bf16.msra.mxu0 %v857
  %1231 = vmatprep.subr.bf16.mxu0 0
  %1232 = vmatpush1.bf16.msra.mxu0 0
  %1233 = vmatprep.subr.bf16.mxu0 0
  %1234 = vmatpush1.bf16.msra.mxu0 0
  %1235 = vmatprep.subr.bf16.mxu0 0
  %1236 = vmatpush1.bf16.msra.mxu0 0
  %1237 = vmatprep.subr.bf16.mxu0 0
  %1238 = vmatpush1.bf16.msra.mxu0 0
  %1239 = vmatprep.subr.bf16.mxu0 0
  %1240 = vmatpush1.bf16.msra.mxu0 0
  %1241 = vmatprep.subr.bf16.mxu0 0
  %1242 = vmatpush1.bf16.msra.mxu0 0
  %1243 = vmatprep.subr.bf16.mxu0 0
  %1244 = vmatpush1.bf16.msra.mxu0 0
  %1245 = vmatprep.subr.bf16.mxu0 0
  %1246 = vmatpush1.bf16.msra.mxu0 0
  %1247 = vmatprep.mubr.bf16.mxu0 0
  %1248 = vmatmul.mubr.bf16.gmra.mrb[0].mxu0 %v255
  %v1249 = vpop.f32.mrb[0].mxu0
  %v1250 = vadd.f32 %v1197, %v1249
  %v1251 = vpop.f32.mrb[0].mxu0
  %v1252 = vadd.f32 %v1199, %v1251
  %v1253 = vpop.f32.mrb[0].mxu0
  %v1254 = vadd.f32 %v1201, %v1253
  %v1255 = vpop.f32.mrb[0].mxu0
  %v1256 = vadd.f32 %v1203, %v1255
  %1257 = vmatprep.mubr.bf16.mxu0 0
  %1258 = vmatmul.mubr.bf16.gmra.mrb[0].mxu0 %v264
  %v1259 = vpop.f32.mrb[0].mxu0
  %v1260 = vadd.f32 %v1207, %v1259
  %v1261 = vpop.f32.mrb[0].mxu0
  %v1262 = vadd.f32 %v1209, %v1261
  %v1263 = vpop.f32.mrb[0].mxu0
  %v1264 = vadd.f32 %v1211, %v1263
  %v1265 = vpop.f32.mrb[0].mxu0
  %v1266 = vadd.f32 %v1213, %v1265
  %1267 = vdwg.mxu0
  %v1268 = vmax.f32 %v1250, 0.0
  %v1269 = vmax.f32 %v1252, 0.0
  %v1270 = vmax.f32 %v1254, 0.0
  %v1271 = vmax.f32 %v1256, 0.0
  %v1272 = vmax.f32 %v1260, 0.0
  %v1273 = vmax.f32 %v1262, 0.0
  %v1274 = vmax.f32 %v1264, 0.0
  %v1275 = vmax.f32 %v1266, 0.0
  %1276 = vst [vmem:[%s3] sm:$0xff] %v1268
  %vm1277 = vcmask 523264
  %1278 = vst.msk [vmem:[%s3 + $0x8] sm:$0xff] %vm1277, %v1269
  %1279 = vst [vmem:[%s3 + $0x10] sm:$0xff] %v1270
  %1280 = vst.msk [vmem:[%s3 + $0x18] sm:$0xff] %vm1277, %v1271
  %1281 = vst [vmem:[%s3 + $0x20] sm:$0xff] %v1272
  %1282 = vst.msk [vmem:[%s3 + $0x28] sm:$0xff] %vm1277, %v1273
  %1283 = vst [vmem:[%s3 + $0x30] sm:$0xff] %v1274
  %1284 = vst.msk [vmem:[%s3 + $0x38] sm:$0xff] %vm1277, %v1275
  // Predicated region
  $region14: #{googlenet_forward.27} parent=0 // pred_check
    _
  $region15: #{googlenet_forward.27} parent=0 // pred_check_branch
    %1286 = sbr.rel (0) target = $region17
  $region16: #{googlenet_forward.27} parent=0 // pred_region
    _
  $region17: #{googlenet_forward.27} parent=0 // pred_fallthru
    _
  // Predicated region
  $region18: #{googlenet_forward.27} parent=0 // pred_check
    _
  $region19: #{googlenet_forward.27} parent=0 // pred_check_branch
    %1288 = sbr.rel (0) target = $region21
  $region20: #{googlenet_forward.27} parent=0 // pred_region
    _
  $region21: #{googlenet_forward.27} parent=0 // pred_fallthru
    _

// kernel: googlenet_forward.28
$region0: #{googlenet_forward.28}
  #allocation0 [shape = 'u32[]', space=smem, size = 0x4, offset = 0x4, fixed_abs, tag = 'smem constant byte address 0x4 - core index']
  #allocation1 [shape = 'u32[144,128]{1,0:T(1,128)}', space=vmem, size = 0x12000, scoped, tag = 'internal scratch']
  %s0 = inlined_call_operand.vmem [shape: bf16[32,288], index: 0, kind: input, shape index: {}]
  %s1 = inlined_call_operand.vmem [shape: bf16[288,96], index: 1, kind: input, shape index: {}]
  %s2 = inlined_call_operand.vmem [shape: f32[1,96], index: 2, kind: input, shape index: {}]
  %s3 = inlined_call_operand.vmem [shape: f32[32,96], index: 3, kind: output, shape index: {}]
  %s4 = sld [smem:[#allocation0]]
  $region22: #{googlenet_forward.28} parent=0
    _
  %s6 = ssub.s32 1, %s4
  %s7 = scalar_select 0, %s6, %s4
  // Predicated region
  $region2: #{googlenet_forward.28} parent=0 // pred_check
    _
  $region3: #{googlenet_forward.28} parent=0 // pred_check_branch
    %9 = sbr.rel (0) target = $region5
  $region4: #{googlenet_forward.28} parent=0 // pred_region
    _
  $region5: #{googlenet_forward.28} parent=0 // pred_fallthru
    _
  // Predicated region
  $region6: #{googlenet_forward.28} parent=0 // pred_check
    _
  $region7: #{googlenet_forward.28} parent=0 // pred_check_branch
    %11 = sbr.rel (0) target = $region9
  $region8: #{googlenet_forward.28} parent=0 // pred_region
    _
  $region9: #{googlenet_forward.28} parent=0 // pred_fallthru
    _
  // Predicated region
  $region10: #{googlenet_forward.28} parent=0 // pred_check
    _
  $region11: #{googlenet_forward.28} parent=0 // pred_check_branch
    %13 = sbr.rel (0) target = $region13
  $region12: #{googlenet_forward.28} parent=0 // pred_region
    _
  $region13: #{googlenet_forward.28} parent=0 // pred_fallthru
    _
  %v15 = vld [vmem:[%s0] sm:$0xff]
  %v16 = vld [vmem:[%s0 + $0x8] sm:$0xf]
  %v17 = vld [vmem:[%s0 + $0xc] sm:$0xff]
  %v18 = vld [vmem:[%s0 + $0x14] sm:$0xf]
  %v19 = vld [vmem:[%s0 + $0x18] sm:$0xff]
  %v20 = vld [vmem:[%s0 + $0x20] sm:$0xf]
  %v21 = vld [vmem:[%s0 + $0x24] sm:$0xff]
  %v22 = vld [vmem:[%s0 + $0x2c] sm:$0xf]
  %v23 = vld [vmem:[%s1] sm:$0xf]
  %v24 = vld [vmem:[%s1 + $0x4] sm:$0xf]
  %v25 = vld [vmem:[%s1 + $0x8] sm:$0xf]
  %v26 = vld [vmem:[%s1 + $0xc] sm:$0xf]
  %v27 = vld [vmem:[%s1 + $0x10] sm:$0xf]
  %v28 = vld [vmem:[%s1 + $0x14] sm:$0xf]
  %v29 = vld [vmem:[%s1 + $0x18] sm:$0xf]
  %v30 = vld [vmem:[%s1 + $0x1c] sm:$0xf]
  %v31 = vld [vmem:[%s1 + $0x20] sm:$0xf]
  %v32 = vld [vmem:[%s1 + $0x24] sm:$0xf]
  %v33 = vld [vmem:[%s1 + $0x28] sm:$0xf]
  %v34 = vld [vmem:[%s1 + $0x2c] sm:$0xf]
  %v35 = vld [vmem:[%s1 + $0x30] sm:$0xf]
  %v36 = vld [vmem:[%s1 + $0x34] sm:$0xf]
  %v37 = vld [vmem:[%s1 + $0x38] sm:$0xf]
  %v38 = vld [vmem:[%s1 + $0x3c] sm:$0xf]
  %v39 = vld [vmem:[%s1 + $0x40] sm:$0xf]
  %v40 = vld [vmem:[%s1 + $0x44] sm:$0xf]
  %v41 = vld [vmem:[%s1 + $0x48] sm:$0xf]
  %v42 = vld [vmem:[%s1 + $0x4c] sm:$0xf]
  %v43 = vld [vmem:[%s1 + $0x50] sm:$0xf]
  %v44 = vld [vmem:[%s1 + $0x54] sm:$0xf]
  %v45 = vld [vmem:[%s1 + $0x58] sm:$0xf]
  %v46 = vld [vmem:[%s1 + $0x5c] sm:$0xf]
  %v47 = vld [vmem:[%s1 + $0x60] sm:$0xf]
  %v48 = vld [vmem:[%s1 + $0x64] sm:$0xf]
  %v49 = vld [vmem:[%s1 + $0x68] sm:$0xf]
  %v50 = vld [vmem:[%s1 + $0x6c] sm:$0xf]
  %v51 = vld [vmem:[%s1 + $0x70] sm:$0xf]
  %v52 = vld [vmem:[%s1 + $0x74] sm:$0xf]
  %v53 = vld [vmem:[%s1 + $0x78] sm:$0xf]
  %v54 = vld [vmem:[%s1 + $0x7c] sm:$0xf]
  %v55 = vld [vmem:[%s1 + $0x80] sm:$0xf]
  %v56 = vld [vmem:[%s1 + $0x84] sm:$0xf]
  %v57 = vld [vmem:[%s1 + $0x88] sm:$0xf]
  %v58 = vld [vmem:[%s1 + $0x8c] sm:$0xf]
  %v59 = vld [vmem:[%s2] sm:$0x1]
  %v61 = vlaneseq
  %v62 = vshrl.u32 %v61, 7
  %v63 = vsub.s32 0, %v62
  %v64 = vrot.slane %v59, %v63
  %v74 = vunpack.c.l.b16 %v15
  %v75 = vunpack.c.h.b16 %v15
  %v76 = vunpack.c.l.b16 %v16
  %v77 = vunpack.c.l.b16 %v17
  %v78 = vunpack.c.h.b16 %v17
  %v79 = vunpack.c.l.b16 %v18
  %v80 = vunpack.c.l.b16 %v19
  %v81 = vunpack.c.h.b16 %v19
  %v82 = vunpack.c.l.b16 %v20
  %v83 = vunpack.c.l.b16 %v21
  %v84 = vunpack.c.h.b16 %v21
  %v85 = vunpack.c.l.b16 %v22
  %v86 = vpack.c.b16 %v77, %v74
  %v87 = vpack.c.b16 %v78, %v75
  %v88 = vpack.c.b16 %v79, %v76
  %v89 = vpack.c.b16 %v83, %v80
  %v90 = vpack.c.b16 %v84, %v81
  %v91 = vpack.c.b16 %v85, %v82
  %v132 = vunpack.c.l.b16 %v23
  %v133 = vunpack.c.l.b16 %v24
  %v134 = vunpack.c.l.b16 %v25
  %v135 = vunpack.c.l.b16 %v26
  %v136 = vunpack.c.l.b16 %v27
  %v137 = vunpack.c.l.b16 %v28
  %v138 = vunpack.c.l.b16 %v29
  %v139 = vunpack.c.l.b16 %v30
  %v140 = vunpack.c.l.b16 %v31
  %v141 = vunpack.c.l.b16 %v32
  %v142 = vunpack.c.l.b16 %v33
  %v143 = vunpack.c.l.b16 %v34
  %v144 = vunpack.c.l.b16 %v35
  %v145 = vunpack.c.l.b16 %v36
  %v146 = vunpack.c.l.b16 %v37
  %v147 = vunpack.c.l.b16 %v38
  %v148 = vunpack.c.l.b16 %v39
  %v149 = vunpack.c.l.b16 %v40
  %v150 = vunpack.c.l.b16 %v41
  %v151 = vunpack.c.l.b16 %v42
  %v152 = vunpack.c.l.b16 %v43
  %v153 = vunpack.c.l.b16 %v44
  %v154 = vunpack.c.l.b16 %v45
  %v155 = vunpack.c.l.b16 %v46
  %v156 = vunpack.c.l.b16 %v47
  %v157 = vunpack.c.l.b16 %v48
  %v158 = vunpack.c.l.b16 %v49
  %v159 = vunpack.c.l.b16 %v50
  %v160 = vunpack.c.l.b16 %v51
  %v161 = vunpack.c.l.b16 %v52
  %v162 = vunpack.c.l.b16 %v53
  %v163 = vunpack.c.l.b16 %v54
  %v164 = vunpack.c.l.b16 %v55
  %v165 = vunpack.c.l.b16 %v56
  %v166 = vunpack.c.l.b16 %v57
  %v167 = vunpack.c.l.b16 %v58
  %v168 = vpack.c.b16 %v133, %v132
  %v169 = vpack.c.b16 %v135, %v134
  %v170 = vpack.c.b16 %v137, %v136
  %v171 = vpack.c.b16 %v139, %v138
  %v172 = vpack.c.b16 %v141, %v140
  %v173 = vpack.c.b16 %v143, %v142
  %v174 = vpack.c.b16 %v145, %v144
  %v175 = vpack.c.b16 %v147, %v146
  %v176 = vpack.c.b16 %v149, %v148
  %v177 = vpack.c.b16 %v151, %v150
  %v178 = vpack.c.b16 %v153, %v152
  %v179 = vpack.c.b16 %v155, %v154
  %v180 = vpack.c.b16 %v157, %v156
  %v181 = vpack.c.b16 %v159, %v158
  %v182 = vpack.c.b16 %v161, %v160
  %v183 = vpack.c.b16 %v163, %v162
  %v184 = vpack.c.b16 %v165, %v164
  %v185 = vpack.c.b16 %v167, %v166
  %vm204 = vcmask 261120
  %v206 = vsel %vm204, %v88, 0
  %v209 = vsel %vm204, %v91, 0
  %211 = vmatprep.subr.bf16.mxu0 0
  %212 = vmatpush1.bf16.msra.mxu0 %v168
  %213 = vmatprep.subr.bf16.mxu0 0
  %214 = vmatpush1.bf16.msra.mxu0 %v169
  %215 = vmatprep.subr.bf16.mxu0 0
  %216 = vmatpush1.bf16.msra.mxu0 %v170
  %217 = vmatprep.subr.bf16.mxu0 0
  %218 = vmatpush1.bf16.msra.mxu0 %v171
  %219 = vmatprep.subr.bf16.mxu0 0
  %220 = vmatpush1.bf16.msra.mxu0 %v172
  %221 = vmatprep.subr.bf16.mxu0 0
  %222 = vmatpush1.bf16.msra.mxu0 %v173
  %223 = vmatprep.subr.bf16.mxu0 0
  %224 = vmatpush1.bf16.msra.mxu0 %v174
  %225 = vmatprep.subr.bf16.mxu0 0
  %226 = vmatpush1.bf16.msra.mxu0 %v175
  %227 = vmatprep.subr.bf16.mxu0 0
  %228 = vmatpush1.bf16.msra.mxu0 %v176
  %229 = vmatprep.subr.bf16.mxu0 0
  %230 = vmatpush1.bf16.msra.mxu0 %v177
  %231 = vmatprep.subr.bf16.mxu0 0
  %232 = vmatpush1.bf16.msra.mxu0 %v178
  %233 = vmatprep.subr.bf16.mxu0 0
  %234 = vmatpush1.bf16.msra.mxu0 %v179
  %235 = vmatprep.subr.bf16.mxu0 0
  %236 = vmatpush1.bf16.msra.mxu0 %v180
  %237 = vmatprep.subr.bf16.mxu0 0
  %238 = vmatpush1.bf16.msra.mxu0 %v181
  %239 = vmatprep.subr.bf16.mxu0 0
  %240 = vmatpush1.bf16.msra.mxu0 %v182
  %241 = vmatprep.subr.bf16.mxu0 0
  %242 = vmatpush1.bf16.msra.mxu0 %v183
  %243 = vmatprep.mubr.bf16.mxu0 %v87
  %244 = vmatmul.mubr.bf16.gmra.mrb[0].mxu0 %v86
  %v245 = vpop.f32.mrb[0].mxu0
  %v246 = vadd.f32 %v64, %v245
  %v247 = vpop.f32.mrb[0].mxu0
  %v248 = vpop.f32.mrb[0].mxu0
  %v249 = vadd.f32 %v64, %v248
  %v250 = vpop.f32.mrb[0].mxu0
  %251 = vmatprep.mubr.bf16.mxu0 %v90
  %252 = vmatmul.mubr.bf16.gmra.mrb[0].mxu0 %v89
  %v253 = vpop.f32.mrb[0].mxu0
  %v254 = vadd.f32 %v64, %v253
  %v255 = vpop.f32.mrb[0].mxu0
  %v256 = vpop.f32.mrb[0].mxu0
  %v257 = vadd.f32 %v64, %v256
  %v258 = vpop.f32.mrb[0].mxu0
  %259 = vdwg.mxu0
  %260 = vmatprep.subr.bf16.mxu0 0
  %261 = vmatpush1.bf16.msra.mxu0 %v184
  %262 = vmatprep.subr.bf16.mxu0 0
  %263 = vmatpush1.bf16.msra.mxu0 %v185
  %264 = vmatprep.subr.bf16.mxu0 0
  %265 = vmatpush1.bf16.msra.mxu0 0
  %266 = vmatprep.subr.bf16.mxu0 0
  %267 = vmatpush1.bf16.msra.mxu0 0
  %268 = vmatprep.subr.bf16.mxu0 0
  %269 = vmatpush1.bf16.msra.mxu0 0
  %270 = vmatprep.subr.bf16.mxu0 0
  %271 = vmatpush1.bf16.msra.mxu0 0
  %272 = vmatprep.subr.bf16.mxu0 0
  %273 = vmatpush1.bf16.msra.mxu0 0
  %274 = vmatprep.subr.bf16.mxu0 0
  %275 = vmatpush1.bf16.msra.mxu0 0
  %276 = vmatprep.subr.bf16.mxu0 0
  %277 = vmatpush1.bf16.msra.mxu0 0
  %278 = vmatprep.subr.bf16.mxu0 0
  %279 = vmatpush1.bf16.msra.mxu0 0
  %280 = vmatprep.subr.bf16.mxu0 0
  %281 = vmatpush1.bf16.msra.mxu0 0
  %282 = vmatprep.subr.bf16.mxu0 0
  %283 = vmatpush1.bf16.msra.mxu0 0
  %284 = vmatprep.subr.bf16.mxu0 0
  %285 = vmatpush1.bf16.msra.mxu0 0
  %286 = vmatprep.subr.bf16.mxu0 0
  %287 = vmatpush1.bf16.msra.mxu0 0
  %288 = vmatprep.subr.bf16.mxu0 0
  %289 = vmatpush1.bf16.msra.mxu0 0
  %290 = vmatprep.subr.bf16.mxu0 0
  %291 = vmatpush1.bf16.msra.mxu0 0
  %292 = vmatprep.mubr.bf16.mxu0 0
  %293 = vmatmul.mubr.bf16.gmra.mrb[0].mxu0 %v206
  %v294 = vpop.f32.mrb[0].mxu0
  %v295 = vadd.f32 %v246, %v294
  %v296 = vpop.f32.mrb[0].mxu0
  %v297 = vpop.f32.mrb[0].mxu0
  %v298 = vadd.f32 %v249, %v297
  %v299 = vpop.f32.mrb[0].mxu0
  %300 = vmatprep.mubr.bf16.mxu0 0
  %301 = vmatmul.mubr.bf16.gmra.mrb[0].mxu0 %v209
  %v302 = vpop.f32.mrb[0].mxu0
  %v303 = vadd.f32 %v254, %v302
  %v304 = vpop.f32.mrb[0].mxu0
  %v305 = vpop.f32.mrb[0].mxu0
  %v306 = vadd.f32 %v257, %v305
  %v307 = vpop.f32.mrb[0].mxu0
  %308 = vdwg.mxu0
  %v309 = vmax.f32 %v295, 0.0
  %v310 = vmax.f32 %v298, 0.0
  %v311 = vmax.f32 %v303, 0.0
  %v312 = vmax.f32 %v306, 0.0
  %vm313 = vcmask 785408
  %314 = vst.msk [vmem:[%s3] sm:$0xff] %vm313, %v309
  %315 = vst.msk [vmem:[%s3 + $0x8] sm:$0xff] %vm313, %v310
  %316 = vst.msk [vmem:[%s3 + $0x10] sm:$0xff] %vm313, %v311
  %317 = vst.msk [vmem:[%s3 + $0x18] sm:$0xff] %vm313, %v312
  // Predicated region
  $region14: #{googlenet_forward.28} parent=0 // pred_check
    _
  $region15: #{googlenet_forward.28} parent=0 // pred_check_branch
    %319 = sbr.rel (0) target = $region17
  $region16: #{googlenet_forward.28} parent=0 // pred_region
    _
  $region17: #{googlenet_forward.28} parent=0 // pred_fallthru
    _
  // Predicated region
  $region18: #{googlenet_forward.28} parent=0 // pred_check
    _
  $region19: #{googlenet_forward.28} parent=0 // pred_check_branch
    %321 = sbr.rel (0) target = $region21
  $region20: #{googlenet_forward.28} parent=0 // pred_region
    _
  $region21: #{googlenet_forward.28} parent=0 // pred_fallthru
    _

// kernel: googlenet_forward.29
$region0: #{googlenet_forward.29}
  #allocation0 [shape = 'u32[]', space=smem, size = 0x4, offset = 0x4, fixed_abs, tag = 'smem constant byte address 0x4 - core index']
  #allocation1 [shape = 'u32[144,128]{1,0:T(1,128)}', space=vmem, size = 0x12000, scoped, tag = 'internal scratch']
  %s0 = inlined_call_operand.vmem [shape: f32[2,6,6,256], index: 0, kind: input, shape index: {}]
  %s1 = inlined_call_operand.vmem [shape: f32[2,4,4,256], index: 1, kind: output, shape index: {}]
  %s2 = sld [smem:[#allocation0]]
  $region37: #{googlenet_forward.29} parent=0
    _
  %s4 = ssub.s32 1, %s2
  %s5 = scalar_select 0, %s4, %s2
  loop: start=0, step=1, limit=4
  $region2: #{googlenet_forward.29} parent=0 // loop_pre_header
    _
  $region3: #{googlenet_forward.29} parent=0 // loop_header
    %s7 = sphi 0, %s11
    %p8 = scmp.ge.s32.totalorder %s7, 4
    %s17 = sphi 0, %s19
    %s20 = sphi 0, %s17
    %s21 = sphi 0, %s20
    %s37 = sphi 0, %s21
    %s43 = sphi 0, %s45
    %s46 = sphi 0, %s43
    %s47 = sphi 0, %s46
    %s63 = sphi 0, %s47
  $region4: #{googlenet_forward.29} parent=0 // loop_header_branch
    %10 = sbr.rel (%p8) target = $region8
  $region5: #{googlenet_forward.29} parent=0 // loop_body
    %s12 = ssub.s32 %s7, 1
    %s13 = ssub.s32 %s7, 2
    %s14 = sadd.s32 %s7, 1
    %s15 = ssub.s32 %s7, %s14
    %p16 = scmp.eq.s32.totalorder %s15, 0
    %s18 = sadd.s32 %s17, 1
    %s19 = scalar_select %p16, %s17, %s18
    %p22 = pneg %p16
    %p23 = scmp.eq.s32.totalorder %s7, 1
    %p24 = por %p22, %p23
    %p25 = scmp.ne.s32.totalorder %s17, %s20
    %p26 = scmp.eq.s32.totalorder %s7, 0
    %p27 = por %p25, %p26
    %p28 = scmp.ne.s32.totalorder %s17, %s20
    %p29 = scmp.eq.s32.totalorder %s12, 1
    %p30 = por %p28, %p29
    %p31 = scmp.ne.s32.totalorder %s20, %s21
    %p32 = scmp.eq.s32.totalorder %s12, 0
    %p33 = por %p31, %p32
    %p34 = scmp.ne.s32.totalorder %s20, %s21
    %p35 = scmp.eq.s32.totalorder %s13, 1
    %p36 = por %p34, %p35
    %p38 = scmp.ne.s32.totalorder %s21, %s37
    %p39 = scmp.eq.s32.totalorder %s13, 0
    %p40 = por %p38, %p39
    %s41 = ssub.s32 %s7, %s14
    %p42 = scmp.eq.s32.totalorder %s41, 0
    %s44 = sadd.s32 %s43, 1
    %s45 = scalar_select %p42, %s43, %s44
    %p48 = pneg %p42
    %p49 = scmp.eq.s32.totalorder %s7, 1
    %p50 = por %p48, %p49
    %p51 = scmp.ne.s32.totalorder %s43, %s46
    %p52 = scmp.eq.s32.totalorder %s7, 0
    %p53 = por %p51, %p52
    %p54 = scmp.ne.s32.totalorder %s43, %s46
    %p55 = scmp.eq.s32.totalorder %s12, 1
    %p56 = por %p54, %p55
    %p57 = scmp.ne.s32.totalorder %s46, %s47
    %p58 = scmp.eq.s32.totalorder %s12, 0
    %p59 = por %p57, %p58
    %p60 = scmp.ne.s32.totalorder %s46, %s47
    %p61 = scmp.eq.s32.totalorder %s13, 1
    %p62 = por %p60, %p61
    %p64 = scmp.ne.s32.totalorder %s47, %s63
    %p65 = scmp.eq.s32.totalorder %s13, 0
    %p66 = por %p64, %p65
    %p67 = scmp.le.s32.totalorder 1, %s7
    %p68 = scmp.lt.s32.totalorder %s7, 3
    %p69 = pnand %p67, %p68
    %p70 = pneg %p69
    // Predicated region
    $region9: #{googlenet_forward.29} parent=5 // pred_check
      _
    $region10: #{googlenet_forward.29} parent=5 // pred_check_branch
      %72 = sbr.rel (%p69) target = $region12
    $region11: #{googlenet_forward.29} parent=5 // pred_region
      %s73 = ssub.s32 %s7, 1
    $region12: #{googlenet_forward.29} parent=5 // pred_fallthru
      _
    %p74 = scmp.lt.s32.totalorder %s7, 2
    // Predicated region
    $region13: #{googlenet_forward.29} parent=5 // pred_check
      %p75 = pneg %p74
    $region14: #{googlenet_forward.29} parent=5 // pred_check_branch
      %77 = sbr.rel (%p75) target = $region16
    $region15: #{googlenet_forward.29} parent=5 // pred_region
      // Predicated region
      $region17: #{googlenet_forward.29} parent=15 // pred_check
        %p78 = pneg %p27
      $region18: #{googlenet_forward.29} parent=15 // pred_check_branch
        %80 = sbr.rel (%p78) target = $region20
      $region19: #{googlenet_forward.29} parent=15 // pred_region
        %p81 = scmp.lt.s32.totalorder %s7, 1
        %s82 = scalar_select %p81, %s7, 1
        %s83 = smul.addr %s82, 12
        %s84 = smul.addr %s83, 8
        %s85 = scalar_lea.vmem %s0, %s84
      $region20: #{googlenet_forward.29} parent=15 // pred_fallthru
        _
    $region16: #{googlenet_forward.29} parent=5 // pred_fallthru
      _
    %p86 = scmp.le.s32.totalorder 1, %s7
    %p87 = scmp.lt.s32.totalorder %s7, 3
    %p88 = pnand %p86, %p87
    %p89 = pneg %p88
    // Predicated region
    $region21: #{googlenet_forward.29} parent=5 // pred_check
      _
    $region22: #{googlenet_forward.29} parent=5 // pred_check_branch
      %91 = sbr.rel (%p88) target = $region24
    $region23: #{googlenet_forward.29} parent=5 // pred_region
      %s92 = ssub.s32 %s7, 1
      %p93 = scmp.lt.s32.totalorder %s12, 1
      %s94 = scalar_select %p93, %s12, 1
      %s95 = smul.addr %s94, 12
      %s96 = smul.addr %s95, 8
      %s97 = scalar_lea.vmem %s0, %s96
      %p98 = pneg %p33
      %p99 = pneg %p30
      %p100 = pneg %p59
      %p101 = pneg %p56
      %p102 = scmp.lt.s32.totalorder %s12, 1
      %s103 = scalar_select %p102, %s12, 1
      %s104 = smul.addr %s103, 8
      %s105 = smul.addr %s104, 4
      %s106 = scalar_lea.vmem %s1, %s105
      %p107 = scmp.lt.s32.totalorder %s12, 1
      %s108 = scalar_select %p107, %s12, 1
      %s109 = smul.addr %s108, 12
      %s110 = smul.addr %s109, 8
      %s111 = scalar_lea.vmem %s0, %s110
      %p112 = scmp.lt.s32.totalorder %s12, 1
      %s113 = scalar_select %p112, %s12, 1
      %s114 = smul.addr %s113, 8
      %s115 = smul.addr %s114, 4
      %s116 = scalar_lea.vmem %s1, %s115
      %v117 = vld [vmem:[%s111] sm:$0xf]
      %v118 = vld [vmem:[%s111 + $0x8] sm:$0xf]
      %v119 = vld [vmem:[%s111 + $0x10] sm:$0xf]
      %v120 = vld [vmem:[%s111 + $0x18] sm:$0xf]
      %v121 = vld [vmem:[%s111 + $0x20] sm:$0xf]
      %v122 = vld [vmem:[%s111 + $0x28] sm:$0xf]
      %v123 = vld [vmem:[%s111 + $0x30] sm:$0xf]
      %v124 = vld [vmem:[%s111 + $0x38] sm:$0xf]
      %v125 = vld [vmem:[%s111] sm:$0x1e]
      %v126 = vld [vmem:[%s111 + $0x8] sm:$0x1e]
      %v127 = vld [vmem:[%s111 + $0x10] sm:$0x1e]
      %v128 = vld [vmem:[%s111 + $0x18] sm:$0x1e]
      %v129 = vld [vmem:[%s111 + $0x20] sm:$0x1e]
      %v130 = vld [vmem:[%s111 + $0x28] sm:$0x1e]
      %v131 = vld [vmem:[%s111 + $0x30] sm:$0x1e]
      %v132 = vld [vmem:[%s111 + $0x38] sm:$0x1e]
      %v141 = vrot.slane %v125, 1
      %v142 = vrot.slane %v126, 1
      %v143 = vrot.slane %v127, 1
      %v144 = vrot.slane %v128, 1
      %v145 = vrot.slane %v129, 1
      %v146 = vrot.slane %v130, 1
      %v147 = vrot.slane %v131, 1
      %v148 = vrot.slane %v132, 1
      %v157 = vmax.f32 %v117, %v141
      %v158 = vmax.f32 %v118, %v142
      %v159 = vmax.f32 %v119, %v143
      %v160 = vmax.f32 %v120, %v144
      %v161 = vmax.f32 %v121, %v145
      %v162 = vmax.f32 %v122, %v146
      %v163 = vmax.f32 %v123, %v147
      %v164 = vmax.f32 %v124, %v148
      %v165 = vld [vmem:[%s111] sm:$0x3c]
      %v166 = vld [vmem:[%s111 + $0x8] sm:$0x3c]
      %v167 = vld [vmem:[%s111 + $0x10] sm:$0x3c]
      %v168 = vld [vmem:[%s111 + $0x18] sm:$0x3c]
      %v169 = vld [vmem:[%s111 + $0x20] sm:$0x3c]
      %v170 = vld [vmem:[%s111 + $0x28] sm:$0x3c]
      %v171 = vld [vmem:[%s111 + $0x30] sm:$0x3c]
      %v172 = vld [vmem:[%s111 + $0x38] sm:$0x3c]
      %v181 = vrot.slane %v165, 2
      %v182 = vrot.slane %v166, 2
      %v183 = vrot.slane %v167, 2
      %v184 = vrot.slane %v168, 2
      %v185 = vrot.slane %v169, 2
      %v186 = vrot.slane %v170, 2
      %v187 = vrot.slane %v171, 2
      %v188 = vrot.slane %v172, 2
      %v197 = vmax.f32 %v157, %v181
      %v198 = vmax.f32 %v158, %v182
      %v199 = vmax.f32 %v159, %v183
      %v200 = vmax.f32 %v160, %v184
      %v201 = vmax.f32 %v161, %v185
      %v202 = vmax.f32 %v162, %v186
      %v203 = vmax.f32 %v163, %v187
      %v204 = vmax.f32 %v164, %v188
      %s205 = scalar_lea.vmem %s111, 16
      %v206 = vld [vmem:[%s205] sm:$0xf]
      %v207 = vld [vmem:[%s205 + $0x8] sm:$0xf]
      %v208 = vld [vmem:[%s205 + $0x10] sm:$0xf]
      %v209 = vld [vmem:[%s205 + $0x18] sm:$0xf]
      %v210 = vld [vmem:[%s205 + $0x20] sm:$0xf]
      %v211 = vld [vmem:[%s205 + $0x28] sm:$0xf]
      %v212 = vld [vmem:[%s205 + $0x30] sm:$0xf]
      %v213 = vld [vmem:[%s205 + $0x38] sm:$0xf]
      %v214 = vmax.f32 %v197, %v206
      %v215 = vmax.f32 %v198, %v207
      %v216 = vmax.f32 %v199, %v208
      %v217 = vmax.f32 %v200, %v209
      %v218 = vmax.f32 %v201, %v210
      %v219 = vmax.f32 %v202, %v211
      %v220 = vmax.f32 %v203, %v212
      %v221 = vmax.f32 %v204, %v213
      %v222 = vld [vmem:[%s205] sm:$0x1e]
      %v223 = vld [vmem:[%s205 + $0x8] sm:$0x1e]
      %v224 = vld [vmem:[%s205 + $0x10] sm:$0x1e]
      %v225 = vld [vmem:[%s205 + $0x18] sm:$0x1e]
      %v226 = vld [vmem:[%s205 + $0x20] sm:$0x1e]
      %v227 = vld [vmem:[%s205 + $0x28] sm:$0x1e]
      %v228 = vld [vmem:[%s205 + $0x30] sm:$0x1e]
      %v229 = vld [vmem:[%s205 + $0x38] sm:$0x1e]
      %v238 = vrot.slane %v222, 1
      %v239 = vrot.slane %v223, 1
      %v240 = vrot.slane %v224, 1
      %v241 = vrot.slane %v225, 1
      %v242 = vrot.slane %v226, 1
      %v243 = vrot.slane %v227, 1
      %v244 = vrot.slane %v228, 1
      %v245 = vrot.slane %v229, 1
      %v254 = vmax.f32 %v214, %v238
      %v255 = vmax.f32 %v215, %v239
      %v256 = vmax.f32 %v216, %v240
      %v257 = vmax.f32 %v217, %v241
      %v258 = vmax.f32 %v218, %v242
      %v259 = vmax.f32 %v219, %v243
      %v260 = vmax.f32 %v220, %v244
      %v261 = vmax.f32 %v221, %v245
      %v262 = vld [vmem:[%s205] sm:$0x3c]
      %v263 = vld [vmem:[%s205 + $0x8] sm:$0x3c]
      %v264 = vld [vmem:[%s205 + $0x10] sm:$0x3c]
      %v265 = vld [vmem:[%s205 + $0x18] sm:$0x3c]
      %v266 = vld [vmem:[%s205 + $0x20] sm:$0x3c]
      %v267 = vld [vmem:[%s205 + $0x28] sm:$0x3c]
      %v268 = vld [vmem:[%s205 + $0x30] sm:$0x3c]
      %v269 = vld [vmem:[%s205 + $0x38] sm:$0x3c]
      %v278 = vrot.slane %v262, 2
      %v279 = vrot.slane %v263, 2
      %v280 = vrot.slane %v264, 2
      %v281 = vrot.slane %v265, 2
      %v282 = vrot.slane %v266, 2
      %v283 = vrot.slane %v267, 2
      %v284 = vrot.slane %v268, 2
      %v285 = vrot.slane %v269, 2
      %v294 = vmax.f32 %v254, %v278
      %v295 = vmax.f32 %v255, %v279
      %v296 = vmax.f32 %v256, %v280
      %v297 = vmax.f32 %v257, %v281
      %v298 = vmax.f32 %v258, %v282
      %v299 = vmax.f32 %v259, %v283
      %v300 = vmax.f32 %v260, %v284
      %v301 = vmax.f32 %v261, %v285
      %s302 = scalar_lea.vmem %s111, 32
      %v303 = vld [vmem:[%s302] sm:$0xf]
      %v304 = vld [vmem:[%s302 + $0x8] sm:$0xf]
      %v305 = vld [vmem:[%s302 + $0x10] sm:$0xf]
      %v306 = vld [vmem:[%s302 + $0x18] sm:$0xf]
      %v307 = vld [vmem:[%s302 + $0x20] sm:$0xf]
      %v308 = vld [vmem:[%s302 + $0x28] sm:$0xf]
      %v309 = vld [vmem:[%s302 + $0x30] sm:$0xf]
      %v310 = vld [vmem:[%s302 + $0x38] sm:$0xf]
      %v311 = vmax.f32 %v294, %v303
      %v312 = vmax.f32 %v295, %v304
      %v313 = vmax.f32 %v296, %v305
      %v314 = vmax.f32 %v297, %v306
      %v315 = vmax.f32 %v298, %v307
      %v316 = vmax.f32 %v299, %v308
      %v317 = vmax.f32 %v300, %v309
      %v318 = vmax.f32 %v301, %v310
      %v319 = vld [vmem:[%s302] sm:$0x1e]
      %v320 = vld [vmem:[%s302 + $0x8] sm:$0x1e]
      %v321 = vld [vmem:[%s302 + $0x10] sm:$0x1e]
      %v322 = vld [vmem:[%s302 + $0x18] sm:$0x1e]
      %v323 = vld [vmem:[%s302 + $0x20] sm:$0x1e]
      %v324 = vld [vmem:[%s302 + $0x28] sm:$0x1e]
      %v325 = vld [vmem:[%s302 + $0x30] sm:$0x1e]
      %v326 = vld [vmem:[%s302 + $0x38] sm:$0x1e]
      %v335 = vrot.slane %v319, 1
      %v336 = vrot.slane %v320, 1
      %v337 = vrot.slane %v321, 1
      %v338 = vrot.slane %v322, 1
      %v339 = vrot.slane %v323, 1
      %v340 = vrot.slane %v324, 1
      %v341 = vrot.slane %v325, 1
      %v342 = vrot.slane %v326, 1
      %v351 = vmax.f32 %v311, %v335
      %v352 = vmax.f32 %v312, %v336
      %v353 = vmax.f32 %v313, %v337
      %v354 = vmax.f32 %v314, %v338
      %v355 = vmax.f32 %v315, %v339
      %v356 = vmax.f32 %v316, %v340
      %v357 = vmax.f32 %v317, %v341
      %v358 = vmax.f32 %v318, %v342
      %v359 = vld [vmem:[%s302] sm:$0x3c]
      %v360 = vld [vmem:[%s302 + $0x8] sm:$0x3c]
      %v361 = vld [vmem:[%s302 + $0x10] sm:$0x3c]
      %v362 = vld [vmem:[%s302 + $0x18] sm:$0x3c]
      %v363 = vld [vmem:[%s302 + $0x20] sm:$0x3c]
      %v364 = vld [vmem:[%s302 + $0x28] sm:$0x3c]
      %v365 = vld [vmem:[%s302 + $0x30] sm:$0x3c]
      %v366 = vld [vmem:[%s302 + $0x38] sm:$0x3c]
      %v375 = vrot.slane %v359, 2
      %v376 = vrot.slane %v360, 2
      %v377 = vrot.slane %v361, 2
      %v378 = vrot.slane %v362, 2
      %v379 = vrot.slane %v363, 2
      %v380 = vrot.slane %v364, 2
      %v381 = vrot.slane %v365, 2
      %v382 = vrot.slane %v366, 2
      %v391 = vmax.f32 %v351, %v375
      %v392 = vmax.f32 %v352, %v376
      %v393 = vmax.f32 %v353, %v377
      %v394 = vmax.f32 %v354, %v378
      %v395 = vmax.f32 %v355, %v379
      %v396 = vmax.f32 %v356, %v380
      %v397 = vmax.f32 %v357, %v381
      %v398 = vmax.f32 %v358, %v382
      %v407 = vcombine.low %v391, %v392
      %v408 = vcombine.low %v393, %v394
      %v409 = vcombine.low %v395, %v396
      %v410 = vcombine.low %v397, %v398
      %415 = vst [vmem:[%s116] sm:$0xff] %v407
      %416 = vst [vmem:[%s116 + $0x8] sm:$0xff] %v408
      %417 = vst [vmem:[%s116 + $0x10] sm:$0xff] %v409
      %418 = vst [vmem:[%s116 + $0x18] sm:$0xff] %v410
      %p419 = scmp.lt.s32.totalorder %s12, 1
      %s420 = scalar_select %p419, %s12, 1
      %s421 = smul.addr %s420, 8
      %s422 = smul.addr %s421, 4
      %s423 = scalar_lea.vmem %s1, %s422
      // Predicated region
      $region25: #{googlenet_forward.29} parent=23 // pred_check
        %p424 = pneg %p56
      $region26: #{googlenet_forward.29} parent=23 // pred_check_branch
        %426 = sbr.rel (%p424) target = $region28
      $region27: #{googlenet_forward.29} parent=23 // pred_region
        _
      $region28: #{googlenet_forward.29} parent=23 // pred_fallthru
        _
    $region24: #{googlenet_forward.29} parent=5 // pred_fallthru
      _
    %p427 = scmp.le.s32.totalorder 2, %s7
    // Predicated region
    $region29: #{googlenet_forward.29} parent=5 // pred_check
      %p428 = pneg %p427
    $region30: #{googlenet_forward.29} parent=5 // pred_check_branch
      %430 = sbr.rel (%p428) target = $region32
    $region31: #{googlenet_forward.29} parent=5 // pred_region
      %s431 = ssub.s32 %s7, 2
      // Predicated region
      $region33: #{googlenet_forward.29} parent=31 // pred_check
        %p432 = pneg %p62
      $region34: #{googlenet_forward.29} parent=31 // pred_check_branch
        %434 = sbr.rel (%p432) target = $region36
      $region35: #{googlenet_forward.29} parent=31 // pred_region
        %p435 = scmp.lt.s32.totalorder %s13, 1
        %s436 = scalar_select %p435, %s13, 1
        %s437 = smul.addr %s436, 8
        %s438 = smul.addr %s437, 4
        %s439 = scalar_lea.vmem %s1, %s438
      $region36: #{googlenet_forward.29} parent=31 // pred_fallthru
        _
    $region32: #{googlenet_forward.29} parent=5 // pred_fallthru
      _
  $region6: #{googlenet_forward.29} parent=0 // loop_footer
    %s11 = sadd.s32 1, %s7
  $region7: #{googlenet_forward.29} parent=0 // loop_footer_branch
    %6 = sbr.rel target = $region3
  $region8: #{googlenet_forward.29} parent=0 // loop_exit
    _

// kernel: googlenet_forward.30
$region0: #{googlenet_forward.30}
  #allocation0 [shape = 'u32[]', space=smem, size = 0x4, offset = 0x4, fixed_abs, tag = 'smem constant byte address 0x4 - core index']
  #allocation1 [shape = 'u32[144,128]{1,0:T(1,128)}', space=vmem, size = 0x12000, scoped, tag = 'internal scratch']
  %s0 = inlined_call_operand.vmem [shape: bf16[32,256], index: 0, kind: input, shape index: {}]
  %s1 = inlined_call_operand.vmem [shape: bf16[256,64], index: 1, kind: input, shape index: {}]
  %s2 = inlined_call_operand.vmem [shape: f32[1,64], index: 2, kind: input, shape index: {}]
  %s3 = inlined_call_operand.vmem [shape: f32[32,64], index: 3, kind: output, shape index: {}]
  %s4 = sld [smem:[#allocation0]]
  $region22: #{googlenet_forward.30} parent=0
    _
  %s6 = ssub.s32 1, %s4
  %s7 = scalar_select 0, %s6, %s4
  // Predicated region
  $region2: #{googlenet_forward.30} parent=0 // pred_check
    _
  $region3: #{googlenet_forward.30} parent=0 // pred_check_branch
    %9 = sbr.rel (0) target = $region5
  $region4: #{googlenet_forward.30} parent=0 // pred_region
    _
  $region5: #{googlenet_forward.30} parent=0 // pred_fallthru
    _
  // Predicated region
  $region6: #{googlenet_forward.30} parent=0 // pred_check
    _
  $region7: #{googlenet_forward.30} parent=0 // pred_check_branch
    %11 = sbr.rel (0) target = $region9
  $region8: #{googlenet_forward.30} parent=0 // pred_region
    _
  $region9: #{googlenet_forward.30} parent=0 // pred_fallthru
    _
  // Predicated region
  $region10: #{googlenet_forward.30} parent=0 // pred_check
    _
  $region11: #{googlenet_forward.30} parent=0 // pred_check_branch
    %13 = sbr.rel (0) target = $region13
  $region12: #{googlenet_forward.30} parent=0 // pred_region
    _
  $region13: #{googlenet_forward.30} parent=0 // pred_fallthru
    _
  %v15 = vld [vmem:[%s0] sm:$0xff]
  %v16 = vld [vmem:[%s0 + $0x8] sm:$0xff]
  %v17 = vld [vmem:[%s0 + $0x10] sm:$0xff]
  %v18 = vld [vmem:[%s0 + $0x18] sm:$0xff]
  %v19 = vld [vmem:[%s1] sm:$0xf]
  %v20 = vld [vmem:[%s1 + $0x4] sm:$0xf]
  %v21 = vld [vmem:[%s1 + $0x8] sm:$0xf]
  %v22 = vld [vmem:[%s1 + $0xc] sm:$0xf]
  %v23 = vld [vmem:[%s1 + $0x10] sm:$0xf]
  %v24 = vld [vmem:[%s1 + $0x14] sm:$0xf]
  %v25 = vld [vmem:[%s1 + $0x18] sm:$0xf]
  %v26 = vld [vmem:[%s1 + $0x1c] sm:$0xf]
  %v27 = vld [vmem:[%s1 + $0x20] sm:$0xf]
  %v28 = vld [vmem:[%s1 + $0x24] sm:$0xf]
  %v29 = vld [vmem:[%s1 + $0x28] sm:$0xf]
  %v30 = vld [vmem:[%s1 + $0x2c] sm:$0xf]
  %v31 = vld [vmem:[%s1 + $0x30] sm:$0xf]
  %v32 = vld [vmem:[%s1 + $0x34] sm:$0xf]
  %v33 = vld [vmem:[%s1 + $0x38] sm:$0xf]
  %v34 = vld [vmem:[%s1 + $0x3c] sm:$0xf]
  %v35 = vld [vmem:[%s1 + $0x40] sm:$0xf]
  %v36 = vld [vmem:[%s1 + $0x44] sm:$0xf]
  %v37 = vld [vmem:[%s1 + $0x48] sm:$0xf]
  %v38 = vld [vmem:[%s1 + $0x4c] sm:$0xf]
  %v39 = vld [vmem:[%s1 + $0x50] sm:$0xf]
  %v40 = vld [vmem:[%s1 + $0x54] sm:$0xf]
  %v41 = vld [vmem:[%s1 + $0x58] sm:$0xf]
  %v42 = vld [vmem:[%s1 + $0x5c] sm:$0xf]
  %v43 = vld [vmem:[%s1 + $0x60] sm:$0xf]
  %v44 = vld [vmem:[%s1 + $0x64] sm:$0xf]
  %v45 = vld [vmem:[%s1 + $0x68] sm:$0xf]
  %v46 = vld [vmem:[%s1 + $0x6c] sm:$0xf]
  %v47 = vld [vmem:[%s1 + $0x70] sm:$0xf]
  %v48 = vld [vmem:[%s1 + $0x74] sm:$0xf]
  %v49 = vld [vmem:[%s1 + $0x78] sm:$0xf]
  %v50 = vld [vmem:[%s1 + $0x7c] sm:$0xf]
  %v51 = vld [vmem:[%s2] sm:$0x1]
  %v53 = vlaneseq
  %v54 = vshrl.u32 %v53, 7
  %v55 = vsub.s32 0, %v54
  %v56 = vrot.slane %v51, %v55
  %v62 = vunpack.c.l.b16 %v15
  %v63 = vunpack.c.h.b16 %v15
  %v64 = vunpack.c.l.b16 %v16
  %v65 = vunpack.c.h.b16 %v16
  %v66 = vunpack.c.l.b16 %v17
  %v67 = vunpack.c.h.b16 %v17
  %v68 = vunpack.c.l.b16 %v18
  %v69 = vunpack.c.h.b16 %v18
  %v70 = vpack.c.b16 %v64, %v62
  %v71 = vpack.c.b16 %v65, %v63
  %v72 = vpack.c.b16 %v68, %v66
  %v73 = vpack.c.b16 %v69, %v67
  %v110 = vunpack.c.l.b16 %v19
  %v111 = vunpack.c.l.b16 %v20
  %v112 = vunpack.c.l.b16 %v21
  %v113 = vunpack.c.l.b16 %v22
  %v114 = vunpack.c.l.b16 %v23
  %v115 = vunpack.c.l.b16 %v24
  %v116 = vunpack.c.l.b16 %v25
  %v117 = vunpack.c.l.b16 %v26
  %v118 = vunpack.c.l.b16 %v27
  %v119 = vunpack.c.l.b16 %v28
  %v120 = vunpack.c.l.b16 %v29
  %v121 = vunpack.c.l.b16 %v30
  %v122 = vunpack.c.l.b16 %v31
  %v123 = vunpack.c.l.b16 %v32
  %v124 = vunpack.c.l.b16 %v33
  %v125 = vunpack.c.l.b16 %v34
  %v126 = vunpack.c.l.b16 %v35
  %v127 = vunpack.c.l.b16 %v36
  %v128 = vunpack.c.l.b16 %v37
  %v129 = vunpack.c.l.b16 %v38
  %v130 = vunpack.c.l.b16 %v39
  %v131 = vunpack.c.l.b16 %v40
  %v132 = vunpack.c.l.b16 %v41
  %v133 = vunpack.c.l.b16 %v42
  %v134 = vunpack.c.l.b16 %v43
  %v135 = vunpack.c.l.b16 %v44
  %v136 = vunpack.c.l.b16 %v45
  %v137 = vunpack.c.l.b16 %v46
  %v138 = vunpack.c.l.b16 %v47
  %v139 = vunpack.c.l.b16 %v48
  %v140 = vunpack.c.l.b16 %v49
  %v141 = vunpack.c.l.b16 %v50
  %v142 = vpack.c.b16 %v111, %v110
  %v143 = vpack.c.b16 %v113, %v112
  %v144 = vpack.c.b16 %v115, %v114
  %v145 = vpack.c.b16 %v117, %v116
  %v146 = vpack.c.b16 %v119, %v118
  %v147 = vpack.c.b16 %v121, %v120
  %v148 = vpack.c.b16 %v123, %v122
  %v149 = vpack.c.b16 %v125, %v124
  %v150 = vpack.c.b16 %v127, %v126
  %v151 = vpack.c.b16 %v129, %v128
  %v152 = vpack.c.b16 %v131, %v130
  %v153 = vpack.c.b16 %v133, %v132
  %v154 = vpack.c.b16 %v135, %v134
  %v155 = vpack.c.b16 %v137, %v136
  %v156 = vpack.c.b16 %v139, %v138
  %v157 = vpack.c.b16 %v141, %v140
  %174 = vmatprep.subr.bf16.mxu0 0
  %175 = vmatpush1.bf16.msra.mxu0 %v142
  %176 = vmatprep.subr.bf16.mxu0 0
  %177 = vmatpush1.bf16.msra.mxu0 %v143
  %178 = vmatprep.subr.bf16.mxu0 0
  %179 = vmatpush1.bf16.msra.mxu0 %v144
  %180 = vmatprep.subr.bf16.mxu0 0
  %181 = vmatpush1.bf16.msra.mxu0 %v145
  %182 = vmatprep.subr.bf16.mxu0 0
  %183 = vmatpush1.bf16.msra.mxu0 %v146
  %184 = vmatprep.subr.bf16.mxu0 0
  %185 = vmatpush1.bf16.msra.mxu0 %v147
  %186 = vmatprep.subr.bf16.mxu0 0
  %187 = vmatpush1.bf16.msra.mxu0 %v148
  %188 = vmatprep.subr.bf16.mxu0 0
  %189 = vmatpush1.bf16.msra.mxu0 %v149
  %190 = vmatprep.subr.bf16.mxu0 0
  %191 = vmatpush1.bf16.msra.mxu0 %v150
  %192 = vmatprep.subr.bf16.mxu0 0
  %193 = vmatpush1.bf16.msra.mxu0 %v151
  %194 = vmatprep.subr.bf16.mxu0 0
  %195 = vmatpush1.bf16.msra.mxu0 %v152
  %196 = vmatprep.subr.bf16.mxu0 0
  %197 = vmatpush1.bf16.msra.mxu0 %v153
  %198 = vmatprep.subr.bf16.mxu0 0
  %199 = vmatpush1.bf16.msra.mxu0 %v154
  %200 = vmatprep.subr.bf16.mxu0 0
  %201 = vmatpush1.bf16.msra.mxu0 %v155
  %202 = vmatprep.subr.bf16.mxu0 0
  %203 = vmatpush1.bf16.msra.mxu0 %v156
  %204 = vmatprep.subr.bf16.mxu0 0
  %205 = vmatpush1.bf16.msra.mxu0 %v157
  %206 = vmatprep.mubr.bf16.mxu0 %v71
  %207 = vmatmul.mubr.bf16.gmra.mrb[0].mxu0 %v70
  %v208 = vpop.f32.mrb[0].mxu0
  %v209 = vadd.f32 %v56, %v208
  %v210 = vpop.f32.mrb[0].mxu0
  %v211 = vpop.f32.mrb[0].mxu0
  %v212 = vadd.f32 %v56, %v211
  %v213 = vpop.f32.mrb[0].mxu0
  %214 = vmatprep.mubr.bf16.mxu0 %v73
  %215 = vmatmul.mubr.bf16.gmra.mrb[0].mxu0 %v72
  %v216 = vpop.f32.mrb[0].mxu0
  %v217 = vadd.f32 %v56, %v216
  %v218 = vpop.f32.mrb[0].mxu0
  %v219 = vpop.f32.mrb[0].mxu0
  %v220 = vadd.f32 %v56, %v219
  %v221 = vpop.f32.mrb[0].mxu0
  %222 = vdwg.mxu0
  %v223 = vmax.f32 %v209, 0.0
  %v224 = vmax.f32 %v212, 0.0
  %v225 = vmax.f32 %v217, 0.0
  %v226 = vmax.f32 %v220, 0.0
  %vm227 = vcmask 523264
  %228 = vst.msk [vmem:[%s3] sm:$0xff] %vm227, %v223
  %229 = vst.msk [vmem:[%s3 + $0x8] sm:$0xff] %vm227, %v224
  %230 = vst.msk [vmem:[%s3 + $0x10] sm:$0xff] %vm227, %v225
  %231 = vst.msk [vmem:[%s3 + $0x18] sm:$0xff] %vm227, %v226
  // Predicated region
  $region14: #{googlenet_forward.30} parent=0 // pred_check
    _
  $region15: #{googlenet_forward.30} parent=0 // pred_check_branch
    %233 = sbr.rel (0) target = $region17
  $region16: #{googlenet_forward.30} parent=0 // pred_region
    _
  $region17: #{googlenet_forward.30} parent=0 // pred_fallthru
    _
  // Predicated region
  $region18: #{googlenet_forward.30} parent=0 // pred_check
    _
  $region19: #{googlenet_forward.30} parent=0 // pred_check_branch
    %235 = sbr.rel (0) target = $region21
  $region20: #{googlenet_forward.30} parent=0 // pred_region
    _
  $region21: #{googlenet_forward.30} parent=0 // pred_fallthru
    _

// kernel: googlenet_forward.31
$region0: #{googlenet_forward.31}
  #allocation0 [shape = 'u32[]', space=smem, size = 0x4, offset = 0x4, fixed_abs, tag = 'smem constant byte address 0x4 - core index']
  #allocation1 [shape = 'u32[144,128]{1,0:T(1,128)}', space=vmem, size = 0x12000, scoped, tag = 'internal scratch']
  %s0 = inlined_call_operand.vmem [shape: f32[2,3,3,480], index: 0, kind: input, shape index: {}]
  %s1 = inlined_call_operand.vmem [shape: f32[2,3,2,480], index: 1, kind: input, shape index: {}]
  %s2 = inlined_call_operand.vmem [shape: f32[2,2,3,480], index: 2, kind: input, shape index: {}]
  %s3 = inlined_call_operand.vmem [shape: f32[2,2,2,480], index: 3, kind: input, shape index: {}]
  %s4 = inlined_call_operand.hbm [shape: f32[2,2,2,480], index: 4, kind: output, shape index: {}]
  %s5 = sld [smem:[#allocation0]]
  $region49: #{googlenet_forward.31} parent=0
    _
  %s7 = ssub.s32 1, %s5
  %s8 = scalar_select 0, %s7, %s5
  $region1: #{googlenet_forward.31} parent=0
    #allocation2 [shape = 'u8[16384]{0}', space=vmem, size = 0x4000, scoped, tag = 'output window, operand 0']
    #allocation3 [shape = 's32[2]{0}', space=sflag, size = 0x8, scoped, tag = 'scoped memory for googlenet_forward.31']
    %9 = vsyncpa [#allocation3], 0
    %s10 = scalar_lea.sflag [#allocation3], 1
    %11 = vsyncpa %s10, 0
    loop: start=0, step=1, limit=4
    $region2: #{googlenet_forward.31} parent=1 // loop_pre_header
      _
    $region3: #{googlenet_forward.31} parent=1 // loop_header
      %s13 = sphi 0, %s17
      %p14 = scmp.ge.s32.totalorder %s13, 4
      %s23 = sphi 0, %s25
      %s26 = sphi 0, %s23
      %s27 = sphi 0, %s26
      %s43 = sphi 0, %s27
      %s49 = sphi 0, %s51
      %s52 = sphi 0, %s49
      %s53 = sphi 0, %s52
      %s69 = sphi 0, %s53
      %s75 = sphi 0, %s77
      %s78 = sphi 0, %s75
      %s79 = sphi 0, %s78
      %s95 = sphi 0, %s79
      %s101 = sphi 0, %s103
      %s104 = sphi 0, %s101
      %s105 = sphi 0, %s104
      %s121 = sphi 0, %s105
      %s127 = sphi 0, %s129
      %s130 = sphi 0, %s127
      %s131 = sphi 0, %s130
      %s147 = sphi 0, %s131
    $region4: #{googlenet_forward.31} parent=1 // loop_header_branch
      %16 = sbr.rel (%p14) target = $region8
    $region5: #{googlenet_forward.31} parent=1 // loop_body
      %s18 = ssub.s32 %s13, 1
      %s19 = ssub.s32 %s13, 2
      %s20 = sadd.s32 %s13, 1
      %s21 = ssub.s32 %s13, %s20
      %p22 = scmp.eq.s32.totalorder %s21, 0
      %s24 = sadd.s32 %s23, 1
      %s25 = scalar_select %p22, %s23, %s24
      %p28 = pneg %p22
      %p29 = scmp.eq.s32.totalorder %s13, 1
      %p30 = por %p28, %p29
      %p31 = scmp.ne.s32.totalorder %s23, %s26
      %p32 = scmp.eq.s32.totalorder %s13, 0
      %p33 = por %p31, %p32
      %p34 = scmp.ne.s32.totalorder %s23, %s26
      %p35 = scmp.eq.s32.totalorder %s18, 1
      %p36 = por %p34, %p35
      %p37 = scmp.ne.s32.totalorder %s26, %s27
      %p38 = scmp.eq.s32.totalorder %s18, 0
      %p39 = por %p37, %p38
      %p40 = scmp.ne.s32.totalorder %s26, %s27
      %p41 = scmp.eq.s32.totalorder %s19, 1
      %p42 = por %p40, %p41
      %p44 = scmp.ne.s32.totalorder %s27, %s43
      %p45 = scmp.eq.s32.totalorder %s19, 0
      %p46 = por %p44, %p45
      %s47 = ssub.s32 %s13, %s20
      %p48 = scmp.eq.s32.totalorder %s47, 0
      %s50 = sadd.s32 %s49, 1
      %s51 = scalar_select %p48, %s49, %s50
      %p54 = pneg %p48
      %p55 = scmp.eq.s32.totalorder %s13, 1
      %p56 = por %p54, %p55
      %p57 = scmp.ne.s32.totalorder %s49, %s52
      %p58 = scmp.eq.s32.totalorder %s13, 0
      %p59 = por %p57, %p58
      %p60 = scmp.ne.s32.totalorder %s49, %s52
      %p61 = scmp.eq.s32.totalorder %s18, 1
      %p62 = por %p60, %p61
      %p63 = scmp.ne.s32.totalorder %s52, %s53
      %p64 = scmp.eq.s32.totalorder %s18, 0
      %p65 = por %p63, %p64
      %p66 = scmp.ne.s32.totalorder %s52, %s53
      %p67 = scmp.eq.s32.totalorder %s19, 1
      %p68 = por %p66, %p67
      %p70 = scmp.ne.s32.totalorder %s53, %s69
      %p71 = scmp.eq.s32.totalorder %s19, 0
      %p72 = por %p70, %p71
      %s73 = ssub.s32 %s13, %s20
      %p74 = scmp.eq.s32.totalorder %s73, 0
      %s76 = sadd.s32 %s75, 1
      %s77 = scalar_select %p74, %s75, %s76
      %p80 = pneg %p74
      %p81 = scmp.eq.s32.totalorder %s13, 1
      %p82 = por %p80, %p81
      %p83 = scmp.ne.s32.totalorder %s75, %s78
      %p84 = scmp.eq.s32.totalorder %s13, 0
      %p85 = por %p83, %p84
      %p86 = scmp.ne.s32.totalorder %s75, %s78
      %p87 = scmp.eq.s32.totalorder %s18, 1
      %p88 = por %p86, %p87
      %p89 = scmp.ne.s32.totalorder %s78, %s79
      %p90 = scmp.eq.s32.totalorder %s18, 0
      %p91 = por %p89, %p90
      %p92 = scmp.ne.s32.totalorder %s78, %s79
      %p93 = scmp.eq.s32.totalorder %s19, 1
      %p94 = por %p92, %p93
      %p96 = scmp.ne.s32.totalorder %s79, %s95
      %p97 = scmp.eq.s32.totalorder %s19, 0
      %p98 = por %p96, %p97
      %s99 = ssub.s32 %s13, %s20
      %p100 = scmp.eq.s32.totalorder %s99, 0
      %s102 = sadd.s32 %s101, 1
      %s103 = scalar_select %p100, %s101, %s102
      %p106 = pneg %p100
      %p107 = scmp.eq.s32.totalorder %s13, 1
      %p108 = por %p106, %p107
      %p109 = scmp.ne.s32.totalorder %s101, %s104
      %p110 = scmp.eq.s32.totalorder %s13, 0
      %p111 = por %p109, %p110
      %p112 = scmp.ne.s32.totalorder %s101, %s104
      %p113 = scmp.eq.s32.totalorder %s18, 1
      %p114 = por %p112, %p113
      %p115 = scmp.ne.s32.totalorder %s104, %s105
      %p116 = scmp.eq.s32.totalorder %s18, 0
      %p117 = por %p115, %p116
      %p118 = scmp.ne.s32.totalorder %s104, %s105
      %p119 = scmp.eq.s32.totalorder %s19, 1
      %p120 = por %p118, %p119
      %p122 = scmp.ne.s32.totalorder %s105, %s121
      %p123 = scmp.eq.s32.totalorder %s19, 0
      %p124 = por %p122, %p123
      %s125 = ssub.s32 %s13, %s20
      %p126 = scmp.eq.s32.totalorder %s125, 0
      %s128 = sadd.s32 %s127, 1
      %s129 = scalar_select %p126, %s127, %s128
      %p132 = pneg %p126
      %p133 = scmp.eq.s32.totalorder %s13, 1
      %p134 = por %p132, %p133
      %p135 = scmp.ne.s32.totalorder %s127, %s130
      %p136 = scmp.eq.s32.totalorder %s13, 0
      %p137 = por %p135, %p136
      %p138 = scmp.ne.s32.totalorder %s127, %s130
      %p139 = scmp.eq.s32.totalorder %s18, 1
      %p140 = por %p138, %p139
      %p141 = scmp.ne.s32.totalorder %s130, %s131
      %p142 = scmp.eq.s32.totalorder %s18, 0
      %p143 = por %p141, %p142
      %p144 = scmp.ne.s32.totalorder %s130, %s131
      %p145 = scmp.eq.s32.totalorder %s19, 1
      %p146 = por %p144, %p145
      %p148 = scmp.ne.s32.totalorder %s131, %s147
      %p149 = scmp.eq.s32.totalorder %s19, 0
      %p150 = por %p148, %p149
      %p151 = scmp.le.s32.totalorder 1, %s13
      %p152 = scmp.lt.s32.totalorder %s13, 3
      %p153 = pnand %p151, %p152
      %p154 = pneg %p153
      // Predicated region
      $region9: #{googlenet_forward.31} parent=5 // pred_check
        _
      $region10: #{googlenet_forward.31} parent=5 // pred_check_branch
        %156 = sbr.rel (%p153) target = $region12
      $region11: #{googlenet_forward.31} parent=5 // pred_region
        %s157 = ssub.s32 %s13, 1
      $region12: #{googlenet_forward.31} parent=5 // pred_fallthru
        _
      %p158 = scmp.lt.s32.totalorder %s13, 2
      // Predicated region
      $region13: #{googlenet_forward.31} parent=5 // pred_check
        %p159 = pneg %p158
      $region14: #{googlenet_forward.31} parent=5 // pred_check_branch
        %161 = sbr.rel (%p159) target = $region16
      $region15: #{googlenet_forward.31} parent=5 // pred_region
        // Predicated region
        $region17: #{googlenet_forward.31} parent=15 // pred_check
          %p162 = pneg %p33
        $region18: #{googlenet_forward.31} parent=15 // pred_check_branch
          %164 = sbr.rel (%p162) target = $region20
        $region19: #{googlenet_forward.31} parent=15 // pred_region
          %p165 = scmp.lt.s32.totalorder %s13, 1
          %s166 = scalar_select %p165, %s13, 1
          %s167 = smul.addr %s166, 12
          %s168 = smul.addr %s167, 4
          %s169 = scalar_lea.vmem %s0, %s168
        $region20: #{googlenet_forward.31} parent=15 // pred_fallthru
          _
        // Predicated region
        $region21: #{googlenet_forward.31} parent=15 // pred_check
          %p170 = pneg %p59
        $region22: #{googlenet_forward.31} parent=15 // pred_check_branch
          %172 = sbr.rel (%p170) target = $region24
        $region23: #{googlenet_forward.31} parent=15 // pred_region
          %p173 = scmp.lt.s32.totalorder %s13, 1
          %s174 = scalar_select %p173, %s13, 1
          %s175 = smul.addr %s174, 12
          %s176 = smul.addr %s175, 2
          %s177 = scalar_lea.vmem %s1, %s176
        $region24: #{googlenet_forward.31} parent=15 // pred_fallthru
          _
        // Predicated region
        $region25: #{googlenet_forward.31} parent=15 // pred_check
          %p178 = pneg %p85
        $region26: #{googlenet_forward.31} parent=15 // pred_check_branch
          %180 = sbr.rel (%p178) target = $region28
        $region27: #{googlenet_forward.31} parent=15 // pred_region
          %p181 = scmp.lt.s32.totalorder %s13, 1
          %s182 = scalar_select %p181, %s13, 1
          %s183 = smul.addr %s182, 8
          %s184 = smul.addr %s183, 4
          %s185 = scalar_lea.vmem %s2, %s184
        $region28: #{googlenet_forward.31} parent=15 // pred_fallthru
          _
        // Predicated region
        $region29: #{googlenet_forward.31} parent=15 // pred_check
          %p186 = pneg %p111
        $region30: #{googlenet_forward.31} parent=15 // pred_check_branch
          %188 = sbr.rel (%p186) target = $region32
        $region31: #{googlenet_forward.31} parent=15 // pred_region
          %p189 = scmp.lt.s32.totalorder %s13, 1
          %s190 = scalar_select %p189, %s13, 1
          %s191 = smul.addr %s190, 8
          %s192 = smul.addr %s191, 2
          %s193 = scalar_lea.vmem %s3, %s192
        $region32: #{googlenet_forward.31} parent=15 // pred_fallthru
          _
      $region16: #{googlenet_forward.31} parent=5 // pred_fallthru
        _
      %p194 = scmp.le.s32.totalorder 1, %s13
      %p195 = scmp.lt.s32.totalorder %s13, 3
      %p196 = pnand %p194, %p195
      %p197 = pneg %p196
      // Predicated region
      $region33: #{googlenet_forward.31} parent=5 // pred_check
        _
      $region34: #{googlenet_forward.31} parent=5 // pred_check_branch
        %199 = sbr.rel (%p196) target = $region36
      $region35: #{googlenet_forward.31} parent=5 // pred_region
        %s200 = ssub.s32 %s13, 1
        %p201 = scmp.lt.s32.totalorder %s18, 1
        %s202 = scalar_select %p201, %s18, 1
        %s203 = smul.addr %s202, 12
        %s204 = smul.addr %s203, 4
        %s205 = scalar_lea.vmem %s0, %s204
        %p206 = pneg %p39
        %p207 = pneg %p36
        %p208 = scmp.lt.s32.totalorder %s18, 1
        %s209 = scalar_select %p208, %s18, 1
        %s210 = smul.addr %s209, 12
        %s211 = smul.addr %s210, 2
        %s212 = scalar_lea.vmem %s1, %s211
        %p213 = pneg %p65
        %p214 = pneg %p62
        %p215 = scmp.lt.s32.totalorder %s18, 1
        %s216 = scalar_select %p215, %s18, 1
        %s217 = smul.addr %s216, 8
        %s218 = smul.addr %s217, 4
        %s219 = scalar_lea.vmem %s2, %s218
        %p220 = pneg %p91
        %p221 = pneg %p88
        %p222 = scmp.lt.s32.totalorder %s18, 1
        %s223 = scalar_select %p222, %s18, 1
        %s224 = smul.addr %s223, 8
        %s225 = smul.addr %s224, 2
        %s226 = scalar_lea.vmem %s3, %s225
        %p227 = pneg %p117
        %p228 = pneg %p114
        %p229 = pneg %p143
        %p230 = pneg %p140
        %s231 = sand.u32 %s130, 1
        %s232 = scalar_lea.sflag [#allocation3], %s231
        %s233 = sand.u32 %s130, 1
        %s234 = smul.addr %s233, 16
        %s235 = scalar_lea.vmem [#allocation2], %s234
        %p236 = scmp.lt.s32.totalorder %s18, 1
        %s237 = scalar_select %p236, %s18, 1
        %s238 = smul.addr %s237, 12
        %s239 = smul.addr %s238, 4
        %s240 = scalar_lea.vmem %s0, %s239
        %p241 = scmp.lt.s32.totalorder %s18, 1
        %s242 = scalar_select %p241, %s18, 1
        %s243 = smul.addr %s242, 12
        %s244 = smul.addr %s243, 2
        %s245 = scalar_lea.vmem %s1, %s244
        %p246 = scmp.lt.s32.totalorder %s18, 1
        %s247 = scalar_select %p246, %s18, 1
        %s248 = smul.addr %s247, 8
        %s249 = smul.addr %s248, 4
        %s250 = scalar_lea.vmem %s2, %s249
        %p251 = scmp.lt.s32.totalorder %s18, 1
        %s252 = scalar_select %p251, %s18, 1
        %s253 = smul.addr %s252, 8
        %s254 = smul.addr %s253, 2
        %s255 = scalar_lea.vmem %s3, %s254
        %v256 = vld [vmem:[%s240] sm:$0x33]
        %v257 = vld [vmem:[%s240 + $0x8] sm:$0x33]
        %v258 = vld [vmem:[%s240 + $0x10] sm:$0x33]
        %v259 = vld [vmem:[%s240 + $0x18] sm:$0x33]
        %v260 = vld [vmem:[%s240] sm:$0x66]
        %v261 = vld [vmem:[%s240 + $0x8] sm:$0x66]
        %v262 = vld [vmem:[%s240 + $0x10] sm:$0x66]
        %v263 = vld [vmem:[%s240 + $0x18] sm:$0x66]
        %v268 = vrot.slane %v260, 5
        %v269 = vrot.slane %v268, 4
        %v270 = vrot.slane %v261, 5
        %v271 = vrot.slane %v270, 4
        %v272 = vrot.slane %v262, 5
        %v273 = vrot.slane %v272, 4
        %v274 = vrot.slane %v263, 5
        %v275 = vrot.slane %v274, 4
        %v280 = vmax.f32 %v256, %v269
        %v281 = vmax.f32 %v257, %v271
        %v282 = vmax.f32 %v258, %v273
        %v283 = vmax.f32 %v259, %v275
        %s284 = scalar_lea.vmem %s240, 16
        %v285 = vld [vmem:[%s284] sm:$0x33]
        %v286 = vld [vmem:[%s284 + $0x8] sm:$0x33]
        %v287 = vld [vmem:[%s284 + $0x10] sm:$0x33]
        %v288 = vld [vmem:[%s284 + $0x18] sm:$0x33]
        %v289 = vmax.f32 %v280, %v285
        %v290 = vmax.f32 %v281, %v286
        %v291 = vmax.f32 %v282, %v287
        %v292 = vmax.f32 %v283, %v288
        %v293 = vld [vmem:[%s284] sm:$0x66]
        %v294 = vld [vmem:[%s284 + $0x8] sm:$0x66]
        %v295 = vld [vmem:[%s284 + $0x10] sm:$0x66]
        %v296 = vld [vmem:[%s284 + $0x18] sm:$0x66]
        %v301 = vrot.slane %v293, 5
        %v302 = vrot.slane %v301, 4
        %v303 = vrot.slane %v294, 5
        %v304 = vrot.slane %v303, 4
        %v305 = vrot.slane %v295, 5
        %v306 = vrot.slane %v305, 4
        %v307 = vrot.slane %v296, 5
        %v308 = vrot.slane %v307, 4
        %v313 = vmax.f32 %v289, %v302
        %v314 = vmax.f32 %v290, %v304
        %v315 = vmax.f32 %v291, %v306
        %v316 = vmax.f32 %v292, %v308
        %v317 = vld [vmem:[%s245] sm:$0xff]
        %v318 = vld [vmem:[%s245 + $0x8] sm:$0xff]
        %v321 = vcombine.high %v317, %v317
        %v323 = vunpack.c.l.s4 1983009808
        %v324 = vunpack.c.0.s8 %v323
        %v325 = vlaneseq
        %v326 = vshrl.u32 %v325, 7
        %v327 = vsub.s32 %v324, %v326
        %v328 = vrot.slane %v317, %v327
        %v330 = vunpack.c.l.s4 1983009808
        %v331 = vunpack.c.0.s8 %v330
        %v332 = vlaneseq
        %v333 = vshrl.u32 %v332, 7
        %v334 = vsub.s32 %v331, %v333
        %v335 = vrot.slane %v321, %v334
        %v336 = vcombine.high %v318, %v318
        %v338 = vunpack.c.l.s4 1983009808
        %v339 = vunpack.c.0.s8 %v338
        %v340 = vlaneseq
        %v341 = vshrl.u32 %v340, 7
        %v342 = vsub.s32 %v339, %v341
        %v343 = vrot.slane %v318, %v342
        %v345 = vunpack.c.l.s4 1983009808
        %v346 = vunpack.c.0.s8 %v345
        %v347 = vlaneseq
        %v348 = vshrl.u32 %v347, 7
        %v349 = vsub.s32 %v346, %v348
        %v350 = vrot.slane %v336, %v349
        %v355 = vmax.f32 %v313, %v328
        %v356 = vmax.f32 %v314, %v335
        %v357 = vmax.f32 %v315, %v343
        %v358 = vmax.f32 %v316, %v350
        %s359 = scalar_lea.vmem %s245, 8
        %v360 = vld [vmem:[%s359] sm:$0xff]
        %v361 = vld [vmem:[%s359 + $0x8] sm:$0xff]
        %v364 = vcombine.high %v360, %v360
        %v366 = vunpack.c.l.s4 1983009808
        %v367 = vunpack.c.0.s8 %v366
        %v368 = vlaneseq
        %v369 = vshrl.u32 %v368, 7
        %v370 = vsub.s32 %v367, %v369
        %v371 = vrot.slane %v360, %v370
        %v373 = vunpack.c.l.s4 1983009808
        %v374 = vunpack.c.0.s8 %v373
        %v375 = vlaneseq
        %v376 = vshrl.u32 %v375, 7
        %v377 = vsub.s32 %v374, %v376
        %v378 = vrot.slane %v364, %v377
        %v379 = vcombine.high %v361, %v361
        %v381 = vunpack.c.l.s4 1983009808
        %v382 = vunpack.c.0.s8 %v381
        %v383 = vlaneseq
        %v384 = vshrl.u32 %v383, 7
        %v385 = vsub.s32 %v382, %v384
        %v386 = vrot.slane %v361, %v385
        %v388 = vunpack.c.l.s4 1983009808
        %v389 = vunpack.c.0.s8 %v388
        %v390 = vlaneseq
        %v391 = vshrl.u32 %v390, 7
        %v392 = vsub.s32 %v389, %v391
        %v393 = vrot.slane %v379, %v392
        %v398 = vmax.f32 %v355, %v371
        %v399 = vmax.f32 %v356, %v378
        %v400 = vmax.f32 %v357, %v386
        %v401 = vmax.f32 %v358, %v393
        %v402 = vld [vmem:[%s250] sm:$0x33]
        %v403 = vld [vmem:[%s250 + $0x8] sm:$0x33]
        %v404 = vld [vmem:[%s250 + $0x10] sm:$0x33]
        %v405 = vld [vmem:[%s250 + $0x18] sm:$0x33]
        %v406 = vmax.f32 %v398, %v402
        %v407 = vmax.f32 %v399, %v403
        %v408 = vmax.f32 %v400, %v404
        %v409 = vmax.f32 %v401, %v405
        %v410 = vld [vmem:[%s250] sm:$0x66]
        %v411 = vld [vmem:[%s250 + $0x8] sm:$0x66]
        %v412 = vld [vmem:[%s250 + $0x10] sm:$0x66]
        %v413 = vld [vmem:[%s250 + $0x18] sm:$0x66]
        %v418 = vrot.slane %v410, 5
        %v419 = vrot.slane %v418, 4
        %v420 = vrot.slane %v411, 5
        %v421 = vrot.slane %v420, 4
        %v422 = vrot.slane %v412, 5
        %v423 = vrot.slane %v422, 4
        %v424 = vrot.slane %v413, 5
        %v425 = vrot.slane %v424, 4
        %v430 = vmax.f32 %v406, %v419
        %v431 = vmax.f32 %v407, %v421
        %v432 = vmax.f32 %v408, %v423
        %v433 = vmax.f32 %v409, %v425
        %v434 = vld [vmem:[%s255] sm:$0xff]
        %v435 = vld [vmem:[%s255 + $0x8] sm:$0xff]
        %v438 = vcombine.high %v434, %v434
        %v440 = vunpack.c.l.s4 1983009808
        %v441 = vunpack.c.0.s8 %v440
        %v442 = vlaneseq
        %v443 = vshrl.u32 %v442, 7
        %v444 = vsub.s32 %v441, %v443
        %v445 = vrot.slane %v434, %v444
        %v447 = vunpack.c.l.s4 1983009808
        %v448 = vunpack.c.0.s8 %v447
        %v449 = vlaneseq
        %v450 = vshrl.u32 %v449, 7
        %v451 = vsub.s32 %v448, %v450
        %v452 = vrot.slane %v438, %v451
        %v453 = vcombine.high %v435, %v435
        %v455 = vunpack.c.l.s4 1983009808
        %v456 = vunpack.c.0.s8 %v455
        %v457 = vlaneseq
        %v458 = vshrl.u32 %v457, 7
        %v459 = vsub.s32 %v456, %v458
        %v460 = vrot.slane %v435, %v459
        %v462 = vunpack.c.l.s4 1983009808
        %v463 = vunpack.c.0.s8 %v462
        %v464 = vlaneseq
        %v465 = vshrl.u32 %v464, 7
        %v466 = vsub.s32 %v463, %v465
        %v467 = vrot.slane %v453, %v466
        %v472 = vmax.f32 %v430, %v445
        %v473 = vmax.f32 %v431, %v452
        %v474 = vmax.f32 %v432, %v460
        %v475 = vmax.f32 %v433, %v467
        %v481 = vunpack.c.l.s4 1983009808
        %v482 = vunpack.c.0.s8 %v481
        %v483 = vlaneseq
        %v484 = vshrl.u32 %v483, 7
        %v485 = vsub.s32 %v482, %v484
        %v486 = vrot.slane %v472, %v485
        %v488 = vunpack.c.l.s4 1983009808
        %v489 = vunpack.c.0.s8 %v488
        %v490 = vlaneseq
        %v491 = vshrl.u32 %v490, 7
        %v492 = vsub.s32 %v489, %v491
        %v493 = vrot.slane %v473, %v492
        %v494 = vcombine.low %v486, %v493
        %v496 = vunpack.c.l.s4 1983009808
        %v497 = vunpack.c.0.s8 %v496
        %v498 = vlaneseq
        %v499 = vshrl.u32 %v498, 7
        %v500 = vsub.s32 %v497, %v499
        %v501 = vrot.slane %v474, %v500
        %v503 = vunpack.c.l.s4 1983009808
        %v504 = vunpack.c.0.s8 %v503
        %v505 = vlaneseq
        %v506 = vshrl.u32 %v505, 7
        %v507 = vsub.s32 %v504, %v506
        %v508 = vrot.slane %v475, %v507
        %v509 = vcombine.low %v501, %v508
        %vm512 = vcmask 1041408
        %vm513 = vcmask 1043458
        %vm514 = vmor %vm513, %vm512
        %vm515 = vcmask 1045508
        %vm516 = vmor %vm515, %vm514
        %vm517 = vcmask 785414
        %vm518 = vmor %vm517, %vm516
        %519 = vst.msk [vmem:[%s235] sm:$0xff] %vm518, %v494
        %520 = vst.msk [vmem:[%s235 + $0x8] sm:$0xff] %vm518, %v509
        %s521 = sand.u32 %s130, 1
        %s522 = scalar_lea.sflag [#allocation3], %s521
        %s523 = sand.u32 %s130, 1
        %s524 = smul.addr %s523, 16
        %s525 = scalar_lea.vmem [#allocation2], %s524
        // Predicated region
        $region37: #{googlenet_forward.31} parent=35 // pred_check
          %p526 = pneg %p140
        $region38: #{googlenet_forward.31} parent=35 // pred_check_branch
          %528 = sbr.rel (%p526) target = $region40
        $region39: #{googlenet_forward.31} parent=35 // pred_region
          %s530 = ssub.s32 256, 256
          %531 = vsyncadd %s522, %s530
          %s532 = smul.addr %s18, 8
          %s533 = smul.addr %s532, 32
          %s534 = scalar_lea.hbm %s4, %s533
          %s535 = sshll.u32 %s525, 4
          %s536 = int_to_ptr.vmem [resolvable:$true] %s535
          %541 = dma.vmem_to_hbm [thread:$0]  %s536, 256, %s534, %s522, 128, 128, 8
        $region40: #{googlenet_forward.31} parent=35 // pred_fallthru
          _
      $region36: #{googlenet_forward.31} parent=5 // pred_fallthru
        _
      %p542 = scmp.le.s32.totalorder 2, %s13
      // Predicated region
      $region41: #{googlenet_forward.31} parent=5 // pred_check
        %p543 = pneg %p542
      $region42: #{googlenet_forward.31} parent=5 // pred_check_branch
        %545 = sbr.rel (%p543) target = $region44
      $region43: #{googlenet_forward.31} parent=5 // pred_region
        %s546 = ssub.s32 %s13, 2
        // Predicated region
        $region45: #{googlenet_forward.31} parent=43 // pred_check
          %p547 = pneg %p146
        $region46: #{googlenet_forward.31} parent=43 // pred_check_branch
          %549 = sbr.rel (%p547) target = $region48
        $region47: #{googlenet_forward.31} parent=43 // pred_region
          %s550 = sand.u32 %s131, 1
          %s551 = scalar_lea.sflag [#allocation3], %s550
          %s552 = sand.u32 %s131, 1
          %s553 = smul.addr %s552, 16
          %s554 = scalar_lea.vmem [#allocation2], %s553
          %555 = dma.done %s551, 256
        $region48: #{googlenet_forward.31} parent=43 // pred_fallthru
          _
      $region44: #{googlenet_forward.31} parent=5 // pred_fallthru
        _
    $region6: #{googlenet_forward.31} parent=1 // loop_footer
      %s17 = sadd.s32 1, %s13
    $region7: #{googlenet_forward.31} parent=1 // loop_footer_branch
      %12 = sbr.rel target = $region3
    $region8: #{googlenet_forward.31} parent=1 // loop_exit
      _
    %556 = vsyncpa [#allocation3], 1
    %s557 = scalar_lea.sflag [#allocation3], 1
    %558 = vsyncpa %s557, 1

</llo_original>
